<compile_context>
chip_gen: v5e
topology: v5e:2x2
jax: 0.10.0
libtpu: 0.0.40
codegen_flags: <defaults>
</compile_context>

<pallas_src>
import functools

import jax
import jax.numpy as jnp
from jax.experimental import pallas as pl
from jax.experimental.pallas import tpu as pltpu

LANE = 128  # TPU lane width; channel-like dims of weights are padded to this.


def _round_up(x, m):
    return (x + m - 1) // m * m


def _pad_to(a, shape):
    pad = [(0, t - s) for s, t in zip(a.shape, shape)]
    return jnp.pad(a, pad)


# ---------------------------------------------------------------------------
# Fused kernel: per grid step, B_TILE images run the whole forward in VMEM.
# ---------------------------------------------------------------------------
def fused_newnet_kernel(p1_ref, w1_ref, s1_ref, w2_ref, s2_ref,
                        wc_ref, bc_ref, wfc_ref, bfc_ref, o_ref,
                        *, B, KH, KW, H1, W1, H2, W2, K1P):
    # --- stem BasicConv2d #1: wrapper pre-im2col'd bf16 patches -> one contraction
    p1 = p1_ref[...].reshape(B * H1 * W1, K1P)                       # bf16
    f1 = jnp.dot(p1, w1_ref[...], preferred_element_type=jnp.float32)
    f1 = jnp.maximum(f1 + s1_ref[...], 0.0)                          # BN shift + ReLU (f32)
    f1 = f1.astype(jnp.bfloat16).reshape(B, H1, W1, LANE)            # bf16 BEFORE im2col

    # --- stem BasicConv2d #2: in-kernel batched im2col (bf16) -> one contraction
    cols = []
    for kh in range(KH):
        for kw in range(KW):
            cols.append(f1[:, kh:kh + H2, kw:kw + W2, :].reshape(B * H2 * W2, LANE))
    p2 = jnp.concatenate(cols, axis=-1)                              # (B*H2*W2, 9*128) bf16
    f2 = jnp.dot(p2, w2_ref[...], preferred_element_type=jnp.float32)
    f2 = jnp.maximum(f2 + s2_ref[...], 0.0)                          # (B*H2*W2, 128) f32

    # --- global average pool per image
    pooled = jnp.sum(f2.reshape(B, H2 * W2, LANE), axis=1) * (1.0 / (H2 * W2))  # (B, 128)

    # --- folded (last_linear * last_bn) @ logits: single matmul + bias (exact fold)
    logits = jnp.dot(pooled.astype(jnp.bfloat16), wc_ref[...],
                     preferred_element_type=jnp.float32) + bc_ref[...]

    # --- NewNet head: ReLU -> Dropout(0.2, eval = identity) -> Linear
    r = jnp.maximum(logits, 0.0).astype(jnp.bfloat16)
    out = jnp.dot(r, wfc_ref[...], preferred_element_type=jnp.float32) + bfc_ref[...]

    o_ref[0] = out                                                   # (B, 128) lane-dense


def newnet_pallas(patches1, p, *, B, KH, KW, H1, W1, H2, W2):
    """patches1: (N_pad, H1*W1, K1P) bf16; p: packed params. Returns (NB, B, LANE) f32."""
    n_pad = patches1.shape[0]
    K1P = patches1.shape[-1]
    nb = n_pad // B

    kernel = functools.partial(fused_newnet_kernel, B=B, KH=KH, KW=KW,
                               H1=H1, W1=W1, H2=H2, W2=W2, K1P=K1P)

    def full_spec(arr):  # whole (small) weight resident in VMEM, constant block index
        nd = arr.ndim
        return pl.BlockSpec(arr.shape, lambda n, _nd=nd: (0,) * _nd)

    return pl.pallas_call(
        kernel,
        out_shape=jax.ShapeDtypeStruct((nb, B, LANE), jnp.float32),
        grid=(nb,),
        in_specs=[
            pl.BlockSpec((B, H1 * W1, K1P), lambda n: (n, 0, 0)),
            full_spec(p["w1"]), full_spec(p["s1"]),
            full_spec(p["w2"]), full_spec(p["s2"]),
            full_spec(p["wcomb"]), full_spec(p["bcomb"]),
            full_spec(p["wfc"]), full_spec(p["bfc"]),
        ],
        out_specs=pl.BlockSpec((1, B, LANE), lambda n: (n, 0, 0)),
        compiler_params=pltpu.CompilerParams(
            dimension_semantics=("parallel",),
            vmem_limit_bytes=32 * 1024 * 1024),
    )(patches1, p["w1"], p["s1"], p["w2"], p["s2"],
      p["wcomb"], p["bcomb"], p["wfc"], p["bfc"])


# ---------------------------------------------------------------------------
# Parameter init (deterministic, synthetic), BN folding, padding / packing.
# ---------------------------------------------------------------------------
def init_raw_params(key, cin=3, c1=16, c2=32, emb=32, num_classes=1):
    ks = jax.random.split(key, 10)

    def bn(k, n):  # (gamma, beta, running_mean, running_var)
        k1, k2, k3, k4 = jax.random.split(k, 4)
        return (1.0 + 0.05 * jax.random.normal(k1, (n,), jnp.float32),
                0.05 * jax.random.normal(k2, (n,), jnp.float32),
                0.05 * jax.random.normal(k3, (n,), jnp.float32),
                jnp.abs(jax.random.normal(k4, (n,), jnp.float32)) + 0.5)

    return {
        "w1": 0.1 * jax.random.normal(ks[0], (3, 3, cin, c1), jnp.float32),
        "bn1": bn(ks[1], c1),
        "w2": 0.1 * jax.random.normal(ks[2], (3, 3, c1, c2), jnp.float32),
        "bn2": bn(ks[3], c2),
        # last_linear: Linear(c2 -> emb, bias=False), stored (in, out)
        "w_emb": 0.1 * jax.random.normal(ks[4], (c2, emb), jnp.float32),
        "bn3": bn(ks[5], emb),
        # logits: Linear(emb -> num_classes)
        "w_log": 0.1 * jax.random.normal(ks[6], (emb, num_classes), jnp.float32),
        "b_log": 0.1 * jax.random.normal(ks[7], (num_classes,), jnp.float32),
        # NewNet.layers[2]: Linear(num_classes -> num_classes)
        "w_fc": 0.1 * jax.random.normal(ks[8], (num_classes, num_classes), jnp.float32),
        "b_fc": 0.1 * jax.random.normal(ks[9], (num_classes,), jnp.float32),
    }


def _bn_fold(bn, eps=1e-3):
    gamma, beta, mean, var = bn
    scale = gamma / jnp.sqrt(var + eps)
    shift = beta - mean * scale
    return scale, shift


def pack_params(raw):
    """Fold BN scales into weights, fold head affines, pad to lanes, bf16 matmul weights."""
    p = {}
    KH, KW, cin, _ = raw["w1"].shape

    # conv1: BN1 scale folded into Cout; K rows padded to a multiple of 8 (wrapper
    # pads the im2col patches the same way).  Column order matches patch layout:
    # (kh, kw) tap-major, channel fastest.
    scale1, shift1 = _bn_fold(raw["bn1"])
    w1 = (raw["w1"] * scale1[None, None, None, :]).reshape(KH * KW * cin, -1)
    K1P = _round_up(KH * KW * cin, 8)
    p["w1"] = _pad_to(w1, (K1P, LANE)).astype(jnp.bfloat16)
    p["s1"] = _pad_to(shift1[None, :], (1, LANE)).astype(jnp.float32)

    # conv2: Cin padded to LANE (the in-kernel im2col emits 128-wide channel chunks,
    # padded channels are exactly zero through ReLU), BN2 scale folded into Cout.
    scale2, shift2 = _bn_fold(raw["bn2"])
    w2 = raw["w2"] * scale2[None, None, None, :]
    w2 = _pad_to(w2, (KH, KW, LANE, LANE)).reshape(KH * KW * LANE, LANE)
    p["w2"] = w2.astype(jnp.bfloat16)
    p["s2"] = _pad_to(shift2[None, :], (1, LANE)).astype(jnp.float32)

    # head fold: last_linear (bias-free) * last_bn (eval) then logits Linear,
    # collapsed into a single affine (exact, no nonlinearity in between).
    scale3, shift3 = _bn_fold(raw["bn3"])
    wcomb = (raw["w_emb"] * scale3[None, :]) @ raw["w_log"]          # (c2, num_classes)
    bcomb = shift3 @ raw["w_log"] + raw["b_log"]                     # (num_classes,)
    p["wcomb"] = _pad_to(wcomb, (LANE, LANE)).astype(jnp.bfloat16)
    p["bcomb"] = _pad_to(bcomb[None, :], (1, LANE)).astype(jnp.float32)

    p["wfc"] = _pad_to(raw["w_fc"], (LANE, LANE)).astype(jnp.bfloat16)
    p["bfc"] = _pad_to(raw["b_fc"][None, :], (1, LANE)).astype(jnp.float32)
    return p


def newnet_forward(x_nchw, packed, num_classes, *, b_tile=4, KH=3, KW=3):
    """x_nchw: (N, C, H, W) f32 -> (N, num_classes) f32."""
    N, C, H, W = x_nchw.shape
    H1, W1 = H - KH + 1, W - KW + 1
    H2, W2 = H1 - KH + 1, W1 - KW + 1

    B = max(1, min(b_tile, N))
    n_pad = _round_up(N, B)

    x = jnp.transpose(x_nchw, (0, 2, 3, 1)).astype(jnp.bfloat16)     # NHWC, bf16 in HBM
    if n_pad != N:
        x = jnp.pad(x, ((0, n_pad - N), (0, 0), (0, 0), (0, 0)))

    # conv1 im2col in the wrapper (XLA): (N_pad, H1*W1, KH*KW*C) bf16, K padded to x8.
    cols = [x[:, kh:kh + H1, kw:kw + W1, :].reshape(n_pad, H1 * W1, C)
            for kh in range(KH) for kw in range(KW)]
    patches1 = jnp.concatenate(cols, axis=-1)
    K1 = KH * KW * C
    K1P = _round_up(K1, 8)
    if K1P != K1:
        patches1 = jnp.pad(patches1, ((0, 0), (0, 0), (0, K1P - K1)))

    out = newnet_pallas(patches1, packed, B=B, KH=KH, KW=KW,
                        H1=H1, W1=W1, H2=H2, W2=W2)                  # (NB, B, 128)
    return out.reshape(n_pad, LANE)[:N, :num_classes]


# ---------------------------------------------------------------------------
# Pure-JAX reference (f32) for a correctness check.
# ---------------------------------------------------------------------------
def ref_forward(x_nchw, raw):
    x = jnp.transpose(x_nchw, (0, 2, 3, 1)).astype(jnp.float32)

    def conv_bn_relu(x, w, bn):
        y = jax.lax.conv_general_dilated(
            x, w, window_strides=(1, 1), padding="VALID",
            dimension_numbers=("NHWC", "HWIO", "NHWC"))
        scale, shift = _bn_fold(bn)
        return jnp.maximum(y * scale + shift, 0.0)

    x = conv_bn_relu(x, raw["w1"], raw["bn1"])
    x = conv_bn_relu(x, raw["w2"], raw["bn2"])
    pooled = jnp.mean(x, axis=(1, 2))
    emb = pooled @ raw["w_emb"]
    scale3, shift3 = _bn_fold(raw["bn3"])
    emb = emb * scale3 + shift3
    logits = emb @ raw["w_log"] + raw["b_log"]
    r = jnp.maximum(logits, 0.0)                 # ReLU; Dropout eval = identity
    return r @ raw["w_fc"] + raw["b_fc"]


if __name__ == "__main__":
    key = jax.random.PRNGKey(0)
    k_x, k_p = jax.random.split(key)

    N, C, H, W = 8, 3, 16, 16       # B_TILE=4 -> grid=(2,): both v7x TCs get work
    NUM_CLASSES = 1

    x = jax.random.normal(k_x, (N, C, H, W), jnp.float32)
    raw = init_raw_params(k_p, cin=C, c1=16, c2=32, emb=32, num_classes=NUM_CLASSES)
    packed = pack_params(raw)

    out = newnet_forward(x, packed, NUM_CLASSES, b_tile=4)
    out = jax.block_until_ready(out)

    assert out.shape == (N, NUM_CLASSES), out.shape
    assert bool(jnp.all(jnp.isfinite(out)))

    ref = ref_forward(x, raw)
    err = float(jnp.max(jnp.abs(out - ref)))
    assert err < 5e-2, f"max abs err vs reference: {err}"

    print("KERNEL_OK")
</pallas_src>

<mosaic_0001>
module attributes {stable_mosaic.version = 11 : i64} {
  func.func @fused_newnet_kernel(%arg0: i32, %arg1: memref<4x196x32xbf16, #tpu.memory_space<vmem>>, %arg2: memref<32x128xbf16, #tpu.memory_space<vmem>>, %arg3: memref<1x128xf32, #tpu.memory_space<vmem>>, %arg4: memref<1152x128xbf16, #tpu.memory_space<vmem>>, %arg5: memref<1x128xf32, #tpu.memory_space<vmem>>, %arg6: memref<128x128xbf16, #tpu.memory_space<vmem>>, %arg7: memref<1x128xf32, #tpu.memory_space<vmem>>, %arg8: memref<128x128xbf16, #tpu.memory_space<vmem>>, %arg9: memref<1x128xf32, #tpu.memory_space<vmem>>, %arg10: memref<1x4x128xf32, #tpu.memory_space<vmem>>) attributes {dimension_semantics = [#tpu.dimension_semantics<parallel>], iteration_bounds = array<i64: 2>, scalar_prefetch = 0 : i64, scratch_operands = 0 : i64, tpu.core_type = #tpu.core_type<tc>, window_params = [{transform_indices = @transform_0, window_bounds = array<i64: 4, 196, 32>}, {pipeline_mode = #tpu.pipeline_mode<synchronous>, transform_indices = @transform_1, window_bounds = array<i64: 32, 128>}, {pipeline_mode = #tpu.pipeline_mode<synchronous>, transform_indices = @transform_2, window_bounds = array<i64: 1, 128>}, {pipeline_mode = #tpu.pipeline_mode<synchronous>, transform_indices = @transform_3, window_bounds = array<i64: 1152, 128>}, {pipeline_mode = #tpu.pipeline_mode<synchronous>, transform_indices = @transform_4, window_bounds = array<i64: 1, 128>}, {pipeline_mode = #tpu.pipeline_mode<synchronous>, transform_indices = @transform_5, window_bounds = array<i64: 128, 128>}, {pipeline_mode = #tpu.pipeline_mode<synchronous>, transform_indices = @transform_6, window_bounds = array<i64: 1, 128>}, {pipeline_mode = #tpu.pipeline_mode<synchronous>, transform_indices = @transform_7, window_bounds = array<i64: 128, 128>}, {pipeline_mode = #tpu.pipeline_mode<synchronous>, transform_indices = @transform_8, window_bounds = array<i64: 1, 128>}, {transform_indices = @transform_9, window_bounds = array<i64: 1, 4, 128>}]} {
    %c0 = arith.constant 0 : index
    %c0_0 = arith.constant 0 : index
    %c0_1 = arith.constant 0 : index
    %0 = vector.load %arg1[%c0, %c0_0, %c0_1] : memref<4x196x32xbf16, #tpu.memory_space<vmem>>, vector<4x196x32xbf16>
    %1 = vector.shape_cast %0 : vector<4x196x32xbf16> to vector<784x32xbf16>
    %c0_2 = arith.constant 0 : index
    %c0_3 = arith.constant 0 : index
    %2 = vector.load %arg2[%c0_2, %c0_3] : memref<32x128xbf16, #tpu.memory_space<vmem>>, vector<32x128xbf16>
    %cst = arith.constant dense<0.000000e+00> : vector<784x128xf32>
    %3 = tpu.matmul %1, %2, %cst {dimension_numbers = #tpu.dot_dimension_numbers<[1], [0], [0], [1], [0, 0, 1, 1], [], []>} : vector<784x32xbf16>, vector<32x128xbf16>, vector<784x128xf32> -> vector<784x128xf32>
    %c0_4 = arith.constant 0 : index
    %c0_5 = arith.constant 0 : index
    %4 = vector.load %arg3[%c0_4, %c0_5] : memref<1x128xf32, #tpu.memory_space<vmem>>, vector<1x128xf32>
    %5 = vector.broadcast %4 : vector<1x128xf32> to vector<784x128xf32>
    %6 = arith.addf %3, %5 : vector<784x128xf32>
    %cst_6 = arith.constant 0.000000e+00 : f32
    %7 = vector.broadcast %cst_6 : f32 to vector<784x128xf32>
    %8 = arith.maximumf %6, %7 : vector<784x128xf32>
    %9 = arith.truncf %8 : vector<784x128xf32> to vector<784x128xbf16>
    %10 = vector.shape_cast %9 : vector<784x128xbf16> to vector<4x14x14x128xbf16>
    %11 = vector.extract_strided_slice %10 {offsets = [0, 0, 0, 0], sizes = [4, 12, 12, 128], strides = [1, 1, 1, 1]} : vector<4x14x14x128xbf16> to vector<4x12x12x128xbf16>
    %12 = vector.shape_cast %11 : vector<4x12x12x128xbf16> to vector<576x128xbf16>
    %13 = vector.extract_strided_slice %10 {offsets = [0, 0, 1, 0], sizes = [4, 12, 12, 128], strides = [1, 1, 1, 1]} : vector<4x14x14x128xbf16> to vector<4x12x12x128xbf16>
    %14 = vector.shape_cast %13 : vector<4x12x12x128xbf16> to vector<576x128xbf16>
    %15 = vector.extract_strided_slice %10 {offsets = [0, 0, 2, 0], sizes = [4, 12, 12, 128], strides = [1, 1, 1, 1]} : vector<4x14x14x128xbf16> to vector<4x12x12x128xbf16>
    %16 = vector.shape_cast %15 : vector<4x12x12x128xbf16> to vector<576x128xbf16>
    %17 = vector.extract_strided_slice %10 {offsets = [0, 1, 0, 0], sizes = [4, 12, 12, 128], strides = [1, 1, 1, 1]} : vector<4x14x14x128xbf16> to vector<4x12x12x128xbf16>
    %18 = vector.shape_cast %17 : vector<4x12x12x128xbf16> to vector<576x128xbf16>
    %19 = vector.extract_strided_slice %10 {offsets = [0, 1, 1, 0], sizes = [4, 12, 12, 128], strides = [1, 1, 1, 1]} : vector<4x14x14x128xbf16> to vector<4x12x12x128xbf16>
    %20 = vector.shape_cast %19 : vector<4x12x12x128xbf16> to vector<576x128xbf16>
    %21 = vector.extract_strided_slice %10 {offsets = [0, 1, 2, 0], sizes = [4, 12, 12, 128], strides = [1, 1, 1, 1]} : vector<4x14x14x128xbf16> to vector<4x12x12x128xbf16>
    %22 = vector.shape_cast %21 : vector<4x12x12x128xbf16> to vector<576x128xbf16>
    %23 = vector.extract_strided_slice %10 {offsets = [0, 2, 0, 0], sizes = [4, 12, 12, 128], strides = [1, 1, 1, 1]} : vector<4x14x14x128xbf16> to vector<4x12x12x128xbf16>
    %24 = vector.shape_cast %23 : vector<4x12x12x128xbf16> to vector<576x128xbf16>
    %25 = vector.extract_strided_slice %10 {offsets = [0, 2, 1, 0], sizes = [4, 12, 12, 128], strides = [1, 1, 1, 1]} : vector<4x14x14x128xbf16> to vector<4x12x12x128xbf16>
    %26 = vector.shape_cast %25 : vector<4x12x12x128xbf16> to vector<576x128xbf16>
    %27 = vector.extract_strided_slice %10 {offsets = [0, 2, 2, 0], sizes = [4, 12, 12, 128], strides = [1, 1, 1, 1]} : vector<4x14x14x128xbf16> to vector<4x12x12x128xbf16>
    %28 = vector.shape_cast %27 : vector<4x12x12x128xbf16> to vector<576x128xbf16>
    %29 = tpu.concatenate %12, %14, %16, %18, %20, %22, %24, %26, %28 in 1 : vector<576x128xbf16>, vector<576x128xbf16>, vector<576x128xbf16>, vector<576x128xbf16>, vector<576x128xbf16>, vector<576x128xbf16>, vector<576x128xbf16>, vector<576x128xbf16>, vector<576x128xbf16> -> vector<576x1152xbf16>
    %c0_7 = arith.constant 0 : index
    %c0_8 = arith.constant 0 : index
    %30 = vector.load %arg4[%c0_7, %c0_8] : memref<1152x128xbf16, #tpu.memory_space<vmem>>, vector<1152x128xbf16>
    %cst_9 = arith.constant dense<0.000000e+00> : vector<576x128xf32>
    %31 = tpu.matmul %29, %30, %cst_9 {dimension_numbers = #tpu.dot_dimension_numbers<[1], [0], [0], [1], [0, 0, 1, 1], [], []>} : vector<576x1152xbf16>, vector<1152x128xbf16>, vector<576x128xf32> -> vector<576x128xf32>
    %c0_10 = arith.constant 0 : index
    %c0_11 = arith.constant 0 : index
    %32 = vector.load %arg5[%c0_10, %c0_11] : memref<1x128xf32, #tpu.memory_space<vmem>>, vector<1x128xf32>
    %33 = vector.broadcast %32 : vector<1x128xf32> to vector<576x128xf32>
    %34 = arith.addf %31, %33 : vector<576x128xf32>
    %cst_12 = arith.constant 0.000000e+00 : f32
    %35 = vector.broadcast %cst_12 : f32 to vector<576x128xf32>
    %36 = arith.maximumf %34, %35 : vector<576x128xf32>
    %37 = vector.shape_cast %36 : vector<576x128xf32> to vector<4x144x128xf32>
    %cst_13 = arith.constant dense<0.000000e+00> : vector<4x128xf32>
    %38 = vector.multi_reduction <add>, %37, %cst_13 [1] : vector<4x144x128xf32> to vector<4x128xf32>
    %cst_14 = arith.constant 0.0069444445 : f32
    %39 = vector.broadcast %cst_14 : f32 to vector<4x128xf32>
    %40 = arith.mulf %38, %39 : vector<4x128xf32>
    %41 = arith.truncf %40 : vector<4x128xf32> to vector<4x128xbf16>
    %c0_15 = arith.constant 0 : index
    %c0_16 = arith.constant 0 : index
    %42 = vector.load %arg6[%c0_15, %c0_16] : memref<128x128xbf16, #tpu.memory_space<vmem>>, vector<128x128xbf16>
    %cst_17 = arith.constant dense<0.000000e+00> : vector<4x128xf32>
    %43 = tpu.matmul %41, %42, %cst_17 {dimension_numbers = #tpu.dot_dimension_numbers<[1], [0], [0], [1], [0, 0, 1, 1], [], []>} : vector<4x128xbf16>, vector<128x128xbf16>, vector<4x128xf32> -> vector<4x128xf32>
    %c0_18 = arith.constant 0 : index
    %c0_19 = arith.constant 0 : index
    %44 = vector.load %arg7[%c0_18, %c0_19] : memref<1x128xf32, #tpu.memory_space<vmem>>, vector<1x128xf32>
    %45 = vector.broadcast %44 : vector<1x128xf32> to vector<4x128xf32>
    %46 = arith.addf %43, %45 : vector<4x128xf32>
    %cst_20 = arith.constant 0.000000e+00 : f32
    %47 = vector.broadcast %cst_20 : f32 to vector<4x128xf32>
    %48 = arith.maximumf %46, %47 : vector<4x128xf32>
    %49 = arith.truncf %48 : vector<4x128xf32> to vector<4x128xbf16>
    %c0_21 = arith.constant 0 : index
    %c0_22 = arith.constant 0 : index
    %50 = vector.load %arg8[%c0_21, %c0_22] : memref<128x128xbf16, #tpu.memory_space<vmem>>, vector<128x128xbf16>
    %cst_23 = arith.constant dense<0.000000e+00> : vector<4x128xf32>
    %51 = tpu.matmul %49, %50, %cst_23 {dimension_numbers = #tpu.dot_dimension_numbers<[1], [0], [0], [1], [0, 0, 1, 1], [], []>} : vector<4x128xbf16>, vector<128x128xbf16>, vector<4x128xf32> -> vector<4x128xf32>
    %c0_24 = arith.constant 0 : index
    %c0_25 = arith.constant 0 : index
    %52 = vector.load %arg9[%c0_24, %c0_25] : memref<1x128xf32, #tpu.memory_space<vmem>>, vector<1x128xf32>
    %53 = vector.broadcast %52 : vector<1x128xf32> to vector<4x128xf32>
    %54 = arith.addf %51, %53 : vector<4x128xf32>
    %c0_26 = arith.constant 0 : index
    %c0_27 = arith.constant 0 : index
    %c0_28 = arith.constant 0 : index
    %55 = vector.load %arg10[%c0_26, %c0_27, %c0_28] : memref<1x4x128xf32, #tpu.memory_space<vmem>>, vector<1x4x128xf32>
    %56 = vector.shape_cast %55 : vector<1x4x128xf32> to vector<4x128xf32>
    %57 = vector.shape_cast %54 : vector<4x128xf32> to vector<1x4x128xf32>
    tpu.vector_store %arg10[%c0_26, %c0_27, %c0_28], %57 {strides = array<i32>} : memref<1x4x128xf32, #tpu.memory_space<vmem>>, vector<1x4x128xf32>,
    return
  }
  func.func @transform_0(%arg0: i32) -> (i32, i32, i32) {
    %c0_i32 = arith.constant 0 : i32
    %c0_i32_0 = arith.constant 0 : i32
    %c0_i32_1 = arith.constant 0 : i32
    return %arg0, %c0_i32, %c0_i32_0 : i32, i32, i32
  }
  func.func @transform_1(%arg0: i32) -> (i32, i32) {
    %c0_i32 = arith.constant 0 : i32
    %c0_i32_0 = arith.constant 0 : i32
    %c0_i32_1 = arith.constant 0 : i32
    return %c0_i32, %c0_i32_0 : i32, i32
  }
  func.func @transform_2(%arg0: i32) -> (i32, i32) {
    %c0_i32 = arith.constant 0 : i32
    %c0_i32_0 = arith.constant 0 : i32
    %c0_i32_1 = arith.constant 0 : i32
    return %c0_i32, %c0_i32_0 : i32, i32
  }
  func.func @transform_3(%arg0: i32) -> (i32, i32) {
    %c0_i32 = arith.constant 0 : i32
    %c0_i32_0 = arith.constant 0 : i32
    %c0_i32_1 = arith.constant 0 : i32
    return %c0_i32, %c0_i32_0 : i32, i32
  }
  func.func @transform_4(%arg0: i32) -> (i32, i32) {
    %c0_i32 = arith.constant 0 : i32
    %c0_i32_0 = arith.constant 0 : i32
    %c0_i32_1 = arith.constant 0 : i32
    return %c0_i32, %c0_i32_0 : i32, i32
  }
  func.func @transform_5(%arg0: i32) -> (i32, i32) {
    %c0_i32 = arith.constant 0 : i32
    %c0_i32_0 = arith.constant 0 : i32
    %c0_i32_1 = arith.constant 0 : i32
    return %c0_i32, %c0_i32_0 : i32, i32
  }
  func.func @transform_6(%arg0: i32) -> (i32, i32) {
    %c0_i32 = arith.constant 0 : i32
    %c0_i32_0 = arith.constant 0 : i32
    %c0_i32_1 = arith.constant 0 : i32
    return %c0_i32, %c0_i32_0 : i32, i32
  }
  func.func @transform_7(%arg0: i32) -> (i32, i32) {
    %c0_i32 = arith.constant 0 : i32
    %c0_i32_0 = arith.constant 0 : i32
    %c0_i32_1 = arith.constant 0 : i32
    return %c0_i32, %c0_i32_0 : i32, i32
  }
  func.func @transform_8(%arg0: i32) -> (i32, i32) {
    %c0_i32 = arith.constant 0 : i32
    %c0_i32_0 = arith.constant 0 : i32
    %c0_i32_1 = arith.constant 0 : i32
    return %c0_i32, %c0_i32_0 : i32, i32
  }
  func.func @transform_9(%arg0: i32) -> (i32, i32, i32) {
    %c0_i32 = arith.constant 0 : i32
    %c0_i32_0 = arith.constant 0 : i32
    %c0_i32_1 = arith.constant 0 : i32
    return %arg0, %c0_i32, %c0_i32_0 : i32, i32, i32
  }
}

</mosaic_0001>

<llo_original>
// kernel: tpu_custom_call.1
$region0: #{tpu_custom_call.1}
  #allocation0 [shape = 'u32[]', space=smem, size = 0x4, offset = 0x4, fixed_abs, tag = 'smem constant byte address 0x4 - core index']
  #allocation1 [shape = 'u32[72,128]{1,0:T(1,128)}', space=vmem, size = 0x9000, scoped, tag = 'internal scratch']
  %s0 = inlined_call_operand.vmem [shape: bf16[8,196,32], index: 0, kind: input, shape index: {}]
  %s1 = inlined_call_operand.vmem [shape: bf16[32,128], index: 1, kind: input, shape index: {}]
  %s2 = inlined_call_operand.vmem [shape: f32[1,128], index: 2, kind: input, shape index: {}]
  %s3 = inlined_call_operand.vmem [shape: bf16[1152,128], index: 3, kind: input, shape index: {}]
  %s4 = inlined_call_operand.vmem [shape: f32[1,128], index: 4, kind: input, shape index: {}]
  %s5 = inlined_call_operand.vmem [shape: bf16[128,128], index: 5, kind: input, shape index: {}]
  %s6 = inlined_call_operand.vmem [shape: f32[1,128], index: 6, kind: input, shape index: {}]
  %s7 = inlined_call_operand.vmem [shape: bf16[128,128], index: 7, kind: input, shape index: {}]
  %s8 = inlined_call_operand.vmem [shape: f32[1,128], index: 8, kind: input, shape index: {}]
  %s9 = inlined_call_operand.hbm [shape: f32[2,4,128], index: 9, kind: output, shape index: {}]
  %s10 = sld [smem:[#allocation0]]
  $region69: #{tpu_custom_call.1} parent=0
    _
  %s12 = ssub.s32 1, %s10
  %s13 = scalar_select 0, %s12, %s10
  $region1: #{tpu_custom_call.1} parent=0
    #allocation2 [shape = 'u8[4096]{0}', space=vmem, size = 0x1000, scoped, tag = 'output window, operand 0']
    #allocation3 [shape = 's32[2]{0}', space=sflag, size = 0x8, scoped, tag = 'scoped memory for tpu_custom_call.1']
    %14 = vsyncpa [#allocation3], 0
    %s15 = scalar_lea.sflag [#allocation3], 1
    %16 = vsyncpa %s15, 0
    loop: start=0, step=1, limit=4
    $region2: #{tpu_custom_call.1} parent=1 // loop_pre_header
      _
    $region3: #{tpu_custom_call.1} parent=1 // loop_header
      %s18 = sphi 0, %s22
      %p19 = scmp.ge.s32.totalorder %s18, 4
      %s28 = sphi 0, %s30
      %s31 = sphi 0, %s28
      %s32 = sphi 0, %s31
      %s48 = sphi 0, %s32
      %s52 = sphi 0, %s52
      %s54 = sphi 0, %s52
      %s55 = sphi 0, %s54
      %s69 = sphi 0, %s55
      %s73 = sphi 0, %s73
      %s75 = sphi 0, %s73
      %s76 = sphi 0, %s75
      %s90 = sphi 0, %s76
      %s94 = sphi 0, %s94
      %s96 = sphi 0, %s94
      %s97 = sphi 0, %s96
      %s111 = sphi 0, %s97
      %s115 = sphi 0, %s115
      %s117 = sphi 0, %s115
      %s118 = sphi 0, %s117
      %s132 = sphi 0, %s118
      %s136 = sphi 0, %s136
      %s138 = sphi 0, %s136
      %s139 = sphi 0, %s138
      %s153 = sphi 0, %s139
      %s157 = sphi 0, %s157
      %s159 = sphi 0, %s157
      %s160 = sphi 0, %s159
      %s174 = sphi 0, %s160
      %s178 = sphi 0, %s178
      %s180 = sphi 0, %s178
      %s181 = sphi 0, %s180
      %s195 = sphi 0, %s181
      %s199 = sphi 0, %s199
      %s201 = sphi 0, %s199
      %s202 = sphi 0, %s201
      %s216 = sphi 0, %s202
      %s222 = sphi 0, %s224
      %s225 = sphi 0, %s222
      %s226 = sphi 0, %s225
      %s242 = sphi 0, %s226
    $region4: #{tpu_custom_call.1} parent=1 // loop_header_branch
      %21 = sbr.rel (%p19) target = $region8
    $region5: #{tpu_custom_call.1} parent=1 // loop_body
      %s23 = ssub.s32 %s18, 1
      %s24 = ssub.s32 %s18, 2
      %s25 = sadd.s32 %s18, 1
      %s26 = ssub.s32 %s18, %s25
      %p27 = scmp.eq.s32.totalorder %s26, 0
      %s29 = sadd.s32 %s28, 1
      %s30 = scalar_select %p27, %s28, %s29
      %p33 = pneg %p27
      %p34 = scmp.eq.s32.totalorder %s18, 1
      %p35 = por %p33, %p34
      %p36 = scmp.ne.s32.totalorder %s28, %s31
      %p37 = scmp.eq.s32.totalorder %s18, 0
      %p38 = por %p36, %p37
      %p39 = scmp.ne.s32.totalorder %s28, %s31
      %p40 = scmp.eq.s32.totalorder %s23, 1
      %p41 = por %p39, %p40
      %p42 = scmp.ne.s32.totalorder %s31, %s32
      %p43 = scmp.eq.s32.totalorder %s23, 0
      %p44 = por %p42, %p43
      %p45 = scmp.ne.s32.totalorder %s31, %s32
      %p46 = scmp.eq.s32.totalorder %s24, 1
      %p47 = por %p45, %p46
      %p49 = scmp.ne.s32.totalorder %s32, %s48
      %p50 = scmp.eq.s32.totalorder %s24, 0
      %p51 = por %p49, %p50
      %s53 = sadd.s32 %s52, 1
      %p56 = scmp.eq.s32.totalorder %s18, 1
      %p57 = scmp.ne.s32.totalorder %s52, %s54
      %p58 = scmp.eq.s32.totalorder %s18, 0
      %p59 = por %p57, %p58
      %p60 = scmp.ne.s32.totalorder %s52, %s54
      %p61 = scmp.eq.s32.totalorder %s23, 1
      %p62 = por %p60, %p61
      %p63 = scmp.ne.s32.totalorder %s54, %s55
      %p64 = scmp.eq.s32.totalorder %s23, 0
      %p65 = por %p63, %p64
      %p66 = scmp.ne.s32.totalorder %s54, %s55
      %p67 = scmp.eq.s32.totalorder %s24, 1
      %p68 = por %p66, %p67
      %p70 = scmp.ne.s32.totalorder %s55, %s69
      %p71 = scmp.eq.s32.totalorder %s24, 0
      %p72 = por %p70, %p71
      %s74 = sadd.s32 %s73, 1
      %p77 = scmp.eq.s32.totalorder %s18, 1
      %p78 = scmp.ne.s32.totalorder %s73, %s75
      %p79 = scmp.eq.s32.totalorder %s18, 0
      %p80 = por %p78, %p79
      %p81 = scmp.ne.s32.totalorder %s73, %s75
      %p82 = scmp.eq.s32.totalorder %s23, 1
      %p83 = por %p81, %p82
      %p84 = scmp.ne.s32.totalorder %s75, %s76
      %p85 = scmp.eq.s32.totalorder %s23, 0
      %p86 = por %p84, %p85
      %p87 = scmp.ne.s32.totalorder %s75, %s76
      %p88 = scmp.eq.s32.totalorder %s24, 1
      %p89 = por %p87, %p88
      %p91 = scmp.ne.s32.totalorder %s76, %s90
      %p92 = scmp.eq.s32.totalorder %s24, 0
      %p93 = por %p91, %p92
      %s95 = sadd.s32 %s94, 1
      %p98 = scmp.eq.s32.totalorder %s18, 1
      %p99 = scmp.ne.s32.totalorder %s94, %s96
      %p100 = scmp.eq.s32.totalorder %s18, 0
      %p101 = por %p99, %p100
      %p102 = scmp.ne.s32.totalorder %s94, %s96
      %p103 = scmp.eq.s32.totalorder %s23, 1
      %p104 = por %p102, %p103
      %p105 = scmp.ne.s32.totalorder %s96, %s97
      %p106 = scmp.eq.s32.totalorder %s23, 0
      %p107 = por %p105, %p106
      %p108 = scmp.ne.s32.totalorder %s96, %s97
      %p109 = scmp.eq.s32.totalorder %s24, 1
      %p110 = por %p108, %p109
      %p112 = scmp.ne.s32.totalorder %s97, %s111
      %p113 = scmp.eq.s32.totalorder %s24, 0
      %p114 = por %p112, %p113
      %s116 = sadd.s32 %s115, 1
      %p119 = scmp.eq.s32.totalorder %s18, 1
      %p120 = scmp.ne.s32.totalorder %s115, %s117
      %p121 = scmp.eq.s32.totalorder %s18, 0
      %p122 = por %p120, %p121
      %p123 = scmp.ne.s32.totalorder %s115, %s117
      %p124 = scmp.eq.s32.totalorder %s23, 1
      %p125 = por %p123, %p124
      %p126 = scmp.ne.s32.totalorder %s117, %s118
      %p127 = scmp.eq.s32.totalorder %s23, 0
      %p128 = por %p126, %p127
      %p129 = scmp.ne.s32.totalorder %s117, %s118
      %p130 = scmp.eq.s32.totalorder %s24, 1
      %p131 = por %p129, %p130
      %p133 = scmp.ne.s32.totalorder %s118, %s132
      %p134 = scmp.eq.s32.totalorder %s24, 0
      %p135 = por %p133, %p134
      %s137 = sadd.s32 %s136, 1
      %p140 = scmp.eq.s32.totalorder %s18, 1
      %p141 = scmp.ne.s32.totalorder %s136, %s138
      %p142 = scmp.eq.s32.totalorder %s18, 0
      %p143 = por %p141, %p142
      %p144 = scmp.ne.s32.totalorder %s136, %s138
      %p145 = scmp.eq.s32.totalorder %s23, 1
      %p146 = por %p144, %p145
      %p147 = scmp.ne.s32.totalorder %s138, %s139
      %p148 = scmp.eq.s32.totalorder %s23, 0
      %p149 = por %p147, %p148
      %p150 = scmp.ne.s32.totalorder %s138, %s139
      %p151 = scmp.eq.s32.totalorder %s24, 1
      %p152 = por %p150, %p151
      %p154 = scmp.ne.s32.totalorder %s139, %s153
      %p155 = scmp.eq.s32.totalorder %s24, 0
      %p156 = por %p154, %p155
      %s158 = sadd.s32 %s157, 1
      %p161 = scmp.eq.s32.totalorder %s18, 1
      %p162 = scmp.ne.s32.totalorder %s157, %s159
      %p163 = scmp.eq.s32.totalorder %s18, 0
      %p164 = por %p162, %p163
      %p165 = scmp.ne.s32.totalorder %s157, %s159
      %p166 = scmp.eq.s32.totalorder %s23, 1
      %p167 = por %p165, %p166
      %p168 = scmp.ne.s32.totalorder %s159, %s160
      %p169 = scmp.eq.s32.totalorder %s23, 0
      %p170 = por %p168, %p169
      %p171 = scmp.ne.s32.totalorder %s159, %s160
      %p172 = scmp.eq.s32.totalorder %s24, 1
      %p173 = por %p171, %p172
      %p175 = scmp.ne.s32.totalorder %s160, %s174
      %p176 = scmp.eq.s32.totalorder %s24, 0
      %p177 = por %p175, %p176
      %s179 = sadd.s32 %s178, 1
      %p182 = scmp.eq.s32.totalorder %s18, 1
      %p183 = scmp.ne.s32.totalorder %s178, %s180
      %p184 = scmp.eq.s32.totalorder %s18, 0
      %p185 = por %p183, %p184
      %p186 = scmp.ne.s32.totalorder %s178, %s180
      %p187 = scmp.eq.s32.totalorder %s23, 1
      %p188 = por %p186, %p187
      %p189 = scmp.ne.s32.totalorder %s180, %s181
      %p190 = scmp.eq.s32.totalorder %s23, 0
      %p191 = por %p189, %p190
      %p192 = scmp.ne.s32.totalorder %s180, %s181
      %p193 = scmp.eq.s32.totalorder %s24, 1
      %p194 = por %p192, %p193
      %p196 = scmp.ne.s32.totalorder %s181, %s195
      %p197 = scmp.eq.s32.totalorder %s24, 0
      %p198 = por %p196, %p197
      %s200 = sadd.s32 %s199, 1
      %p203 = scmp.eq.s32.totalorder %s18, 1
      %p204 = scmp.ne.s32.totalorder %s199, %s201
      %p205 = scmp.eq.s32.totalorder %s18, 0
      %p206 = por %p204, %p205
      %p207 = scmp.ne.s32.totalorder %s199, %s201
      %p208 = scmp.eq.s32.totalorder %s23, 1
      %p209 = por %p207, %p208
      %p210 = scmp.ne.s32.totalorder %s201, %s202
      %p211 = scmp.eq.s32.totalorder %s23, 0
      %p212 = por %p210, %p211
      %p213 = scmp.ne.s32.totalorder %s201, %s202
      %p214 = scmp.eq.s32.totalorder %s24, 1
      %p215 = por %p213, %p214
      %p217 = scmp.ne.s32.totalorder %s202, %s216
      %p218 = scmp.eq.s32.totalorder %s24, 0
      %p219 = por %p217, %p218
      %s220 = ssub.s32 %s18, %s25
      %p221 = scmp.eq.s32.totalorder %s220, 0
      %s223 = sadd.s32 %s222, 1
      %s224 = scalar_select %p221, %s222, %s223
      %p227 = pneg %p221
      %p228 = scmp.eq.s32.totalorder %s18, 1
      %p229 = por %p227, %p228
      %p230 = scmp.ne.s32.totalorder %s222, %s225
      %p231 = scmp.eq.s32.totalorder %s18, 0
      %p232 = por %p230, %p231
      %p233 = scmp.ne.s32.totalorder %s222, %s225
      %p234 = scmp.eq.s32.totalorder %s23, 1
      %p235 = por %p233, %p234
      %p236 = scmp.ne.s32.totalorder %s225, %s226
      %p237 = scmp.eq.s32.totalorder %s23, 0
      %p238 = por %p236, %p237
      %p239 = scmp.ne.s32.totalorder %s225, %s226
      %p240 = scmp.eq.s32.totalorder %s24, 1
      %p241 = por %p239, %p240
      %p243 = scmp.ne.s32.totalorder %s226, %s242
      %p244 = scmp.eq.s32.totalorder %s24, 0
      %p245 = por %p243, %p244
      %p246 = scmp.le.s32.totalorder 1, %s18
      %p247 = scmp.lt.s32.totalorder %s18, 3
      %p248 = pnand %p246, %p247
      %p249 = pneg %p248
      // Predicated region
      $region9: #{tpu_custom_call.1} parent=5 // pred_check
        _
      $region10: #{tpu_custom_call.1} parent=5 // pred_check_branch
        %251 = sbr.rel (%p248) target = $region12
      $region11: #{tpu_custom_call.1} parent=5 // pred_region
        %s252 = ssub.s32 %s18, 1
        // Predicated region
        $region13: #{tpu_custom_call.1} parent=11 // pred_check
          %p253 = pneg %p65
        $region14: #{tpu_custom_call.1} parent=11 // pred_check_branch
          %255 = sbr.rel (%p253) target = $region16
        $region15: #{tpu_custom_call.1} parent=11 // pred_region
          _
        $region16: #{tpu_custom_call.1} parent=11 // pred_fallthru
          _
        // Predicated region
        $region17: #{tpu_custom_call.1} parent=11 // pred_check
          %p256 = pneg %p86
        $region18: #{tpu_custom_call.1} parent=11 // pred_check_branch
          %258 = sbr.rel (%p256) target = $region20
        $region19: #{tpu_custom_call.1} parent=11 // pred_region
          _
        $region20: #{tpu_custom_call.1} parent=11 // pred_fallthru
          _
        // Predicated region
        $region21: #{tpu_custom_call.1} parent=11 // pred_check
          %p259 = pneg %p107
        $region22: #{tpu_custom_call.1} parent=11 // pred_check_branch
          %261 = sbr.rel (%p259) target = $region24
        $region23: #{tpu_custom_call.1} parent=11 // pred_region
          _
        $region24: #{tpu_custom_call.1} parent=11 // pred_fallthru
          _
        // Predicated region
        $region25: #{tpu_custom_call.1} parent=11 // pred_check
          %p262 = pneg %p128
        $region26: #{tpu_custom_call.1} parent=11 // pred_check_branch
          %264 = sbr.rel (%p262) target = $region28
        $region27: #{tpu_custom_call.1} parent=11 // pred_region
          _
        $region28: #{tpu_custom_call.1} parent=11 // pred_fallthru
          _
        // Predicated region
        $region29: #{tpu_custom_call.1} parent=11 // pred_check
          %p265 = pneg %p149
        $region30: #{tpu_custom_call.1} parent=11 // pred_check_branch
          %267 = sbr.rel (%p265) target = $region32
        $region31: #{tpu_custom_call.1} parent=11 // pred_region
          _
        $region32: #{tpu_custom_call.1} parent=11 // pred_fallthru
          _
        // Predicated region
        $region33: #{tpu_custom_call.1} parent=11 // pred_check
          %p268 = pneg %p170
        $region34: #{tpu_custom_call.1} parent=11 // pred_check_branch
          %270 = sbr.rel (%p268) target = $region36
        $region35: #{tpu_custom_call.1} parent=11 // pred_region
          _
        $region36: #{tpu_custom_call.1} parent=11 // pred_fallthru
          _
        // Predicated region
        $region37: #{tpu_custom_call.1} parent=11 // pred_check
          %p271 = pneg %p191
        $region38: #{tpu_custom_call.1} parent=11 // pred_check_branch
          %273 = sbr.rel (%p271) target = $region40
        $region39: #{tpu_custom_call.1} parent=11 // pred_region
          _
        $region40: #{tpu_custom_call.1} parent=11 // pred_fallthru
          _
        // Predicated region
        $region41: #{tpu_custom_call.1} parent=11 // pred_check
          %p274 = pneg %p212
        $region42: #{tpu_custom_call.1} parent=11 // pred_check_branch
          %276 = sbr.rel (%p274) target = $region44
        $region43: #{tpu_custom_call.1} parent=11 // pred_region
          _
        $region44: #{tpu_custom_call.1} parent=11 // pred_fallthru
          _
      $region12: #{tpu_custom_call.1} parent=5 // pred_fallthru
        _
      %p277 = scmp.lt.s32.totalorder %s18, 2
      // Predicated region
      $region45: #{tpu_custom_call.1} parent=5 // pred_check
        %p278 = pneg %p277
      $region46: #{tpu_custom_call.1} parent=5 // pred_check_branch
        %280 = sbr.rel (%p278) target = $region48
      $region47: #{tpu_custom_call.1} parent=5 // pred_region
        // Predicated region
        $region49: #{tpu_custom_call.1} parent=47 // pred_check
          %p281 = pneg %p38
        $region50: #{tpu_custom_call.1} parent=47 // pred_check_branch
          %283 = sbr.rel (%p281) target = $region52
        $region51: #{tpu_custom_call.1} parent=47 // pred_region
          %s284 = smul.u32 4, %s18
          %p285 = scmp.lt.s32.totalorder %s284, 7
          %s286 = scalar_select %p285, %s284, 7
          %s287 = smul.addr %s286, 25
          %s288 = smul.addr %s287, 4
          %s289 = scalar_lea.vmem %s0, %s288
          %s290 = smul.u32 4, %s18
        $region52: #{tpu_custom_call.1} parent=47 // pred_fallthru
          _
      $region48: #{tpu_custom_call.1} parent=5 // pred_fallthru
        _
      %p291 = scmp.le.s32.totalorder 1, %s18
      %p292 = scmp.lt.s32.totalorder %s18, 3
      %p293 = pnand %p291, %p292
      %p294 = pneg %p293
      // Predicated region
      $region53: #{tpu_custom_call.1} parent=5 // pred_check
        _
      $region54: #{tpu_custom_call.1} parent=5 // pred_check_branch
        %296 = sbr.rel (%p293) target = $region56
      $region55: #{tpu_custom_call.1} parent=5 // pred_region
        %s297 = ssub.s32 %s18, 1
        %s298 = smul.u32 4, %s23
        %p299 = scmp.lt.s32.totalorder %s298, 7
        %s300 = scalar_select %p299, %s298, 7
        %s301 = smul.addr %s300, 25
        %s302 = smul.addr %s301, 4
        %s303 = scalar_lea.vmem %s0, %s302
        %p304 = pneg %p44
        %p305 = pneg %p41
        %p306 = pneg %p65
        %p307 = pneg %p62
        %p308 = pneg %p86
        %p309 = pneg %p83
        %p310 = pneg %p107
        %p311 = pneg %p104
        %p312 = pneg %p128
        %p313 = pneg %p125
        %p314 = pneg %p149
        %p315 = pneg %p146
        %p316 = pneg %p170
        %p317 = pneg %p167
        %p318 = pneg %p191
        %p319 = pneg %p188
        %p320 = pneg %p212
        %p321 = pneg %p209
        %p322 = pneg %p238
        %p323 = pneg %p235
        %s324 = sand.u32 %s225, 1
        %s325 = scalar_lea.sflag [#allocation3], %s324
        %s326 = sand.u32 %s225, 1
        %s327 = smul.addr %s326, 4
        %s328 = scalar_lea.vmem [#allocation2], %s327
        %s329 = smul.u32 4, %s23
        %p330 = scmp.lt.s32.totalorder %s329, 7
        %s331 = scalar_select %p330, %s329, 7
        %s332 = smul.addr %s331, 25
        %s333 = smul.addr %s332, 4
        %s334 = scalar_lea.vmem %s0, %s333
        %s335 = smul.u32 4, %s23
        %v337 = vld [vmem:[%s334] sm:$0xf]
        %v338 = vld [vmem:[%s334 + $0x4] sm:$0xf]
        %v339 = vld [vmem:[%s334 + $0x8] sm:$0xf]
        %v340 = vld [vmem:[%s334 + $0xc] sm:$0xf]
        %v341 = vld [vmem:[%s334 + $0x10] sm:$0xf]
        %v342 = vld [vmem:[%s334 + $0x14] sm:$0xf]
        %v343 = vld [vmem:[%s334 + $0x18] sm:$0xf]
        %v344 = vld [vmem:[%s334 + $0x1c] sm:$0xf]
        %v345 = vld [vmem:[%s334 + $0x20] sm:$0xf]
        %v346 = vld [vmem:[%s334 + $0x24] sm:$0xf]
        %v347 = vld [vmem:[%s334 + $0x28] sm:$0xf]
        %v348 = vld [vmem:[%s334 + $0x2c] sm:$0xf]
        %v349 = vld [vmem:[%s334 + $0x30] sm:$0xf]
        %v350 = vld [vmem:[%s334 + $0x34] sm:$0xf]
        %v351 = vld [vmem:[%s334 + $0x38] sm:$0xf]
        %v352 = vld [vmem:[%s334 + $0x3c] sm:$0xf]
        %v353 = vld [vmem:[%s334 + $0x40] sm:$0xf]
        %v354 = vld [vmem:[%s334 + $0x44] sm:$0xf]
        %v355 = vld [vmem:[%s334 + $0x48] sm:$0xf]
        %v356 = vld [vmem:[%s334 + $0x4c] sm:$0xf]
        %v357 = vld [vmem:[%s334 + $0x50] sm:$0xf]
        %v358 = vld [vmem:[%s334 + $0x54] sm:$0xf]
        %v359 = vld [vmem:[%s334 + $0x58] sm:$0xf]
        %v360 = vld [vmem:[%s334 + $0x5c] sm:$0xf]
        %v361 = vld [vmem:[%s334 + $0x60] sm:$0x3]
        %v362 = vld [vmem:[%s334 + $0x64] sm:$0xf]
        %v363 = vld [vmem:[%s334 + $0x68] sm:$0xf]
        %v364 = vld [vmem:[%s334 + $0x6c] sm:$0xf]
        %v365 = vld [vmem:[%s334 + $0x70] sm:$0xf]
        %v366 = vld [vmem:[%s334 + $0x74] sm:$0xf]
        %v367 = vld [vmem:[%s334 + $0x78] sm:$0xf]
        %v368 = vld [vmem:[%s334 + $0x7c] sm:$0xf]
        %v369 = vld [vmem:[%s334 + $0x80] sm:$0xf]
        %v370 = vld [vmem:[%s334 + $0x84] sm:$0xf]
        %v371 = vld [vmem:[%s334 + $0x88] sm:$0xf]
        %v372 = vld [vmem:[%s334 + $0x8c] sm:$0xf]
        %v373 = vld [vmem:[%s334 + $0x90] sm:$0xf]
        %v374 = vld [vmem:[%s334 + $0x94] sm:$0xf]
        %v375 = vld [vmem:[%s334 + $0x98] sm:$0xf]
        %v376 = vld [vmem:[%s334 + $0x9c] sm:$0xf]
        %v377 = vld [vmem:[%s334 + $0xa0] sm:$0xf]
        %v378 = vld [vmem:[%s334 + $0xa4] sm:$0xf]
        %v379 = vld [vmem:[%s334 + $0xa8] sm:$0xf]
        %v380 = vld [vmem:[%s334 + $0xac] sm:$0xf]
        %v381 = vld [vmem:[%s334 + $0xb0] sm:$0xf]
        %v382 = vld [vmem:[%s334 + $0xb4] sm:$0xf]
        %v383 = vld [vmem:[%s334 + $0xb8] sm:$0xf]
        %v384 = vld [vmem:[%s334 + $0xbc] sm:$0xf]
        %v385 = vld [vmem:[%s334 + $0xc0] sm:$0xf]
        %v386 = vld [vmem:[%s334 + $0xc4] sm:$0x3]
        %v387 = vld [vmem:[%s334 + $0xc8] sm:$0xf]
        %v388 = vld [vmem:[%s334 + $0xcc] sm:$0xf]
        %v389 = vld [vmem:[%s334 + $0xd0] sm:$0xf]
        %v390 = vld [vmem:[%s334 + $0xd4] sm:$0xf]
        %v391 = vld [vmem:[%s334 + $0xd8] sm:$0xf]
        %v392 = vld [vmem:[%s334 + $0xdc] sm:$0xf]
        %v393 = vld [vmem:[%s334 + $0xe0] sm:$0xf]
        %v394 = vld [vmem:[%s334 + $0xe4] sm:$0xf]
        %v395 = vld [vmem:[%s334 + $0xe8] sm:$0xf]
        %v396 = vld [vmem:[%s334 + $0xec] sm:$0xf]
        %v397 = vld [vmem:[%s334 + $0xf0] sm:$0xf]
        %v398 = vld [vmem:[%s334 + $0xf4] sm:$0xf]
        %v399 = vld [vmem:[%s334 + $0xf8] sm:$0xf]
        %v400 = vld [vmem:[%s334 + $0xfc] sm:$0xf]
        %v401 = vld [vmem:[%s334 + $0x100] sm:$0xf]
        %v402 = vld [vmem:[%s334 + $0x104] sm:$0xf]
        %v403 = vld [vmem:[%s334 + $0x108] sm:$0xf]
        %v404 = vld [vmem:[%s334 + $0x10c] sm:$0xf]
        %v405 = vld [vmem:[%s334 + $0x110] sm:$0xf]
        %v406 = vld [vmem:[%s334 + $0x114] sm:$0xf]
        %v407 = vld [vmem:[%s334 + $0x118] sm:$0xf]
        %v408 = vld [vmem:[%s334 + $0x11c] sm:$0xf]
        %v409 = vld [vmem:[%s334 + $0x120] sm:$0xf]
        %v410 = vld [vmem:[%s334 + $0x124] sm:$0xf]
        %v411 = vld [vmem:[%s334 + $0x128] sm:$0x3]
        %v412 = vld [vmem:[%s334 + $0x12c] sm:$0xf]
        %v413 = vld [vmem:[%s334 + $0x130] sm:$0xf]
        %v414 = vld [vmem:[%s334 + $0x134] sm:$0xf]
        %v415 = vld [vmem:[%s334 + $0x138] sm:$0xf]
        %v416 = vld [vmem:[%s334 + $0x13c] sm:$0xf]
        %v417 = vld [vmem:[%s334 + $0x140] sm:$0xf]
        %v418 = vld [vmem:[%s334 + $0x144] sm:$0xf]
        %v419 = vld [vmem:[%s334 + $0x148] sm:$0xf]
        %v420 = vld [vmem:[%s334 + $0x14c] sm:$0xf]
        %v421 = vld [vmem:[%s334 + $0x150] sm:$0xf]
        %v422 = vld [vmem:[%s334 + $0x154] sm:$0xf]
        %v423 = vld [vmem:[%s334 + $0x158] sm:$0xf]
        %v424 = vld [vmem:[%s334 + $0x15c] sm:$0xf]
        %v425 = vld [vmem:[%s334 + $0x160] sm:$0xf]
        %v426 = vld [vmem:[%s334 + $0x164] sm:$0xf]
        %v427 = vld [vmem:[%s334 + $0x168] sm:$0xf]
        %v428 = vld [vmem:[%s334 + $0x16c] sm:$0xf]
        %v429 = vld [vmem:[%s334 + $0x170] sm:$0xf]
        %v430 = vld [vmem:[%s334 + $0x174] sm:$0xf]
        %v431 = vld [vmem:[%s334 + $0x178] sm:$0xf]
        %v432 = vld [vmem:[%s334 + $0x17c] sm:$0xf]
        %v433 = vld [vmem:[%s334 + $0x180] sm:$0xf]
        %v434 = vld [vmem:[%s334 + $0x184] sm:$0xf]
        %v435 = vld [vmem:[%s334 + $0x188] sm:$0xf]
        %v436 = vld [vmem:[%s334 + $0x18c] sm:$0x3]
        %v537 = vrot.slane %v337, 2
        %v538 = vrot.slane %v338, 2
        %v539 = vrot.slane %v339, 2
        %v540 = vrot.slane %v340, 2
        %v541 = vrot.slane %v341, 2
        %v542 = vrot.slane %v342, 2
        %v543 = vrot.slane %v343, 2
        %v544 = vrot.slane %v344, 2
        %v545 = vrot.slane %v345, 2
        %v546 = vrot.slane %v346, 2
        %v547 = vrot.slane %v347, 2
        %v548 = vrot.slane %v348, 2
        %v549 = vrot.slane %v349, 2
        %v550 = vrot.slane %v350, 2
        %v551 = vrot.slane %v351, 2
        %v552 = vrot.slane %v352, 2
        %v553 = vrot.slane %v353, 2
        %v554 = vrot.slane %v354, 2
        %v555 = vrot.slane %v355, 2
        %v556 = vrot.slane %v356, 2
        %v557 = vrot.slane %v357, 2
        %v558 = vrot.slane %v358, 2
        %v559 = vrot.slane %v359, 2
        %v560 = vrot.slane %v360, 2
        %v561 = vrot.slane %v361, 2
        %v562 = vrot.slane %v362, 2
        %v563 = vrot.slane %v363, 2
        %v564 = vrot.slane %v364, 2
        %v565 = vrot.slane %v365, 2
        %v566 = vrot.slane %v366, 2
        %v567 = vrot.slane %v367, 2
        %v568 = vrot.slane %v368, 2
        %v569 = vrot.slane %v369, 2
        %v570 = vrot.slane %v370, 2
        %v571 = vrot.slane %v371, 2
        %v572 = vrot.slane %v372, 2
        %v573 = vrot.slane %v373, 2
        %v574 = vrot.slane %v374, 2
        %v575 = vrot.slane %v375, 2
        %v576 = vrot.slane %v376, 2
        %v577 = vrot.slane %v377, 2
        %v578 = vrot.slane %v378, 2
        %v579 = vrot.slane %v379, 2
        %v580 = vrot.slane %v380, 2
        %v581 = vrot.slane %v381, 2
        %v582 = vrot.slane %v382, 2
        %v583 = vrot.slane %v383, 2
        %v584 = vrot.slane %v384, 2
        %v585 = vrot.slane %v385, 2
        %v586 = vrot.slane %v386, 2
        %v587 = vrot.slane %v387, 2
        %v588 = vrot.slane %v388, 2
        %v589 = vrot.slane %v389, 2
        %v590 = vrot.slane %v390, 2
        %v591 = vrot.slane %v391, 2
        %v592 = vrot.slane %v392, 2
        %v593 = vrot.slane %v393, 2
        %v594 = vrot.slane %v394, 2
        %v595 = vrot.slane %v395, 2
        %v596 = vrot.slane %v396, 2
        %v597 = vrot.slane %v397, 2
        %v598 = vrot.slane %v398, 2
        %v599 = vrot.slane %v399, 2
        %v600 = vrot.slane %v400, 2
        %v601 = vrot.slane %v401, 2
        %v602 = vrot.slane %v402, 2
        %v603 = vrot.slane %v403, 2
        %v604 = vrot.slane %v404, 2
        %v605 = vrot.slane %v405, 2
        %v606 = vrot.slane %v406, 2
        %v607 = vrot.slane %v407, 2
        %v608 = vrot.slane %v408, 2
        %v609 = vrot.slane %v409, 2
        %v610 = vrot.slane %v410, 2
        %v611 = vrot.slane %v411, 2
        %v612 = vrot.slane %v412, 2
        %v613 = vrot.slane %v413, 2
        %v614 = vrot.slane %v414, 2
        %v615 = vrot.slane %v415, 2
        %v616 = vrot.slane %v416, 2
        %v617 = vrot.slane %v417, 2
        %v618 = vrot.slane %v418, 2
        %v619 = vrot.slane %v419, 2
        %v620 = vrot.slane %v420, 2
        %v621 = vrot.slane %v421, 2
        %v622 = vrot.slane %v422, 2
        %v623 = vrot.slane %v423, 2
        %v624 = vrot.slane %v424, 2
        %v625 = vrot.slane %v425, 2
        %v626 = vrot.slane %v426, 2
        %v627 = vrot.slane %v427, 2
        %v628 = vrot.slane %v428, 2
        %v629 = vrot.slane %v429, 2
        %v630 = vrot.slane %v430, 2
        %v631 = vrot.slane %v431, 2
        %v632 = vrot.slane %v432, 2
        %v633 = vrot.slane %v433, 2
        %v634 = vrot.slane %v434, 2
        %v635 = vrot.slane %v435, 2
        %v636 = vrot.slane %v436, 2
        %vm637 = vcmask 1041408
        %v640 = vsel %vm637, %v337, %v537
        %vm641 = vcmask 1043458
        %v642 = vsel %vm641, %v337, %v537
        %v644 = vrot.slane %v642, 2
        %v647 = vsel %vm637, %v338, %v538
        %v648 = vsel %vm641, %v338, %v538
        %v650 = vrot.slane %v648, 2
        %v653 = vsel %vm637, %v339, %v539
        %v654 = vsel %vm641, %v339, %v539
        %v656 = vrot.slane %v654, 2
        %v659 = vsel %vm637, %v340, %v540
        %v660 = vsel %vm641, %v340, %v540
        %v662 = vrot.slane %v660, 2
        %v665 = vsel %vm637, %v341, %v541
        %v666 = vsel %vm641, %v341, %v541
        %v668 = vrot.slane %v666, 2
        %v671 = vsel %vm637, %v342, %v542
        %v672 = vsel %vm641, %v342, %v542
        %v674 = vrot.slane %v672, 2
        %v677 = vsel %vm637, %v343, %v543
        %v678 = vsel %vm641, %v343, %v543
        %v680 = vrot.slane %v678, 2
        %v683 = vsel %vm637, %v344, %v544
        %v684 = vsel %vm641, %v344, %v544
        %v686 = vrot.slane %v684, 2
        %v689 = vsel %vm637, %v345, %v545
        %v690 = vsel %vm641, %v345, %v545
        %v692 = vrot.slane %v690, 2
        %v695 = vsel %vm637, %v346, %v546
        %v696 = vsel %vm641, %v346, %v546
        %v698 = vrot.slane %v696, 2
        %v701 = vsel %vm637, %v347, %v547
        %v702 = vsel %vm641, %v347, %v547
        %v704 = vrot.slane %v702, 2
        %v707 = vsel %vm637, %v348, %v548
        %v708 = vsel %vm641, %v348, %v548
        %v710 = vrot.slane %v708, 2
        %v713 = vsel %vm637, %v349, %v549
        %v714 = vsel %vm641, %v349, %v549
        %v716 = vrot.slane %v714, 2
        %v719 = vsel %vm637, %v350, %v550
        %v720 = vsel %vm641, %v350, %v550
        %v722 = vrot.slane %v720, 2
        %v725 = vsel %vm637, %v351, %v551
        %v726 = vsel %vm641, %v351, %v551
        %v728 = vrot.slane %v726, 2
        %v731 = vsel %vm637, %v352, %v552
        %v732 = vsel %vm641, %v352, %v552
        %v734 = vrot.slane %v732, 2
        %v737 = vsel %vm637, %v353, %v553
        %v738 = vsel %vm641, %v353, %v553
        %v740 = vrot.slane %v738, 2
        %v743 = vsel %vm637, %v354, %v554
        %v744 = vsel %vm641, %v354, %v554
        %v746 = vrot.slane %v744, 2
        %v749 = vsel %vm637, %v355, %v555
        %v750 = vsel %vm641, %v355, %v555
        %v752 = vrot.slane %v750, 2
        %v755 = vsel %vm637, %v356, %v556
        %v756 = vsel %vm641, %v356, %v556
        %v758 = vrot.slane %v756, 2
        %v761 = vsel %vm637, %v357, %v557
        %v762 = vsel %vm641, %v357, %v557
        %v764 = vrot.slane %v762, 2
        %v767 = vsel %vm637, %v358, %v558
        %v768 = vsel %vm641, %v358, %v558
        %v770 = vrot.slane %v768, 2
        %v773 = vsel %vm637, %v359, %v559
        %v774 = vsel %vm641, %v359, %v559
        %v776 = vrot.slane %v774, 2
        %v779 = vsel %vm637, %v360, %v560
        %v780 = vsel %vm641, %v360, %v560
        %v782 = vrot.slane %v780, 2
        %v785 = vsel %vm637, %v361, %v561
        %v788 = vsel %vm637, %v362, %v562
        %v789 = vsel %vm641, %v362, %v562
        %v791 = vrot.slane %v789, 2
        %v794 = vsel %vm637, %v363, %v563
        %v795 = vsel %vm641, %v363, %v563
        %v797 = vrot.slane %v795, 2
        %v800 = vsel %vm637, %v364, %v564
        %v801 = vsel %vm641, %v364, %v564
        %v803 = vrot.slane %v801, 2
        %v806 = vsel %vm637, %v365, %v565
        %v807 = vsel %vm641, %v365, %v565
        %v809 = vrot.slane %v807, 2
        %v812 = vsel %vm637, %v366, %v566
        %v813 = vsel %vm641, %v366, %v566
        %v815 = vrot.slane %v813, 2
        %v818 = vsel %vm637, %v367, %v567
        %v819 = vsel %vm641, %v367, %v567
        %v821 = vrot.slane %v819, 2
        %v824 = vsel %vm637, %v368, %v568
        %v825 = vsel %vm641, %v368, %v568
        %v827 = vrot.slane %v825, 2
        %v830 = vsel %vm637, %v369, %v569
        %v831 = vsel %vm641, %v369, %v569
        %v833 = vrot.slane %v831, 2
        %v836 = vsel %vm637, %v370, %v570
        %v837 = vsel %vm641, %v370, %v570
        %v839 = vrot.slane %v837, 2
        %v842 = vsel %vm637, %v371, %v571
        %v843 = vsel %vm641, %v371, %v571
        %v845 = vrot.slane %v843, 2
        %v848 = vsel %vm637, %v372, %v572
        %v849 = vsel %vm641, %v372, %v572
        %v851 = vrot.slane %v849, 2
        %v854 = vsel %vm637, %v373, %v573
        %v855 = vsel %vm641, %v373, %v573
        %v857 = vrot.slane %v855, 2
        %v860 = vsel %vm637, %v374, %v574
        %v861 = vsel %vm641, %v374, %v574
        %v863 = vrot.slane %v861, 2
        %v866 = vsel %vm637, %v375, %v575
        %v867 = vsel %vm641, %v375, %v575
        %v869 = vrot.slane %v867, 2
        %v872 = vsel %vm637, %v376, %v576
        %v873 = vsel %vm641, %v376, %v576
        %v875 = vrot.slane %v873, 2
        %v878 = vsel %vm637, %v377, %v577
        %v879 = vsel %vm641, %v377, %v577
        %v881 = vrot.slane %v879, 2
        %v884 = vsel %vm637, %v378, %v578
        %v885 = vsel %vm641, %v378, %v578
        %v887 = vrot.slane %v885, 2
        %v890 = vsel %vm637, %v379, %v579
        %v891 = vsel %vm641, %v379, %v579
        %v893 = vrot.slane %v891, 2
        %v896 = vsel %vm637, %v380, %v580
        %v897 = vsel %vm641, %v380, %v580
        %v899 = vrot.slane %v897, 2
        %v902 = vsel %vm637, %v381, %v581
        %v903 = vsel %vm641, %v381, %v581
        %v905 = vrot.slane %v903, 2
        %v908 = vsel %vm637, %v382, %v582
        %v909 = vsel %vm641, %v382, %v582
        %v911 = vrot.slane %v909, 2
        %v914 = vsel %vm637, %v383, %v583
        %v915 = vsel %vm641, %v383, %v583
        %v917 = vrot.slane %v915, 2
        %v920 = vsel %vm637, %v384, %v584
        %v921 = vsel %vm641, %v384, %v584
        %v923 = vrot.slane %v921, 2
        %v926 = vsel %vm637, %v385, %v585
        %v927 = vsel %vm641, %v385, %v585
        %v929 = vrot.slane %v927, 2
        %v932 = vsel %vm637, %v386, %v586
        %v935 = vsel %vm637, %v387, %v587
        %v936 = vsel %vm641, %v387, %v587
        %v938 = vrot.slane %v936, 2
        %v941 = vsel %vm637, %v388, %v588
        %v942 = vsel %vm641, %v388, %v588
        %v944 = vrot.slane %v942, 2
        %v947 = vsel %vm637, %v389, %v589
        %v948 = vsel %vm641, %v389, %v589
        %v950 = vrot.slane %v948, 2
        %v953 = vsel %vm637, %v390, %v590
        %v954 = vsel %vm641, %v390, %v590
        %v956 = vrot.slane %v954, 2
        %v959 = vsel %vm637, %v391, %v591
        %v960 = vsel %vm641, %v391, %v591
        %v962 = vrot.slane %v960, 2
        %v965 = vsel %vm637, %v392, %v592
        %v966 = vsel %vm641, %v392, %v592
        %v968 = vrot.slane %v966, 2
        %v971 = vsel %vm637, %v393, %v593
        %v972 = vsel %vm641, %v393, %v593
        %v974 = vrot.slane %v972, 2
        %v977 = vsel %vm637, %v394, %v594
        %v978 = vsel %vm641, %v394, %v594
        %v980 = vrot.slane %v978, 2
        %v983 = vsel %vm637, %v395, %v595
        %v984 = vsel %vm641, %v395, %v595
        %v986 = vrot.slane %v984, 2
        %v989 = vsel %vm637, %v396, %v596
        %v990 = vsel %vm641, %v396, %v596
        %v992 = vrot.slane %v990, 2
        %v995 = vsel %vm637, %v397, %v597
        %v996 = vsel %vm641, %v397, %v597
        %v998 = vrot.slane %v996, 2
        %v1001 = vsel %vm637, %v398, %v598
        %v1002 = vsel %vm641, %v398, %v598
        %v1004 = vrot.slane %v1002, 2
        %v1007 = vsel %vm637, %v399, %v599
        %v1008 = vsel %vm641, %v399, %v599
        %v1010 = vrot.slane %v1008, 2
        %v1013 = vsel %vm637, %v400, %v600
        %v1014 = vsel %vm641, %v400, %v600
        %v1016 = vrot.slane %v1014, 2
        %v1019 = vsel %vm637, %v401, %v601
        %v1020 = vsel %vm641, %v401, %v601
        %v1022 = vrot.slane %v1020, 2
        %v1025 = vsel %vm637, %v402, %v602
        %v1026 = vsel %vm641, %v402, %v602
        %v1028 = vrot.slane %v1026, 2
        %v1031 = vsel %vm637, %v403, %v603
        %v1032 = vsel %vm641, %v403, %v603
        %v1034 = vrot.slane %v1032, 2
        %v1037 = vsel %vm637, %v404, %v604
        %v1038 = vsel %vm641, %v404, %v604
        %v1040 = vrot.slane %v1038, 2
        %v1043 = vsel %vm637, %v405, %v605
        %v1044 = vsel %vm641, %v405, %v605
        %v1046 = vrot.slane %v1044, 2
        %v1049 = vsel %vm637, %v406, %v606
        %v1050 = vsel %vm641, %v406, %v606
        %v1052 = vrot.slane %v1050, 2
        %v1055 = vsel %vm637, %v407, %v607
        %v1056 = vsel %vm641, %v407, %v607
        %v1058 = vrot.slane %v1056, 2
        %v1061 = vsel %vm637, %v408, %v608
        %v1062 = vsel %vm641, %v408, %v608
        %v1064 = vrot.slane %v1062, 2
        %v1067 = vsel %vm637, %v409, %v609
        %v1068 = vsel %vm641, %v409, %v609
        %v1070 = vrot.slane %v1068, 2
        %v1073 = vsel %vm637, %v410, %v610
        %v1074 = vsel %vm641, %v410, %v610
        %v1076 = vrot.slane %v1074, 2
        %v1079 = vsel %vm637, %v411, %v611
        %v1082 = vsel %vm637, %v412, %v612
        %v1083 = vsel %vm641, %v412, %v612
        %v1085 = vrot.slane %v1083, 2
        %v1088 = vsel %vm637, %v413, %v613
        %v1089 = vsel %vm641, %v413, %v613
        %v1091 = vrot.slane %v1089, 2
        %v1094 = vsel %vm637, %v414, %v614
        %v1095 = vsel %vm641, %v414, %v614
        %v1097 = vrot.slane %v1095, 2
        %v1100 = vsel %vm637, %v415, %v615
        %v1101 = vsel %vm641, %v415, %v615
        %v1103 = vrot.slane %v1101, 2
        %v1106 = vsel %vm637, %v416, %v616
        %v1107 = vsel %vm641, %v416, %v616
        %v1109 = vrot.slane %v1107, 2
        %v1112 = vsel %vm637, %v417, %v617
        %v1113 = vsel %vm641, %v417, %v617
        %v1115 = vrot.slane %v1113, 2
        %v1118 = vsel %vm637, %v418, %v618
        %v1119 = vsel %vm641, %v418, %v618
        %v1121 = vrot.slane %v1119, 2
        %v1124 = vsel %vm637, %v419, %v619
        %v1125 = vsel %vm641, %v419, %v619
        %v1127 = vrot.slane %v1125, 2
        %v1130 = vsel %vm637, %v420, %v620
        %v1131 = vsel %vm641, %v420, %v620
        %v1133 = vrot.slane %v1131, 2
        %v1136 = vsel %vm637, %v421, %v621
        %v1137 = vsel %vm641, %v421, %v621
        %v1139 = vrot.slane %v1137, 2
        %v1142 = vsel %vm637, %v422, %v622
        %v1143 = vsel %vm641, %v422, %v622
        %v1145 = vrot.slane %v1143, 2
        %v1148 = vsel %vm637, %v423, %v623
        %v1149 = vsel %vm641, %v423, %v623
        %v1151 = vrot.slane %v1149, 2
        %v1154 = vsel %vm637, %v424, %v624
        %v1155 = vsel %vm641, %v424, %v624
        %v1157 = vrot.slane %v1155, 2
        %v1160 = vsel %vm637, %v425, %v625
        %v1161 = vsel %vm641, %v425, %v625
        %v1163 = vrot.slane %v1161, 2
        %v1166 = vsel %vm637, %v426, %v626
        %v1167 = vsel %vm641, %v426, %v626
        %v1169 = vrot.slane %v1167, 2
        %v1172 = vsel %vm637, %v427, %v627
        %v1173 = vsel %vm641, %v427, %v627
        %v1175 = vrot.slane %v1173, 2
        %v1178 = vsel %vm637, %v428, %v628
        %v1179 = vsel %vm641, %v428, %v628
        %v1181 = vrot.slane %v1179, 2
        %v1184 = vsel %vm637, %v429, %v629
        %v1185 = vsel %vm641, %v429, %v629
        %v1187 = vrot.slane %v1185, 2
        %v1190 = vsel %vm637, %v430, %v630
        %v1191 = vsel %vm641, %v430, %v630
        %v1193 = vrot.slane %v1191, 2
        %v1196 = vsel %vm637, %v431, %v631
        %v1197 = vsel %vm641, %v431, %v631
        %v1199 = vrot.slane %v1197, 2
        %v1202 = vsel %vm637, %v432, %v632
        %v1203 = vsel %vm641, %v432, %v632
        %v1205 = vrot.slane %v1203, 2
        %v1208 = vsel %vm637, %v433, %v633
        %v1209 = vsel %vm641, %v433, %v633
        %v1211 = vrot.slane %v1209, 2
        %v1214 = vsel %vm637, %v434, %v634
        %v1215 = vsel %vm641, %v434, %v634
        %v1217 = vrot.slane %v1215, 2
        %v1220 = vsel %vm637, %v435, %v635
        %v1221 = vsel %vm641, %v435, %v635
        %v1223 = vrot.slane %v1221, 2
        %v1226 = vsel %vm637, %v436, %v636
        %v1227 = vld [vmem:[%s1] sm:$0xf]
        %v1228 = vld [vmem:[%s1 + $0x4] sm:$0xf]
        %v1229 = vld [vmem:[%s1 + $0x8] sm:$0xf]
        %v1230 = vld [vmem:[%s1 + $0xc] sm:$0xf]
        %v1231 = vld [vmem:[%s2] sm:$0x1]
        %v1233 = vperm.slane %v1231, 0
        %1235 = vst [vmem:[#allocation1] ss:$4 sm:$0xff] %v640
        %s1237 = scalar_lea.vmem [#allocation1], 1
        %1238 = vst [vmem:[%s1237] ss:$4 sm:$0xff] %v644
        %s1239 = scalar_lea.vmem [#allocation1], 2
        %1240 = vst [vmem:[%s1239] ss:$4 sm:$0xff] %v647
        %s1242 = scalar_lea.vmem [#allocation1], 3
        %1243 = vst [vmem:[%s1242] ss:$4 sm:$0xff] %v650
        %s1244 = scalar_lea.vmem [#allocation1], 32
        %1245 = vst [vmem:[%s1244] ss:$4 sm:$0xff] %v653
        %s1247 = scalar_lea.vmem [#allocation1], 33
        %1248 = vst [vmem:[%s1247] ss:$4 sm:$0xff] %v656
        %s1249 = scalar_lea.vmem [#allocation1], 34
        %1250 = vst [vmem:[%s1249] ss:$4 sm:$0xff] %v659
        %s1252 = scalar_lea.vmem [#allocation1], 35
        %1253 = vst [vmem:[%s1252] ss:$4 sm:$0xff] %v662
        %v1254 = vld.sshfl [vmem:[#allocation1] sm:$0xff pattern:$0x73625140]
        %v1255 = vld.sshfl [vmem:[#allocation1 + $0x20] sm:$0xff pattern:$0x73625140]
        %1256 = vst [vmem:[#allocation1] ss:$4 sm:$0xff] %v665
        %1258 = vst [vmem:[%s1237] ss:$4 sm:$0xff] %v668
        %1259 = vst [vmem:[%s1239] ss:$4 sm:$0xff] %v671
        %1261 = vst [vmem:[%s1242] ss:$4 sm:$0xff] %v674
        %1262 = vst [vmem:[%s1244] ss:$4 sm:$0xff] %v677
        %1264 = vst [vmem:[%s1247] ss:$4 sm:$0xff] %v680
        %1265 = vst [vmem:[%s1249] ss:$4 sm:$0xff] %v683
        %1267 = vst [vmem:[%s1252] ss:$4 sm:$0xff] %v686
        %v1268 = vld.sshfl [vmem:[#allocation1] sm:$0xff pattern:$0x73625140]
        %v1269 = vld.sshfl [vmem:[#allocation1 + $0x20] sm:$0xff pattern:$0x73625140]
        %1270 = vst [vmem:[#allocation1] ss:$4 sm:$0xff] %v689
        %1272 = vst [vmem:[%s1237] ss:$4 sm:$0xff] %v692
        %1273 = vst [vmem:[%s1239] ss:$4 sm:$0xff] %v695
        %1275 = vst [vmem:[%s1242] ss:$4 sm:$0xff] %v698
        %1276 = vst [vmem:[%s1244] ss:$4 sm:$0xff] %v701
        %1278 = vst [vmem:[%s1247] ss:$4 sm:$0xff] %v704
        %1279 = vst [vmem:[%s1249] ss:$4 sm:$0xff] %v707
        %1281 = vst [vmem:[%s1252] ss:$4 sm:$0xff] %v710
        %v1282 = vld.sshfl [vmem:[#allocation1] sm:$0xff pattern:$0x73625140]
        %v1283 = vld.sshfl [vmem:[#allocation1 + $0x20] sm:$0xff pattern:$0x73625140]
        %1284 = vst [vmem:[#allocation1] ss:$4 sm:$0xff] %v713
        %1286 = vst [vmem:[%s1237] ss:$4 sm:$0xff] %v716
        %1287 = vst [vmem:[%s1239] ss:$4 sm:$0xff] %v719
        %1289 = vst [vmem:[%s1242] ss:$4 sm:$0xff] %v722
        %1290 = vst [vmem:[%s1244] ss:$4 sm:$0xff] %v725
        %1292 = vst [vmem:[%s1247] ss:$4 sm:$0xff] %v728
        %1293 = vst [vmem:[%s1249] ss:$4 sm:$0xff] %v731
        %1295 = vst [vmem:[%s1252] ss:$4 sm:$0xff] %v734
        %v1296 = vld.sshfl [vmem:[#allocation1] sm:$0xff pattern:$0x73625140]
        %v1297 = vld.sshfl [vmem:[#allocation1 + $0x20] sm:$0xff pattern:$0x73625140]
        %1298 = vst [vmem:[#allocation1] ss:$4 sm:$0xff] %v737
        %1300 = vst [vmem:[%s1237] ss:$4 sm:$0xff] %v740
        %1301 = vst [vmem:[%s1239] ss:$4 sm:$0xff] %v743
        %1303 = vst [vmem:[%s1242] ss:$4 sm:$0xff] %v746
        %1304 = vst [vmem:[%s1244] ss:$4 sm:$0xff] %v749
        %1306 = vst [vmem:[%s1247] ss:$4 sm:$0xff] %v752
        %1307 = vst [vmem:[%s1249] ss:$4 sm:$0xff] %v755
        %1309 = vst [vmem:[%s1252] ss:$4 sm:$0xff] %v758
        %v1310 = vld.sshfl [vmem:[#allocation1] sm:$0xff pattern:$0x73625140]
        %v1311 = vld.sshfl [vmem:[#allocation1 + $0x20] sm:$0xff pattern:$0x73625140]
        %1312 = vst [vmem:[#allocation1] ss:$4 sm:$0xff] %v761
        %1314 = vst [vmem:[%s1237] ss:$4 sm:$0xff] %v764
        %1315 = vst [vmem:[%s1239] ss:$4 sm:$0xff] %v767
        %1317 = vst [vmem:[%s1242] ss:$4 sm:$0xff] %v770
        %1318 = vst [vmem:[%s1244] ss:$4 sm:$0xff] %v773
        %1320 = vst [vmem:[%s1247] ss:$4 sm:$0xff] %v776
        %1321 = vst [vmem:[%s1249] ss:$4 sm:$0xff] %v779
        %1323 = vst [vmem:[%s1252] ss:$4 sm:$0xff] %v782
        %v1324 = vld.sshfl [vmem:[#allocation1] sm:$0xff pattern:$0x73625140]
        %v1325 = vld.sshfl [vmem:[#allocation1 + $0x20] sm:$0xff pattern:$0x73625140]
        %1326 = vst [vmem:[#allocation1] ss:$4 sm:$0xff] %v785
        %1327 = vst [vmem:[%s1237] ss:$4 sm:$0xff] %v788
        %1329 = vst [vmem:[%s1239] ss:$4 sm:$0xff] %v791
        %1330 = vst [vmem:[%s1242] ss:$4 sm:$0xff] %v794
        %1332 = vst [vmem:[%s1244] ss:$4 sm:$0xff] %v797
        %1333 = vst [vmem:[%s1247] ss:$4 sm:$0xff] %v800
        %1335 = vst [vmem:[%s1249] ss:$4 sm:$0xff] %v803
        %1336 = vst [vmem:[%s1252] ss:$4 sm:$0xff] %v806
        %v1337 = vld.sshfl [vmem:[#allocation1] sm:$0xff pattern:$0x73625140]
        %v1338 = vld.sshfl [vmem:[#allocation1 + $0x20] sm:$0xff pattern:$0x73625140]
        %1340 = vst [vmem:[#allocation1] ss:$4 sm:$0xff] %v809
        %1341 = vst [vmem:[%s1237] ss:$4 sm:$0xff] %v812
        %1343 = vst [vmem:[%s1239] ss:$4 sm:$0xff] %v815
        %1344 = vst [vmem:[%s1242] ss:$4 sm:$0xff] %v818
        %1346 = vst [vmem:[%s1244] ss:$4 sm:$0xff] %v821
        %1347 = vst [vmem:[%s1247] ss:$4 sm:$0xff] %v824
        %1349 = vst [vmem:[%s1249] ss:$4 sm:$0xff] %v827
        %1350 = vst [vmem:[%s1252] ss:$4 sm:$0xff] %v830
        %v1351 = vld.sshfl [vmem:[#allocation1] sm:$0xff pattern:$0x73625140]
        %v1352 = vld.sshfl [vmem:[#allocation1 + $0x20] sm:$0xff pattern:$0x73625140]
        %1354 = vst [vmem:[#allocation1] ss:$4 sm:$0xff] %v833
        %1355 = vst [vmem:[%s1237] ss:$4 sm:$0xff] %v836
        %1357 = vst [vmem:[%s1239] ss:$4 sm:$0xff] %v839
        %1358 = vst [vmem:[%s1242] ss:$4 sm:$0xff] %v842
        %1360 = vst [vmem:[%s1244] ss:$4 sm:$0xff] %v845
        %1361 = vst [vmem:[%s1247] ss:$4 sm:$0xff] %v848
        %1363 = vst [vmem:[%s1249] ss:$4 sm:$0xff] %v851
        %1364 = vst [vmem:[%s1252] ss:$4 sm:$0xff] %v854
        %v1365 = vld.sshfl [vmem:[#allocation1] sm:$0xff pattern:$0x73625140]
        %v1366 = vld.sshfl [vmem:[#allocation1 + $0x20] sm:$0xff pattern:$0x73625140]
        %1368 = vst [vmem:[#allocation1] ss:$4 sm:$0xff] %v857
        %1369 = vst [vmem:[%s1237] ss:$4 sm:$0xff] %v860
        %1371 = vst [vmem:[%s1239] ss:$4 sm:$0xff] %v863
        %1372 = vst [vmem:[%s1242] ss:$4 sm:$0xff] %v866
        %1374 = vst [vmem:[%s1244] ss:$4 sm:$0xff] %v869
        %1375 = vst [vmem:[%s1247] ss:$4 sm:$0xff] %v872
        %1377 = vst [vmem:[%s1249] ss:$4 sm:$0xff] %v875
        %1378 = vst [vmem:[%s1252] ss:$4 sm:$0xff] %v878
        %v1379 = vld.sshfl [vmem:[#allocation1] sm:$0xff pattern:$0x73625140]
        %v1380 = vld.sshfl [vmem:[#allocation1 + $0x20] sm:$0xff pattern:$0x73625140]
        %1382 = vst [vmem:[#allocation1] ss:$4 sm:$0xff] %v881
        %1383 = vst [vmem:[%s1237] ss:$4 sm:$0xff] %v884
        %1385 = vst [vmem:[%s1239] ss:$4 sm:$0xff] %v887
        %1386 = vst [vmem:[%s1242] ss:$4 sm:$0xff] %v890
        %1388 = vst [vmem:[%s1244] ss:$4 sm:$0xff] %v893
        %1389 = vst [vmem:[%s1247] ss:$4 sm:$0xff] %v896
        %1391 = vst [vmem:[%s1249] ss:$4 sm:$0xff] %v899
        %1392 = vst [vmem:[%s1252] ss:$4 sm:$0xff] %v902
        %v1393 = vld.sshfl [vmem:[#allocation1] sm:$0xff pattern:$0x73625140]
        %v1394 = vld.sshfl [vmem:[#allocation1 + $0x20] sm:$0xff pattern:$0x73625140]
        %1396 = vst [vmem:[#allocation1] ss:$4 sm:$0xff] %v905
        %1397 = vst [vmem:[%s1237] ss:$4 sm:$0xff] %v908
        %1399 = vst [vmem:[%s1239] ss:$4 sm:$0xff] %v911
        %1400 = vst [vmem:[%s1242] ss:$4 sm:$0xff] %v914
        %1402 = vst [vmem:[%s1244] ss:$4 sm:$0xff] %v917
        %1403 = vst [vmem:[%s1247] ss:$4 sm:$0xff] %v920
        %1405 = vst [vmem:[%s1249] ss:$4 sm:$0xff] %v923
        %1406 = vst [vmem:[%s1252] ss:$4 sm:$0xff] %v926
        %v1407 = vld.sshfl [vmem:[#allocation1] sm:$0xff pattern:$0x73625140]
        %v1408 = vld.sshfl [vmem:[#allocation1 + $0x20] sm:$0xff pattern:$0x73625140]
        %1410 = vst [vmem:[#allocation1] ss:$4 sm:$0xff] %v929
        %1411 = vst [vmem:[%s1237] ss:$4 sm:$0xff] %v932
        %1412 = vst [vmem:[%s1239] ss:$4 sm:$0xff] %v935
        %1414 = vst [vmem:[%s1242] ss:$4 sm:$0xff] %v938
        %1415 = vst [vmem:[%s1244] ss:$4 sm:$0xff] %v941
        %1417 = vst [vmem:[%s1247] ss:$4 sm:$0xff] %v944
        %1418 = vst [vmem:[%s1249] ss:$4 sm:$0xff] %v947
        %1420 = vst [vmem:[%s1252] ss:$4 sm:$0xff] %v950
        %v1421 = vld.sshfl [vmem:[#allocation1] sm:$0xff pattern:$0x73625140]
        %v1422 = vld.sshfl [vmem:[#allocation1 + $0x20] sm:$0xff pattern:$0x73625140]
        %1423 = vst [vmem:[#allocation1] ss:$4 sm:$0xff] %v953
        %1425 = vst [vmem:[%s1237] ss:$4 sm:$0xff] %v956
        %1426 = vst [vmem:[%s1239] ss:$4 sm:$0xff] %v959
        %1428 = vst [vmem:[%s1242] ss:$4 sm:$0xff] %v962
        %1429 = vst [vmem:[%s1244] ss:$4 sm:$0xff] %v965
        %1431 = vst [vmem:[%s1247] ss:$4 sm:$0xff] %v968
        %1432 = vst [vmem:[%s1249] ss:$4 sm:$0xff] %v971
        %1434 = vst [vmem:[%s1252] ss:$4 sm:$0xff] %v974
        %v1435 = vld.sshfl [vmem:[#allocation1] sm:$0xff pattern:$0x73625140]
        %v1436 = vld.sshfl [vmem:[#allocation1 + $0x20] sm:$0xff pattern:$0x73625140]
        %1437 = vst [vmem:[#allocation1] ss:$4 sm:$0xff] %v977
        %1439 = vst [vmem:[%s1237] ss:$4 sm:$0xff] %v980
        %1440 = vst [vmem:[%s1239] ss:$4 sm:$0xff] %v983
        %1442 = vst [vmem:[%s1242] ss:$4 sm:$0xff] %v986
        %1443 = vst [vmem:[%s1244] ss:$4 sm:$0xff] %v989
        %1445 = vst [vmem:[%s1247] ss:$4 sm:$0xff] %v992
        %1446 = vst [vmem:[%s1249] ss:$4 sm:$0xff] %v995
        %1448 = vst [vmem:[%s1252] ss:$4 sm:$0xff] %v998
        %v1449 = vld.sshfl [vmem:[#allocation1] sm:$0xff pattern:$0x73625140]
        %v1450 = vld.sshfl [vmem:[#allocation1 + $0x20] sm:$0xff pattern:$0x73625140]
        %1451 = vst [vmem:[#allocation1] ss:$4 sm:$0xff] %v1001
        %1453 = vst [vmem:[%s1237] ss:$4 sm:$0xff] %v1004
        %1454 = vst [vmem:[%s1239] ss:$4 sm:$0xff] %v1007
        %1456 = vst [vmem:[%s1242] ss:$4 sm:$0xff] %v1010
        %1457 = vst [vmem:[%s1244] ss:$4 sm:$0xff] %v1013
        %1459 = vst [vmem:[%s1247] ss:$4 sm:$0xff] %v1016
        %1460 = vst [vmem:[%s1249] ss:$4 sm:$0xff] %v1019
        %1462 = vst [vmem:[%s1252] ss:$4 sm:$0xff] %v1022
        %v1463 = vld.sshfl [vmem:[#allocation1] sm:$0xff pattern:$0x73625140]
        %v1464 = vld.sshfl [vmem:[#allocation1 + $0x20] sm:$0xff pattern:$0x73625140]
        %1465 = vst [vmem:[#allocation1] ss:$4 sm:$0xff] %v1025
        %1467 = vst [vmem:[%s1237] ss:$4 sm:$0xff] %v1028
        %1468 = vst [vmem:[%s1239] ss:$4 sm:$0xff] %v1031
        %1470 = vst [vmem:[%s1242] ss:$4 sm:$0xff] %v1034
        %1471 = vst [vmem:[%s1244] ss:$4 sm:$0xff] %v1037
        %1473 = vst [vmem:[%s1247] ss:$4 sm:$0xff] %v1040
        %1474 = vst [vmem:[%s1249] ss:$4 sm:$0xff] %v1043
        %1476 = vst [vmem:[%s1252] ss:$4 sm:$0xff] %v1046
        %v1477 = vld.sshfl [vmem:[#allocation1] sm:$0xff pattern:$0x73625140]
        %v1478 = vld.sshfl [vmem:[#allocation1 + $0x20] sm:$0xff pattern:$0x73625140]
        %1479 = vst [vmem:[#allocation1] ss:$4 sm:$0xff] %v1049
        %1481 = vst [vmem:[%s1237] ss:$4 sm:$0xff] %v1052
        %1482 = vst [vmem:[%s1239] ss:$4 sm:$0xff] %v1055
        %1484 = vst [vmem:[%s1242] ss:$4 sm:$0xff] %v1058
        %1485 = vst [vmem:[%s1244] ss:$4 sm:$0xff] %v1061
        %1487 = vst [vmem:[%s1247] ss:$4 sm:$0xff] %v1064
        %1488 = vst [vmem:[%s1249] ss:$4 sm:$0xff] %v1067
        %1490 = vst [vmem:[%s1252] ss:$4 sm:$0xff] %v1070
        %v1491 = vld.sshfl [vmem:[#allocation1] sm:$0xff pattern:$0x73625140]
        %v1492 = vld.sshfl [vmem:[#allocation1 + $0x20] sm:$0xff pattern:$0x73625140]
        %1493 = vst [vmem:[#allocation1] ss:$4 sm:$0xff] %v1073
        %1495 = vst [vmem:[%s1237] ss:$4 sm:$0xff] %v1076
        %1496 = vst [vmem:[%s1239] ss:$4 sm:$0xff] %v1079
        %1497 = vst [vmem:[%s1242] ss:$4 sm:$0xff] %v1082
        %1499 = vst [vmem:[%s1244] ss:$4 sm:$0xff] %v1085
        %1500 = vst [vmem:[%s1247] ss:$4 sm:$0xff] %v1088
        %1502 = vst [vmem:[%s1249] ss:$4 sm:$0xff] %v1091
        %1503 = vst [vmem:[%s1252] ss:$4 sm:$0xff] %v1094
        %v1504 = vld.sshfl [vmem:[#allocation1] sm:$0xff pattern:$0x73625140]
        %v1505 = vld.sshfl [vmem:[#allocation1 + $0x20] sm:$0xff pattern:$0x73625140]
        %1507 = vst [vmem:[#allocation1] ss:$4 sm:$0xff] %v1097
        %1508 = vst [vmem:[%s1237] ss:$4 sm:$0xff] %v1100
        %1510 = vst [vmem:[%s1239] ss:$4 sm:$0xff] %v1103
        %1511 = vst [vmem:[%s1242] ss:$4 sm:$0xff] %v1106
        %1513 = vst [vmem:[%s1244] ss:$4 sm:$0xff] %v1109
        %1514 = vst [vmem:[%s1247] ss:$4 sm:$0xff] %v1112
        %1516 = vst [vmem:[%s1249] ss:$4 sm:$0xff] %v1115
        %1517 = vst [vmem:[%s1252] ss:$4 sm:$0xff] %v1118
        %v1518 = vld.sshfl [vmem:[#allocation1] sm:$0xff pattern:$0x73625140]
        %v1519 = vld.sshfl [vmem:[#allocation1 + $0x20] sm:$0xff pattern:$0x73625140]
        %1521 = vst [vmem:[#allocation1] ss:$4 sm:$0xff] %v1121
        %1522 = vst [vmem:[%s1237] ss:$4 sm:$0xff] %v1124
        %1524 = vst [vmem:[%s1239] ss:$4 sm:$0xff] %v1127
        %1525 = vst [vmem:[%s1242] ss:$4 sm:$0xff] %v1130
        %1527 = vst [vmem:[%s1244] ss:$4 sm:$0xff] %v1133
        %1528 = vst [vmem:[%s1247] ss:$4 sm:$0xff] %v1136
        %1530 = vst [vmem:[%s1249] ss:$4 sm:$0xff] %v1139
        %1531 = vst [vmem:[%s1252] ss:$4 sm:$0xff] %v1142
        %v1532 = vld.sshfl [vmem:[#allocation1] sm:$0xff pattern:$0x73625140]
        %v1533 = vld.sshfl [vmem:[#allocation1 + $0x20] sm:$0xff pattern:$0x73625140]
        %1535 = vst [vmem:[#allocation1] ss:$4 sm:$0xff] %v1145
        %1536 = vst [vmem:[%s1237] ss:$4 sm:$0xff] %v1148
        %1538 = vst [vmem:[%s1239] ss:$4 sm:$0xff] %v1151
        %1539 = vst [vmem:[%s1242] ss:$4 sm:$0xff] %v1154
        %1541 = vst [vmem:[%s1244] ss:$4 sm:$0xff] %v1157
        %1542 = vst [vmem:[%s1247] ss:$4 sm:$0xff] %v1160
        %1544 = vst [vmem:[%s1249] ss:$4 sm:$0xff] %v1163
        %1545 = vst [vmem:[%s1252] ss:$4 sm:$0xff] %v1166
        %v1546 = vld.sshfl [vmem:[#allocation1] sm:$0xff pattern:$0x73625140]
        %v1547 = vld.sshfl [vmem:[#allocation1 + $0x20] sm:$0xff pattern:$0x73625140]
        %1549 = vst [vmem:[#allocation1] ss:$4 sm:$0xff] %v1169
        %1550 = vst [vmem:[%s1237] ss:$4 sm:$0xff] %v1172
        %1552 = vst [vmem:[%s1239] ss:$4 sm:$0xff] %v1175
        %1553 = vst [vmem:[%s1242] ss:$4 sm:$0xff] %v1178
        %1555 = vst [vmem:[%s1244] ss:$4 sm:$0xff] %v1181
        %1556 = vst [vmem:[%s1247] ss:$4 sm:$0xff] %v1184
        %1558 = vst [vmem:[%s1249] ss:$4 sm:$0xff] %v1187
        %1559 = vst [vmem:[%s1252] ss:$4 sm:$0xff] %v1190
        %v1560 = vld.sshfl [vmem:[#allocation1] sm:$0xff pattern:$0x73625140]
        %v1561 = vld.sshfl [vmem:[#allocation1 + $0x20] sm:$0xff pattern:$0x73625140]
        %1563 = vst [vmem:[#allocation1] ss:$4 sm:$0xff] %v1193
        %1564 = vst [vmem:[%s1237] ss:$4 sm:$0xff] %v1196
        %1566 = vst [vmem:[%s1239] ss:$4 sm:$0xff] %v1199
        %1567 = vst [vmem:[%s1242] ss:$4 sm:$0xff] %v1202
        %1569 = vst [vmem:[%s1244] ss:$4 sm:$0xff] %v1205
        %1570 = vst [vmem:[%s1247] ss:$4 sm:$0xff] %v1208
        %1572 = vst [vmem:[%s1249] ss:$4 sm:$0xff] %v1211
        %1573 = vst [vmem:[%s1252] ss:$4 sm:$0xff] %v1214
        %v1574 = vld.sshfl [vmem:[#allocation1] sm:$0xff pattern:$0x73625140]
        %v1575 = vld.sshfl [vmem:[#allocation1 + $0x20] sm:$0xff pattern:$0x73625140]
        %1577 = vst [vmem:[#allocation1] ss:$4 sm:$0xff] %v1217
        %1578 = vst [vmem:[%s1237] ss:$4 sm:$0xff] %v1220
        %1580 = vst [vmem:[%s1239] ss:$4 sm:$0xff] %v1223
        %1581 = vst [vmem:[%s1242] ss:$4 sm:$0xff] %v1226
        %v1582 = vld.sshfl [vmem:[#allocation1] sm:$0xff pattern:$0x73625140]
        %v1587 = vunpack.c.l.b16 %v1227
        %v1588 = vunpack.c.l.b16 %v1228
        %v1589 = vunpack.c.l.b16 %v1229
        %v1590 = vunpack.c.l.b16 %v1230
        %v1591 = vpack.c.b16 %v1588, %v1587
        %v1592 = vpack.c.b16 %v1590, %v1589
        %vm1595 = vcmask 261120
        %v1596 = vsel %vm1595, %v1254, 0
        %v1598 = vsel %vm1595, %v1255, 0
        %v1600 = vsel %vm1595, %v1268, 0
        %v1602 = vsel %vm1595, %v1269, 0
        %v1604 = vsel %vm1595, %v1282, 0
        %v1606 = vsel %vm1595, %v1283, 0
        %v1608 = vsel %vm1595, %v1296, 0
        %v1610 = vsel %vm1595, %v1297, 0
        %v1612 = vsel %vm1595, %v1310, 0
        %v1614 = vsel %vm1595, %v1311, 0
        %v1616 = vsel %vm1595, %v1324, 0
        %v1618 = vsel %vm1595, %v1325, 0
        %v1620 = vsel %vm1595, %v1337, 0
        %v1622 = vsel %vm1595, %v1338, 0
        %v1624 = vsel %vm1595, %v1351, 0
        %v1626 = vsel %vm1595, %v1352, 0
        %v1628 = vsel %vm1595, %v1365, 0
        %v1630 = vsel %vm1595, %v1366, 0
        %v1632 = vsel %vm1595, %v1379, 0
        %v1634 = vsel %vm1595, %v1380, 0
        %v1636 = vsel %vm1595, %v1393, 0
        %v1638 = vsel %vm1595, %v1394, 0
        %v1640 = vsel %vm1595, %v1407, 0
        %v1642 = vsel %vm1595, %v1408, 0
        %v1644 = vsel %vm1595, %v1421, 0
        %v1646 = vsel %vm1595, %v1422, 0
        %v1648 = vsel %vm1595, %v1435, 0
        %v1650 = vsel %vm1595, %v1436, 0
        %v1652 = vsel %vm1595, %v1449, 0
        %v1654 = vsel %vm1595, %v1450, 0
        %v1656 = vsel %vm1595, %v1463, 0
        %v1658 = vsel %vm1595, %v1464, 0
        %v1660 = vsel %vm1595, %v1477, 0
        %v1662 = vsel %vm1595, %v1478, 0
        %v1664 = vsel %vm1595, %v1491, 0
        %v1666 = vsel %vm1595, %v1492, 0
        %v1668 = vsel %vm1595, %v1504, 0
        %v1670 = vsel %vm1595, %v1505, 0
        %v1672 = vsel %vm1595, %v1518, 0
        %v1674 = vsel %vm1595, %v1519, 0
        %v1676 = vsel %vm1595, %v1532, 0
        %v1678 = vsel %vm1595, %v1533, 0
        %v1680 = vsel %vm1595, %v1546, 0
        %v1682 = vsel %vm1595, %v1547, 0
        %v1684 = vsel %vm1595, %v1560, 0
        %v1686 = vsel %vm1595, %v1561, 0
        %v1688 = vsel %vm1595, %v1574, 0
        %v1690 = vsel %vm1595, %v1575, 0
        %v1692 = vsel %vm1595, %v1582, 0
        %1694 = vmatpush.bf16.msra.mxu0 0
        %1695 = vmatpush.bf16.msra.mxu0 0
        %1696 = vmatpush.bf16.msra.mxu0 0
        %1697 = vmatpush.bf16.msra.mxu0 0
        %1698 = vmatpush.bf16.msra.mxu0 0
        %1699 = vmatpush.bf16.msra.mxu0 0
        %1700 = vmatpush.bf16.msra.mxu0 %v1592
        %1701 = vmatpush.bf16.msra.mxu0 %v1591
        %1702 = vmatmul.bf16.gmra.mxu0 %v1596
        %v1703 = vpop.f32.mrf.mxu0
        %v1704 = vadd.f32 %v1233, %v1703
        %v1705 = vpop.f32.mrf.mxu0
        %v1706 = vadd.f32 %v1233, %v1705
        %1707 = vmatmul.bf16.gmra.mxu0 %v1598
        %v1708 = vpop.f32.mrf.mxu0
        %v1709 = vadd.f32 %v1233, %v1708
        %v1710 = vpop.f32.mrf.mxu0
        %v1711 = vadd.f32 %v1233, %v1710
        %1712 = vmatmul.bf16.gmra.mxu0 %v1600
        %v1713 = vpop.f32.mrf.mxu0
        %v1714 = vadd.f32 %v1233, %v1713
        %v1715 = vpop.f32.mrf.mxu0
        %v1716 = vadd.f32 %v1233, %v1715
        %1717 = vmatmul.bf16.gmra.mxu0 %v1602
        %v1718 = vpop.f32.mrf.mxu0
        %v1719 = vadd.f32 %v1233, %v1718
        %v1720 = vpop.f32.mrf.mxu0
        %v1721 = vadd.f32 %v1233, %v1720
        %1722 = vmatmul.bf16.gmra.mxu0 %v1604
        %v1723 = vpop.f32.mrf.mxu0
        %v1724 = vadd.f32 %v1233, %v1723
        %v1725 = vpop.f32.mrf.mxu0
        %v1726 = vadd.f32 %v1233, %v1725
        %1727 = vmatmul.bf16.gmra.mxu0 %v1606
        %v1728 = vpop.f32.mrf.mxu0
        %v1729 = vadd.f32 %v1233, %v1728
        %v1730 = vpop.f32.mrf.mxu0
        %v1731 = vadd.f32 %v1233, %v1730
        %1732 = vmatmul.bf16.gmra.mxu0 %v1608
        %v1733 = vpop.f32.mrf.mxu0
        %v1734 = vadd.f32 %v1233, %v1733
        %v1735 = vpop.f32.mrf.mxu0
        %v1736 = vadd.f32 %v1233, %v1735
        %1737 = vmatmul.bf16.gmra.mxu0 %v1610
        %v1738 = vpop.f32.mrf.mxu0
        %v1739 = vadd.f32 %v1233, %v1738
        %v1740 = vpop.f32.mrf.mxu0
        %v1741 = vadd.f32 %v1233, %v1740
        %1742 = vmatmul.bf16.gmra.mxu0 %v1612
        %v1743 = vpop.f32.mrf.mxu0
        %v1744 = vadd.f32 %v1233, %v1743
        %v1745 = vpop.f32.mrf.mxu0
        %v1746 = vadd.f32 %v1233, %v1745
        %1747 = vmatmul.bf16.gmra.mxu0 %v1614
        %v1748 = vpop.f32.mrf.mxu0
        %v1749 = vadd.f32 %v1233, %v1748
        %v1750 = vpop.f32.mrf.mxu0
        %v1751 = vadd.f32 %v1233, %v1750
        %1752 = vmatmul.bf16.gmra.mxu0 %v1616
        %v1753 = vpop.f32.mrf.mxu0
        %v1754 = vadd.f32 %v1233, %v1753
        %v1755 = vpop.f32.mrf.mxu0
        %v1756 = vadd.f32 %v1233, %v1755
        %1757 = vmatmul.bf16.gmra.mxu0 %v1618
        %v1758 = vpop.f32.mrf.mxu0
        %v1759 = vadd.f32 %v1233, %v1758
        %v1760 = vpop.f32.mrf.mxu0
        %v1761 = vadd.f32 %v1233, %v1760
        %1762 = vmatmul.bf16.gmra.mxu0 %v1620
        %v1763 = vpop.f32.mrf.mxu0
        %v1764 = vadd.f32 %v1233, %v1763
        %v1765 = vpop.f32.mrf.mxu0
        %v1766 = vadd.f32 %v1233, %v1765
        %1767 = vmatmul.bf16.gmra.mxu0 %v1622
        %v1768 = vpop.f32.mrf.mxu0
        %v1769 = vadd.f32 %v1233, %v1768
        %v1770 = vpop.f32.mrf.mxu0
        %v1771 = vadd.f32 %v1233, %v1770
        %1772 = vmatmul.bf16.gmra.mxu0 %v1624
        %v1773 = vpop.f32.mrf.mxu0
        %v1774 = vadd.f32 %v1233, %v1773
        %v1775 = vpop.f32.mrf.mxu0
        %v1776 = vadd.f32 %v1233, %v1775
        %1777 = vmatmul.bf16.gmra.mxu0 %v1626
        %v1778 = vpop.f32.mrf.mxu0
        %v1779 = vadd.f32 %v1233, %v1778
        %v1780 = vpop.f32.mrf.mxu0
        %v1781 = vadd.f32 %v1233, %v1780
        %1782 = vmatmul.bf16.gmra.mxu0 %v1628
        %v1783 = vpop.f32.mrf.mxu0
        %v1784 = vadd.f32 %v1233, %v1783
        %v1785 = vpop.f32.mrf.mxu0
        %v1786 = vadd.f32 %v1233, %v1785
        %1787 = vmatmul.bf16.gmra.mxu0 %v1630
        %v1788 = vpop.f32.mrf.mxu0
        %v1789 = vadd.f32 %v1233, %v1788
        %v1790 = vpop.f32.mrf.mxu0
        %v1791 = vadd.f32 %v1233, %v1790
        %1792 = vmatmul.bf16.gmra.mxu0 %v1632
        %v1793 = vpop.f32.mrf.mxu0
        %v1794 = vadd.f32 %v1233, %v1793
        %v1795 = vpop.f32.mrf.mxu0
        %v1796 = vadd.f32 %v1233, %v1795
        %1797 = vmatmul.bf16.gmra.mxu0 %v1634
        %v1798 = vpop.f32.mrf.mxu0
        %v1799 = vadd.f32 %v1233, %v1798
        %v1800 = vpop.f32.mrf.mxu0
        %v1801 = vadd.f32 %v1233, %v1800
        %1802 = vmatmul.bf16.gmra.mxu0 %v1636
        %v1803 = vpop.f32.mrf.mxu0
        %v1804 = vadd.f32 %v1233, %v1803
        %v1805 = vpop.f32.mrf.mxu0
        %v1806 = vadd.f32 %v1233, %v1805
        %1807 = vmatmul.bf16.gmra.mxu0 %v1638
        %v1808 = vpop.f32.mrf.mxu0
        %v1809 = vadd.f32 %v1233, %v1808
        %v1810 = vpop.f32.mrf.mxu0
        %v1811 = vadd.f32 %v1233, %v1810
        %1812 = vmatmul.bf16.gmra.mxu0 %v1640
        %v1813 = vpop.f32.mrf.mxu0
        %v1814 = vadd.f32 %v1233, %v1813
        %v1815 = vpop.f32.mrf.mxu0
        %v1816 = vadd.f32 %v1233, %v1815
        %1817 = vmatmul.bf16.gmra.mxu0 %v1642
        %v1818 = vpop.f32.mrf.mxu0
        %v1819 = vadd.f32 %v1233, %v1818
        %v1820 = vpop.f32.mrf.mxu0
        %v1821 = vadd.f32 %v1233, %v1820
        %1822 = vmatmul.bf16.gmra.mxu0 %v1644
        %v1823 = vpop.f32.mrf.mxu0
        %v1824 = vadd.f32 %v1233, %v1823
        %v1825 = vpop.f32.mrf.mxu0
        %v1826 = vadd.f32 %v1233, %v1825
        %1827 = vmatmul.bf16.gmra.mxu0 %v1646
        %v1828 = vpop.f32.mrf.mxu0
        %v1829 = vadd.f32 %v1233, %v1828
        %v1830 = vpop.f32.mrf.mxu0
        %v1831 = vadd.f32 %v1233, %v1830
        %1832 = vmatmul.bf16.gmra.mxu0 %v1648
        %v1833 = vpop.f32.mrf.mxu0
        %v1834 = vadd.f32 %v1233, %v1833
        %v1835 = vpop.f32.mrf.mxu0
        %v1836 = vadd.f32 %v1233, %v1835
        %1837 = vmatmul.bf16.gmra.mxu0 %v1650
        %v1838 = vpop.f32.mrf.mxu0
        %v1839 = vadd.f32 %v1233, %v1838
        %v1840 = vpop.f32.mrf.mxu0
        %v1841 = vadd.f32 %v1233, %v1840
        %1842 = vmatmul.bf16.gmra.mxu0 %v1652
        %v1843 = vpop.f32.mrf.mxu0
        %v1844 = vadd.f32 %v1233, %v1843
        %v1845 = vpop.f32.mrf.mxu0
        %v1846 = vadd.f32 %v1233, %v1845
        %1847 = vmatmul.bf16.gmra.mxu0 %v1654
        %v1848 = vpop.f32.mrf.mxu0
        %v1849 = vadd.f32 %v1233, %v1848
        %v1850 = vpop.f32.mrf.mxu0
        %v1851 = vadd.f32 %v1233, %v1850
        %1852 = vmatmul.bf16.gmra.mxu0 %v1656
        %v1853 = vpop.f32.mrf.mxu0
        %v1854 = vadd.f32 %v1233, %v1853
        %v1855 = vpop.f32.mrf.mxu0
        %v1856 = vadd.f32 %v1233, %v1855
        %1857 = vmatmul.bf16.gmra.mxu0 %v1658
        %v1858 = vpop.f32.mrf.mxu0
        %v1859 = vadd.f32 %v1233, %v1858
        %v1860 = vpop.f32.mrf.mxu0
        %v1861 = vadd.f32 %v1233, %v1860
        %1862 = vmatmul.bf16.gmra.mxu0 %v1660
        %v1863 = vpop.f32.mrf.mxu0
        %v1864 = vadd.f32 %v1233, %v1863
        %v1865 = vpop.f32.mrf.mxu0
        %v1866 = vadd.f32 %v1233, %v1865
        %1867 = vmatmul.bf16.gmra.mxu0 %v1662
        %v1868 = vpop.f32.mrf.mxu0
        %v1869 = vadd.f32 %v1233, %v1868
        %v1870 = vpop.f32.mrf.mxu0
        %v1871 = vadd.f32 %v1233, %v1870
        %1872 = vmatmul.bf16.gmra.mxu0 %v1664
        %v1873 = vpop.f32.mrf.mxu0
        %v1874 = vadd.f32 %v1233, %v1873
        %v1875 = vpop.f32.mrf.mxu0
        %v1876 = vadd.f32 %v1233, %v1875
        %1877 = vmatmul.bf16.gmra.mxu0 %v1666
        %v1878 = vpop.f32.mrf.mxu0
        %v1879 = vadd.f32 %v1233, %v1878
        %v1880 = vpop.f32.mrf.mxu0
        %v1881 = vadd.f32 %v1233, %v1880
        %1882 = vmatmul.bf16.gmra.mxu0 %v1668
        %v1883 = vpop.f32.mrf.mxu0
        %v1884 = vadd.f32 %v1233, %v1883
        %v1885 = vpop.f32.mrf.mxu0
        %v1886 = vadd.f32 %v1233, %v1885
        %1887 = vmatmul.bf16.gmra.mxu0 %v1670
        %v1888 = vpop.f32.mrf.mxu0
        %v1889 = vadd.f32 %v1233, %v1888
        %v1890 = vpop.f32.mrf.mxu0
        %v1891 = vadd.f32 %v1233, %v1890
        %1892 = vmatmul.bf16.gmra.mxu0 %v1672
        %v1893 = vpop.f32.mrf.mxu0
        %v1894 = vadd.f32 %v1233, %v1893
        %v1895 = vpop.f32.mrf.mxu0
        %v1896 = vadd.f32 %v1233, %v1895
        %1897 = vmatmul.bf16.gmra.mxu0 %v1674
        %v1898 = vpop.f32.mrf.mxu0
        %v1899 = vadd.f32 %v1233, %v1898
        %v1900 = vpop.f32.mrf.mxu0
        %v1901 = vadd.f32 %v1233, %v1900
        %1902 = vmatmul.bf16.gmra.mxu0 %v1676
        %v1903 = vpop.f32.mrf.mxu0
        %v1904 = vadd.f32 %v1233, %v1903
        %v1905 = vpop.f32.mrf.mxu0
        %v1906 = vadd.f32 %v1233, %v1905
        %1907 = vmatmul.bf16.gmra.mxu0 %v1678
        %v1908 = vpop.f32.mrf.mxu0
        %v1909 = vadd.f32 %v1233, %v1908
        %v1910 = vpop.f32.mrf.mxu0
        %v1911 = vadd.f32 %v1233, %v1910
        %1912 = vmatmul.bf16.gmra.mxu0 %v1680
        %v1913 = vpop.f32.mrf.mxu0
        %v1914 = vadd.f32 %v1233, %v1913
        %v1915 = vpop.f32.mrf.mxu0
        %v1916 = vadd.f32 %v1233, %v1915
        %1917 = vmatmul.bf16.gmra.mxu0 %v1682
        %v1918 = vpop.f32.mrf.mxu0
        %v1919 = vadd.f32 %v1233, %v1918
        %v1920 = vpop.f32.mrf.mxu0
        %v1921 = vadd.f32 %v1233, %v1920
        %1922 = vmatmul.bf16.gmra.mxu0 %v1684
        %v1923 = vpop.f32.mrf.mxu0
        %v1924 = vadd.f32 %v1233, %v1923
        %v1925 = vpop.f32.mrf.mxu0
        %v1926 = vadd.f32 %v1233, %v1925
        %1927 = vmatmul.bf16.gmra.mxu0 %v1686
        %v1928 = vpop.f32.mrf.mxu0
        %v1929 = vadd.f32 %v1233, %v1928
        %v1930 = vpop.f32.mrf.mxu0
        %v1931 = vadd.f32 %v1233, %v1930
        %1932 = vmatmul.bf16.gmra.mxu0 %v1688
        %v1933 = vpop.f32.mrf.mxu0
        %v1934 = vadd.f32 %v1233, %v1933
        %v1935 = vpop.f32.mrf.mxu0
        %v1936 = vadd.f32 %v1233, %v1935
        %1937 = vmatmul.bf16.gmra.mxu0 %v1690
        %v1938 = vpop.f32.mrf.mxu0
        %v1939 = vadd.f32 %v1233, %v1938
        %v1940 = vpop.f32.mrf.mxu0
        %v1941 = vadd.f32 %v1233, %v1940
        %1942 = vmatmul.bf16.gmra.mxu0 %v1692
        %v1943 = vpop.f32.mrf.mxu0
        %v1944 = vadd.f32 %v1233, %v1943
        %v1945 = vpop.f32.mrf.mxu0
        %v1946 = vadd.f32 %v1233, %v1945
        %1947 = vdwg.mxu0
        %v1948 = vmax.f32 %v1704, 0.0
        %v1949 = vmax.f32 %v1706, 0.0
        %v1950 = vmax.f32 %v1709, 0.0
        %v1951 = vmax.f32 %v1711, 0.0
        %v1952 = vmax.f32 %v1714, 0.0
        %v1953 = vmax.f32 %v1716, 0.0
        %v1954 = vmax.f32 %v1719, 0.0
        %v1955 = vmax.f32 %v1721, 0.0
        %v1956 = vmax.f32 %v1724, 0.0
        %v1957 = vmax.f32 %v1726, 0.0
        %v1958 = vmax.f32 %v1729, 0.0
        %v1959 = vmax.f32 %v1731, 0.0
        %v1960 = vmax.f32 %v1734, 0.0
        %v1961 = vmax.f32 %v1736, 0.0
        %v1962 = vmax.f32 %v1739, 0.0
        %v1963 = vmax.f32 %v1741, 0.0
        %v1964 = vmax.f32 %v1744, 0.0
        %v1965 = vmax.f32 %v1746, 0.0
        %v1966 = vmax.f32 %v1749, 0.0
        %v1967 = vmax.f32 %v1751, 0.0
        %v1968 = vmax.f32 %v1754, 0.0
        %v1969 = vmax.f32 %v1756, 0.0
        %v1970 = vmax.f32 %v1759, 0.0
        %v1971 = vmax.f32 %v1761, 0.0
        %v1972 = vmax.f32 %v1764, 0.0
        %v1973 = vmax.f32 %v1766, 0.0
        %v1974 = vmax.f32 %v1769, 0.0
        %v1975 = vmax.f32 %v1771, 0.0
        %v1976 = vmax.f32 %v1774, 0.0
        %v1977 = vmax.f32 %v1776, 0.0
        %v1978 = vmax.f32 %v1779, 0.0
        %v1979 = vmax.f32 %v1781, 0.0
        %v1980 = vmax.f32 %v1784, 0.0
        %v1981 = vmax.f32 %v1786, 0.0
        %v1982 = vmax.f32 %v1789, 0.0
        %v1983 = vmax.f32 %v1791, 0.0
        %v1984 = vmax.f32 %v1794, 0.0
        %v1985 = vmax.f32 %v1796, 0.0
        %v1986 = vmax.f32 %v1799, 0.0
        %v1987 = vmax.f32 %v1801, 0.0
        %v1988 = vmax.f32 %v1804, 0.0
        %v1989 = vmax.f32 %v1806, 0.0
        %v1990 = vmax.f32 %v1809, 0.0
        %v1991 = vmax.f32 %v1811, 0.0
        %v1992 = vmax.f32 %v1814, 0.0
        %v1993 = vmax.f32 %v1816, 0.0
        %v1994 = vmax.f32 %v1819, 0.0
        %v1995 = vmax.f32 %v1821, 0.0
        %v1996 = vmax.f32 %v1824, 0.0
        %v1997 = vmax.f32 %v1826, 0.0
        %v1998 = vmax.f32 %v1829, 0.0
        %v1999 = vmax.f32 %v1831, 0.0
        %v2000 = vmax.f32 %v1834, 0.0
        %v2001 = vmax.f32 %v1836, 0.0
        %v2002 = vmax.f32 %v1839, 0.0
        %v2003 = vmax.f32 %v1841, 0.0
        %v2004 = vmax.f32 %v1844, 0.0
        %v2005 = vmax.f32 %v1846, 0.0
        %v2006 = vmax.f32 %v1849, 0.0
        %v2007 = vmax.f32 %v1851, 0.0
        %v2008 = vmax.f32 %v1854, 0.0
        %v2009 = vmax.f32 %v1856, 0.0
        %v2010 = vmax.f32 %v1859, 0.0
        %v2011 = vmax.f32 %v1861, 0.0
        %v2012 = vmax.f32 %v1864, 0.0
        %v2013 = vmax.f32 %v1866, 0.0
        %v2014 = vmax.f32 %v1869, 0.0
        %v2015 = vmax.f32 %v1871, 0.0
        %v2016 = vmax.f32 %v1874, 0.0
        %v2017 = vmax.f32 %v1876, 0.0
        %v2018 = vmax.f32 %v1879, 0.0
        %v2019 = vmax.f32 %v1881, 0.0
        %v2020 = vmax.f32 %v1884, 0.0
        %v2021 = vmax.f32 %v1886, 0.0
        %v2022 = vmax.f32 %v1889, 0.0
        %v2023 = vmax.f32 %v1891, 0.0
        %v2024 = vmax.f32 %v1894, 0.0
        %v2025 = vmax.f32 %v1896, 0.0
        %v2026 = vmax.f32 %v1899, 0.0
        %v2027 = vmax.f32 %v1901, 0.0
        %v2028 = vmax.f32 %v1904, 0.0
        %v2029 = vmax.f32 %v1906, 0.0
        %v2030 = vmax.f32 %v1909, 0.0
        %v2031 = vmax.f32 %v1911, 0.0
        %v2032 = vmax.f32 %v1914, 0.0
        %v2033 = vmax.f32 %v1916, 0.0
        %v2034 = vmax.f32 %v1919, 0.0
        %v2035 = vmax.f32 %v1921, 0.0
        %v2036 = vmax.f32 %v1924, 0.0
        %v2037 = vmax.f32 %v1926, 0.0
        %v2038 = vmax.f32 %v1929, 0.0
        %v2039 = vmax.f32 %v1931, 0.0
        %v2040 = vmax.f32 %v1934, 0.0
        %v2041 = vmax.f32 %v1936, 0.0
        %v2042 = vmax.f32 %v1939, 0.0
        %v2043 = vmax.f32 %v1941, 0.0
        %v2044 = vmax.f32 %v1944, 0.0
        %v2045 = vmax.f32 %v1946, 0.0
        %v2046 = vpack.c.bf16 %v1948, %v1948
        %v2047 = vpack.c.bf16 %v1949, %v1949
        %v2048 = vpack.c.bf16 %v1950, %v1950
        %v2049 = vpack.c.bf16 %v1951, %v1951
        %v2050 = vpack.c.bf16 %v1952, %v1952
        %v2051 = vpack.c.bf16 %v1953, %v1953
        %v2052 = vpack.c.bf16 %v1954, %v1954
        %v2053 = vpack.c.bf16 %v1955, %v1955
        %v2054 = vpack.c.bf16 %v1956, %v1956
        %v2055 = vpack.c.bf16 %v1957, %v1957
        %v2056 = vpack.c.bf16 %v1958, %v1958
        %v2057 = vpack.c.bf16 %v1959, %v1959
        %v2058 = vpack.c.bf16 %v1960, %v1960
        %v2059 = vpack.c.bf16 %v1961, %v1961
        %v2060 = vpack.c.bf16 %v1962, %v1962
        %v2061 = vpack.c.bf16 %v1963, %v1963
        %v2062 = vpack.c.bf16 %v1964, %v1964
        %v2063 = vpack.c.bf16 %v1965, %v1965
        %v2064 = vpack.c.bf16 %v1966, %v1966
        %v2065 = vpack.c.bf16 %v1967, %v1967
        %v2066 = vpack.c.bf16 %v1968, %v1968
        %v2067 = vpack.c.bf16 %v1969, %v1969
        %v2068 = vpack.c.bf16 %v1970, %v1970
        %v2069 = vpack.c.bf16 %v1971, %v1971
        %v2070 = vpack.c.bf16 %v1972, %v1972
        %v2071 = vpack.c.bf16 %v1973, %v1973
        %v2072 = vpack.c.bf16 %v1974, %v1974
        %v2073 = vpack.c.bf16 %v1975, %v1975
        %v2074 = vpack.c.bf16 %v1976, %v1976
        %v2075 = vpack.c.bf16 %v1977, %v1977
        %v2076 = vpack.c.bf16 %v1978, %v1978
        %v2077 = vpack.c.bf16 %v1979, %v1979
        %v2078 = vpack.c.bf16 %v1980, %v1980
        %v2079 = vpack.c.bf16 %v1981, %v1981
        %v2080 = vpack.c.bf16 %v1982, %v1982
        %v2081 = vpack.c.bf16 %v1983, %v1983
        %v2082 = vpack.c.bf16 %v1984, %v1984
        %v2083 = vpack.c.bf16 %v1985, %v1985
        %v2084 = vpack.c.bf16 %v1986, %v1986
        %v2085 = vpack.c.bf16 %v1987, %v1987
        %v2086 = vpack.c.bf16 %v1988, %v1988
        %v2087 = vpack.c.bf16 %v1989, %v1989
        %v2088 = vpack.c.bf16 %v1990, %v1990
        %v2089 = vpack.c.bf16 %v1991, %v1991
        %v2090 = vpack.c.bf16 %v1992, %v1992
        %v2091 = vpack.c.bf16 %v1993, %v1993
        %v2092 = vpack.c.bf16 %v1994, %v1994
        %v2093 = vpack.c.bf16 %v1995, %v1995
        %v2094 = vpack.c.bf16 %v1996, %v1996
        %v2095 = vpack.c.bf16 %v1997, %v1997
        %v2096 = vpack.c.bf16 %v1998, %v1998
        %v2097 = vpack.c.bf16 %v1999, %v1999
        %v2098 = vpack.c.bf16 %v2000, %v2000
        %v2099 = vpack.c.bf16 %v2001, %v2001
        %v2100 = vpack.c.bf16 %v2002, %v2002
        %v2101 = vpack.c.bf16 %v2003, %v2003
        %v2102 = vpack.c.bf16 %v2004, %v2004
        %v2103 = vpack.c.bf16 %v2005, %v2005
        %v2104 = vpack.c.bf16 %v2006, %v2006
        %v2105 = vpack.c.bf16 %v2007, %v2007
        %v2106 = vpack.c.bf16 %v2008, %v2008
        %v2107 = vpack.c.bf16 %v2009, %v2009
        %v2108 = vpack.c.bf16 %v2010, %v2010
        %v2109 = vpack.c.bf16 %v2011, %v2011
        %v2110 = vpack.c.bf16 %v2012, %v2012
        %v2111 = vpack.c.bf16 %v2013, %v2013
        %v2112 = vpack.c.bf16 %v2014, %v2014
        %v2113 = vpack.c.bf16 %v2015, %v2015
        %v2114 = vpack.c.bf16 %v2016, %v2016
        %v2115 = vpack.c.bf16 %v2017, %v2017
        %v2116 = vpack.c.bf16 %v2018, %v2018
        %v2117 = vpack.c.bf16 %v2019, %v2019
        %v2118 = vpack.c.bf16 %v2020, %v2020
        %v2119 = vpack.c.bf16 %v2021, %v2021
        %v2120 = vpack.c.bf16 %v2022, %v2022
        %v2121 = vpack.c.bf16 %v2023, %v2023
        %v2122 = vpack.c.bf16 %v2024, %v2024
        %v2123 = vpack.c.bf16 %v2025, %v2025
        %v2124 = vpack.c.bf16 %v2026, %v2026
        %v2125 = vpack.c.bf16 %v2027, %v2027
        %v2126 = vpack.c.bf16 %v2028, %v2028
        %v2127 = vpack.c.bf16 %v2029, %v2029
        %v2128 = vpack.c.bf16 %v2030, %v2030
        %v2129 = vpack.c.bf16 %v2031, %v2031
        %v2130 = vpack.c.bf16 %v2032, %v2032
        %v2131 = vpack.c.bf16 %v2033, %v2033
        %v2132 = vpack.c.bf16 %v2034, %v2034
        %v2133 = vpack.c.bf16 %v2035, %v2035
        %v2134 = vpack.c.bf16 %v2036, %v2036
        %v2135 = vpack.c.bf16 %v2037, %v2037
        %v2136 = vpack.c.bf16 %v2038, %v2038
        %v2137 = vpack.c.bf16 %v2039, %v2039
        %v2138 = vpack.c.bf16 %v2040, %v2040
        %v2139 = vpack.c.bf16 %v2041, %v2041
        %v2140 = vpack.c.bf16 %v2042, %v2042
        %v2141 = vpack.c.bf16 %v2043, %v2043
        %v2142 = vpack.c.bf16 %v2044, %v2044
        %v2143 = vpack.c.bf16 %v2045, %v2045
        %v2242 = vrot.slane %v2046, 3
        %v2243 = vrot.slane %v2047, 3
        %v2244 = vrot.slane %v2048, 3
        %v2245 = vrot.slane %v2049, 3
        %v2246 = vrot.slane %v2050, 3
        %v2247 = vrot.slane %v2051, 3
        %v2248 = vrot.slane %v2052, 3
        %v2249 = vrot.slane %v2053, 3
        %v2250 = vrot.slane %v2054, 3
        %v2251 = vrot.slane %v2055, 3
        %v2252 = vrot.slane %v2056, 3
        %v2253 = vrot.slane %v2057, 3
        %v2254 = vrot.slane %v2058, 3
        %v2255 = vrot.slane %v2059, 3
        %v2256 = vrot.slane %v2060, 3
        %v2257 = vrot.slane %v2061, 3
        %v2258 = vrot.slane %v2062, 3
        %v2259 = vrot.slane %v2063, 3
        %v2260 = vrot.slane %v2064, 3
        %v2261 = vrot.slane %v2065, 3
        %v2262 = vrot.slane %v2066, 3
        %v2263 = vrot.slane %v2067, 3
        %v2264 = vrot.slane %v2068, 3
        %v2265 = vrot.slane %v2069, 3
        %v2266 = vrot.slane %v2070, 3
        %v2267 = vrot.slane %v2071, 3
        %v2268 = vrot.slane %v2072, 3
        %v2269 = vrot.slane %v2073, 3
        %v2270 = vrot.slane %v2074, 3
        %v2271 = vrot.slane %v2075, 3
        %v2272 = vrot.slane %v2076, 3
        %v2273 = vrot.slane %v2077, 3
        %v2274 = vrot.slane %v2078, 3
        %v2275 = vrot.slane %v2079, 3
        %v2276 = vrot.slane %v2080, 3
        %v2277 = vrot.slane %v2081, 3
        %v2278 = vrot.slane %v2082, 3
        %v2279 = vrot.slane %v2083, 3
        %v2280 = vrot.slane %v2084, 3
        %v2281 = vrot.slane %v2085, 3
        %v2282 = vrot.slane %v2086, 3
        %v2283 = vrot.slane %v2087, 3
        %v2284 = vrot.slane %v2088, 3
        %v2285 = vrot.slane %v2089, 3
        %v2286 = vrot.slane %v2090, 3
        %v2287 = vrot.slane %v2091, 3
        %v2288 = vrot.slane %v2092, 3
        %v2289 = vrot.slane %v2093, 3
        %v2290 = vrot.slane %v2094, 3
        %v2291 = vrot.slane %v2095, 3
        %v2292 = vrot.slane %v2096, 3
        %v2293 = vrot.slane %v2097, 3
        %v2294 = vrot.slane %v2098, 3
        %v2295 = vrot.slane %v2099, 3
        %v2296 = vrot.slane %v2100, 3
        %v2297 = vrot.slane %v2101, 3
        %v2298 = vrot.slane %v2102, 3
        %v2299 = vrot.slane %v2103, 3
        %v2300 = vrot.slane %v2104, 3
        %v2301 = vrot.slane %v2105, 3
        %v2302 = vrot.slane %v2106, 3
        %v2303 = vrot.slane %v2107, 3
        %v2304 = vrot.slane %v2108, 3
        %v2305 = vrot.slane %v2109, 3
        %v2306 = vrot.slane %v2110, 3
        %v2307 = vrot.slane %v2111, 3
        %v2308 = vrot.slane %v2112, 3
        %v2309 = vrot.slane %v2113, 3
        %v2310 = vrot.slane %v2114, 3
        %v2311 = vrot.slane %v2115, 3
        %v2312 = vrot.slane %v2116, 3
        %v2313 = vrot.slane %v2117, 3
        %v2314 = vrot.slane %v2118, 3
        %v2315 = vrot.slane %v2119, 3
        %v2316 = vrot.slane %v2120, 3
        %v2317 = vrot.slane %v2121, 3
        %v2318 = vrot.slane %v2122, 3
        %v2319 = vrot.slane %v2123, 3
        %v2320 = vrot.slane %v2124, 3
        %v2321 = vrot.slane %v2125, 3
        %v2322 = vrot.slane %v2126, 3
        %v2323 = vrot.slane %v2127, 3
        %v2324 = vrot.slane %v2128, 3
        %v2325 = vrot.slane %v2129, 3
        %v2326 = vrot.slane %v2130, 3
        %v2327 = vrot.slane %v2131, 3
        %v2328 = vrot.slane %v2132, 3
        %v2329 = vrot.slane %v2133, 3
        %v2330 = vrot.slane %v2134, 3
        %v2331 = vrot.slane %v2135, 3
        %v2332 = vrot.slane %v2136, 3
        %v2333 = vrot.slane %v2137, 3
        %v2334 = vrot.slane %v2138, 3
        %v2335 = vrot.slane %v2139, 3
        %v2336 = vrot.slane %v2140, 3
        %v2337 = vrot.slane %v2141, 3
        %v2338 = vrot.slane %v2142, 3
        %v2339 = vrot.slane %v2143, 3
        %vm2340 = vcmask 1040384
        %v2343 = vsel %vm2340, %v2046, %v2242
        %vm2344 = vcmask 1041409
        %v2345 = vsel %vm2344, %v2046, %v2242
        %v2347 = vrot.slane %v2345, 1
        %vm2348 = vcmask 1042434
        %v2349 = vsel %vm2348, %v2046, %v2242
        %v2351 = vrot.slane %v2349, 2
        %vm2352 = vcmask 1043459
        %v2353 = vsel %vm2352, %v2046, %v2242
        %v2355 = vrot.slane %v2353, 3
        %v2358 = vsel %vm2340, %v2047, %v2243
        %v2359 = vsel %vm2344, %v2047, %v2243
        %v2361 = vrot.slane %v2359, 1
        %v2362 = vsel %vm2348, %v2047, %v2243
        %v2364 = vrot.slane %v2362, 2
        %v2365 = vsel %vm2352, %v2047, %v2243
        %v2367 = vrot.slane %v2365, 3
        %v2370 = vsel %vm2340, %v2048, %v2244
        %v2371 = vsel %vm2344, %v2048, %v2244
        %v2373 = vrot.slane %v2371, 1
        %v2374 = vsel %vm2348, %v2048, %v2244
        %v2376 = vrot.slane %v2374, 2
        %v2377 = vsel %vm2352, %v2048, %v2244
        %v2379 = vrot.slane %v2377, 3
        %v2382 = vsel %vm2340, %v2049, %v2245
        %v2383 = vsel %vm2344, %v2049, %v2245
        %v2385 = vrot.slane %v2383, 1
        %v2386 = vsel %vm2348, %v2049, %v2245
        %v2388 = vrot.slane %v2386, 2
        %v2389 = vsel %vm2352, %v2049, %v2245
        %v2391 = vrot.slane %v2389, 3
        %v2394 = vsel %vm2340, %v2050, %v2246
        %v2395 = vsel %vm2344, %v2050, %v2246
        %v2397 = vrot.slane %v2395, 1
        %v2398 = vsel %vm2348, %v2050, %v2246
        %v2400 = vrot.slane %v2398, 2
        %v2401 = vsel %vm2352, %v2050, %v2246
        %v2403 = vrot.slane %v2401, 3
        %v2406 = vsel %vm2340, %v2051, %v2247
        %v2407 = vsel %vm2344, %v2051, %v2247
        %v2409 = vrot.slane %v2407, 1
        %v2410 = vsel %vm2348, %v2051, %v2247
        %v2412 = vrot.slane %v2410, 2
        %v2413 = vsel %vm2352, %v2051, %v2247
        %v2415 = vrot.slane %v2413, 3
        %v2418 = vsel %vm2340, %v2052, %v2248
        %v2419 = vsel %vm2344, %v2052, %v2248
        %v2421 = vrot.slane %v2419, 1
        %v2422 = vsel %vm2348, %v2052, %v2248
        %v2424 = vrot.slane %v2422, 2
        %v2425 = vsel %vm2352, %v2052, %v2248
        %v2427 = vrot.slane %v2425, 3
        %v2430 = vsel %vm2340, %v2053, %v2249
        %v2431 = vsel %vm2344, %v2053, %v2249
        %v2433 = vrot.slane %v2431, 1
        %v2434 = vsel %vm2348, %v2053, %v2249
        %v2436 = vrot.slane %v2434, 2
        %v2437 = vsel %vm2352, %v2053, %v2249
        %v2439 = vrot.slane %v2437, 3
        %v2442 = vsel %vm2340, %v2054, %v2250
        %v2443 = vsel %vm2344, %v2054, %v2250
        %v2445 = vrot.slane %v2443, 1
        %v2446 = vsel %vm2348, %v2054, %v2250
        %v2448 = vrot.slane %v2446, 2
        %v2449 = vsel %vm2352, %v2054, %v2250
        %v2451 = vrot.slane %v2449, 3
        %v2454 = vsel %vm2340, %v2055, %v2251
        %v2455 = vsel %vm2344, %v2055, %v2251
        %v2457 = vrot.slane %v2455, 1
        %v2458 = vsel %vm2348, %v2055, %v2251
        %v2460 = vrot.slane %v2458, 2
        %v2461 = vsel %vm2352, %v2055, %v2251
        %v2463 = vrot.slane %v2461, 3
        %v2466 = vsel %vm2340, %v2056, %v2252
        %v2467 = vsel %vm2344, %v2056, %v2252
        %v2469 = vrot.slane %v2467, 1
        %v2470 = vsel %vm2348, %v2056, %v2252
        %v2472 = vrot.slane %v2470, 2
        %v2473 = vsel %vm2352, %v2056, %v2252
        %v2475 = vrot.slane %v2473, 3
        %v2478 = vsel %vm2340, %v2057, %v2253
        %v2479 = vsel %vm2344, %v2057, %v2253
        %v2481 = vrot.slane %v2479, 1
        %v2482 = vsel %vm2348, %v2057, %v2253
        %v2484 = vrot.slane %v2482, 2
        %v2485 = vsel %vm2352, %v2057, %v2253
        %v2487 = vrot.slane %v2485, 3
        %v2490 = vsel %vm2340, %v2058, %v2254
        %v2491 = vsel %vm2344, %v2058, %v2254
        %v2493 = vrot.slane %v2491, 1
        %v2494 = vsel %vm2348, %v2058, %v2254
        %v2496 = vrot.slane %v2494, 2
        %v2497 = vsel %vm2352, %v2058, %v2254
        %v2499 = vrot.slane %v2497, 3
        %v2502 = vsel %vm2340, %v2059, %v2255
        %v2503 = vsel %vm2344, %v2059, %v2255
        %v2505 = vrot.slane %v2503, 1
        %v2506 = vsel %vm2348, %v2059, %v2255
        %v2508 = vrot.slane %v2506, 2
        %v2509 = vsel %vm2352, %v2059, %v2255
        %v2511 = vrot.slane %v2509, 3
        %v2514 = vsel %vm2340, %v2060, %v2256
        %v2515 = vsel %vm2344, %v2060, %v2256
        %v2517 = vrot.slane %v2515, 1
        %v2518 = vsel %vm2348, %v2060, %v2256
        %v2520 = vrot.slane %v2518, 2
        %v2521 = vsel %vm2352, %v2060, %v2256
        %v2523 = vrot.slane %v2521, 3
        %v2526 = vsel %vm2340, %v2061, %v2257
        %v2527 = vsel %vm2344, %v2061, %v2257
        %v2529 = vrot.slane %v2527, 1
        %v2530 = vsel %vm2348, %v2061, %v2257
        %v2532 = vrot.slane %v2530, 2
        %v2533 = vsel %vm2352, %v2061, %v2257
        %v2535 = vrot.slane %v2533, 3
        %v2538 = vsel %vm2340, %v2062, %v2258
        %v2539 = vsel %vm2344, %v2062, %v2258
        %v2541 = vrot.slane %v2539, 1
        %v2542 = vsel %vm2348, %v2062, %v2258
        %v2544 = vrot.slane %v2542, 2
        %v2545 = vsel %vm2352, %v2062, %v2258
        %v2547 = vrot.slane %v2545, 3
        %v2550 = vsel %vm2340, %v2063, %v2259
        %v2551 = vsel %vm2344, %v2063, %v2259
        %v2553 = vrot.slane %v2551, 1
        %v2554 = vsel %vm2348, %v2063, %v2259
        %v2556 = vrot.slane %v2554, 2
        %v2557 = vsel %vm2352, %v2063, %v2259
        %v2559 = vrot.slane %v2557, 3
        %v2562 = vsel %vm2340, %v2064, %v2260
        %v2563 = vsel %vm2344, %v2064, %v2260
        %v2565 = vrot.slane %v2563, 1
        %v2566 = vsel %vm2348, %v2064, %v2260
        %v2568 = vrot.slane %v2566, 2
        %v2569 = vsel %vm2352, %v2064, %v2260
        %v2571 = vrot.slane %v2569, 3
        %v2574 = vsel %vm2340, %v2065, %v2261
        %v2575 = vsel %vm2344, %v2065, %v2261
        %v2577 = vrot.slane %v2575, 1
        %v2578 = vsel %vm2348, %v2065, %v2261
        %v2580 = vrot.slane %v2578, 2
        %v2581 = vsel %vm2352, %v2065, %v2261
        %v2583 = vrot.slane %v2581, 3
        %v2586 = vsel %vm2340, %v2066, %v2262
        %v2587 = vsel %vm2344, %v2066, %v2262
        %v2589 = vrot.slane %v2587, 1
        %v2590 = vsel %vm2348, %v2066, %v2262
        %v2592 = vrot.slane %v2590, 2
        %v2593 = vsel %vm2352, %v2066, %v2262
        %v2595 = vrot.slane %v2593, 3
        %v2598 = vsel %vm2340, %v2067, %v2263
        %v2599 = vsel %vm2344, %v2067, %v2263
        %v2601 = vrot.slane %v2599, 1
        %v2602 = vsel %vm2348, %v2067, %v2263
        %v2604 = vrot.slane %v2602, 2
        %v2605 = vsel %vm2352, %v2067, %v2263
        %v2607 = vrot.slane %v2605, 3
        %v2610 = vsel %vm2340, %v2068, %v2264
        %v2611 = vsel %vm2344, %v2068, %v2264
        %v2613 = vrot.slane %v2611, 1
        %v2614 = vsel %vm2348, %v2068, %v2264
        %v2616 = vrot.slane %v2614, 2
        %v2617 = vsel %vm2352, %v2068, %v2264
        %v2619 = vrot.slane %v2617, 3
        %v2622 = vsel %vm2340, %v2069, %v2265
        %v2623 = vsel %vm2344, %v2069, %v2265
        %v2625 = vrot.slane %v2623, 1
        %v2626 = vsel %vm2348, %v2069, %v2265
        %v2628 = vrot.slane %v2626, 2
        %v2629 = vsel %vm2352, %v2069, %v2265
        %v2631 = vrot.slane %v2629, 3
        %v2634 = vsel %vm2340, %v2070, %v2266
        %v2635 = vsel %vm2344, %v2070, %v2266
        %v2637 = vrot.slane %v2635, 1
        %v2638 = vsel %vm2348, %v2070, %v2266
        %v2640 = vrot.slane %v2638, 2
        %v2641 = vsel %vm2352, %v2070, %v2266
        %v2643 = vrot.slane %v2641, 3
        %v2646 = vsel %vm2340, %v2071, %v2267
        %v2647 = vsel %vm2344, %v2071, %v2267
        %v2649 = vrot.slane %v2647, 1
        %v2650 = vsel %vm2348, %v2071, %v2267
        %v2652 = vrot.slane %v2650, 2
        %v2653 = vsel %vm2352, %v2071, %v2267
        %v2655 = vrot.slane %v2653, 3
        %v2658 = vsel %vm2340, %v2072, %v2268
        %v2659 = vsel %vm2344, %v2072, %v2268
        %v2661 = vrot.slane %v2659, 1
        %v2662 = vsel %vm2348, %v2072, %v2268
        %v2664 = vrot.slane %v2662, 2
        %v2665 = vsel %vm2352, %v2072, %v2268
        %v2667 = vrot.slane %v2665, 3
        %v2670 = vsel %vm2340, %v2073, %v2269
        %v2671 = vsel %vm2344, %v2073, %v2269
        %v2673 = vrot.slane %v2671, 1
        %v2674 = vsel %vm2348, %v2073, %v2269
        %v2676 = vrot.slane %v2674, 2
        %v2677 = vsel %vm2352, %v2073, %v2269
        %v2679 = vrot.slane %v2677, 3
        %v2682 = vsel %vm2340, %v2074, %v2270
        %v2683 = vsel %vm2344, %v2074, %v2270
        %v2685 = vrot.slane %v2683, 1
        %v2686 = vsel %vm2348, %v2074, %v2270
        %v2688 = vrot.slane %v2686, 2
        %v2689 = vsel %vm2352, %v2074, %v2270
        %v2691 = vrot.slane %v2689, 3
        %v2694 = vsel %vm2340, %v2075, %v2271
        %v2695 = vsel %vm2344, %v2075, %v2271
        %v2697 = vrot.slane %v2695, 1
        %v2698 = vsel %vm2348, %v2075, %v2271
        %v2700 = vrot.slane %v2698, 2
        %v2701 = vsel %vm2352, %v2075, %v2271
        %v2703 = vrot.slane %v2701, 3
        %v2706 = vsel %vm2340, %v2076, %v2272
        %v2707 = vsel %vm2344, %v2076, %v2272
        %v2709 = vrot.slane %v2707, 1
        %v2710 = vsel %vm2348, %v2076, %v2272
        %v2712 = vrot.slane %v2710, 2
        %v2713 = vsel %vm2352, %v2076, %v2272
        %v2715 = vrot.slane %v2713, 3
        %v2718 = vsel %vm2340, %v2077, %v2273
        %v2719 = vsel %vm2344, %v2077, %v2273
        %v2721 = vrot.slane %v2719, 1
        %v2722 = vsel %vm2348, %v2077, %v2273
        %v2724 = vrot.slane %v2722, 2
        %v2725 = vsel %vm2352, %v2077, %v2273
        %v2727 = vrot.slane %v2725, 3
        %v2730 = vsel %vm2340, %v2078, %v2274
        %v2731 = vsel %vm2344, %v2078, %v2274
        %v2733 = vrot.slane %v2731, 1
        %v2734 = vsel %vm2348, %v2078, %v2274
        %v2736 = vrot.slane %v2734, 2
        %v2737 = vsel %vm2352, %v2078, %v2274
        %v2739 = vrot.slane %v2737, 3
        %v2742 = vsel %vm2340, %v2079, %v2275
        %v2743 = vsel %vm2344, %v2079, %v2275
        %v2745 = vrot.slane %v2743, 1
        %v2746 = vsel %vm2348, %v2079, %v2275
        %v2748 = vrot.slane %v2746, 2
        %v2749 = vsel %vm2352, %v2079, %v2275
        %v2751 = vrot.slane %v2749, 3
        %v2754 = vsel %vm2340, %v2080, %v2276
        %v2755 = vsel %vm2344, %v2080, %v2276
        %v2757 = vrot.slane %v2755, 1
        %v2758 = vsel %vm2348, %v2080, %v2276
        %v2760 = vrot.slane %v2758, 2
        %v2761 = vsel %vm2352, %v2080, %v2276
        %v2763 = vrot.slane %v2761, 3
        %v2766 = vsel %vm2340, %v2081, %v2277
        %v2767 = vsel %vm2344, %v2081, %v2277
        %v2769 = vrot.slane %v2767, 1
        %v2770 = vsel %vm2348, %v2081, %v2277
        %v2772 = vrot.slane %v2770, 2
        %v2773 = vsel %vm2352, %v2081, %v2277
        %v2775 = vrot.slane %v2773, 3
        %v2778 = vsel %vm2340, %v2082, %v2278
        %v2779 = vsel %vm2344, %v2082, %v2278
        %v2781 = vrot.slane %v2779, 1
        %v2782 = vsel %vm2348, %v2082, %v2278
        %v2784 = vrot.slane %v2782, 2
        %v2785 = vsel %vm2352, %v2082, %v2278
        %v2787 = vrot.slane %v2785, 3
        %v2790 = vsel %vm2340, %v2083, %v2279
        %v2791 = vsel %vm2344, %v2083, %v2279
        %v2793 = vrot.slane %v2791, 1
        %v2794 = vsel %vm2348, %v2083, %v2279
        %v2796 = vrot.slane %v2794, 2
        %v2797 = vsel %vm2352, %v2083, %v2279
        %v2799 = vrot.slane %v2797, 3
        %v2802 = vsel %vm2340, %v2084, %v2280
        %v2803 = vsel %vm2344, %v2084, %v2280
        %v2805 = vrot.slane %v2803, 1
        %v2806 = vsel %vm2348, %v2084, %v2280
        %v2808 = vrot.slane %v2806, 2
        %v2809 = vsel %vm2352, %v2084, %v2280
        %v2811 = vrot.slane %v2809, 3
        %v2814 = vsel %vm2340, %v2085, %v2281
        %v2815 = vsel %vm2344, %v2085, %v2281
        %v2817 = vrot.slane %v2815, 1
        %v2818 = vsel %vm2348, %v2085, %v2281
        %v2820 = vrot.slane %v2818, 2
        %v2821 = vsel %vm2352, %v2085, %v2281
        %v2823 = vrot.slane %v2821, 3
        %v2826 = vsel %vm2340, %v2086, %v2282
        %v2827 = vsel %vm2344, %v2086, %v2282
        %v2829 = vrot.slane %v2827, 1
        %v2830 = vsel %vm2348, %v2086, %v2282
        %v2832 = vrot.slane %v2830, 2
        %v2833 = vsel %vm2352, %v2086, %v2282
        %v2835 = vrot.slane %v2833, 3
        %v2838 = vsel %vm2340, %v2087, %v2283
        %v2839 = vsel %vm2344, %v2087, %v2283
        %v2841 = vrot.slane %v2839, 1
        %v2842 = vsel %vm2348, %v2087, %v2283
        %v2844 = vrot.slane %v2842, 2
        %v2845 = vsel %vm2352, %v2087, %v2283
        %v2847 = vrot.slane %v2845, 3
        %v2850 = vsel %vm2340, %v2088, %v2284
        %v2851 = vsel %vm2344, %v2088, %v2284
        %v2853 = vrot.slane %v2851, 1
        %v2854 = vsel %vm2348, %v2088, %v2284
        %v2856 = vrot.slane %v2854, 2
        %v2857 = vsel %vm2352, %v2088, %v2284
        %v2859 = vrot.slane %v2857, 3
        %v2862 = vsel %vm2340, %v2089, %v2285
        %v2863 = vsel %vm2344, %v2089, %v2285
        %v2865 = vrot.slane %v2863, 1
        %v2866 = vsel %vm2348, %v2089, %v2285
        %v2868 = vrot.slane %v2866, 2
        %v2869 = vsel %vm2352, %v2089, %v2285
        %v2871 = vrot.slane %v2869, 3
        %v2874 = vsel %vm2340, %v2090, %v2286
        %v2875 = vsel %vm2344, %v2090, %v2286
        %v2877 = vrot.slane %v2875, 1
        %v2878 = vsel %vm2348, %v2090, %v2286
        %v2880 = vrot.slane %v2878, 2
        %v2881 = vsel %vm2352, %v2090, %v2286
        %v2883 = vrot.slane %v2881, 3
        %v2886 = vsel %vm2340, %v2091, %v2287
        %v2887 = vsel %vm2344, %v2091, %v2287
        %v2889 = vrot.slane %v2887, 1
        %v2890 = vsel %vm2348, %v2091, %v2287
        %v2892 = vrot.slane %v2890, 2
        %v2893 = vsel %vm2352, %v2091, %v2287
        %v2895 = vrot.slane %v2893, 3
        %v2898 = vsel %vm2340, %v2092, %v2288
        %v2899 = vsel %vm2344, %v2092, %v2288
        %v2901 = vrot.slane %v2899, 1
        %v2902 = vsel %vm2348, %v2092, %v2288
        %v2904 = vrot.slane %v2902, 2
        %v2905 = vsel %vm2352, %v2092, %v2288
        %v2907 = vrot.slane %v2905, 3
        %v2910 = vsel %vm2340, %v2093, %v2289
        %v2911 = vsel %vm2344, %v2093, %v2289
        %v2913 = vrot.slane %v2911, 1
        %v2914 = vsel %vm2348, %v2093, %v2289
        %v2916 = vrot.slane %v2914, 2
        %v2917 = vsel %vm2352, %v2093, %v2289
        %v2919 = vrot.slane %v2917, 3
        %v2922 = vsel %vm2340, %v2094, %v2290
        %v2923 = vsel %vm2344, %v2094, %v2290
        %v2925 = vrot.slane %v2923, 1
        %v2926 = vsel %vm2348, %v2094, %v2290
        %v2928 = vrot.slane %v2926, 2
        %v2929 = vsel %vm2352, %v2094, %v2290
        %v2931 = vrot.slane %v2929, 3
        %v2934 = vsel %vm2340, %v2095, %v2291
        %v2935 = vsel %vm2344, %v2095, %v2291
        %v2937 = vrot.slane %v2935, 1
        %v2938 = vsel %vm2348, %v2095, %v2291
        %v2940 = vrot.slane %v2938, 2
        %v2941 = vsel %vm2352, %v2095, %v2291
        %v2943 = vrot.slane %v2941, 3
        %v2946 = vsel %vm2340, %v2096, %v2292
        %v2947 = vsel %vm2344, %v2096, %v2292
        %v2949 = vrot.slane %v2947, 1
        %v2950 = vsel %vm2348, %v2096, %v2292
        %v2952 = vrot.slane %v2950, 2
        %v2953 = vsel %vm2352, %v2096, %v2292
        %v2955 = vrot.slane %v2953, 3
        %v2958 = vsel %vm2340, %v2097, %v2293
        %v2959 = vsel %vm2344, %v2097, %v2293
        %v2961 = vrot.slane %v2959, 1
        %v2962 = vsel %vm2348, %v2097, %v2293
        %v2964 = vrot.slane %v2962, 2
        %v2965 = vsel %vm2352, %v2097, %v2293
        %v2967 = vrot.slane %v2965, 3
        %v2970 = vsel %vm2340, %v2098, %v2294
        %v2971 = vsel %vm2344, %v2098, %v2294
        %v2973 = vrot.slane %v2971, 1
        %v2974 = vsel %vm2348, %v2098, %v2294
        %v2976 = vrot.slane %v2974, 2
        %v2977 = vsel %vm2352, %v2098, %v2294
        %v2979 = vrot.slane %v2977, 3
        %v2982 = vsel %vm2340, %v2099, %v2295
        %v2983 = vsel %vm2344, %v2099, %v2295
        %v2985 = vrot.slane %v2983, 1
        %v2986 = vsel %vm2348, %v2099, %v2295
        %v2988 = vrot.slane %v2986, 2
        %v2989 = vsel %vm2352, %v2099, %v2295
        %v2991 = vrot.slane %v2989, 3
        %v2994 = vsel %vm2340, %v2100, %v2296
        %v2995 = vsel %vm2344, %v2100, %v2296
        %v2997 = vrot.slane %v2995, 1
        %v2998 = vsel %vm2348, %v2100, %v2296
        %v3000 = vrot.slane %v2998, 2
        %v3001 = vsel %vm2352, %v2100, %v2296
        %v3003 = vrot.slane %v3001, 3
        %v3006 = vsel %vm2340, %v2101, %v2297
        %v3007 = vsel %vm2344, %v2101, %v2297
        %v3009 = vrot.slane %v3007, 1
        %v3010 = vsel %vm2348, %v2101, %v2297
        %v3012 = vrot.slane %v3010, 2
        %v3013 = vsel %vm2352, %v2101, %v2297
        %v3015 = vrot.slane %v3013, 3
        %v3018 = vsel %vm2340, %v2102, %v2298
        %v3019 = vsel %vm2344, %v2102, %v2298
        %v3021 = vrot.slane %v3019, 1
        %v3022 = vsel %vm2348, %v2102, %v2298
        %v3024 = vrot.slane %v3022, 2
        %v3025 = vsel %vm2352, %v2102, %v2298
        %v3027 = vrot.slane %v3025, 3
        %v3030 = vsel %vm2340, %v2103, %v2299
        %v3031 = vsel %vm2344, %v2103, %v2299
        %v3033 = vrot.slane %v3031, 1
        %v3034 = vsel %vm2348, %v2103, %v2299
        %v3036 = vrot.slane %v3034, 2
        %v3037 = vsel %vm2352, %v2103, %v2299
        %v3039 = vrot.slane %v3037, 3
        %v3042 = vsel %vm2340, %v2104, %v2300
        %v3043 = vsel %vm2344, %v2104, %v2300
        %v3045 = vrot.slane %v3043, 1
        %v3046 = vsel %vm2348, %v2104, %v2300
        %v3048 = vrot.slane %v3046, 2
        %v3049 = vsel %vm2352, %v2104, %v2300
        %v3051 = vrot.slane %v3049, 3
        %v3054 = vsel %vm2340, %v2105, %v2301
        %v3055 = vsel %vm2344, %v2105, %v2301
        %v3057 = vrot.slane %v3055, 1
        %v3058 = vsel %vm2348, %v2105, %v2301
        %v3060 = vrot.slane %v3058, 2
        %v3061 = vsel %vm2352, %v2105, %v2301
        %v3063 = vrot.slane %v3061, 3
        %v3066 = vsel %vm2340, %v2106, %v2302
        %v3067 = vsel %vm2344, %v2106, %v2302
        %v3069 = vrot.slane %v3067, 1
        %v3070 = vsel %vm2348, %v2106, %v2302
        %v3072 = vrot.slane %v3070, 2
        %v3073 = vsel %vm2352, %v2106, %v2302
        %v3075 = vrot.slane %v3073, 3
        %v3078 = vsel %vm2340, %v2107, %v2303
        %v3079 = vsel %vm2344, %v2107, %v2303
        %v3081 = vrot.slane %v3079, 1
        %v3082 = vsel %vm2348, %v2107, %v2303
        %v3084 = vrot.slane %v3082, 2
        %v3085 = vsel %vm2352, %v2107, %v2303
        %v3087 = vrot.slane %v3085, 3
        %v3090 = vsel %vm2340, %v2108, %v2304
        %v3091 = vsel %vm2344, %v2108, %v2304
        %v3093 = vrot.slane %v3091, 1
        %v3094 = vsel %vm2348, %v2108, %v2304
        %v3096 = vrot.slane %v3094, 2
        %v3097 = vsel %vm2352, %v2108, %v2304
        %v3099 = vrot.slane %v3097, 3
        %v3102 = vsel %vm2340, %v2109, %v2305
        %v3103 = vsel %vm2344, %v2109, %v2305
        %v3105 = vrot.slane %v3103, 1
        %v3106 = vsel %vm2348, %v2109, %v2305
        %v3108 = vrot.slane %v3106, 2
        %v3109 = vsel %vm2352, %v2109, %v2305
        %v3111 = vrot.slane %v3109, 3
        %v3114 = vsel %vm2340, %v2110, %v2306
        %v3115 = vsel %vm2344, %v2110, %v2306
        %v3117 = vrot.slane %v3115, 1
        %v3118 = vsel %vm2348, %v2110, %v2306
        %v3120 = vrot.slane %v3118, 2
        %v3121 = vsel %vm2352, %v2110, %v2306
        %v3123 = vrot.slane %v3121, 3
        %v3126 = vsel %vm2340, %v2111, %v2307
        %v3127 = vsel %vm2344, %v2111, %v2307
        %v3129 = vrot.slane %v3127, 1
        %v3130 = vsel %vm2348, %v2111, %v2307
        %v3132 = vrot.slane %v3130, 2
        %v3133 = vsel %vm2352, %v2111, %v2307
        %v3135 = vrot.slane %v3133, 3
        %v3138 = vsel %vm2340, %v2112, %v2308
        %v3139 = vsel %vm2344, %v2112, %v2308
        %v3141 = vrot.slane %v3139, 1
        %v3142 = vsel %vm2348, %v2112, %v2308
        %v3144 = vrot.slane %v3142, 2
        %v3145 = vsel %vm2352, %v2112, %v2308
        %v3147 = vrot.slane %v3145, 3
        %v3150 = vsel %vm2340, %v2113, %v2309
        %v3151 = vsel %vm2344, %v2113, %v2309
        %v3153 = vrot.slane %v3151, 1
        %v3154 = vsel %vm2348, %v2113, %v2309
        %v3156 = vrot.slane %v3154, 2
        %v3157 = vsel %vm2352, %v2113, %v2309
        %v3159 = vrot.slane %v3157, 3
        %v3162 = vsel %vm2340, %v2114, %v2310
        %v3163 = vsel %vm2344, %v2114, %v2310
        %v3165 = vrot.slane %v3163, 1
        %v3166 = vsel %vm2348, %v2114, %v2310
        %v3168 = vrot.slane %v3166, 2
        %v3169 = vsel %vm2352, %v2114, %v2310
        %v3171 = vrot.slane %v3169, 3
        %v3174 = vsel %vm2340, %v2115, %v2311
        %v3175 = vsel %vm2344, %v2115, %v2311
        %v3177 = vrot.slane %v3175, 1
        %v3178 = vsel %vm2348, %v2115, %v2311
        %v3180 = vrot.slane %v3178, 2
        %v3181 = vsel %vm2352, %v2115, %v2311
        %v3183 = vrot.slane %v3181, 3
        %v3186 = vsel %vm2340, %v2116, %v2312
        %v3187 = vsel %vm2344, %v2116, %v2312
        %v3189 = vrot.slane %v3187, 1
        %v3190 = vsel %vm2348, %v2116, %v2312
        %v3192 = vrot.slane %v3190, 2
        %v3193 = vsel %vm2352, %v2116, %v2312
        %v3195 = vrot.slane %v3193, 3
        %v3198 = vsel %vm2340, %v2117, %v2313
        %v3199 = vsel %vm2344, %v2117, %v2313
        %v3201 = vrot.slane %v3199, 1
        %v3202 = vsel %vm2348, %v2117, %v2313
        %v3204 = vrot.slane %v3202, 2
        %v3205 = vsel %vm2352, %v2117, %v2313
        %v3207 = vrot.slane %v3205, 3
        %v3210 = vsel %vm2340, %v2118, %v2314
        %v3211 = vsel %vm2344, %v2118, %v2314
        %v3213 = vrot.slane %v3211, 1
        %v3214 = vsel %vm2348, %v2118, %v2314
        %v3216 = vrot.slane %v3214, 2
        %v3217 = vsel %vm2352, %v2118, %v2314
        %v3219 = vrot.slane %v3217, 3
        %v3222 = vsel %vm2340, %v2119, %v2315
        %v3223 = vsel %vm2344, %v2119, %v2315
        %v3225 = vrot.slane %v3223, 1
        %v3226 = vsel %vm2348, %v2119, %v2315
        %v3228 = vrot.slane %v3226, 2
        %v3229 = vsel %vm2352, %v2119, %v2315
        %v3231 = vrot.slane %v3229, 3
        %v3234 = vsel %vm2340, %v2120, %v2316
        %v3235 = vsel %vm2344, %v2120, %v2316
        %v3237 = vrot.slane %v3235, 1
        %v3238 = vsel %vm2348, %v2120, %v2316
        %v3240 = vrot.slane %v3238, 2
        %v3241 = vsel %vm2352, %v2120, %v2316
        %v3243 = vrot.slane %v3241, 3
        %v3246 = vsel %vm2340, %v2121, %v2317
        %v3247 = vsel %vm2344, %v2121, %v2317
        %v3249 = vrot.slane %v3247, 1
        %v3250 = vsel %vm2348, %v2121, %v2317
        %v3252 = vrot.slane %v3250, 2
        %v3253 = vsel %vm2352, %v2121, %v2317
        %v3255 = vrot.slane %v3253, 3
        %v3258 = vsel %vm2340, %v2122, %v2318
        %v3259 = vsel %vm2344, %v2122, %v2318
        %v3261 = vrot.slane %v3259, 1
        %v3262 = vsel %vm2348, %v2122, %v2318
        %v3264 = vrot.slane %v3262, 2
        %v3265 = vsel %vm2352, %v2122, %v2318
        %v3267 = vrot.slane %v3265, 3
        %v3270 = vsel %vm2340, %v2123, %v2319
        %v3271 = vsel %vm2344, %v2123, %v2319
        %v3273 = vrot.slane %v3271, 1
        %v3274 = vsel %vm2348, %v2123, %v2319
        %v3276 = vrot.slane %v3274, 2
        %v3277 = vsel %vm2352, %v2123, %v2319
        %v3279 = vrot.slane %v3277, 3
        %v3282 = vsel %vm2340, %v2124, %v2320
        %v3283 = vsel %vm2344, %v2124, %v2320
        %v3285 = vrot.slane %v3283, 1
        %v3286 = vsel %vm2348, %v2124, %v2320
        %v3288 = vrot.slane %v3286, 2
        %v3289 = vsel %vm2352, %v2124, %v2320
        %v3291 = vrot.slane %v3289, 3
        %v3294 = vsel %vm2340, %v2125, %v2321
        %v3295 = vsel %vm2344, %v2125, %v2321
        %v3297 = vrot.slane %v3295, 1
        %v3298 = vsel %vm2348, %v2125, %v2321
        %v3300 = vrot.slane %v3298, 2
        %v3301 = vsel %vm2352, %v2125, %v2321
        %v3303 = vrot.slane %v3301, 3
        %v3306 = vsel %vm2340, %v2126, %v2322
        %v3307 = vsel %vm2344, %v2126, %v2322
        %v3309 = vrot.slane %v3307, 1
        %v3310 = vsel %vm2348, %v2126, %v2322
        %v3312 = vrot.slane %v3310, 2
        %v3313 = vsel %vm2352, %v2126, %v2322
        %v3315 = vrot.slane %v3313, 3
        %v3318 = vsel %vm2340, %v2127, %v2323
        %v3319 = vsel %vm2344, %v2127, %v2323
        %v3321 = vrot.slane %v3319, 1
        %v3322 = vsel %vm2348, %v2127, %v2323
        %v3324 = vrot.slane %v3322, 2
        %v3325 = vsel %vm2352, %v2127, %v2323
        %v3327 = vrot.slane %v3325, 3
        %v3330 = vsel %vm2340, %v2128, %v2324
        %v3331 = vsel %vm2344, %v2128, %v2324
        %v3333 = vrot.slane %v3331, 1
        %v3334 = vsel %vm2348, %v2128, %v2324
        %v3336 = vrot.slane %v3334, 2
        %v3337 = vsel %vm2352, %v2128, %v2324
        %v3339 = vrot.slane %v3337, 3
        %v3342 = vsel %vm2340, %v2129, %v2325
        %v3343 = vsel %vm2344, %v2129, %v2325
        %v3345 = vrot.slane %v3343, 1
        %v3346 = vsel %vm2348, %v2129, %v2325
        %v3348 = vrot.slane %v3346, 2
        %v3349 = vsel %vm2352, %v2129, %v2325
        %v3351 = vrot.slane %v3349, 3
        %v3354 = vsel %vm2340, %v2130, %v2326
        %v3355 = vsel %vm2344, %v2130, %v2326
        %v3357 = vrot.slane %v3355, 1
        %v3358 = vsel %vm2348, %v2130, %v2326
        %v3360 = vrot.slane %v3358, 2
        %v3361 = vsel %vm2352, %v2130, %v2326
        %v3363 = vrot.slane %v3361, 3
        %v3366 = vsel %vm2340, %v2131, %v2327
        %v3367 = vsel %vm2344, %v2131, %v2327
        %v3369 = vrot.slane %v3367, 1
        %v3370 = vsel %vm2348, %v2131, %v2327
        %v3372 = vrot.slane %v3370, 2
        %v3373 = vsel %vm2352, %v2131, %v2327
        %v3375 = vrot.slane %v3373, 3
        %v3378 = vsel %vm2340, %v2132, %v2328
        %v3379 = vsel %vm2344, %v2132, %v2328
        %v3381 = vrot.slane %v3379, 1
        %v3382 = vsel %vm2348, %v2132, %v2328
        %v3384 = vrot.slane %v3382, 2
        %v3385 = vsel %vm2352, %v2132, %v2328
        %v3387 = vrot.slane %v3385, 3
        %v3390 = vsel %vm2340, %v2133, %v2329
        %v3391 = vsel %vm2344, %v2133, %v2329
        %v3393 = vrot.slane %v3391, 1
        %v3394 = vsel %vm2348, %v2133, %v2329
        %v3396 = vrot.slane %v3394, 2
        %v3397 = vsel %vm2352, %v2133, %v2329
        %v3399 = vrot.slane %v3397, 3
        %v3402 = vsel %vm2340, %v2134, %v2330
        %v3403 = vsel %vm2344, %v2134, %v2330
        %v3405 = vrot.slane %v3403, 1
        %v3406 = vsel %vm2348, %v2134, %v2330
        %v3408 = vrot.slane %v3406, 2
        %v3409 = vsel %vm2352, %v2134, %v2330
        %v3411 = vrot.slane %v3409, 3
        %v3414 = vsel %vm2340, %v2135, %v2331
        %v3415 = vsel %vm2344, %v2135, %v2331
        %v3417 = vrot.slane %v3415, 1
        %v3418 = vsel %vm2348, %v2135, %v2331
        %v3420 = vrot.slane %v3418, 2
        %v3421 = vsel %vm2352, %v2135, %v2331
        %v3423 = vrot.slane %v3421, 3
        %v3426 = vsel %vm2340, %v2136, %v2332
        %v3427 = vsel %vm2344, %v2136, %v2332
        %v3429 = vrot.slane %v3427, 1
        %v3430 = vsel %vm2348, %v2136, %v2332
        %v3432 = vrot.slane %v3430, 2
        %v3433 = vsel %vm2352, %v2136, %v2332
        %v3435 = vrot.slane %v3433, 3
        %v3438 = vsel %vm2340, %v2137, %v2333
        %v3439 = vsel %vm2344, %v2137, %v2333
        %v3441 = vrot.slane %v3439, 1
        %v3442 = vsel %vm2348, %v2137, %v2333
        %v3444 = vrot.slane %v3442, 2
        %v3445 = vsel %vm2352, %v2137, %v2333
        %v3447 = vrot.slane %v3445, 3
        %v3450 = vsel %vm2340, %v2138, %v2334
        %v3451 = vsel %vm2344, %v2138, %v2334
        %v3453 = vrot.slane %v3451, 1
        %v3454 = vsel %vm2348, %v2138, %v2334
        %v3456 = vrot.slane %v3454, 2
        %v3457 = vsel %vm2352, %v2138, %v2334
        %v3459 = vrot.slane %v3457, 3
        %v3462 = vsel %vm2340, %v2139, %v2335
        %v3463 = vsel %vm2344, %v2139, %v2335
        %v3465 = vrot.slane %v3463, 1
        %v3466 = vsel %vm2348, %v2139, %v2335
        %v3468 = vrot.slane %v3466, 2
        %v3469 = vsel %vm2352, %v2139, %v2335
        %v3471 = vrot.slane %v3469, 3
        %v3474 = vsel %vm2340, %v2140, %v2336
        %v3475 = vsel %vm2344, %v2140, %v2336
        %v3477 = vrot.slane %v3475, 1
        %v3478 = vsel %vm2348, %v2140, %v2336
        %v3480 = vrot.slane %v3478, 2
        %v3481 = vsel %vm2352, %v2140, %v2336
        %v3483 = vrot.slane %v3481, 3
        %v3486 = vsel %vm2340, %v2141, %v2337
        %v3487 = vsel %vm2344, %v2141, %v2337
        %v3489 = vrot.slane %v3487, 1
        %v3490 = vsel %vm2348, %v2141, %v2337
        %v3492 = vrot.slane %v3490, 2
        %v3493 = vsel %vm2352, %v2141, %v2337
        %v3495 = vrot.slane %v3493, 3
        %v3498 = vsel %vm2340, %v2142, %v2338
        %v3499 = vsel %vm2344, %v2142, %v2338
        %v3501 = vrot.slane %v3499, 1
        %v3502 = vsel %vm2348, %v2142, %v2338
        %v3504 = vrot.slane %v3502, 2
        %v3505 = vsel %vm2352, %v2142, %v2338
        %v3507 = vrot.slane %v3505, 3
        %v3510 = vsel %vm2340, %v2143, %v2339
        %v3511 = vsel %vm2344, %v2143, %v2339
        %v3513 = vrot.slane %v3511, 1
        %v3514 = vsel %vm2348, %v2143, %v2339
        %v3516 = vrot.slane %v3514, 2
        %v3517 = vsel %vm2352, %v2143, %v2339
        %v3519 = vrot.slane %v3517, 3
        %vm3520 = vsmask.f32 256
        %vm3521 = vsmask.f32 1284
        %vm3522 = vmor %vm3520, %vm3521
        %vm3523 = vsmask.f32 2312
        %vm3524 = vmor %vm3522, %vm3523
        %vm3525 = vsmask.f32 3340
        %vm3526 = vmor %vm3524, %vm3525
        %vm3527 = vsmask.f32 4368
        %vm3528 = vmor %vm3526, %vm3527
        %vm3529 = vsmask.f32 5396
        %vm3530 = vmor %vm3528, %vm3529
        %vm3531 = vsmask.f32 6424
        %vm3532 = vmor %vm3530, %vm3531
        %vm3533 = vsmask.f32 7452
        %vm3534 = vmor %vm3532, %vm3533
        %v3535 = vshrl.u32 %v2343, 16
        %v3537 = vrot.slane %v3535, 7
        %v3538 = vrot.slane %v3537, 1
        %v3540 = vshll.u32 %v2347, 16
        %v3542 = vsel %vm3534, %v3538, %v3540
        %v3543 = vshrl.u32 %v2347, 16
        %v3545 = vrot.slane %v3543, 7
        %v3546 = vrot.slane %v3545, 1
        %v3548 = vshll.u32 %v2351, 16
        %v3550 = vsel %vm3534, %v3546, %v3548
        %v3551 = vshrl.u32 %v2351, 16
        %v3553 = vrot.slane %v3551, 7
        %v3554 = vrot.slane %v3553, 1
        %v3556 = vshll.u32 %v2355, 16
        %v3558 = vsel %vm3534, %v3554, %v3556
        %v3559 = vshrl.u32 %v2355, 16
        %v3561 = vrot.slane %v3559, 7
        %v3562 = vrot.slane %v3561, 1
        %v3563 = vshll.u32 %v2358, 16
        %v3565 = vsel %vm3534, %v3562, %v3563
        %v3566 = vshrl.u32 %v2358, 16
        %v3568 = vrot.slane %v3566, 7
        %v3569 = vrot.slane %v3568, 1
        %v3571 = vshll.u32 %v2361, 16
        %v3573 = vsel %vm3534, %v3569, %v3571
        %v3574 = vshrl.u32 %v2361, 16
        %v3576 = vrot.slane %v3574, 7
        %v3577 = vrot.slane %v3576, 1
        %v3579 = vshll.u32 %v2364, 16
        %v3581 = vsel %vm3534, %v3577, %v3579
        %v3583 = vshrl.u32 %v2367, 16
        %v3585 = vrot.slane %v3583, 7
        %v3586 = vrot.slane %v3585, 1
        %v3587 = vshll.u32 %v2370, 16
        %v3589 = vsel %vm3534, %v3586, %v3587
        %v3590 = vshrl.u32 %v2370, 16
        %v3592 = vrot.slane %v3590, 7
        %v3593 = vrot.slane %v3592, 1
        %v3595 = vshll.u32 %v2373, 16
        %v3597 = vsel %vm3534, %v3593, %v3595
        %v3598 = vshrl.u32 %v2373, 16
        %v3600 = vrot.slane %v3598, 7
        %v3601 = vrot.slane %v3600, 1
        %v3603 = vshll.u32 %v2376, 16
        %v3605 = vsel %vm3534, %v3601, %v3603
        %v3606 = vshrl.u32 %v2376, 16
        %v3608 = vrot.slane %v3606, 7
        %v3609 = vrot.slane %v3608, 1
        %v3611 = vshll.u32 %v2379, 16
        %v3613 = vsel %vm3534, %v3609, %v3611
        %v3614 = vshrl.u32 %v2379, 16
        %v3616 = vrot.slane %v3614, 7
        %v3617 = vrot.slane %v3616, 1
        %v3618 = vshll.u32 %v2382, 16
        %v3620 = vsel %vm3534, %v3617, %v3618
        %v3621 = vshrl.u32 %v2382, 16
        %v3623 = vrot.slane %v3621, 7
        %v3624 = vrot.slane %v3623, 1
        %v3626 = vshll.u32 %v2385, 16
        %v3628 = vsel %vm3534, %v3624, %v3626
        %v3630 = vshrl.u32 %v2388, 16
        %v3632 = vrot.slane %v3630, 7
        %v3633 = vrot.slane %v3632, 1
        %v3635 = vshll.u32 %v2391, 16
        %v3637 = vsel %vm3534, %v3633, %v3635
        %v3638 = vshrl.u32 %v2391, 16
        %v3640 = vrot.slane %v3638, 7
        %v3641 = vrot.slane %v3640, 1
        %v3642 = vshll.u32 %v2394, 16
        %v3644 = vsel %vm3534, %v3641, %v3642
        %v3645 = vshrl.u32 %v2394, 16
        %v3647 = vrot.slane %v3645, 7
        %v3648 = vrot.slane %v3647, 1
        %v3650 = vshll.u32 %v2397, 16
        %v3652 = vsel %vm3534, %v3648, %v3650
        %v3653 = vshrl.u32 %v2397, 16
        %v3655 = vrot.slane %v3653, 7
        %v3656 = vrot.slane %v3655, 1
        %v3658 = vshll.u32 %v2400, 16
        %v3660 = vsel %vm3534, %v3656, %v3658
        %v3661 = vshrl.u32 %v2400, 16
        %v3663 = vrot.slane %v3661, 7
        %v3664 = vrot.slane %v3663, 1
        %v3666 = vshll.u32 %v2403, 16
        %v3668 = vsel %vm3534, %v3664, %v3666
        %v3669 = vshrl.u32 %v2403, 16
        %v3671 = vrot.slane %v3669, 7
        %v3672 = vrot.slane %v3671, 1
        %v3673 = vshll.u32 %v2406, 16
        %v3675 = vsel %vm3534, %v3672, %v3673
        %v3677 = vshrl.u32 %v2409, 16
        %v3679 = vrot.slane %v3677, 7
        %v3680 = vrot.slane %v3679, 1
        %v3682 = vshll.u32 %v2412, 16
        %v3684 = vsel %vm3534, %v3680, %v3682
        %v3685 = vshrl.u32 %v2412, 16
        %v3687 = vrot.slane %v3685, 7
        %v3688 = vrot.slane %v3687, 1
        %v3690 = vshll.u32 %v2415, 16
        %v3692 = vsel %vm3534, %v3688, %v3690
        %v3693 = vshrl.u32 %v2415, 16
        %v3695 = vrot.slane %v3693, 7
        %v3696 = vrot.slane %v3695, 1
        %v3697 = vshll.u32 %v2418, 16
        %v3699 = vsel %vm3534, %v3696, %v3697
        %v3700 = vshrl.u32 %v2418, 16
        %v3702 = vrot.slane %v3700, 7
        %v3703 = vrot.slane %v3702, 1
        %v3705 = vshll.u32 %v2421, 16
        %v3707 = vsel %vm3534, %v3703, %v3705
        %v3708 = vshrl.u32 %v2421, 16
        %v3710 = vrot.slane %v3708, 7
        %v3711 = vrot.slane %v3710, 1
        %v3713 = vshll.u32 %v2424, 16
        %v3715 = vsel %vm3534, %v3711, %v3713
        %v3716 = vshrl.u32 %v2424, 16
        %v3718 = vrot.slane %v3716, 7
        %v3719 = vrot.slane %v3718, 1
        %v3721 = vshll.u32 %v2427, 16
        %v3723 = vsel %vm3534, %v3719, %v3721
        %v3724 = vshrl.u32 %v2430, 16
        %v3726 = vrot.slane %v3724, 7
        %v3727 = vrot.slane %v3726, 1
        %v3729 = vshll.u32 %v2433, 16
        %v3731 = vsel %vm3534, %v3727, %v3729
        %v3732 = vshrl.u32 %v2433, 16
        %v3734 = vrot.slane %v3732, 7
        %v3735 = vrot.slane %v3734, 1
        %v3737 = vshll.u32 %v2436, 16
        %v3739 = vsel %vm3534, %v3735, %v3737
        %v3740 = vshrl.u32 %v2436, 16
        %v3742 = vrot.slane %v3740, 7
        %v3743 = vrot.slane %v3742, 1
        %v3745 = vshll.u32 %v2439, 16
        %v3747 = vsel %vm3534, %v3743, %v3745
        %v3748 = vshrl.u32 %v2439, 16
        %v3750 = vrot.slane %v3748, 7
        %v3751 = vrot.slane %v3750, 1
        %v3752 = vshll.u32 %v2442, 16
        %v3754 = vsel %vm3534, %v3751, %v3752
        %v3755 = vshrl.u32 %v2442, 16
        %v3757 = vrot.slane %v3755, 7
        %v3758 = vrot.slane %v3757, 1
        %v3760 = vshll.u32 %v2445, 16
        %v3762 = vsel %vm3534, %v3758, %v3760
        %v3763 = vshrl.u32 %v2445, 16
        %v3765 = vrot.slane %v3763, 7
        %v3766 = vrot.slane %v3765, 1
        %v3768 = vshll.u32 %v2448, 16
        %v3770 = vsel %vm3534, %v3766, %v3768
        %v3772 = vshrl.u32 %v2451, 16
        %v3774 = vrot.slane %v3772, 7
        %v3775 = vrot.slane %v3774, 1
        %v3776 = vshll.u32 %v2454, 16
        %v3778 = vsel %vm3534, %v3775, %v3776
        %v3779 = vshrl.u32 %v2454, 16
        %v3781 = vrot.slane %v3779, 7
        %v3782 = vrot.slane %v3781, 1
        %v3784 = vshll.u32 %v2457, 16
        %v3786 = vsel %vm3534, %v3782, %v3784
        %v3787 = vshrl.u32 %v2457, 16
        %v3789 = vrot.slane %v3787, 7
        %v3790 = vrot.slane %v3789, 1
        %v3792 = vshll.u32 %v2460, 16
        %v3794 = vsel %vm3534, %v3790, %v3792
        %v3795 = vshrl.u32 %v2460, 16
        %v3797 = vrot.slane %v3795, 7
        %v3798 = vrot.slane %v3797, 1
        %v3800 = vshll.u32 %v2463, 16
        %v3802 = vsel %vm3534, %v3798, %v3800
        %v3803 = vshrl.u32 %v2463, 16
        %v3805 = vrot.slane %v3803, 7
        %v3806 = vrot.slane %v3805, 1
        %v3807 = vshll.u32 %v2466, 16
        %v3809 = vsel %vm3534, %v3806, %v3807
        %v3810 = vshrl.u32 %v2466, 16
        %v3812 = vrot.slane %v3810, 7
        %v3813 = vrot.slane %v3812, 1
        %v3815 = vshll.u32 %v2469, 16
        %v3817 = vsel %vm3534, %v3813, %v3815
        %v3819 = vshrl.u32 %v2472, 16
        %v3821 = vrot.slane %v3819, 7
        %v3822 = vrot.slane %v3821, 1
        %v3824 = vshll.u32 %v2475, 16
        %v3826 = vsel %vm3534, %v3822, %v3824
        %v3827 = vshrl.u32 %v2475, 16
        %v3829 = vrot.slane %v3827, 7
        %v3830 = vrot.slane %v3829, 1
        %v3831 = vshll.u32 %v2478, 16
        %v3833 = vsel %vm3534, %v3830, %v3831
        %v3834 = vshrl.u32 %v2478, 16
        %v3836 = vrot.slane %v3834, 7
        %v3837 = vrot.slane %v3836, 1
        %v3839 = vshll.u32 %v2481, 16
        %v3841 = vsel %vm3534, %v3837, %v3839
        %v3842 = vshrl.u32 %v2481, 16
        %v3844 = vrot.slane %v3842, 7
        %v3845 = vrot.slane %v3844, 1
        %v3847 = vshll.u32 %v2484, 16
        %v3849 = vsel %vm3534, %v3845, %v3847
        %v3850 = vshrl.u32 %v2484, 16
        %v3852 = vrot.slane %v3850, 7
        %v3853 = vrot.slane %v3852, 1
        %v3855 = vshll.u32 %v2487, 16
        %v3857 = vsel %vm3534, %v3853, %v3855
        %v3858 = vshrl.u32 %v2487, 16
        %v3860 = vrot.slane %v3858, 7
        %v3861 = vrot.slane %v3860, 1
        %v3862 = vshll.u32 %v2490, 16
        %v3864 = vsel %vm3534, %v3861, %v3862
        %v3866 = vshrl.u32 %v2493, 16
        %v3868 = vrot.slane %v3866, 7
        %v3869 = vrot.slane %v3868, 1
        %v3871 = vshll.u32 %v2496, 16
        %v3873 = vsel %vm3534, %v3869, %v3871
        %v3874 = vshrl.u32 %v2496, 16
        %v3876 = vrot.slane %v3874, 7
        %v3877 = vrot.slane %v3876, 1
        %v3879 = vshll.u32 %v2499, 16
        %v3881 = vsel %vm3534, %v3877, %v3879
        %v3882 = vshrl.u32 %v2499, 16
        %v3884 = vrot.slane %v3882, 7
        %v3885 = vrot.slane %v3884, 1
        %v3886 = vshll.u32 %v2502, 16
        %v3888 = vsel %vm3534, %v3885, %v3886
        %v3889 = vshrl.u32 %v2502, 16
        %v3891 = vrot.slane %v3889, 7
        %v3892 = vrot.slane %v3891, 1
        %v3894 = vshll.u32 %v2505, 16
        %v3896 = vsel %vm3534, %v3892, %v3894
        %v3897 = vshrl.u32 %v2505, 16
        %v3899 = vrot.slane %v3897, 7
        %v3900 = vrot.slane %v3899, 1
        %v3902 = vshll.u32 %v2508, 16
        %v3904 = vsel %vm3534, %v3900, %v3902
        %v3905 = vshrl.u32 %v2508, 16
        %v3907 = vrot.slane %v3905, 7
        %v3908 = vrot.slane %v3907, 1
        %v3910 = vshll.u32 %v2511, 16
        %v3912 = vsel %vm3534, %v3908, %v3910
        %v3913 = vshrl.u32 %v2514, 16
        %v3915 = vrot.slane %v3913, 7
        %v3916 = vrot.slane %v3915, 1
        %v3918 = vshll.u32 %v2517, 16
        %v3920 = vsel %vm3534, %v3916, %v3918
        %v3921 = vshrl.u32 %v2517, 16
        %v3923 = vrot.slane %v3921, 7
        %v3924 = vrot.slane %v3923, 1
        %v3926 = vshll.u32 %v2520, 16
        %v3928 = vsel %vm3534, %v3924, %v3926
        %v3929 = vshrl.u32 %v2520, 16
        %v3931 = vrot.slane %v3929, 7
        %v3932 = vrot.slane %v3931, 1
        %v3934 = vshll.u32 %v2523, 16
        %v3936 = vsel %vm3534, %v3932, %v3934
        %v3937 = vshrl.u32 %v2523, 16
        %v3939 = vrot.slane %v3937, 7
        %v3940 = vrot.slane %v3939, 1
        %v3941 = vshll.u32 %v2526, 16
        %v3943 = vsel %vm3534, %v3940, %v3941
        %v3944 = vshrl.u32 %v2526, 16
        %v3946 = vrot.slane %v3944, 7
        %v3947 = vrot.slane %v3946, 1
        %v3949 = vshll.u32 %v2529, 16
        %v3951 = vsel %vm3534, %v3947, %v3949
        %v3952 = vshrl.u32 %v2529, 16
        %v3954 = vrot.slane %v3952, 7
        %v3955 = vrot.slane %v3954, 1
        %v3957 = vshll.u32 %v2532, 16
        %v3959 = vsel %vm3534, %v3955, %v3957
        %v3961 = vshrl.u32 %v2535, 16
        %v3963 = vrot.slane %v3961, 7
        %v3964 = vrot.slane %v3963, 1
        %v3965 = vshll.u32 %v2538, 16
        %v3967 = vsel %vm3534, %v3964, %v3965
        %v3968 = vshrl.u32 %v2538, 16
        %v3970 = vrot.slane %v3968, 7
        %v3971 = vrot.slane %v3970, 1
        %v3973 = vshll.u32 %v2541, 16
        %v3975 = vsel %vm3534, %v3971, %v3973
        %v3976 = vshrl.u32 %v2541, 16
        %v3978 = vrot.slane %v3976, 7
        %v3979 = vrot.slane %v3978, 1
        %v3981 = vshll.u32 %v2544, 16
        %v3983 = vsel %vm3534, %v3979, %v3981
        %v3984 = vshrl.u32 %v2544, 16
        %v3986 = vrot.slane %v3984, 7
        %v3987 = vrot.slane %v3986, 1
        %v3989 = vshll.u32 %v2547, 16
        %v3991 = vsel %vm3534, %v3987, %v3989
        %v3992 = vshrl.u32 %v2547, 16
        %v3994 = vrot.slane %v3992, 7
        %v3995 = vrot.slane %v3994, 1
        %v3996 = vshll.u32 %v2550, 16
        %v3998 = vsel %vm3534, %v3995, %v3996
        %v3999 = vshrl.u32 %v2550, 16
        %v4001 = vrot.slane %v3999, 7
        %v4002 = vrot.slane %v4001, 1
        %v4004 = vshll.u32 %v2553, 16
        %v4006 = vsel %vm3534, %v4002, %v4004
        %v4008 = vshrl.u32 %v2556, 16
        %v4010 = vrot.slane %v4008, 7
        %v4011 = vrot.slane %v4010, 1
        %v4013 = vshll.u32 %v2559, 16
        %v4015 = vsel %vm3534, %v4011, %v4013
        %v4016 = vshrl.u32 %v2559, 16
        %v4018 = vrot.slane %v4016, 7
        %v4019 = vrot.slane %v4018, 1
        %v4020 = vshll.u32 %v2562, 16
        %v4022 = vsel %vm3534, %v4019, %v4020
        %v4023 = vshrl.u32 %v2562, 16
        %v4025 = vrot.slane %v4023, 7
        %v4026 = vrot.slane %v4025, 1
        %v4028 = vshll.u32 %v2565, 16
        %v4030 = vsel %vm3534, %v4026, %v4028
        %v4031 = vshrl.u32 %v2565, 16
        %v4033 = vrot.slane %v4031, 7
        %v4034 = vrot.slane %v4033, 1
        %v4036 = vshll.u32 %v2568, 16
        %v4038 = vsel %vm3534, %v4034, %v4036
        %v4039 = vshrl.u32 %v2568, 16
        %v4041 = vrot.slane %v4039, 7
        %v4042 = vrot.slane %v4041, 1
        %v4044 = vshll.u32 %v2571, 16
        %v4046 = vsel %vm3534, %v4042, %v4044
        %v4047 = vshrl.u32 %v2571, 16
        %v4049 = vrot.slane %v4047, 7
        %v4050 = vrot.slane %v4049, 1
        %v4051 = vshll.u32 %v2574, 16
        %v4053 = vsel %vm3534, %v4050, %v4051
        %v4055 = vshrl.u32 %v2577, 16
        %v4057 = vrot.slane %v4055, 7
        %v4058 = vrot.slane %v4057, 1
        %v4060 = vshll.u32 %v2580, 16
        %v4062 = vsel %vm3534, %v4058, %v4060
        %v4063 = vshrl.u32 %v2580, 16
        %v4065 = vrot.slane %v4063, 7
        %v4066 = vrot.slane %v4065, 1
        %v4068 = vshll.u32 %v2583, 16
        %v4070 = vsel %vm3534, %v4066, %v4068
        %v4071 = vshrl.u32 %v2583, 16
        %v4073 = vrot.slane %v4071, 7
        %v4074 = vrot.slane %v4073, 1
        %v4075 = vshll.u32 %v2586, 16
        %v4077 = vsel %vm3534, %v4074, %v4075
        %v4078 = vshrl.u32 %v2586, 16
        %v4080 = vrot.slane %v4078, 7
        %v4081 = vrot.slane %v4080, 1
        %v4083 = vshll.u32 %v2589, 16
        %v4085 = vsel %vm3534, %v4081, %v4083
        %v4086 = vshrl.u32 %v2589, 16
        %v4088 = vrot.slane %v4086, 7
        %v4089 = vrot.slane %v4088, 1
        %v4091 = vshll.u32 %v2592, 16
        %v4093 = vsel %vm3534, %v4089, %v4091
        %v4094 = vshrl.u32 %v2592, 16
        %v4096 = vrot.slane %v4094, 7
        %v4097 = vrot.slane %v4096, 1
        %v4099 = vshll.u32 %v2595, 16
        %v4101 = vsel %vm3534, %v4097, %v4099
        %v4103 = vshrl.u32 %v2640, 16
        %v4105 = vrot.slane %v4103, 7
        %v4106 = vrot.slane %v4105, 1
        %v4108 = vshll.u32 %v2643, 16
        %v4110 = vsel %vm3534, %v4106, %v4108
        %v4111 = vshrl.u32 %v2643, 16
        %v4113 = vrot.slane %v4111, 7
        %v4114 = vrot.slane %v4113, 1
        %v4115 = vshll.u32 %v2646, 16
        %v4117 = vsel %vm3534, %v4114, %v4115
        %v4118 = vshrl.u32 %v2646, 16
        %v4120 = vrot.slane %v4118, 7
        %v4121 = vrot.slane %v4120, 1
        %v4123 = vshll.u32 %v2649, 16
        %v4125 = vsel %vm3534, %v4121, %v4123
        %v4126 = vshrl.u32 %v2649, 16
        %v4128 = vrot.slane %v4126, 7
        %v4129 = vrot.slane %v4128, 1
        %v4131 = vshll.u32 %v2652, 16
        %v4133 = vsel %vm3534, %v4129, %v4131
        %v4134 = vshrl.u32 %v2652, 16
        %v4136 = vrot.slane %v4134, 7
        %v4137 = vrot.slane %v4136, 1
        %v4139 = vshll.u32 %v2655, 16
        %v4141 = vsel %vm3534, %v4137, %v4139
        %v4142 = vshrl.u32 %v2655, 16
        %v4144 = vrot.slane %v4142, 7
        %v4145 = vrot.slane %v4144, 1
        %v4146 = vshll.u32 %v2658, 16
        %v4148 = vsel %vm3534, %v4145, %v4146
        %v4150 = vshrl.u32 %v2661, 16
        %v4152 = vrot.slane %v4150, 7
        %v4153 = vrot.slane %v4152, 1
        %v4155 = vshll.u32 %v2664, 16
        %v4157 = vsel %vm3534, %v4153, %v4155
        %v4158 = vshrl.u32 %v2664, 16
        %v4160 = vrot.slane %v4158, 7
        %v4161 = vrot.slane %v4160, 1
        %v4163 = vshll.u32 %v2667, 16
        %v4165 = vsel %vm3534, %v4161, %v4163
        %v4166 = vshrl.u32 %v2667, 16
        %v4168 = vrot.slane %v4166, 7
        %v4169 = vrot.slane %v4168, 1
        %v4170 = vshll.u32 %v2670, 16
        %v4172 = vsel %vm3534, %v4169, %v4170
        %v4173 = vshrl.u32 %v2670, 16
        %v4175 = vrot.slane %v4173, 7
        %v4176 = vrot.slane %v4175, 1
        %v4178 = vshll.u32 %v2673, 16
        %v4180 = vsel %vm3534, %v4176, %v4178
        %v4181 = vshrl.u32 %v2673, 16
        %v4183 = vrot.slane %v4181, 7
        %v4184 = vrot.slane %v4183, 1
        %v4186 = vshll.u32 %v2676, 16
        %v4188 = vsel %vm3534, %v4184, %v4186
        %v4189 = vshrl.u32 %v2676, 16
        %v4191 = vrot.slane %v4189, 7
        %v4192 = vrot.slane %v4191, 1
        %v4194 = vshll.u32 %v2679, 16
        %v4196 = vsel %vm3534, %v4192, %v4194
        %v4197 = vshrl.u32 %v2682, 16
        %v4199 = vrot.slane %v4197, 7
        %v4200 = vrot.slane %v4199, 1
        %v4202 = vshll.u32 %v2685, 16
        %v4204 = vsel %vm3534, %v4200, %v4202
        %v4205 = vshrl.u32 %v2685, 16
        %v4207 = vrot.slane %v4205, 7
        %v4208 = vrot.slane %v4207, 1
        %v4210 = vshll.u32 %v2688, 16
        %v4212 = vsel %vm3534, %v4208, %v4210
        %v4213 = vshrl.u32 %v2688, 16
        %v4215 = vrot.slane %v4213, 7
        %v4216 = vrot.slane %v4215, 1
        %v4218 = vshll.u32 %v2691, 16
        %v4220 = vsel %vm3534, %v4216, %v4218
        %v4221 = vshrl.u32 %v2691, 16
        %v4223 = vrot.slane %v4221, 7
        %v4224 = vrot.slane %v4223, 1
        %v4225 = vshll.u32 %v2694, 16
        %v4227 = vsel %vm3534, %v4224, %v4225
        %v4228 = vshrl.u32 %v2694, 16
        %v4230 = vrot.slane %v4228, 7
        %v4231 = vrot.slane %v4230, 1
        %v4233 = vshll.u32 %v2697, 16
        %v4235 = vsel %vm3534, %v4231, %v4233
        %v4236 = vshrl.u32 %v2697, 16
        %v4238 = vrot.slane %v4236, 7
        %v4239 = vrot.slane %v4238, 1
        %v4241 = vshll.u32 %v2700, 16
        %v4243 = vsel %vm3534, %v4239, %v4241
        %v4245 = vshrl.u32 %v2703, 16
        %v4247 = vrot.slane %v4245, 7
        %v4248 = vrot.slane %v4247, 1
        %v4249 = vshll.u32 %v2706, 16
        %v4251 = vsel %vm3534, %v4248, %v4249
        %v4252 = vshrl.u32 %v2706, 16
        %v4254 = vrot.slane %v4252, 7
        %v4255 = vrot.slane %v4254, 1
        %v4257 = vshll.u32 %v2709, 16
        %v4259 = vsel %vm3534, %v4255, %v4257
        %v4260 = vshrl.u32 %v2709, 16
        %v4262 = vrot.slane %v4260, 7
        %v4263 = vrot.slane %v4262, 1
        %v4265 = vshll.u32 %v2712, 16
        %v4267 = vsel %vm3534, %v4263, %v4265
        %v4268 = vshrl.u32 %v2712, 16
        %v4270 = vrot.slane %v4268, 7
        %v4271 = vrot.slane %v4270, 1
        %v4273 = vshll.u32 %v2715, 16
        %v4275 = vsel %vm3534, %v4271, %v4273
        %v4276 = vshrl.u32 %v2715, 16
        %v4278 = vrot.slane %v4276, 7
        %v4279 = vrot.slane %v4278, 1
        %v4280 = vshll.u32 %v2718, 16
        %v4282 = vsel %vm3534, %v4279, %v4280
        %v4283 = vshrl.u32 %v2718, 16
        %v4285 = vrot.slane %v4283, 7
        %v4286 = vrot.slane %v4285, 1
        %v4288 = vshll.u32 %v2721, 16
        %v4290 = vsel %vm3534, %v4286, %v4288
        %v4292 = vshrl.u32 %v2724, 16
        %v4294 = vrot.slane %v4292, 7
        %v4295 = vrot.slane %v4294, 1
        %v4297 = vshll.u32 %v2727, 16
        %v4299 = vsel %vm3534, %v4295, %v4297
        %v4300 = vshrl.u32 %v2727, 16
        %v4302 = vrot.slane %v4300, 7
        %v4303 = vrot.slane %v4302, 1
        %v4304 = vshll.u32 %v2730, 16
        %v4306 = vsel %vm3534, %v4303, %v4304
        %v4307 = vshrl.u32 %v2730, 16
        %v4309 = vrot.slane %v4307, 7
        %v4310 = vrot.slane %v4309, 1
        %v4312 = vshll.u32 %v2733, 16
        %v4314 = vsel %vm3534, %v4310, %v4312
        %v4315 = vshrl.u32 %v2733, 16
        %v4317 = vrot.slane %v4315, 7
        %v4318 = vrot.slane %v4317, 1
        %v4320 = vshll.u32 %v2736, 16
        %v4322 = vsel %vm3534, %v4318, %v4320
        %v4323 = vshrl.u32 %v2736, 16
        %v4325 = vrot.slane %v4323, 7
        %v4326 = vrot.slane %v4325, 1
        %v4328 = vshll.u32 %v2739, 16
        %v4330 = vsel %vm3534, %v4326, %v4328
        %v4331 = vshrl.u32 %v2739, 16
        %v4333 = vrot.slane %v4331, 7
        %v4334 = vrot.slane %v4333, 1
        %v4335 = vshll.u32 %v2742, 16
        %v4337 = vsel %vm3534, %v4334, %v4335
        %v4339 = vshrl.u32 %v2745, 16
        %v4341 = vrot.slane %v4339, 7
        %v4342 = vrot.slane %v4341, 1
        %v4344 = vshll.u32 %v2748, 16
        %v4346 = vsel %vm3534, %v4342, %v4344
        %v4347 = vshrl.u32 %v2748, 16
        %v4349 = vrot.slane %v4347, 7
        %v4350 = vrot.slane %v4349, 1
        %v4352 = vshll.u32 %v2751, 16
        %v4354 = vsel %vm3534, %v4350, %v4352
        %v4355 = vshrl.u32 %v2751, 16
        %v4357 = vrot.slane %v4355, 7
        %v4358 = vrot.slane %v4357, 1
        %v4359 = vshll.u32 %v2754, 16
        %v4361 = vsel %vm3534, %v4358, %v4359
        %v4362 = vshrl.u32 %v2754, 16
        %v4364 = vrot.slane %v4362, 7
        %v4365 = vrot.slane %v4364, 1
        %v4367 = vshll.u32 %v2757, 16
        %v4369 = vsel %vm3534, %v4365, %v4367
        %v4370 = vshrl.u32 %v2757, 16
        %v4372 = vrot.slane %v4370, 7
        %v4373 = vrot.slane %v4372, 1
        %v4375 = vshll.u32 %v2760, 16
        %v4377 = vsel %vm3534, %v4373, %v4375
        %v4378 = vshrl.u32 %v2760, 16
        %v4380 = vrot.slane %v4378, 7
        %v4381 = vrot.slane %v4380, 1
        %v4383 = vshll.u32 %v2763, 16
        %v4385 = vsel %vm3534, %v4381, %v4383
        %v4386 = vshrl.u32 %v2766, 16
        %v4388 = vrot.slane %v4386, 7
        %v4389 = vrot.slane %v4388, 1
        %v4391 = vshll.u32 %v2769, 16
        %v4393 = vsel %vm3534, %v4389, %v4391
        %v4394 = vshrl.u32 %v2769, 16
        %v4396 = vrot.slane %v4394, 7
        %v4397 = vrot.slane %v4396, 1
        %v4399 = vshll.u32 %v2772, 16
        %v4401 = vsel %vm3534, %v4397, %v4399
        %v4402 = vshrl.u32 %v2772, 16
        %v4404 = vrot.slane %v4402, 7
        %v4405 = vrot.slane %v4404, 1
        %v4407 = vshll.u32 %v2775, 16
        %v4409 = vsel %vm3534, %v4405, %v4407
        %v4410 = vshrl.u32 %v2775, 16
        %v4412 = vrot.slane %v4410, 7
        %v4413 = vrot.slane %v4412, 1
        %v4414 = vshll.u32 %v2778, 16
        %v4416 = vsel %vm3534, %v4413, %v4414
        %v4417 = vshrl.u32 %v2778, 16
        %v4419 = vrot.slane %v4417, 7
        %v4420 = vrot.slane %v4419, 1
        %v4422 = vshll.u32 %v2781, 16
        %v4424 = vsel %vm3534, %v4420, %v4422
        %v4425 = vshrl.u32 %v2781, 16
        %v4427 = vrot.slane %v4425, 7
        %v4428 = vrot.slane %v4427, 1
        %v4430 = vshll.u32 %v2784, 16
        %v4432 = vsel %vm3534, %v4428, %v4430
        %v4434 = vshrl.u32 %v2787, 16
        %v4436 = vrot.slane %v4434, 7
        %v4437 = vrot.slane %v4436, 1
        %v4438 = vshll.u32 %v2790, 16
        %v4440 = vsel %vm3534, %v4437, %v4438
        %v4441 = vshrl.u32 %v2790, 16
        %v4443 = vrot.slane %v4441, 7
        %v4444 = vrot.slane %v4443, 1
        %v4446 = vshll.u32 %v2793, 16
        %v4448 = vsel %vm3534, %v4444, %v4446
        %v4449 = vshrl.u32 %v2793, 16
        %v4451 = vrot.slane %v4449, 7
        %v4452 = vrot.slane %v4451, 1
        %v4454 = vshll.u32 %v2796, 16
        %v4456 = vsel %vm3534, %v4452, %v4454
        %v4457 = vshrl.u32 %v2796, 16
        %v4459 = vrot.slane %v4457, 7
        %v4460 = vrot.slane %v4459, 1
        %v4462 = vshll.u32 %v2799, 16
        %v4464 = vsel %vm3534, %v4460, %v4462
        %v4465 = vshrl.u32 %v2799, 16
        %v4467 = vrot.slane %v4465, 7
        %v4468 = vrot.slane %v4467, 1
        %v4469 = vshll.u32 %v2802, 16
        %v4471 = vsel %vm3534, %v4468, %v4469
        %v4472 = vshrl.u32 %v2802, 16
        %v4474 = vrot.slane %v4472, 7
        %v4475 = vrot.slane %v4474, 1
        %v4477 = vshll.u32 %v2805, 16
        %v4479 = vsel %vm3534, %v4475, %v4477
        %v4481 = vshrl.u32 %v2808, 16
        %v4483 = vrot.slane %v4481, 7
        %v4484 = vrot.slane %v4483, 1
        %v4486 = vshll.u32 %v2811, 16
        %v4488 = vsel %vm3534, %v4484, %v4486
        %v4489 = vshrl.u32 %v2811, 16
        %v4491 = vrot.slane %v4489, 7
        %v4492 = vrot.slane %v4491, 1
        %v4493 = vshll.u32 %v2814, 16
        %v4495 = vsel %vm3534, %v4492, %v4493
        %v4496 = vshrl.u32 %v2814, 16
        %v4498 = vrot.slane %v4496, 7
        %v4499 = vrot.slane %v4498, 1
        %v4501 = vshll.u32 %v2817, 16
        %v4503 = vsel %vm3534, %v4499, %v4501
        %v4504 = vshrl.u32 %v2817, 16
        %v4506 = vrot.slane %v4504, 7
        %v4507 = vrot.slane %v4506, 1
        %v4509 = vshll.u32 %v2820, 16
        %v4511 = vsel %vm3534, %v4507, %v4509
        %v4512 = vshrl.u32 %v2820, 16
        %v4514 = vrot.slane %v4512, 7
        %v4515 = vrot.slane %v4514, 1
        %v4517 = vshll.u32 %v2823, 16
        %v4519 = vsel %vm3534, %v4515, %v4517
        %v4520 = vshrl.u32 %v2823, 16
        %v4522 = vrot.slane %v4520, 7
        %v4523 = vrot.slane %v4522, 1
        %v4524 = vshll.u32 %v2826, 16
        %v4526 = vsel %vm3534, %v4523, %v4524
        %v4528 = vshrl.u32 %v2829, 16
        %v4530 = vrot.slane %v4528, 7
        %v4531 = vrot.slane %v4530, 1
        %v4533 = vshll.u32 %v2832, 16
        %v4535 = vsel %vm3534, %v4531, %v4533
        %v4536 = vshrl.u32 %v2832, 16
        %v4538 = vrot.slane %v4536, 7
        %v4539 = vrot.slane %v4538, 1
        %v4541 = vshll.u32 %v2835, 16
        %v4543 = vsel %vm3534, %v4539, %v4541
        %v4544 = vshrl.u32 %v2835, 16
        %v4546 = vrot.slane %v4544, 7
        %v4547 = vrot.slane %v4546, 1
        %v4548 = vshll.u32 %v2838, 16
        %v4550 = vsel %vm3534, %v4547, %v4548
        %v4551 = vshrl.u32 %v2838, 16
        %v4553 = vrot.slane %v4551, 7
        %v4554 = vrot.slane %v4553, 1
        %v4556 = vshll.u32 %v2841, 16
        %v4558 = vsel %vm3534, %v4554, %v4556
        %v4559 = vshrl.u32 %v2841, 16
        %v4561 = vrot.slane %v4559, 7
        %v4562 = vrot.slane %v4561, 1
        %v4564 = vshll.u32 %v2844, 16
        %v4566 = vsel %vm3534, %v4562, %v4564
        %v4567 = vshrl.u32 %v2844, 16
        %v4569 = vrot.slane %v4567, 7
        %v4570 = vrot.slane %v4569, 1
        %v4572 = vshll.u32 %v2847, 16
        %v4574 = vsel %vm3534, %v4570, %v4572
        %v4575 = vshrl.u32 %v2850, 16
        %v4577 = vrot.slane %v4575, 7
        %v4578 = vrot.slane %v4577, 1
        %v4580 = vshll.u32 %v2853, 16
        %v4582 = vsel %vm3534, %v4578, %v4580
        %v4583 = vshrl.u32 %v2853, 16
        %v4585 = vrot.slane %v4583, 7
        %v4586 = vrot.slane %v4585, 1
        %v4588 = vshll.u32 %v2856, 16
        %v4590 = vsel %vm3534, %v4586, %v4588
        %v4591 = vshrl.u32 %v2856, 16
        %v4593 = vrot.slane %v4591, 7
        %v4594 = vrot.slane %v4593, 1
        %v4596 = vshll.u32 %v2859, 16
        %v4598 = vsel %vm3534, %v4594, %v4596
        %v4599 = vshrl.u32 %v2859, 16
        %v4601 = vrot.slane %v4599, 7
        %v4602 = vrot.slane %v4601, 1
        %v4603 = vshll.u32 %v2862, 16
        %v4605 = vsel %vm3534, %v4602, %v4603
        %v4606 = vshrl.u32 %v2862, 16
        %v4608 = vrot.slane %v4606, 7
        %v4609 = vrot.slane %v4608, 1
        %v4611 = vshll.u32 %v2865, 16
        %v4613 = vsel %vm3534, %v4609, %v4611
        %v4614 = vshrl.u32 %v2865, 16
        %v4616 = vrot.slane %v4614, 7
        %v4617 = vrot.slane %v4616, 1
        %v4619 = vshll.u32 %v2868, 16
        %v4621 = vsel %vm3534, %v4617, %v4619
        %v4623 = vshrl.u32 %v2871, 16
        %v4625 = vrot.slane %v4623, 7
        %v4626 = vrot.slane %v4625, 1
        %v4627 = vshll.u32 %v2874, 16
        %v4629 = vsel %vm3534, %v4626, %v4627
        %v4630 = vshrl.u32 %v2874, 16
        %v4632 = vrot.slane %v4630, 7
        %v4633 = vrot.slane %v4632, 1
        %v4635 = vshll.u32 %v2877, 16
        %v4637 = vsel %vm3534, %v4633, %v4635
        %v4638 = vshrl.u32 %v2877, 16
        %v4640 = vrot.slane %v4638, 7
        %v4641 = vrot.slane %v4640, 1
        %v4643 = vshll.u32 %v2880, 16
        %v4645 = vsel %vm3534, %v4641, %v4643
        %v4646 = vshrl.u32 %v2880, 16
        %v4648 = vrot.slane %v4646, 7
        %v4649 = vrot.slane %v4648, 1
        %v4651 = vshll.u32 %v2883, 16
        %v4653 = vsel %vm3534, %v4649, %v4651
        %v4654 = vshrl.u32 %v2883, 16
        %v4656 = vrot.slane %v4654, 7
        %v4657 = vrot.slane %v4656, 1
        %v4658 = vshll.u32 %v2886, 16
        %v4660 = vsel %vm3534, %v4657, %v4658
        %v4661 = vshrl.u32 %v2886, 16
        %v4663 = vrot.slane %v4661, 7
        %v4664 = vrot.slane %v4663, 1
        %v4666 = vshll.u32 %v2889, 16
        %v4668 = vsel %vm3534, %v4664, %v4666
        %v4669 = vshrl.u32 %v2934, 16
        %v4671 = vrot.slane %v4669, 7
        %v4672 = vrot.slane %v4671, 1
        %v4674 = vshll.u32 %v2937, 16
        %v4676 = vsel %vm3534, %v4672, %v4674
        %v4677 = vshrl.u32 %v2937, 16
        %v4679 = vrot.slane %v4677, 7
        %v4680 = vrot.slane %v4679, 1
        %v4682 = vshll.u32 %v2940, 16
        %v4684 = vsel %vm3534, %v4680, %v4682
        %v4685 = vshrl.u32 %v2940, 16
        %v4687 = vrot.slane %v4685, 7
        %v4688 = vrot.slane %v4687, 1
        %v4690 = vshll.u32 %v2943, 16
        %v4692 = vsel %vm3534, %v4688, %v4690
        %v4693 = vshrl.u32 %v2943, 16
        %v4695 = vrot.slane %v4693, 7
        %v4696 = vrot.slane %v4695, 1
        %v4697 = vshll.u32 %v2946, 16
        %v4699 = vsel %vm3534, %v4696, %v4697
        %v4700 = vshrl.u32 %v2946, 16
        %v4702 = vrot.slane %v4700, 7
        %v4703 = vrot.slane %v4702, 1
        %v4705 = vshll.u32 %v2949, 16
        %v4707 = vsel %vm3534, %v4703, %v4705
        %v4708 = vshrl.u32 %v2949, 16
        %v4710 = vrot.slane %v4708, 7
        %v4711 = vrot.slane %v4710, 1
        %v4713 = vshll.u32 %v2952, 16
        %v4715 = vsel %vm3534, %v4711, %v4713
        %v4717 = vshrl.u32 %v2955, 16
        %v4719 = vrot.slane %v4717, 7
        %v4720 = vrot.slane %v4719, 1
        %v4721 = vshll.u32 %v2958, 16
        %v4723 = vsel %vm3534, %v4720, %v4721
        %v4724 = vshrl.u32 %v2958, 16
        %v4726 = vrot.slane %v4724, 7
        %v4727 = vrot.slane %v4726, 1
        %v4729 = vshll.u32 %v2961, 16
        %v4731 = vsel %vm3534, %v4727, %v4729
        %v4732 = vshrl.u32 %v2961, 16
        %v4734 = vrot.slane %v4732, 7
        %v4735 = vrot.slane %v4734, 1
        %v4737 = vshll.u32 %v2964, 16
        %v4739 = vsel %vm3534, %v4735, %v4737
        %v4740 = vshrl.u32 %v2964, 16
        %v4742 = vrot.slane %v4740, 7
        %v4743 = vrot.slane %v4742, 1
        %v4745 = vshll.u32 %v2967, 16
        %v4747 = vsel %vm3534, %v4743, %v4745
        %v4748 = vshrl.u32 %v2967, 16
        %v4750 = vrot.slane %v4748, 7
        %v4751 = vrot.slane %v4750, 1
        %v4752 = vshll.u32 %v2970, 16
        %v4754 = vsel %vm3534, %v4751, %v4752
        %v4755 = vshrl.u32 %v2970, 16
        %v4757 = vrot.slane %v4755, 7
        %v4758 = vrot.slane %v4757, 1
        %v4760 = vshll.u32 %v2973, 16
        %v4762 = vsel %vm3534, %v4758, %v4760
        %v4764 = vshrl.u32 %v2976, 16
        %v4766 = vrot.slane %v4764, 7
        %v4767 = vrot.slane %v4766, 1
        %v4769 = vshll.u32 %v2979, 16
        %v4771 = vsel %vm3534, %v4767, %v4769
        %v4772 = vshrl.u32 %v2979, 16
        %v4774 = vrot.slane %v4772, 7
        %v4775 = vrot.slane %v4774, 1
        %v4776 = vshll.u32 %v2982, 16
        %v4778 = vsel %vm3534, %v4775, %v4776
        %v4779 = vshrl.u32 %v2982, 16
        %v4781 = vrot.slane %v4779, 7
        %v4782 = vrot.slane %v4781, 1
        %v4784 = vshll.u32 %v2985, 16
        %v4786 = vsel %vm3534, %v4782, %v4784
        %v4787 = vshrl.u32 %v2985, 16
        %v4789 = vrot.slane %v4787, 7
        %v4790 = vrot.slane %v4789, 1
        %v4792 = vshll.u32 %v2988, 16
        %v4794 = vsel %vm3534, %v4790, %v4792
        %v4795 = vshrl.u32 %v2988, 16
        %v4797 = vrot.slane %v4795, 7
        %v4798 = vrot.slane %v4797, 1
        %v4800 = vshll.u32 %v2991, 16
        %v4802 = vsel %vm3534, %v4798, %v4800
        %v4803 = vshrl.u32 %v2991, 16
        %v4805 = vrot.slane %v4803, 7
        %v4806 = vrot.slane %v4805, 1
        %v4807 = vshll.u32 %v2994, 16
        %v4809 = vsel %vm3534, %v4806, %v4807
        %v4811 = vshrl.u32 %v2997, 16
        %v4813 = vrot.slane %v4811, 7
        %v4814 = vrot.slane %v4813, 1
        %v4816 = vshll.u32 %v3000, 16
        %v4818 = vsel %vm3534, %v4814, %v4816
        %v4819 = vshrl.u32 %v3000, 16
        %v4821 = vrot.slane %v4819, 7
        %v4822 = vrot.slane %v4821, 1
        %v4824 = vshll.u32 %v3003, 16
        %v4826 = vsel %vm3534, %v4822, %v4824
        %v4827 = vshrl.u32 %v3003, 16
        %v4829 = vrot.slane %v4827, 7
        %v4830 = vrot.slane %v4829, 1
        %v4831 = vshll.u32 %v3006, 16
        %v4833 = vsel %vm3534, %v4830, %v4831
        %v4834 = vshrl.u32 %v3006, 16
        %v4836 = vrot.slane %v4834, 7
        %v4837 = vrot.slane %v4836, 1
        %v4839 = vshll.u32 %v3009, 16
        %v4841 = vsel %vm3534, %v4837, %v4839
        %v4842 = vshrl.u32 %v3009, 16
        %v4844 = vrot.slane %v4842, 7
        %v4845 = vrot.slane %v4844, 1
        %v4847 = vshll.u32 %v3012, 16
        %v4849 = vsel %vm3534, %v4845, %v4847
        %v4850 = vshrl.u32 %v3012, 16
        %v4852 = vrot.slane %v4850, 7
        %v4853 = vrot.slane %v4852, 1
        %v4855 = vshll.u32 %v3015, 16
        %v4857 = vsel %vm3534, %v4853, %v4855
        %v4858 = vshrl.u32 %v3018, 16
        %v4860 = vrot.slane %v4858, 7
        %v4861 = vrot.slane %v4860, 1
        %v4863 = vshll.u32 %v3021, 16
        %v4865 = vsel %vm3534, %v4861, %v4863
        %v4866 = vshrl.u32 %v3021, 16
        %v4868 = vrot.slane %v4866, 7
        %v4869 = vrot.slane %v4868, 1
        %v4871 = vshll.u32 %v3024, 16
        %v4873 = vsel %vm3534, %v4869, %v4871
        %v4874 = vshrl.u32 %v3024, 16
        %v4876 = vrot.slane %v4874, 7
        %v4877 = vrot.slane %v4876, 1
        %v4879 = vshll.u32 %v3027, 16
        %v4881 = vsel %vm3534, %v4877, %v4879
        %v4882 = vshrl.u32 %v3027, 16
        %v4884 = vrot.slane %v4882, 7
        %v4885 = vrot.slane %v4884, 1
        %v4886 = vshll.u32 %v3030, 16
        %v4888 = vsel %vm3534, %v4885, %v4886
        %v4889 = vshrl.u32 %v3030, 16
        %v4891 = vrot.slane %v4889, 7
        %v4892 = vrot.slane %v4891, 1
        %v4894 = vshll.u32 %v3033, 16
        %v4896 = vsel %vm3534, %v4892, %v4894
        %v4897 = vshrl.u32 %v3033, 16
        %v4899 = vrot.slane %v4897, 7
        %v4900 = vrot.slane %v4899, 1
        %v4902 = vshll.u32 %v3036, 16
        %v4904 = vsel %vm3534, %v4900, %v4902
        %v4906 = vshrl.u32 %v3039, 16
        %v4908 = vrot.slane %v4906, 7
        %v4909 = vrot.slane %v4908, 1
        %v4910 = vshll.u32 %v3042, 16
        %v4912 = vsel %vm3534, %v4909, %v4910
        %v4913 = vshrl.u32 %v3042, 16
        %v4915 = vrot.slane %v4913, 7
        %v4916 = vrot.slane %v4915, 1
        %v4918 = vshll.u32 %v3045, 16
        %v4920 = vsel %vm3534, %v4916, %v4918
        %v4921 = vshrl.u32 %v3045, 16
        %v4923 = vrot.slane %v4921, 7
        %v4924 = vrot.slane %v4923, 1
        %v4926 = vshll.u32 %v3048, 16
        %v4928 = vsel %vm3534, %v4924, %v4926
        %v4929 = vshrl.u32 %v3048, 16
        %v4931 = vrot.slane %v4929, 7
        %v4932 = vrot.slane %v4931, 1
        %v4934 = vshll.u32 %v3051, 16
        %v4936 = vsel %vm3534, %v4932, %v4934
        %v4937 = vshrl.u32 %v3051, 16
        %v4939 = vrot.slane %v4937, 7
        %v4940 = vrot.slane %v4939, 1
        %v4941 = vshll.u32 %v3054, 16
        %v4943 = vsel %vm3534, %v4940, %v4941
        %v4944 = vshrl.u32 %v3054, 16
        %v4946 = vrot.slane %v4944, 7
        %v4947 = vrot.slane %v4946, 1
        %v4949 = vshll.u32 %v3057, 16
        %v4951 = vsel %vm3534, %v4947, %v4949
        %v4953 = vshrl.u32 %v3060, 16
        %v4955 = vrot.slane %v4953, 7
        %v4956 = vrot.slane %v4955, 1
        %v4958 = vshll.u32 %v3063, 16
        %v4960 = vsel %vm3534, %v4956, %v4958
        %v4961 = vshrl.u32 %v3063, 16
        %v4963 = vrot.slane %v4961, 7
        %v4964 = vrot.slane %v4963, 1
        %v4965 = vshll.u32 %v3066, 16
        %v4967 = vsel %vm3534, %v4964, %v4965
        %v4968 = vshrl.u32 %v3066, 16
        %v4970 = vrot.slane %v4968, 7
        %v4971 = vrot.slane %v4970, 1
        %v4973 = vshll.u32 %v3069, 16
        %v4975 = vsel %vm3534, %v4971, %v4973
        %v4976 = vshrl.u32 %v3069, 16
        %v4978 = vrot.slane %v4976, 7
        %v4979 = vrot.slane %v4978, 1
        %v4981 = vshll.u32 %v3072, 16
        %v4983 = vsel %vm3534, %v4979, %v4981
        %v4984 = vshrl.u32 %v3072, 16
        %v4986 = vrot.slane %v4984, 7
        %v4987 = vrot.slane %v4986, 1
        %v4989 = vshll.u32 %v3075, 16
        %v4991 = vsel %vm3534, %v4987, %v4989
        %v4992 = vshrl.u32 %v3075, 16
        %v4994 = vrot.slane %v4992, 7
        %v4995 = vrot.slane %v4994, 1
        %v4996 = vshll.u32 %v3078, 16
        %v4998 = vsel %vm3534, %v4995, %v4996
        %v5000 = vshrl.u32 %v3081, 16
        %v5002 = vrot.slane %v5000, 7
        %v5003 = vrot.slane %v5002, 1
        %v5005 = vshll.u32 %v3084, 16
        %v5007 = vsel %vm3534, %v5003, %v5005
        %v5008 = vshrl.u32 %v3084, 16
        %v5010 = vrot.slane %v5008, 7
        %v5011 = vrot.slane %v5010, 1
        %v5013 = vshll.u32 %v3087, 16
        %v5015 = vsel %vm3534, %v5011, %v5013
        %v5016 = vshrl.u32 %v3087, 16
        %v5018 = vrot.slane %v5016, 7
        %v5019 = vrot.slane %v5018, 1
        %v5020 = vshll.u32 %v3090, 16
        %v5022 = vsel %vm3534, %v5019, %v5020
        %v5023 = vshrl.u32 %v3090, 16
        %v5025 = vrot.slane %v5023, 7
        %v5026 = vrot.slane %v5025, 1
        %v5028 = vshll.u32 %v3093, 16
        %v5030 = vsel %vm3534, %v5026, %v5028
        %v5031 = vshrl.u32 %v3093, 16
        %v5033 = vrot.slane %v5031, 7
        %v5034 = vrot.slane %v5033, 1
        %v5036 = vshll.u32 %v3096, 16
        %v5038 = vsel %vm3534, %v5034, %v5036
        %v5039 = vshrl.u32 %v3096, 16
        %v5041 = vrot.slane %v5039, 7
        %v5042 = vrot.slane %v5041, 1
        %v5044 = vshll.u32 %v3099, 16
        %v5046 = vsel %vm3534, %v5042, %v5044
        %v5047 = vshrl.u32 %v3102, 16
        %v5049 = vrot.slane %v5047, 7
        %v5050 = vrot.slane %v5049, 1
        %v5052 = vshll.u32 %v3105, 16
        %v5054 = vsel %vm3534, %v5050, %v5052
        %v5055 = vshrl.u32 %v3105, 16
        %v5057 = vrot.slane %v5055, 7
        %v5058 = vrot.slane %v5057, 1
        %v5060 = vshll.u32 %v3108, 16
        %v5062 = vsel %vm3534, %v5058, %v5060
        %v5063 = vshrl.u32 %v3108, 16
        %v5065 = vrot.slane %v5063, 7
        %v5066 = vrot.slane %v5065, 1
        %v5068 = vshll.u32 %v3111, 16
        %v5070 = vsel %vm3534, %v5066, %v5068
        %v5071 = vshrl.u32 %v3111, 16
        %v5073 = vrot.slane %v5071, 7
        %v5074 = vrot.slane %v5073, 1
        %v5075 = vshll.u32 %v3114, 16
        %v5077 = vsel %vm3534, %v5074, %v5075
        %v5078 = vshrl.u32 %v3114, 16
        %v5080 = vrot.slane %v5078, 7
        %v5081 = vrot.slane %v5080, 1
        %v5083 = vshll.u32 %v3117, 16
        %v5085 = vsel %vm3534, %v5081, %v5083
        %v5086 = vshrl.u32 %v3117, 16
        %v5088 = vrot.slane %v5086, 7
        %v5089 = vrot.slane %v5088, 1
        %v5091 = vshll.u32 %v3120, 16
        %v5093 = vsel %vm3534, %v5089, %v5091
        %v5095 = vshrl.u32 %v3123, 16
        %v5097 = vrot.slane %v5095, 7
        %v5098 = vrot.slane %v5097, 1
        %v5099 = vshll.u32 %v3126, 16
        %v5101 = vsel %vm3534, %v5098, %v5099
        %v5102 = vshrl.u32 %v3126, 16
        %v5104 = vrot.slane %v5102, 7
        %v5105 = vrot.slane %v5104, 1
        %v5107 = vshll.u32 %v3129, 16
        %v5109 = vsel %vm3534, %v5105, %v5107
        %v5110 = vshrl.u32 %v3129, 16
        %v5112 = vrot.slane %v5110, 7
        %v5113 = vrot.slane %v5112, 1
        %v5115 = vshll.u32 %v3132, 16
        %v5117 = vsel %vm3534, %v5113, %v5115
        %v5118 = vshrl.u32 %v3132, 16
        %v5120 = vrot.slane %v5118, 7
        %v5121 = vrot.slane %v5120, 1
        %v5123 = vshll.u32 %v3135, 16
        %v5125 = vsel %vm3534, %v5121, %v5123
        %v5126 = vshrl.u32 %v3135, 16
        %v5128 = vrot.slane %v5126, 7
        %v5129 = vrot.slane %v5128, 1
        %v5130 = vshll.u32 %v3138, 16
        %v5132 = vsel %vm3534, %v5129, %v5130
        %v5133 = vshrl.u32 %v3138, 16
        %v5135 = vrot.slane %v5133, 7
        %v5136 = vrot.slane %v5135, 1
        %v5138 = vshll.u32 %v3141, 16
        %v5140 = vsel %vm3534, %v5136, %v5138
        %v5142 = vshrl.u32 %v3144, 16
        %v5144 = vrot.slane %v5142, 7
        %v5145 = vrot.slane %v5144, 1
        %v5147 = vshll.u32 %v3147, 16
        %v5149 = vsel %vm3534, %v5145, %v5147
        %v5150 = vshrl.u32 %v3147, 16
        %v5152 = vrot.slane %v5150, 7
        %v5153 = vrot.slane %v5152, 1
        %v5154 = vshll.u32 %v3150, 16
        %v5156 = vsel %vm3534, %v5153, %v5154
        %v5157 = vshrl.u32 %v3150, 16
        %v5159 = vrot.slane %v5157, 7
        %v5160 = vrot.slane %v5159, 1
        %v5162 = vshll.u32 %v3153, 16
        %v5164 = vsel %vm3534, %v5160, %v5162
        %v5165 = vshrl.u32 %v3153, 16
        %v5167 = vrot.slane %v5165, 7
        %v5168 = vrot.slane %v5167, 1
        %v5170 = vshll.u32 %v3156, 16
        %v5172 = vsel %vm3534, %v5168, %v5170
        %v5173 = vshrl.u32 %v3156, 16
        %v5175 = vrot.slane %v5173, 7
        %v5176 = vrot.slane %v5175, 1
        %v5178 = vshll.u32 %v3159, 16
        %v5180 = vsel %vm3534, %v5176, %v5178
        %v5181 = vshrl.u32 %v3159, 16
        %v5183 = vrot.slane %v5181, 7
        %v5184 = vrot.slane %v5183, 1
        %v5185 = vshll.u32 %v3162, 16
        %v5187 = vsel %vm3534, %v5184, %v5185
        %v5189 = vshrl.u32 %v3165, 16
        %v5191 = vrot.slane %v5189, 7
        %v5192 = vrot.slane %v5191, 1
        %v5194 = vshll.u32 %v3168, 16
        %v5196 = vsel %vm3534, %v5192, %v5194
        %v5197 = vshrl.u32 %v3168, 16
        %v5199 = vrot.slane %v5197, 7
        %v5200 = vrot.slane %v5199, 1
        %v5202 = vshll.u32 %v3171, 16
        %v5204 = vsel %vm3534, %v5200, %v5202
        %v5205 = vshrl.u32 %v3171, 16
        %v5207 = vrot.slane %v5205, 7
        %v5208 = vrot.slane %v5207, 1
        %v5209 = vshll.u32 %v3174, 16
        %v5211 = vsel %vm3534, %v5208, %v5209
        %v5212 = vshrl.u32 %v3174, 16
        %v5214 = vrot.slane %v5212, 7
        %v5215 = vrot.slane %v5214, 1
        %v5217 = vshll.u32 %v3177, 16
        %v5219 = vsel %vm3534, %v5215, %v5217
        %v5220 = vshrl.u32 %v3177, 16
        %v5222 = vrot.slane %v5220, 7
        %v5223 = vrot.slane %v5222, 1
        %v5225 = vshll.u32 %v3180, 16
        %v5227 = vsel %vm3534, %v5223, %v5225
        %v5228 = vshrl.u32 %v3180, 16
        %v5230 = vrot.slane %v5228, 7
        %v5231 = vrot.slane %v5230, 1
        %v5233 = vshll.u32 %v3183, 16
        %v5235 = vsel %vm3534, %v5231, %v5233
        %v5237 = vshrl.u32 %v3228, 16
        %v5239 = vrot.slane %v5237, 7
        %v5240 = vrot.slane %v5239, 1
        %v5242 = vshll.u32 %v3231, 16
        %v5244 = vsel %vm3534, %v5240, %v5242
        %v5245 = vshrl.u32 %v3231, 16
        %v5247 = vrot.slane %v5245, 7
        %v5248 = vrot.slane %v5247, 1
        %v5249 = vshll.u32 %v3234, 16
        %v5251 = vsel %vm3534, %v5248, %v5249
        %v5252 = vshrl.u32 %v3234, 16
        %v5254 = vrot.slane %v5252, 7
        %v5255 = vrot.slane %v5254, 1
        %v5257 = vshll.u32 %v3237, 16
        %v5259 = vsel %vm3534, %v5255, %v5257
        %v5260 = vshrl.u32 %v3237, 16
        %v5262 = vrot.slane %v5260, 7
        %v5263 = vrot.slane %v5262, 1
        %v5265 = vshll.u32 %v3240, 16
        %v5267 = vsel %vm3534, %v5263, %v5265
        %v5268 = vshrl.u32 %v3240, 16
        %v5270 = vrot.slane %v5268, 7
        %v5271 = vrot.slane %v5270, 1
        %v5273 = vshll.u32 %v3243, 16
        %v5275 = vsel %vm3534, %v5271, %v5273
        %v5276 = vshrl.u32 %v3243, 16
        %v5278 = vrot.slane %v5276, 7
        %v5279 = vrot.slane %v5278, 1
        %v5280 = vshll.u32 %v3246, 16
        %v5282 = vsel %vm3534, %v5279, %v5280
        %v5284 = vshrl.u32 %v3249, 16
        %v5286 = vrot.slane %v5284, 7
        %v5287 = vrot.slane %v5286, 1
        %v5289 = vshll.u32 %v3252, 16
        %v5291 = vsel %vm3534, %v5287, %v5289
        %v5292 = vshrl.u32 %v3252, 16
        %v5294 = vrot.slane %v5292, 7
        %v5295 = vrot.slane %v5294, 1
        %v5297 = vshll.u32 %v3255, 16
        %v5299 = vsel %vm3534, %v5295, %v5297
        %v5300 = vshrl.u32 %v3255, 16
        %v5302 = vrot.slane %v5300, 7
        %v5303 = vrot.slane %v5302, 1
        %v5304 = vshll.u32 %v3258, 16
        %v5306 = vsel %vm3534, %v5303, %v5304
        %v5307 = vshrl.u32 %v3258, 16
        %v5309 = vrot.slane %v5307, 7
        %v5310 = vrot.slane %v5309, 1
        %v5312 = vshll.u32 %v3261, 16
        %v5314 = vsel %vm3534, %v5310, %v5312
        %v5315 = vshrl.u32 %v3261, 16
        %v5317 = vrot.slane %v5315, 7
        %v5318 = vrot.slane %v5317, 1
        %v5320 = vshll.u32 %v3264, 16
        %v5322 = vsel %vm3534, %v5318, %v5320
        %v5323 = vshrl.u32 %v3264, 16
        %v5325 = vrot.slane %v5323, 7
        %v5326 = vrot.slane %v5325, 1
        %v5328 = vshll.u32 %v3267, 16
        %v5330 = vsel %vm3534, %v5326, %v5328
        %v5331 = vshrl.u32 %v3270, 16
        %v5333 = vrot.slane %v5331, 7
        %v5334 = vrot.slane %v5333, 1
        %v5336 = vshll.u32 %v3273, 16
        %v5338 = vsel %vm3534, %v5334, %v5336
        %v5339 = vshrl.u32 %v3273, 16
        %v5341 = vrot.slane %v5339, 7
        %v5342 = vrot.slane %v5341, 1
        %v5344 = vshll.u32 %v3276, 16
        %v5346 = vsel %vm3534, %v5342, %v5344
        %v5347 = vshrl.u32 %v3276, 16
        %v5349 = vrot.slane %v5347, 7
        %v5350 = vrot.slane %v5349, 1
        %v5352 = vshll.u32 %v3279, 16
        %v5354 = vsel %vm3534, %v5350, %v5352
        %v5355 = vshrl.u32 %v3279, 16
        %v5357 = vrot.slane %v5355, 7
        %v5358 = vrot.slane %v5357, 1
        %v5359 = vshll.u32 %v3282, 16
        %v5361 = vsel %vm3534, %v5358, %v5359
        %v5362 = vshrl.u32 %v3282, 16
        %v5364 = vrot.slane %v5362, 7
        %v5365 = vrot.slane %v5364, 1
        %v5367 = vshll.u32 %v3285, 16
        %v5369 = vsel %vm3534, %v5365, %v5367
        %v5370 = vshrl.u32 %v3285, 16
        %v5372 = vrot.slane %v5370, 7
        %v5373 = vrot.slane %v5372, 1
        %v5375 = vshll.u32 %v3288, 16
        %v5377 = vsel %vm3534, %v5373, %v5375
        %v5379 = vshrl.u32 %v3291, 16
        %v5381 = vrot.slane %v5379, 7
        %v5382 = vrot.slane %v5381, 1
        %v5383 = vshll.u32 %v3294, 16
        %v5385 = vsel %vm3534, %v5382, %v5383
        %v5386 = vshrl.u32 %v3294, 16
        %v5388 = vrot.slane %v5386, 7
        %v5389 = vrot.slane %v5388, 1
        %v5391 = vshll.u32 %v3297, 16
        %v5393 = vsel %vm3534, %v5389, %v5391
        %v5394 = vshrl.u32 %v3297, 16
        %v5396 = vrot.slane %v5394, 7
        %v5397 = vrot.slane %v5396, 1
        %v5399 = vshll.u32 %v3300, 16
        %v5401 = vsel %vm3534, %v5397, %v5399
        %v5402 = vshrl.u32 %v3300, 16
        %v5404 = vrot.slane %v5402, 7
        %v5405 = vrot.slane %v5404, 1
        %v5407 = vshll.u32 %v3303, 16
        %v5409 = vsel %vm3534, %v5405, %v5407
        %v5410 = vshrl.u32 %v3303, 16
        %v5412 = vrot.slane %v5410, 7
        %v5413 = vrot.slane %v5412, 1
        %v5414 = vshll.u32 %v3306, 16
        %v5416 = vsel %vm3534, %v5413, %v5414
        %v5417 = vshrl.u32 %v3306, 16
        %v5419 = vrot.slane %v5417, 7
        %v5420 = vrot.slane %v5419, 1
        %v5422 = vshll.u32 %v3309, 16
        %v5424 = vsel %vm3534, %v5420, %v5422
        %v5426 = vshrl.u32 %v3312, 16
        %v5428 = vrot.slane %v5426, 7
        %v5429 = vrot.slane %v5428, 1
        %v5431 = vshll.u32 %v3315, 16
        %v5433 = vsel %vm3534, %v5429, %v5431
        %v5434 = vshrl.u32 %v3315, 16
        %v5436 = vrot.slane %v5434, 7
        %v5437 = vrot.slane %v5436, 1
        %v5438 = vshll.u32 %v3318, 16
        %v5440 = vsel %vm3534, %v5437, %v5438
        %v5441 = vshrl.u32 %v3318, 16
        %v5443 = vrot.slane %v5441, 7
        %v5444 = vrot.slane %v5443, 1
        %v5446 = vshll.u32 %v3321, 16
        %v5448 = vsel %vm3534, %v5444, %v5446
        %v5449 = vshrl.u32 %v3321, 16
        %v5451 = vrot.slane %v5449, 7
        %v5452 = vrot.slane %v5451, 1
        %v5454 = vshll.u32 %v3324, 16
        %v5456 = vsel %vm3534, %v5452, %v5454
        %v5457 = vshrl.u32 %v3324, 16
        %v5459 = vrot.slane %v5457, 7
        %v5460 = vrot.slane %v5459, 1
        %v5462 = vshll.u32 %v3327, 16
        %v5464 = vsel %vm3534, %v5460, %v5462
        %v5465 = vshrl.u32 %v3327, 16
        %v5467 = vrot.slane %v5465, 7
        %v5468 = vrot.slane %v5467, 1
        %v5469 = vshll.u32 %v3330, 16
        %v5471 = vsel %vm3534, %v5468, %v5469
        %v5473 = vshrl.u32 %v3333, 16
        %v5475 = vrot.slane %v5473, 7
        %v5476 = vrot.slane %v5475, 1
        %v5478 = vshll.u32 %v3336, 16
        %v5480 = vsel %vm3534, %v5476, %v5478
        %v5481 = vshrl.u32 %v3336, 16
        %v5483 = vrot.slane %v5481, 7
        %v5484 = vrot.slane %v5483, 1
        %v5486 = vshll.u32 %v3339, 16
        %v5488 = vsel %vm3534, %v5484, %v5486
        %v5489 = vshrl.u32 %v3339, 16
        %v5491 = vrot.slane %v5489, 7
        %v5492 = vrot.slane %v5491, 1
        %v5493 = vshll.u32 %v3342, 16
        %v5495 = vsel %vm3534, %v5492, %v5493
        %v5496 = vshrl.u32 %v3342, 16
        %v5498 = vrot.slane %v5496, 7
        %v5499 = vrot.slane %v5498, 1
        %v5501 = vshll.u32 %v3345, 16
        %v5503 = vsel %vm3534, %v5499, %v5501
        %v5504 = vshrl.u32 %v3345, 16
        %v5506 = vrot.slane %v5504, 7
        %v5507 = vrot.slane %v5506, 1
        %v5509 = vshll.u32 %v3348, 16
        %v5511 = vsel %vm3534, %v5507, %v5509
        %v5512 = vshrl.u32 %v3348, 16
        %v5514 = vrot.slane %v5512, 7
        %v5515 = vrot.slane %v5514, 1
        %v5517 = vshll.u32 %v3351, 16
        %v5519 = vsel %vm3534, %v5515, %v5517
        %v5520 = vshrl.u32 %v3354, 16
        %v5522 = vrot.slane %v5520, 7
        %v5523 = vrot.slane %v5522, 1
        %v5525 = vshll.u32 %v3357, 16
        %v5527 = vsel %vm3534, %v5523, %v5525
        %v5528 = vshrl.u32 %v3357, 16
        %v5530 = vrot.slane %v5528, 7
        %v5531 = vrot.slane %v5530, 1
        %v5533 = vshll.u32 %v3360, 16
        %v5535 = vsel %vm3534, %v5531, %v5533
        %v5536 = vshrl.u32 %v3360, 16
        %v5538 = vrot.slane %v5536, 7
        %v5539 = vrot.slane %v5538, 1
        %v5541 = vshll.u32 %v3363, 16
        %v5543 = vsel %vm3534, %v5539, %v5541
        %v5544 = vshrl.u32 %v3363, 16
        %v5546 = vrot.slane %v5544, 7
        %v5547 = vrot.slane %v5546, 1
        %v5548 = vshll.u32 %v3366, 16
        %v5550 = vsel %vm3534, %v5547, %v5548
        %v5551 = vshrl.u32 %v3366, 16
        %v5553 = vrot.slane %v5551, 7
        %v5554 = vrot.slane %v5553, 1
        %v5556 = vshll.u32 %v3369, 16
        %v5558 = vsel %vm3534, %v5554, %v5556
        %v5559 = vshrl.u32 %v3369, 16
        %v5561 = vrot.slane %v5559, 7
        %v5562 = vrot.slane %v5561, 1
        %v5564 = vshll.u32 %v3372, 16
        %v5566 = vsel %vm3534, %v5562, %v5564
        %v5568 = vshrl.u32 %v3375, 16
        %v5570 = vrot.slane %v5568, 7
        %v5571 = vrot.slane %v5570, 1
        %v5572 = vshll.u32 %v3378, 16
        %v5574 = vsel %vm3534, %v5571, %v5572
        %v5575 = vshrl.u32 %v3378, 16
        %v5577 = vrot.slane %v5575, 7
        %v5578 = vrot.slane %v5577, 1
        %v5580 = vshll.u32 %v3381, 16
        %v5582 = vsel %vm3534, %v5578, %v5580
        %v5583 = vshrl.u32 %v3381, 16
        %v5585 = vrot.slane %v5583, 7
        %v5586 = vrot.slane %v5585, 1
        %v5588 = vshll.u32 %v3384, 16
        %v5590 = vsel %vm3534, %v5586, %v5588
        %v5591 = vshrl.u32 %v3384, 16
        %v5593 = vrot.slane %v5591, 7
        %v5594 = vrot.slane %v5593, 1
        %v5596 = vshll.u32 %v3387, 16
        %v5598 = vsel %vm3534, %v5594, %v5596
        %v5599 = vshrl.u32 %v3387, 16
        %v5601 = vrot.slane %v5599, 7
        %v5602 = vrot.slane %v5601, 1
        %v5603 = vshll.u32 %v3390, 16
        %v5605 = vsel %vm3534, %v5602, %v5603
        %v5606 = vshrl.u32 %v3390, 16
        %v5608 = vrot.slane %v5606, 7
        %v5609 = vrot.slane %v5608, 1
        %v5611 = vshll.u32 %v3393, 16
        %v5613 = vsel %vm3534, %v5609, %v5611
        %v5615 = vshrl.u32 %v3396, 16
        %v5617 = vrot.slane %v5615, 7
        %v5618 = vrot.slane %v5617, 1
        %v5620 = vshll.u32 %v3399, 16
        %v5622 = vsel %vm3534, %v5618, %v5620
        %v5623 = vshrl.u32 %v3399, 16
        %v5625 = vrot.slane %v5623, 7
        %v5626 = vrot.slane %v5625, 1
        %v5627 = vshll.u32 %v3402, 16
        %v5629 = vsel %vm3534, %v5626, %v5627
        %v5630 = vshrl.u32 %v3402, 16
        %v5632 = vrot.slane %v5630, 7
        %v5633 = vrot.slane %v5632, 1
        %v5635 = vshll.u32 %v3405, 16
        %v5637 = vsel %vm3534, %v5633, %v5635
        %v5638 = vshrl.u32 %v3405, 16
        %v5640 = vrot.slane %v5638, 7
        %v5641 = vrot.slane %v5640, 1
        %v5643 = vshll.u32 %v3408, 16
        %v5645 = vsel %vm3534, %v5641, %v5643
        %v5646 = vshrl.u32 %v3408, 16
        %v5648 = vrot.slane %v5646, 7
        %v5649 = vrot.slane %v5648, 1
        %v5651 = vshll.u32 %v3411, 16
        %v5653 = vsel %vm3534, %v5649, %v5651
        %v5654 = vshrl.u32 %v3411, 16
        %v5656 = vrot.slane %v5654, 7
        %v5657 = vrot.slane %v5656, 1
        %v5658 = vshll.u32 %v3414, 16
        %v5660 = vsel %vm3534, %v5657, %v5658
        %v5662 = vshrl.u32 %v3417, 16
        %v5664 = vrot.slane %v5662, 7
        %v5665 = vrot.slane %v5664, 1
        %v5667 = vshll.u32 %v3420, 16
        %v5669 = vsel %vm3534, %v5665, %v5667
        %v5670 = vshrl.u32 %v3420, 16
        %v5672 = vrot.slane %v5670, 7
        %v5673 = vrot.slane %v5672, 1
        %v5675 = vshll.u32 %v3423, 16
        %v5677 = vsel %vm3534, %v5673, %v5675
        %v5678 = vshrl.u32 %v3423, 16
        %v5680 = vrot.slane %v5678, 7
        %v5681 = vrot.slane %v5680, 1
        %v5682 = vshll.u32 %v3426, 16
        %v5684 = vsel %vm3534, %v5681, %v5682
        %v5685 = vshrl.u32 %v3426, 16
        %v5687 = vrot.slane %v5685, 7
        %v5688 = vrot.slane %v5687, 1
        %v5690 = vshll.u32 %v3429, 16
        %v5692 = vsel %vm3534, %v5688, %v5690
        %v5693 = vshrl.u32 %v3429, 16
        %v5695 = vrot.slane %v5693, 7
        %v5696 = vrot.slane %v5695, 1
        %v5698 = vshll.u32 %v3432, 16
        %v5700 = vsel %vm3534, %v5696, %v5698
        %v5701 = vshrl.u32 %v3432, 16
        %v5703 = vrot.slane %v5701, 7
        %v5704 = vrot.slane %v5703, 1
        %v5706 = vshll.u32 %v3435, 16
        %v5708 = vsel %vm3534, %v5704, %v5706
        %v5709 = vshrl.u32 %v3438, 16
        %v5711 = vrot.slane %v5709, 7
        %v5712 = vrot.slane %v5711, 1
        %v5714 = vshll.u32 %v3441, 16
        %v5716 = vsel %vm3534, %v5712, %v5714
        %v5717 = vshrl.u32 %v3441, 16
        %v5719 = vrot.slane %v5717, 7
        %v5720 = vrot.slane %v5719, 1
        %v5722 = vshll.u32 %v3444, 16
        %v5724 = vsel %vm3534, %v5720, %v5722
        %v5725 = vshrl.u32 %v3444, 16
        %v5727 = vrot.slane %v5725, 7
        %v5728 = vrot.slane %v5727, 1
        %v5730 = vshll.u32 %v3447, 16
        %v5732 = vsel %vm3534, %v5728, %v5730
        %v5733 = vshrl.u32 %v3447, 16
        %v5735 = vrot.slane %v5733, 7
        %v5736 = vrot.slane %v5735, 1
        %v5737 = vshll.u32 %v3450, 16
        %v5739 = vsel %vm3534, %v5736, %v5737
        %v5740 = vshrl.u32 %v3450, 16
        %v5742 = vrot.slane %v5740, 7
        %v5743 = vrot.slane %v5742, 1
        %v5745 = vshll.u32 %v3453, 16
        %v5747 = vsel %vm3534, %v5743, %v5745
        %v5748 = vshrl.u32 %v3453, 16
        %v5750 = vrot.slane %v5748, 7
        %v5751 = vrot.slane %v5750, 1
        %v5753 = vshll.u32 %v3456, 16
        %v5755 = vsel %vm3534, %v5751, %v5753
        %v5757 = vshrl.u32 %v3459, 16
        %v5759 = vrot.slane %v5757, 7
        %v5760 = vrot.slane %v5759, 1
        %v5761 = vshll.u32 %v3462, 16
        %v5763 = vsel %vm3534, %v5760, %v5761
        %v5764 = vshrl.u32 %v3462, 16
        %v5766 = vrot.slane %v5764, 7
        %v5767 = vrot.slane %v5766, 1
        %v5769 = vshll.u32 %v3465, 16
        %v5771 = vsel %vm3534, %v5767, %v5769
        %v5772 = vshrl.u32 %v3465, 16
        %v5774 = vrot.slane %v5772, 7
        %v5775 = vrot.slane %v5774, 1
        %v5777 = vshll.u32 %v3468, 16
        %v5779 = vsel %vm3534, %v5775, %v5777
        %v5780 = vshrl.u32 %v3468, 16
        %v5782 = vrot.slane %v5780, 7
        %v5783 = vrot.slane %v5782, 1
        %v5785 = vshll.u32 %v3471, 16
        %v5787 = vsel %vm3534, %v5783, %v5785
        %v5788 = vshrl.u32 %v3471, 16
        %v5790 = vrot.slane %v5788, 7
        %v5791 = vrot.slane %v5790, 1
        %v5792 = vshll.u32 %v3474, 16
        %v5794 = vsel %vm3534, %v5791, %v5792
        %v5795 = vshrl.u32 %v3474, 16
        %v5797 = vrot.slane %v5795, 7
        %v5798 = vrot.slane %v5797, 1
        %v5800 = vshll.u32 %v3477, 16
        %v5802 = vsel %vm3534, %v5798, %v5800
        %v5803 = vshrl.u32 %v2598, 16
        %v5805 = vrot.slane %v5803, 7
        %v5806 = vrot.slane %v5805, 1
        %v5808 = vshll.u32 %v2601, 16
        %v5810 = vsel %vm3534, %v5806, %v5808
        %v5811 = vshrl.u32 %v2601, 16
        %v5813 = vrot.slane %v5811, 7
        %v5814 = vrot.slane %v5813, 1
        %v5816 = vshll.u32 %v2604, 16
        %v5818 = vsel %vm3534, %v5814, %v5816
        %v5819 = vshrl.u32 %v2604, 16
        %v5821 = vrot.slane %v5819, 7
        %v5822 = vrot.slane %v5821, 1
        %v5824 = vshll.u32 %v2607, 16
        %v5826 = vsel %vm3534, %v5822, %v5824
        %v5827 = vshrl.u32 %v2607, 16
        %v5829 = vrot.slane %v5827, 7
        %v5830 = vrot.slane %v5829, 1
        %v5831 = vshll.u32 %v2610, 16
        %v5833 = vsel %vm3534, %v5830, %v5831
        %v5834 = vshrl.u32 %v2610, 16
        %v5836 = vrot.slane %v5834, 7
        %v5837 = vrot.slane %v5836, 1
        %v5839 = vshll.u32 %v2613, 16
        %v5841 = vsel %vm3534, %v5837, %v5839
        %v5842 = vshrl.u32 %v2613, 16
        %v5844 = vrot.slane %v5842, 7
        %v5845 = vrot.slane %v5844, 1
        %v5847 = vshll.u32 %v2616, 16
        %v5849 = vsel %vm3534, %v5845, %v5847
        %v5851 = vshrl.u32 %v2892, 16
        %v5853 = vrot.slane %v5851, 7
        %v5854 = vrot.slane %v5853, 1
        %v5856 = vshll.u32 %v2895, 16
        %v5858 = vsel %vm3534, %v5854, %v5856
        %v5859 = vshrl.u32 %v2895, 16
        %v5861 = vrot.slane %v5859, 7
        %v5862 = vrot.slane %v5861, 1
        %v5863 = vshll.u32 %v2898, 16
        %v5865 = vsel %vm3534, %v5862, %v5863
        %v5866 = vshrl.u32 %v2898, 16
        %v5868 = vrot.slane %v5866, 7
        %v5869 = vrot.slane %v5868, 1
        %v5871 = vshll.u32 %v2901, 16
        %v5873 = vsel %vm3534, %v5869, %v5871
        %v5874 = vshrl.u32 %v2901, 16
        %v5876 = vrot.slane %v5874, 7
        %v5877 = vrot.slane %v5876, 1
        %v5879 = vshll.u32 %v2904, 16
        %v5881 = vsel %vm3534, %v5877, %v5879
        %v5882 = vshrl.u32 %v2904, 16
        %v5884 = vrot.slane %v5882, 7
        %v5885 = vrot.slane %v5884, 1
        %v5887 = vshll.u32 %v2907, 16
        %v5889 = vsel %vm3534, %v5885, %v5887
        %v5890 = vshrl.u32 %v2907, 16
        %v5892 = vrot.slane %v5890, 7
        %v5893 = vrot.slane %v5892, 1
        %v5894 = vshll.u32 %v2910, 16
        %v5896 = vsel %vm3534, %v5893, %v5894
        %v5897 = vshrl.u32 %v3186, 16
        %v5899 = vrot.slane %v5897, 7
        %v5900 = vrot.slane %v5899, 1
        %v5902 = vshll.u32 %v3189, 16
        %v5904 = vsel %vm3534, %v5900, %v5902
        %v5905 = vshrl.u32 %v3189, 16
        %v5907 = vrot.slane %v5905, 7
        %v5908 = vrot.slane %v5907, 1
        %v5910 = vshll.u32 %v3192, 16
        %v5912 = vsel %vm3534, %v5908, %v5910
        %v5913 = vshrl.u32 %v3192, 16
        %v5915 = vrot.slane %v5913, 7
        %v5916 = vrot.slane %v5915, 1
        %v5918 = vshll.u32 %v3195, 16
        %v5920 = vsel %vm3534, %v5916, %v5918
        %v5921 = vshrl.u32 %v3195, 16
        %v5923 = vrot.slane %v5921, 7
        %v5924 = vrot.slane %v5923, 1
        %v5925 = vshll.u32 %v3198, 16
        %v5927 = vsel %vm3534, %v5924, %v5925
        %v5928 = vshrl.u32 %v3198, 16
        %v5930 = vrot.slane %v5928, 7
        %v5931 = vrot.slane %v5930, 1
        %v5933 = vshll.u32 %v3201, 16
        %v5935 = vsel %vm3534, %v5931, %v5933
        %v5936 = vshrl.u32 %v3201, 16
        %v5938 = vrot.slane %v5936, 7
        %v5939 = vrot.slane %v5938, 1
        %v5941 = vshll.u32 %v3204, 16
        %v5943 = vsel %vm3534, %v5939, %v5941
        %v5945 = vshrl.u32 %v3480, 16
        %v5947 = vrot.slane %v5945, 7
        %v5948 = vrot.slane %v5947, 1
        %v5950 = vshll.u32 %v3483, 16
        %v5952 = vsel %vm3534, %v5948, %v5950
        %v5953 = vshrl.u32 %v3483, 16
        %v5955 = vrot.slane %v5953, 7
        %v5956 = vrot.slane %v5955, 1
        %v5957 = vshll.u32 %v3486, 16
        %v5959 = vsel %vm3534, %v5956, %v5957
        %v5960 = vshrl.u32 %v3486, 16
        %v5962 = vrot.slane %v5960, 7
        %v5963 = vrot.slane %v5962, 1
        %v5965 = vshll.u32 %v3489, 16
        %v5967 = vsel %vm3534, %v5963, %v5965
        %v5968 = vshrl.u32 %v3489, 16
        %v5970 = vrot.slane %v5968, 7
        %v5971 = vrot.slane %v5970, 1
        %v5973 = vshll.u32 %v3492, 16
        %v5975 = vsel %vm3534, %v5971, %v5973
        %v5976 = vshrl.u32 %v3492, 16
        %v5978 = vrot.slane %v5976, 7
        %v5979 = vrot.slane %v5978, 1
        %v5981 = vshll.u32 %v3495, 16
        %v5983 = vsel %vm3534, %v5979, %v5981
        %v5984 = vshrl.u32 %v3495, 16
        %v5986 = vrot.slane %v5984, 7
        %v5987 = vrot.slane %v5986, 1
        %v5988 = vshll.u32 %v3498, 16
        %v5990 = vsel %vm3534, %v5987, %v5988
        %v5992 = vshrl.u32 %v2619, 16
        %v5994 = vrot.slane %v5992, 7
        %v5995 = vrot.slane %v5994, 1
        %v5996 = vshll.u32 %v2622, 16
        %v5998 = vsel %vm3534, %v5995, %v5996
        %v5999 = vshrl.u32 %v2622, 16
        %v6001 = vrot.slane %v5999, 7
        %v6002 = vrot.slane %v6001, 1
        %v6004 = vshll.u32 %v2625, 16
        %v6006 = vsel %vm3534, %v6002, %v6004
        %v6007 = vshrl.u32 %v2625, 16
        %v6009 = vrot.slane %v6007, 7
        %v6010 = vrot.slane %v6009, 1
        %v6012 = vshll.u32 %v2628, 16
        %v6014 = vsel %vm3534, %v6010, %v6012
        %v6015 = vshrl.u32 %v2628, 16
        %v6017 = vrot.slane %v6015, 7
        %v6018 = vrot.slane %v6017, 1
        %v6020 = vshll.u32 %v2631, 16
        %v6022 = vsel %vm3534, %v6018, %v6020
        %v6023 = vshrl.u32 %v2631, 16
        %v6025 = vrot.slane %v6023, 7
        %v6026 = vrot.slane %v6025, 1
        %v6027 = vshll.u32 %v2634, 16
        %v6029 = vsel %vm3534, %v6026, %v6027
        %v6030 = vshrl.u32 %v2634, 16
        %v6032 = vrot.slane %v6030, 7
        %v6033 = vrot.slane %v6032, 1
        %v6035 = vshll.u32 %v2637, 16
        %v6037 = vsel %vm3534, %v6033, %v6035
        %v6039 = vshrl.u32 %v2913, 16
        %v6041 = vrot.slane %v6039, 7
        %v6042 = vrot.slane %v6041, 1
        %v6044 = vshll.u32 %v2916, 16
        %v6046 = vsel %vm3534, %v6042, %v6044
        %v6047 = vshrl.u32 %v2916, 16
        %v6049 = vrot.slane %v6047, 7
        %v6050 = vrot.slane %v6049, 1
        %v6052 = vshll.u32 %v2919, 16
        %v6054 = vsel %vm3534, %v6050, %v6052
        %v6055 = vshrl.u32 %v2919, 16
        %v6057 = vrot.slane %v6055, 7
        %v6058 = vrot.slane %v6057, 1
        %v6059 = vshll.u32 %v2922, 16
        %v6061 = vsel %vm3534, %v6058, %v6059
        %v6062 = vshrl.u32 %v2922, 16
        %v6064 = vrot.slane %v6062, 7
        %v6065 = vrot.slane %v6064, 1
        %v6067 = vshll.u32 %v2925, 16
        %v6069 = vsel %vm3534, %v6065, %v6067
        %v6070 = vshrl.u32 %v2925, 16
        %v6072 = vrot.slane %v6070, 7
        %v6073 = vrot.slane %v6072, 1
        %v6075 = vshll.u32 %v2928, 16
        %v6077 = vsel %vm3534, %v6073, %v6075
        %v6078 = vshrl.u32 %v2928, 16
        %v6080 = vrot.slane %v6078, 7
        %v6081 = vrot.slane %v6080, 1
        %v6083 = vshll.u32 %v2931, 16
        %v6085 = vsel %vm3534, %v6081, %v6083
        %v6087 = vshrl.u32 %v3207, 16
        %v6089 = vrot.slane %v6087, 7
        %v6090 = vrot.slane %v6089, 1
        %v6091 = vshll.u32 %v3210, 16
        %v6093 = vsel %vm3534, %v6090, %v6091
        %v6094 = vshrl.u32 %v3210, 16
        %v6096 = vrot.slane %v6094, 7
        %v6097 = vrot.slane %v6096, 1
        %v6099 = vshll.u32 %v3213, 16
        %v6101 = vsel %vm3534, %v6097, %v6099
        %v6102 = vshrl.u32 %v3213, 16
        %v6104 = vrot.slane %v6102, 7
        %v6105 = vrot.slane %v6104, 1
        %v6107 = vshll.u32 %v3216, 16
        %v6109 = vsel %vm3534, %v6105, %v6107
        %v6110 = vshrl.u32 %v3216, 16
        %v6112 = vrot.slane %v6110, 7
        %v6113 = vrot.slane %v6112, 1
        %v6115 = vshll.u32 %v3219, 16
        %v6117 = vsel %vm3534, %v6113, %v6115
        %v6118 = vshrl.u32 %v3219, 16
        %v6120 = vrot.slane %v6118, 7
        %v6121 = vrot.slane %v6120, 1
        %v6122 = vshll.u32 %v3222, 16
        %v6124 = vsel %vm3534, %v6121, %v6122
        %v6125 = vshrl.u32 %v3222, 16
        %v6127 = vrot.slane %v6125, 7
        %v6128 = vrot.slane %v6127, 1
        %v6130 = vshll.u32 %v3225, 16
        %v6132 = vsel %vm3534, %v6128, %v6130
        %v6134 = vshrl.u32 %v3501, 16
        %v6136 = vrot.slane %v6134, 7
        %v6137 = vrot.slane %v6136, 1
        %v6139 = vshll.u32 %v3504, 16
        %v6141 = vsel %vm3534, %v6137, %v6139
        %v6142 = vshrl.u32 %v3504, 16
        %v6144 = vrot.slane %v6142, 7
        %v6145 = vrot.slane %v6144, 1
        %v6147 = vshll.u32 %v3507, 16
        %v6149 = vsel %vm3534, %v6145, %v6147
        %v6150 = vshrl.u32 %v3507, 16
        %v6152 = vrot.slane %v6150, 7
        %v6153 = vrot.slane %v6152, 1
        %v6154 = vshll.u32 %v3510, 16
        %v6156 = vsel %vm3534, %v6153, %v6154
        %v6157 = vshrl.u32 %v3510, 16
        %v6159 = vrot.slane %v6157, 7
        %v6160 = vrot.slane %v6159, 1
        %v6162 = vshll.u32 %v3513, 16
        %v6164 = vsel %vm3534, %v6160, %v6162
        %v6165 = vshrl.u32 %v3513, 16
        %v6167 = vrot.slane %v6165, 7
        %v6168 = vrot.slane %v6167, 1
        %v6170 = vshll.u32 %v3516, 16
        %v6172 = vsel %vm3534, %v6168, %v6170
        %v6173 = vshrl.u32 %v3516, 16
        %v6175 = vrot.slane %v6173, 7
        %v6176 = vrot.slane %v6175, 1
        %v6178 = vshll.u32 %v3519, 16
        %v6180 = vsel %vm3534, %v6176, %v6178
        %6181 = vst [vmem:[#allocation1] ss:$9 sm:$0xff] %v2343
        %s6182 = scalar_lea.vmem [#allocation1], 1
        %6183 = vst [vmem:[%s6182] ss:$9 sm:$0xff] %v2347
        %s6184 = scalar_lea.vmem [#allocation1], 2
        %6185 = vst [vmem:[%s6184] ss:$9 sm:$0xff] %v2351
        %s6186 = scalar_lea.vmem [#allocation1], 3
        %6187 = vst [vmem:[%s6186] ss:$9 sm:$0xff] %v2355
        %s6188 = scalar_lea.vmem [#allocation1], 4
        %6189 = vst [vmem:[%s6188] ss:$9 sm:$0xff] %v2358
        %s6190 = scalar_lea.vmem [#allocation1], 5
        %6191 = vst [vmem:[%s6190] ss:$9 sm:$0xff] %v2361
        %s6192 = scalar_lea.vmem [#allocation1], 6
        %6193 = vst [vmem:[%s6192] ss:$9 sm:$0xff] %v2367
        %s6194 = scalar_lea.vmem [#allocation1], 7
        %6195 = vst [vmem:[%s6194] ss:$9 sm:$0xff] %v2370
        %v6196 = vld [vmem:[#allocation1] sm:$0xff]
        %6197 = vst [vmem:[#allocation1] ss:$9 sm:$0xff] %v2373
        %6198 = vst [vmem:[%s6182] ss:$9 sm:$0xff] %v2376
        %6199 = vst [vmem:[%s6184] ss:$9 sm:$0xff] %v2379
        %6200 = vst [vmem:[%s6186] ss:$9 sm:$0xff] %v2382
        %6201 = vst [vmem:[%s6188] ss:$9 sm:$0xff] %v2388
        %6202 = vst [vmem:[%s6190] ss:$9 sm:$0xff] %v2391
        %6203 = vst [vmem:[%s6192] ss:$9 sm:$0xff] %v2394
        %6204 = vst [vmem:[%s6194] ss:$9 sm:$0xff] %v2397
        %v6205 = vld [vmem:[#allocation1] sm:$0xff]
        %6206 = vst [vmem:[#allocation1] ss:$9 sm:$0xff] %v2400
        %6207 = vst [vmem:[%s6182] ss:$9 sm:$0xff] %v2403
        %6208 = vst [vmem:[%s6184] ss:$9 sm:$0xff] %v2409
        %6209 = vst [vmem:[%s6186] ss:$9 sm:$0xff] %v2412
        %6210 = vst [vmem:[%s6188] ss:$9 sm:$0xff] %v2415
        %6211 = vst [vmem:[%s6190] ss:$9 sm:$0xff] %v2418
        %6212 = vst [vmem:[%s6192] ss:$9 sm:$0xff] %v2421
        %6213 = vst [vmem:[%s6194] ss:$9 sm:$0xff] %v2424
        %v6214 = vld [vmem:[#allocation1] sm:$0xff]
        %6215 = vst [vmem:[#allocation1] ss:$9 sm:$0xff] %v2430
        %6216 = vst [vmem:[%s6182] ss:$9 sm:$0xff] %v2433
        %6217 = vst [vmem:[%s6184] ss:$9 sm:$0xff] %v2436
        %6218 = vst [vmem:[%s6186] ss:$9 sm:$0xff] %v2439
        %6219 = vst [vmem:[%s6188] ss:$9 sm:$0xff] %v2442
        %6220 = vst [vmem:[%s6190] ss:$9 sm:$0xff] %v2445
        %6221 = vst [vmem:[%s6192] ss:$9 sm:$0xff] %v2451
        %6222 = vst [vmem:[%s6194] ss:$9 sm:$0xff] %v2454
        %v6223 = vld [vmem:[#allocation1] sm:$0xff]
        %6224 = vst [vmem:[#allocation1] ss:$9 sm:$0xff] %v2457
        %6225 = vst [vmem:[%s6182] ss:$9 sm:$0xff] %v2460
        %6226 = vst [vmem:[%s6184] ss:$9 sm:$0xff] %v2463
        %6227 = vst [vmem:[%s6186] ss:$9 sm:$0xff] %v2466
        %6228 = vst [vmem:[%s6188] ss:$9 sm:$0xff] %v2472
        %6229 = vst [vmem:[%s6190] ss:$9 sm:$0xff] %v2475
        %6230 = vst [vmem:[%s6192] ss:$9 sm:$0xff] %v2478
        %6231 = vst [vmem:[%s6194] ss:$9 sm:$0xff] %v2481
        %v6232 = vld [vmem:[#allocation1] sm:$0xff]
        %6233 = vst [vmem:[#allocation1] ss:$9 sm:$0xff] %v2484
        %6234 = vst [vmem:[%s6182] ss:$9 sm:$0xff] %v2487
        %6235 = vst [vmem:[%s6184] ss:$9 sm:$0xff] %v2493
        %6236 = vst [vmem:[%s6186] ss:$9 sm:$0xff] %v2496
        %6237 = vst [vmem:[%s6188] ss:$9 sm:$0xff] %v2499
        %6238 = vst [vmem:[%s6190] ss:$9 sm:$0xff] %v2502
        %6239 = vst [vmem:[%s6192] ss:$9 sm:$0xff] %v2505
        %6240 = vst [vmem:[%s6194] ss:$9 sm:$0xff] %v2508
        %v6241 = vld [vmem:[#allocation1] sm:$0xff]
        %6242 = vst [vmem:[#allocation1] ss:$9 sm:$0xff] %v2514
        %6243 = vst [vmem:[%s6182] ss:$9 sm:$0xff] %v2517
        %6244 = vst [vmem:[%s6184] ss:$9 sm:$0xff] %v2520
        %6245 = vst [vmem:[%s6186] ss:$9 sm:$0xff] %v2523
        %6246 = vst [vmem:[%s6188] ss:$9 sm:$0xff] %v2526
        %6247 = vst [vmem:[%s6190] ss:$9 sm:$0xff] %v2529
        %6248 = vst [vmem:[%s6192] ss:$9 sm:$0xff] %v2535
        %6249 = vst [vmem:[%s6194] ss:$9 sm:$0xff] %v2538
        %v6250 = vld [vmem:[#allocation1] sm:$0xff]
        %6251 = vst [vmem:[#allocation1] ss:$9 sm:$0xff] %v2541
        %6252 = vst [vmem:[%s6182] ss:$9 sm:$0xff] %v2544
        %6253 = vst [vmem:[%s6184] ss:$9 sm:$0xff] %v2547
        %6254 = vst [vmem:[%s6186] ss:$9 sm:$0xff] %v2550
        %6255 = vst [vmem:[%s6188] ss:$9 sm:$0xff] %v2556
        %6256 = vst [vmem:[%s6190] ss:$9 sm:$0xff] %v2559
        %6257 = vst [vmem:[%s6192] ss:$9 sm:$0xff] %v2562
        %6258 = vst [vmem:[%s6194] ss:$9 sm:$0xff] %v2565
        %v6259 = vld [vmem:[#allocation1] sm:$0xff]
        %6260 = vst [vmem:[#allocation1] ss:$9 sm:$0xff] %v2568
        %6261 = vst [vmem:[%s6182] ss:$9 sm:$0xff] %v2571
        %6262 = vst [vmem:[%s6184] ss:$9 sm:$0xff] %v2577
        %6263 = vst [vmem:[%s6186] ss:$9 sm:$0xff] %v2580
        %6264 = vst [vmem:[%s6188] ss:$9 sm:$0xff] %v2583
        %6265 = vst [vmem:[%s6190] ss:$9 sm:$0xff] %v2586
        %6266 = vst [vmem:[%s6192] ss:$9 sm:$0xff] %v2589
        %6267 = vst [vmem:[%s6194] ss:$9 sm:$0xff] %v2592
        %v6268 = vld [vmem:[#allocation1] sm:$0xff]
        %6269 = vst [vmem:[#allocation1] ss:$9 sm:$0xff] %v2640
        %6270 = vst [vmem:[%s6182] ss:$9 sm:$0xff] %v2643
        %6271 = vst [vmem:[%s6184] ss:$9 sm:$0xff] %v2646
        %6272 = vst [vmem:[%s6186] ss:$9 sm:$0xff] %v2649
        %6273 = vst [vmem:[%s6188] ss:$9 sm:$0xff] %v2652
        %6274 = vst [vmem:[%s6190] ss:$9 sm:$0xff] %v2655
        %6275 = vst [vmem:[%s6192] ss:$9 sm:$0xff] %v2661
        %6276 = vst [vmem:[%s6194] ss:$9 sm:$0xff] %v2664
        %v6277 = vld [vmem:[#allocation1] sm:$0xff]
        %6278 = vst [vmem:[#allocation1] ss:$9 sm:$0xff] %v2667
        %6279 = vst [vmem:[%s6182] ss:$9 sm:$0xff] %v2670
        %6280 = vst [vmem:[%s6184] ss:$9 sm:$0xff] %v2673
        %6281 = vst [vmem:[%s6186] ss:$9 sm:$0xff] %v2676
        %6282 = vst [vmem:[%s6188] ss:$9 sm:$0xff] %v2682
        %6283 = vst [vmem:[%s6190] ss:$9 sm:$0xff] %v2685
        %6284 = vst [vmem:[%s6192] ss:$9 sm:$0xff] %v2688
        %6285 = vst [vmem:[%s6194] ss:$9 sm:$0xff] %v2691
        %v6286 = vld [vmem:[#allocation1] sm:$0xff]
        %6287 = vst [vmem:[#allocation1] ss:$9 sm:$0xff] %v2694
        %6288 = vst [vmem:[%s6182] ss:$9 sm:$0xff] %v2697
        %6289 = vst [vmem:[%s6184] ss:$9 sm:$0xff] %v2703
        %6290 = vst [vmem:[%s6186] ss:$9 sm:$0xff] %v2706
        %6291 = vst [vmem:[%s6188] ss:$9 sm:$0xff] %v2709
        %6292 = vst [vmem:[%s6190] ss:$9 sm:$0xff] %v2712
        %6293 = vst [vmem:[%s6192] ss:$9 sm:$0xff] %v2715
        %6294 = vst [vmem:[%s6194] ss:$9 sm:$0xff] %v2718
        %v6295 = vld [vmem:[#allocation1] sm:$0xff]
        %6296 = vst [vmem:[#allocation1] ss:$9 sm:$0xff] %v2724
        %6297 = vst [vmem:[%s6182] ss:$9 sm:$0xff] %v2727
        %6298 = vst [vmem:[%s6184] ss:$9 sm:$0xff] %v2730
        %6299 = vst [vmem:[%s6186] ss:$9 sm:$0xff] %v2733
        %6300 = vst [vmem:[%s6188] ss:$9 sm:$0xff] %v2736
        %6301 = vst [vmem:[%s6190] ss:$9 sm:$0xff] %v2739
        %6302 = vst [vmem:[%s6192] ss:$9 sm:$0xff] %v2745
        %6303 = vst [vmem:[%s6194] ss:$9 sm:$0xff] %v2748
        %v6304 = vld [vmem:[#allocation1] sm:$0xff]
        %6305 = vst [vmem:[#allocation1] ss:$9 sm:$0xff] %v2751
        %6306 = vst [vmem:[%s6182] ss:$9 sm:$0xff] %v2754
        %6307 = vst [vmem:[%s6184] ss:$9 sm:$0xff] %v2757
        %6308 = vst [vmem:[%s6186] ss:$9 sm:$0xff] %v2760
        %6309 = vst [vmem:[%s6188] ss:$9 sm:$0xff] %v2766
        %6310 = vst [vmem:[%s6190] ss:$9 sm:$0xff] %v2769
        %6311 = vst [vmem:[%s6192] ss:$9 sm:$0xff] %v2772
        %6312 = vst [vmem:[%s6194] ss:$9 sm:$0xff] %v2775
        %v6313 = vld [vmem:[#allocation1] sm:$0xff]
        %6314 = vst [vmem:[#allocation1] ss:$9 sm:$0xff] %v2778
        %6315 = vst [vmem:[%s6182] ss:$9 sm:$0xff] %v2781
        %6316 = vst [vmem:[%s6184] ss:$9 sm:$0xff] %v2787
        %6317 = vst [vmem:[%s6186] ss:$9 sm:$0xff] %v2790
        %6318 = vst [vmem:[%s6188] ss:$9 sm:$0xff] %v2793
        %6319 = vst [vmem:[%s6190] ss:$9 sm:$0xff] %v2796
        %6320 = vst [vmem:[%s6192] ss:$9 sm:$0xff] %v2799
        %6321 = vst [vmem:[%s6194] ss:$9 sm:$0xff] %v2802
        %v6322 = vld [vmem:[#allocation1] sm:$0xff]
        %6323 = vst [vmem:[#allocation1] ss:$9 sm:$0xff] %v2808
        %6324 = vst [vmem:[%s6182] ss:$9 sm:$0xff] %v2811
        %6325 = vst [vmem:[%s6184] ss:$9 sm:$0xff] %v2814
        %6326 = vst [vmem:[%s6186] ss:$9 sm:$0xff] %v2817
        %6327 = vst [vmem:[%s6188] ss:$9 sm:$0xff] %v2820
        %6328 = vst [vmem:[%s6190] ss:$9 sm:$0xff] %v2823
        %6329 = vst [vmem:[%s6192] ss:$9 sm:$0xff] %v2829
        %6330 = vst [vmem:[%s6194] ss:$9 sm:$0xff] %v2832
        %v6331 = vld [vmem:[#allocation1] sm:$0xff]
        %6332 = vst [vmem:[#allocation1] ss:$9 sm:$0xff] %v2835
        %6333 = vst [vmem:[%s6182] ss:$9 sm:$0xff] %v2838
        %6334 = vst [vmem:[%s6184] ss:$9 sm:$0xff] %v2841
        %6335 = vst [vmem:[%s6186] ss:$9 sm:$0xff] %v2844
        %6336 = vst [vmem:[%s6188] ss:$9 sm:$0xff] %v2850
        %6337 = vst [vmem:[%s6190] ss:$9 sm:$0xff] %v2853
        %6338 = vst [vmem:[%s6192] ss:$9 sm:$0xff] %v2856
        %6339 = vst [vmem:[%s6194] ss:$9 sm:$0xff] %v2859
        %v6340 = vld [vmem:[#allocation1] sm:$0xff]
        %6341 = vst [vmem:[#allocation1] ss:$9 sm:$0xff] %v2862
        %6342 = vst [vmem:[%s6182] ss:$9 sm:$0xff] %v2865
        %6343 = vst [vmem:[%s6184] ss:$9 sm:$0xff] %v2871
        %6344 = vst [vmem:[%s6186] ss:$9 sm:$0xff] %v2874
        %6345 = vst [vmem:[%s6188] ss:$9 sm:$0xff] %v2877
        %6346 = vst [vmem:[%s6190] ss:$9 sm:$0xff] %v2880
        %6347 = vst [vmem:[%s6192] ss:$9 sm:$0xff] %v2883
        %6348 = vst [vmem:[%s6194] ss:$9 sm:$0xff] %v2886
        %v6349 = vld [vmem:[#allocation1] sm:$0xff]
        %6350 = vst [vmem:[#allocation1] ss:$9 sm:$0xff] %v2934
        %6351 = vst [vmem:[%s6182] ss:$9 sm:$0xff] %v2937
        %6352 = vst [vmem:[%s6184] ss:$9 sm:$0xff] %v2940
        %6353 = vst [vmem:[%s6186] ss:$9 sm:$0xff] %v2943
        %6354 = vst [vmem:[%s6188] ss:$9 sm:$0xff] %v2946
        %6355 = vst [vmem:[%s6190] ss:$9 sm:$0xff] %v2949
        %6356 = vst [vmem:[%s6192] ss:$9 sm:$0xff] %v2955
        %6357 = vst [vmem:[%s6194] ss:$9 sm:$0xff] %v2958
        %v6358 = vld [vmem:[#allocation1] sm:$0xff]
        %6359 = vst [vmem:[#allocation1] ss:$9 sm:$0xff] %v2961
        %6360 = vst [vmem:[%s6182] ss:$9 sm:$0xff] %v2964
        %6361 = vst [vmem:[%s6184] ss:$9 sm:$0xff] %v2967
        %6362 = vst [vmem:[%s6186] ss:$9 sm:$0xff] %v2970
        %6363 = vst [vmem:[%s6188] ss:$9 sm:$0xff] %v2976
        %6364 = vst [vmem:[%s6190] ss:$9 sm:$0xff] %v2979
        %6365 = vst [vmem:[%s6192] ss:$9 sm:$0xff] %v2982
        %6366 = vst [vmem:[%s6194] ss:$9 sm:$0xff] %v2985
        %v6367 = vld [vmem:[#allocation1] sm:$0xff]
        %6368 = vst [vmem:[#allocation1] ss:$9 sm:$0xff] %v2988
        %6369 = vst [vmem:[%s6182] ss:$9 sm:$0xff] %v2991
        %6370 = vst [vmem:[%s6184] ss:$9 sm:$0xff] %v2997
        %6371 = vst [vmem:[%s6186] ss:$9 sm:$0xff] %v3000
        %6372 = vst [vmem:[%s6188] ss:$9 sm:$0xff] %v3003
        %6373 = vst [vmem:[%s6190] ss:$9 sm:$0xff] %v3006
        %6374 = vst [vmem:[%s6192] ss:$9 sm:$0xff] %v3009
        %6375 = vst [vmem:[%s6194] ss:$9 sm:$0xff] %v3012
        %v6376 = vld [vmem:[#allocation1] sm:$0xff]
        %6377 = vst [vmem:[#allocation1] ss:$9 sm:$0xff] %v3018
        %6378 = vst [vmem:[%s6182] ss:$9 sm:$0xff] %v3021
        %6379 = vst [vmem:[%s6184] ss:$9 sm:$0xff] %v3024
        %6380 = vst [vmem:[%s6186] ss:$9 sm:$0xff] %v3027
        %6381 = vst [vmem:[%s6188] ss:$9 sm:$0xff] %v3030
        %6382 = vst [vmem:[%s6190] ss:$9 sm:$0xff] %v3033
        %6383 = vst [vmem:[%s6192] ss:$9 sm:$0xff] %v3039
        %6384 = vst [vmem:[%s6194] ss:$9 sm:$0xff] %v3042
        %v6385 = vld [vmem:[#allocation1] sm:$0xff]
        %6386 = vst [vmem:[#allocation1] ss:$9 sm:$0xff] %v3045
        %6387 = vst [vmem:[%s6182] ss:$9 sm:$0xff] %v3048
        %6388 = vst [vmem:[%s6184] ss:$9 sm:$0xff] %v3051
        %6389 = vst [vmem:[%s6186] ss:$9 sm:$0xff] %v3054
        %6390 = vst [vmem:[%s6188] ss:$9 sm:$0xff] %v3060
        %6391 = vst [vmem:[%s6190] ss:$9 sm:$0xff] %v3063
        %6392 = vst [vmem:[%s6192] ss:$9 sm:$0xff] %v3066
        %6393 = vst [vmem:[%s6194] ss:$9 sm:$0xff] %v3069
        %v6394 = vld [vmem:[#allocation1] sm:$0xff]
        %6395 = vst [vmem:[#allocation1] ss:$9 sm:$0xff] %v3072
        %6396 = vst [vmem:[%s6182] ss:$9 sm:$0xff] %v3075
        %6397 = vst [vmem:[%s6184] ss:$9 sm:$0xff] %v3081
        %6398 = vst [vmem:[%s6186] ss:$9 sm:$0xff] %v3084
        %6399 = vst [vmem:[%s6188] ss:$9 sm:$0xff] %v3087
        %6400 = vst [vmem:[%s6190] ss:$9 sm:$0xff] %v3090
        %6401 = vst [vmem:[%s6192] ss:$9 sm:$0xff] %v3093
        %6402 = vst [vmem:[%s6194] ss:$9 sm:$0xff] %v3096
        %v6403 = vld [vmem:[#allocation1] sm:$0xff]
        %6404 = vst [vmem:[#allocation1] ss:$9 sm:$0xff] %v3102
        %6405 = vst [vmem:[%s6182] ss:$9 sm:$0xff] %v3105
        %6406 = vst [vmem:[%s6184] ss:$9 sm:$0xff] %v3108
        %6407 = vst [vmem:[%s6186] ss:$9 sm:$0xff] %v3111
        %6408 = vst [vmem:[%s6188] ss:$9 sm:$0xff] %v3114
        %6409 = vst [vmem:[%s6190] ss:$9 sm:$0xff] %v3117
        %6410 = vst [vmem:[%s6192] ss:$9 sm:$0xff] %v3123
        %6411 = vst [vmem:[%s6194] ss:$9 sm:$0xff] %v3126
        %v6412 = vld [vmem:[#allocation1] sm:$0xff]
        %6413 = vst [vmem:[#allocation1] ss:$9 sm:$0xff] %v3129
        %6414 = vst [vmem:[%s6182] ss:$9 sm:$0xff] %v3132
        %6415 = vst [vmem:[%s6184] ss:$9 sm:$0xff] %v3135
        %6416 = vst [vmem:[%s6186] ss:$9 sm:$0xff] %v3138
        %6417 = vst [vmem:[%s6188] ss:$9 sm:$0xff] %v3144
        %6418 = vst [vmem:[%s6190] ss:$9 sm:$0xff] %v3147
        %6419 = vst [vmem:[%s6192] ss:$9 sm:$0xff] %v3150
        %6420 = vst [vmem:[%s6194] ss:$9 sm:$0xff] %v3153
        %v6421 = vld [vmem:[#allocation1] sm:$0xff]
        %6422 = vst [vmem:[#allocation1] ss:$9 sm:$0xff] %v3156
        %6423 = vst [vmem:[%s6182] ss:$9 sm:$0xff] %v3159
        %6424 = vst [vmem:[%s6184] ss:$9 sm:$0xff] %v3165
        %6425 = vst [vmem:[%s6186] ss:$9 sm:$0xff] %v3168
        %6426 = vst [vmem:[%s6188] ss:$9 sm:$0xff] %v3171
        %6427 = vst [vmem:[%s6190] ss:$9 sm:$0xff] %v3174
        %6428 = vst [vmem:[%s6192] ss:$9 sm:$0xff] %v3177
        %6429 = vst [vmem:[%s6194] ss:$9 sm:$0xff] %v3180
        %v6430 = vld [vmem:[#allocation1] sm:$0xff]
        %6431 = vst [vmem:[#allocation1] ss:$9 sm:$0xff] %v3228
        %6432 = vst [vmem:[%s6182] ss:$9 sm:$0xff] %v3231
        %6433 = vst [vmem:[%s6184] ss:$9 sm:$0xff] %v3234
        %6434 = vst [vmem:[%s6186] ss:$9 sm:$0xff] %v3237
        %6435 = vst [vmem:[%s6188] ss:$9 sm:$0xff] %v3240
        %6436 = vst [vmem:[%s6190] ss:$9 sm:$0xff] %v3243
        %6437 = vst [vmem:[%s6192] ss:$9 sm:$0xff] %v3249
        %6438 = vst [vmem:[%s6194] ss:$9 sm:$0xff] %v3252
        %v6439 = vld [vmem:[#allocation1] sm:$0xff]
        %6440 = vst [vmem:[#allocation1] ss:$9 sm:$0xff] %v3255
        %6441 = vst [vmem:[%s6182] ss:$9 sm:$0xff] %v3258
        %6442 = vst [vmem:[%s6184] ss:$9 sm:$0xff] %v3261
        %6443 = vst [vmem:[%s6186] ss:$9 sm:$0xff] %v3264
        %6444 = vst [vmem:[%s6188] ss:$9 sm:$0xff] %v3270
        %6445 = vst [vmem:[%s6190] ss:$9 sm:$0xff] %v3273
        %6446 = vst [vmem:[%s6192] ss:$9 sm:$0xff] %v3276
        %6447 = vst [vmem:[%s6194] ss:$9 sm:$0xff] %v3279
        %v6448 = vld [vmem:[#allocation1] sm:$0xff]
        %6449 = vst [vmem:[#allocation1] ss:$9 sm:$0xff] %v3282
        %6450 = vst [vmem:[%s6182] ss:$9 sm:$0xff] %v3285
        %6451 = vst [vmem:[%s6184] ss:$9 sm:$0xff] %v3291
        %6452 = vst [vmem:[%s6186] ss:$9 sm:$0xff] %v3294
        %6453 = vst [vmem:[%s6188] ss:$9 sm:$0xff] %v3297
        %6454 = vst [vmem:[%s6190] ss:$9 sm:$0xff] %v3300
        %6455 = vst [vmem:[%s6192] ss:$9 sm:$0xff] %v3303
        %6456 = vst [vmem:[%s6194] ss:$9 sm:$0xff] %v3306
        %v6457 = vld [vmem:[#allocation1] sm:$0xff]
        %6458 = vst [vmem:[#allocation1] ss:$9 sm:$0xff] %v3312
        %6459 = vst [vmem:[%s6182] ss:$9 sm:$0xff] %v3315
        %6460 = vst [vmem:[%s6184] ss:$9 sm:$0xff] %v3318
        %6461 = vst [vmem:[%s6186] ss:$9 sm:$0xff] %v3321
        %6462 = vst [vmem:[%s6188] ss:$9 sm:$0xff] %v3324
        %6463 = vst [vmem:[%s6190] ss:$9 sm:$0xff] %v3327
        %6464 = vst [vmem:[%s6192] ss:$9 sm:$0xff] %v3333
        %6465 = vst [vmem:[%s6194] ss:$9 sm:$0xff] %v3336
        %v6466 = vld [vmem:[#allocation1] sm:$0xff]
        %6467 = vst [vmem:[#allocation1] ss:$9 sm:$0xff] %v3339
        %6468 = vst [vmem:[%s6182] ss:$9 sm:$0xff] %v3342
        %6469 = vst [vmem:[%s6184] ss:$9 sm:$0xff] %v3345
        %6470 = vst [vmem:[%s6186] ss:$9 sm:$0xff] %v3348
        %6471 = vst [vmem:[%s6188] ss:$9 sm:$0xff] %v3354
        %6472 = vst [vmem:[%s6190] ss:$9 sm:$0xff] %v3357
        %6473 = vst [vmem:[%s6192] ss:$9 sm:$0xff] %v3360
        %6474 = vst [vmem:[%s6194] ss:$9 sm:$0xff] %v3363
        %v6475 = vld [vmem:[#allocation1] sm:$0xff]
        %6476 = vst [vmem:[#allocation1] ss:$9 sm:$0xff] %v3366
        %6477 = vst [vmem:[%s6182] ss:$9 sm:$0xff] %v3369
        %6478 = vst [vmem:[%s6184] ss:$9 sm:$0xff] %v3375
        %6479 = vst [vmem:[%s6186] ss:$9 sm:$0xff] %v3378
        %6480 = vst [vmem:[%s6188] ss:$9 sm:$0xff] %v3381
        %6481 = vst [vmem:[%s6190] ss:$9 sm:$0xff] %v3384
        %6482 = vst [vmem:[%s6192] ss:$9 sm:$0xff] %v3387
        %6483 = vst [vmem:[%s6194] ss:$9 sm:$0xff] %v3390
        %v6484 = vld [vmem:[#allocation1] sm:$0xff]
        %6485 = vst [vmem:[#allocation1] ss:$9 sm:$0xff] %v3396
        %6486 = vst [vmem:[%s6182] ss:$9 sm:$0xff] %v3399
        %6487 = vst [vmem:[%s6184] ss:$9 sm:$0xff] %v3402
        %6488 = vst [vmem:[%s6186] ss:$9 sm:$0xff] %v3405
        %6489 = vst [vmem:[%s6188] ss:$9 sm:$0xff] %v3408
        %6490 = vst [vmem:[%s6190] ss:$9 sm:$0xff] %v3411
        %6491 = vst [vmem:[%s6192] ss:$9 sm:$0xff] %v3417
        %6492 = vst [vmem:[%s6194] ss:$9 sm:$0xff] %v3420
        %v6493 = vld [vmem:[#allocation1] sm:$0xff]
        %6494 = vst [vmem:[#allocation1] ss:$9 sm:$0xff] %v3423
        %6495 = vst [vmem:[%s6182] ss:$9 sm:$0xff] %v3426
        %6496 = vst [vmem:[%s6184] ss:$9 sm:$0xff] %v3429
        %6497 = vst [vmem:[%s6186] ss:$9 sm:$0xff] %v3432
        %6498 = vst [vmem:[%s6188] ss:$9 sm:$0xff] %v3438
        %6499 = vst [vmem:[%s6190] ss:$9 sm:$0xff] %v3441
        %6500 = vst [vmem:[%s6192] ss:$9 sm:$0xff] %v3444
        %6501 = vst [vmem:[%s6194] ss:$9 sm:$0xff] %v3447
        %v6502 = vld [vmem:[#allocation1] sm:$0xff]
        %6503 = vst [vmem:[#allocation1] ss:$9 sm:$0xff] %v3450
        %6504 = vst [vmem:[%s6182] ss:$9 sm:$0xff] %v3453
        %6505 = vst [vmem:[%s6184] ss:$9 sm:$0xff] %v3459
        %6506 = vst [vmem:[%s6186] ss:$9 sm:$0xff] %v3462
        %6507 = vst [vmem:[%s6188] ss:$9 sm:$0xff] %v3465
        %6508 = vst [vmem:[%s6190] ss:$9 sm:$0xff] %v3468
        %6509 = vst [vmem:[%s6192] ss:$9 sm:$0xff] %v3471
        %6510 = vst [vmem:[%s6194] ss:$9 sm:$0xff] %v3474
        %v6511 = vld [vmem:[#allocation1] sm:$0xff]
        %6549 = vst [vmem:[#allocation1] ss:$9 sm:$0xff] %v3542
        %s6551 = scalar_lea.vmem [#allocation1], 1
        %6552 = vst [vmem:[%s6551] ss:$9 sm:$0xff] %v3550
        %s6554 = scalar_lea.vmem [#allocation1], 2
        %6555 = vst [vmem:[%s6554] ss:$9 sm:$0xff] %v3558
        %s6557 = scalar_lea.vmem [#allocation1], 3
        %6558 = vst [vmem:[%s6557] ss:$9 sm:$0xff] %v3565
        %s6560 = scalar_lea.vmem [#allocation1], 4
        %6561 = vst [vmem:[%s6560] ss:$9 sm:$0xff] %v3573
        %s6563 = scalar_lea.vmem [#allocation1], 5
        %6564 = vst [vmem:[%s6563] ss:$9 sm:$0xff] %v3581
        %s6566 = scalar_lea.vmem [#allocation1], 6
        %6567 = vst [vmem:[%s6566] ss:$9 sm:$0xff] %v3589
        %s6569 = scalar_lea.vmem [#allocation1], 7
        %6570 = vst [vmem:[%s6569] ss:$9 sm:$0xff] %v3597
        %v6571 = vld [vmem:[#allocation1] sm:$0xff]
        %6573 = vst [vmem:[#allocation1] ss:$9 sm:$0xff] %v3605
        %6575 = vst [vmem:[%s6551] ss:$9 sm:$0xff] %v3613
        %6577 = vst [vmem:[%s6554] ss:$9 sm:$0xff] %v3620
        %6579 = vst [vmem:[%s6557] ss:$9 sm:$0xff] %v3628
        %6581 = vst [vmem:[%s6560] ss:$9 sm:$0xff] %v3637
        %6583 = vst [vmem:[%s6563] ss:$9 sm:$0xff] %v3644
        %6585 = vst [vmem:[%s6566] ss:$9 sm:$0xff] %v3652
        %6587 = vst [vmem:[%s6569] ss:$9 sm:$0xff] %v3660
        %v6588 = vld [vmem:[#allocation1] sm:$0xff]
        %6590 = vst [vmem:[#allocation1] ss:$9 sm:$0xff] %v3668
        %6592 = vst [vmem:[%s6551] ss:$9 sm:$0xff] %v3675
        %6594 = vst [vmem:[%s6554] ss:$9 sm:$0xff] %v3684
        %6596 = vst [vmem:[%s6557] ss:$9 sm:$0xff] %v3692
        %6598 = vst [vmem:[%s6560] ss:$9 sm:$0xff] %v3699
        %6600 = vst [vmem:[%s6563] ss:$9 sm:$0xff] %v3707
        %6602 = vst [vmem:[%s6566] ss:$9 sm:$0xff] %v3715
        %6604 = vst [vmem:[%s6569] ss:$9 sm:$0xff] %v3723
        %v6605 = vld [vmem:[#allocation1] sm:$0xff]
        %6607 = vst [vmem:[#allocation1] ss:$9 sm:$0xff] %v3731
        %6609 = vst [vmem:[%s6551] ss:$9 sm:$0xff] %v3739
        %6611 = vst [vmem:[%s6554] ss:$9 sm:$0xff] %v3747
        %6613 = vst [vmem:[%s6557] ss:$9 sm:$0xff] %v3754
        %6615 = vst [vmem:[%s6560] ss:$9 sm:$0xff] %v3762
        %6617 = vst [vmem:[%s6563] ss:$9 sm:$0xff] %v3770
        %6619 = vst [vmem:[%s6566] ss:$9 sm:$0xff] %v3778
        %6621 = vst [vmem:[%s6569] ss:$9 sm:$0xff] %v3786
        %v6622 = vld [vmem:[#allocation1] sm:$0xff]
        %6624 = vst [vmem:[#allocation1] ss:$9 sm:$0xff] %v3794
        %6626 = vst [vmem:[%s6551] ss:$9 sm:$0xff] %v3802
        %6628 = vst [vmem:[%s6554] ss:$9 sm:$0xff] %v3809
        %6630 = vst [vmem:[%s6557] ss:$9 sm:$0xff] %v3817
        %6632 = vst [vmem:[%s6560] ss:$9 sm:$0xff] %v3826
        %6634 = vst [vmem:[%s6563] ss:$9 sm:$0xff] %v3833
        %6636 = vst [vmem:[%s6566] ss:$9 sm:$0xff] %v3841
        %6638 = vst [vmem:[%s6569] ss:$9 sm:$0xff] %v3849
        %v6639 = vld [vmem:[#allocation1] sm:$0xff]
        %6641 = vst [vmem:[#allocation1] ss:$9 sm:$0xff] %v3857
        %6643 = vst [vmem:[%s6551] ss:$9 sm:$0xff] %v3864
        %6645 = vst [vmem:[%s6554] ss:$9 sm:$0xff] %v3873
        %6647 = vst [vmem:[%s6557] ss:$9 sm:$0xff] %v3881
        %6649 = vst [vmem:[%s6560] ss:$9 sm:$0xff] %v3888
        %6651 = vst [vmem:[%s6563] ss:$9 sm:$0xff] %v3896
        %6653 = vst [vmem:[%s6566] ss:$9 sm:$0xff] %v3904
        %6655 = vst [vmem:[%s6569] ss:$9 sm:$0xff] %v3912
        %v6656 = vld [vmem:[#allocation1] sm:$0xff]
        %6658 = vst [vmem:[#allocation1] ss:$9 sm:$0xff] %v3920
        %6660 = vst [vmem:[%s6551] ss:$9 sm:$0xff] %v3928
        %6662 = vst [vmem:[%s6554] ss:$9 sm:$0xff] %v3936
        %6664 = vst [vmem:[%s6557] ss:$9 sm:$0xff] %v3943
        %6666 = vst [vmem:[%s6560] ss:$9 sm:$0xff] %v3951
        %6668 = vst [vmem:[%s6563] ss:$9 sm:$0xff] %v3959
        %6670 = vst [vmem:[%s6566] ss:$9 sm:$0xff] %v3967
        %6672 = vst [vmem:[%s6569] ss:$9 sm:$0xff] %v3975
        %v6673 = vld [vmem:[#allocation1] sm:$0xff]
        %6675 = vst [vmem:[#allocation1] ss:$9 sm:$0xff] %v3983
        %6677 = vst [vmem:[%s6551] ss:$9 sm:$0xff] %v3991
        %6679 = vst [vmem:[%s6554] ss:$9 sm:$0xff] %v3998
        %6681 = vst [vmem:[%s6557] ss:$9 sm:$0xff] %v4006
        %6683 = vst [vmem:[%s6560] ss:$9 sm:$0xff] %v4015
        %6685 = vst [vmem:[%s6563] ss:$9 sm:$0xff] %v4022
        %6687 = vst [vmem:[%s6566] ss:$9 sm:$0xff] %v4030
        %6689 = vst [vmem:[%s6569] ss:$9 sm:$0xff] %v4038
        %v6690 = vld [vmem:[#allocation1] sm:$0xff]
        %6692 = vst [vmem:[#allocation1] ss:$9 sm:$0xff] %v4046
        %6694 = vst [vmem:[%s6551] ss:$9 sm:$0xff] %v4053
        %6696 = vst [vmem:[%s6554] ss:$9 sm:$0xff] %v4062
        %6698 = vst [vmem:[%s6557] ss:$9 sm:$0xff] %v4070
        %6700 = vst [vmem:[%s6560] ss:$9 sm:$0xff] %v4077
        %6702 = vst [vmem:[%s6563] ss:$9 sm:$0xff] %v4085
        %6704 = vst [vmem:[%s6566] ss:$9 sm:$0xff] %v4093
        %6706 = vst [vmem:[%s6569] ss:$9 sm:$0xff] %v4101
        %v6707 = vld [vmem:[#allocation1] sm:$0xff]
        %6709 = vst [vmem:[#allocation1] ss:$9 sm:$0xff] %v4110
        %6711 = vst [vmem:[%s6551] ss:$9 sm:$0xff] %v4117
        %6713 = vst [vmem:[%s6554] ss:$9 sm:$0xff] %v4125
        %6715 = vst [vmem:[%s6557] ss:$9 sm:$0xff] %v4133
        %6717 = vst [vmem:[%s6560] ss:$9 sm:$0xff] %v4141
        %6719 = vst [vmem:[%s6563] ss:$9 sm:$0xff] %v4148
        %6721 = vst [vmem:[%s6566] ss:$9 sm:$0xff] %v4157
        %6723 = vst [vmem:[%s6569] ss:$9 sm:$0xff] %v4165
        %v6724 = vld [vmem:[#allocation1] sm:$0xff]
        %6726 = vst [vmem:[#allocation1] ss:$9 sm:$0xff] %v4172
        %6728 = vst [vmem:[%s6551] ss:$9 sm:$0xff] %v4180
        %6730 = vst [vmem:[%s6554] ss:$9 sm:$0xff] %v4188
        %6732 = vst [vmem:[%s6557] ss:$9 sm:$0xff] %v4196
        %6734 = vst [vmem:[%s6560] ss:$9 sm:$0xff] %v4204
        %6736 = vst [vmem:[%s6563] ss:$9 sm:$0xff] %v4212
        %6738 = vst [vmem:[%s6566] ss:$9 sm:$0xff] %v4220
        %6740 = vst [vmem:[%s6569] ss:$9 sm:$0xff] %v4227
        %v6741 = vld [vmem:[#allocation1] sm:$0xff]
        %6743 = vst [vmem:[#allocation1] ss:$9 sm:$0xff] %v4235
        %6745 = vst [vmem:[%s6551] ss:$9 sm:$0xff] %v4243
        %6747 = vst [vmem:[%s6554] ss:$9 sm:$0xff] %v4251
        %6749 = vst [vmem:[%s6557] ss:$9 sm:$0xff] %v4259
        %6751 = vst [vmem:[%s6560] ss:$9 sm:$0xff] %v4267
        %6753 = vst [vmem:[%s6563] ss:$9 sm:$0xff] %v4275
        %6755 = vst [vmem:[%s6566] ss:$9 sm:$0xff] %v4282
        %6757 = vst [vmem:[%s6569] ss:$9 sm:$0xff] %v4290
        %v6758 = vld [vmem:[#allocation1] sm:$0xff]
        %6760 = vst [vmem:[#allocation1] ss:$9 sm:$0xff] %v4299
        %6762 = vst [vmem:[%s6551] ss:$9 sm:$0xff] %v4306
        %6764 = vst [vmem:[%s6554] ss:$9 sm:$0xff] %v4314
        %6766 = vst [vmem:[%s6557] ss:$9 sm:$0xff] %v4322
        %6768 = vst [vmem:[%s6560] ss:$9 sm:$0xff] %v4330
        %6770 = vst [vmem:[%s6563] ss:$9 sm:$0xff] %v4337
        %6772 = vst [vmem:[%s6566] ss:$9 sm:$0xff] %v4346
        %6774 = vst [vmem:[%s6569] ss:$9 sm:$0xff] %v4354
        %v6775 = vld [vmem:[#allocation1] sm:$0xff]
        %6777 = vst [vmem:[#allocation1] ss:$9 sm:$0xff] %v4361
        %6779 = vst [vmem:[%s6551] ss:$9 sm:$0xff] %v4369
        %6781 = vst [vmem:[%s6554] ss:$9 sm:$0xff] %v4377
        %6783 = vst [vmem:[%s6557] ss:$9 sm:$0xff] %v4385
        %6785 = vst [vmem:[%s6560] ss:$9 sm:$0xff] %v4393
        %6787 = vst [vmem:[%s6563] ss:$9 sm:$0xff] %v4401
        %6789 = vst [vmem:[%s6566] ss:$9 sm:$0xff] %v4409
        %6791 = vst [vmem:[%s6569] ss:$9 sm:$0xff] %v4416
        %v6792 = vld [vmem:[#allocation1] sm:$0xff]
        %6794 = vst [vmem:[#allocation1] ss:$9 sm:$0xff] %v4424
        %6796 = vst [vmem:[%s6551] ss:$9 sm:$0xff] %v4432
        %6798 = vst [vmem:[%s6554] ss:$9 sm:$0xff] %v4440
        %6800 = vst [vmem:[%s6557] ss:$9 sm:$0xff] %v4448
        %6802 = vst [vmem:[%s6560] ss:$9 sm:$0xff] %v4456
        %6804 = vst [vmem:[%s6563] ss:$9 sm:$0xff] %v4464
        %6806 = vst [vmem:[%s6566] ss:$9 sm:$0xff] %v4471
        %6808 = vst [vmem:[%s6569] ss:$9 sm:$0xff] %v4479
        %v6809 = vld [vmem:[#allocation1] sm:$0xff]
        %6811 = vst [vmem:[#allocation1] ss:$9 sm:$0xff] %v4488
        %6813 = vst [vmem:[%s6551] ss:$9 sm:$0xff] %v4495
        %6815 = vst [vmem:[%s6554] ss:$9 sm:$0xff] %v4503
        %6817 = vst [vmem:[%s6557] ss:$9 sm:$0xff] %v4511
        %6819 = vst [vmem:[%s6560] ss:$9 sm:$0xff] %v4519
        %6821 = vst [vmem:[%s6563] ss:$9 sm:$0xff] %v4526
        %6823 = vst [vmem:[%s6566] ss:$9 sm:$0xff] %v4535
        %6825 = vst [vmem:[%s6569] ss:$9 sm:$0xff] %v4543
        %v6826 = vld [vmem:[#allocation1] sm:$0xff]
        %6828 = vst [vmem:[#allocation1] ss:$9 sm:$0xff] %v4550
        %6830 = vst [vmem:[%s6551] ss:$9 sm:$0xff] %v4558
        %6832 = vst [vmem:[%s6554] ss:$9 sm:$0xff] %v4566
        %6834 = vst [vmem:[%s6557] ss:$9 sm:$0xff] %v4574
        %6836 = vst [vmem:[%s6560] ss:$9 sm:$0xff] %v4582
        %6838 = vst [vmem:[%s6563] ss:$9 sm:$0xff] %v4590
        %6840 = vst [vmem:[%s6566] ss:$9 sm:$0xff] %v4598
        %6842 = vst [vmem:[%s6569] ss:$9 sm:$0xff] %v4605
        %v6843 = vld [vmem:[#allocation1] sm:$0xff]
        %6845 = vst [vmem:[#allocation1] ss:$9 sm:$0xff] %v4613
        %6847 = vst [vmem:[%s6551] ss:$9 sm:$0xff] %v4621
        %6849 = vst [vmem:[%s6554] ss:$9 sm:$0xff] %v4629
        %6851 = vst [vmem:[%s6557] ss:$9 sm:$0xff] %v4637
        %6853 = vst [vmem:[%s6560] ss:$9 sm:$0xff] %v4645
        %6855 = vst [vmem:[%s6563] ss:$9 sm:$0xff] %v4653
        %6857 = vst [vmem:[%s6566] ss:$9 sm:$0xff] %v4660
        %6859 = vst [vmem:[%s6569] ss:$9 sm:$0xff] %v4668
        %v6860 = vld [vmem:[#allocation1] sm:$0xff]
        %6862 = vst [vmem:[#allocation1] ss:$9 sm:$0xff] %v4676
        %6864 = vst [vmem:[%s6551] ss:$9 sm:$0xff] %v4684
        %6866 = vst [vmem:[%s6554] ss:$9 sm:$0xff] %v4692
        %6868 = vst [vmem:[%s6557] ss:$9 sm:$0xff] %v4699
        %6870 = vst [vmem:[%s6560] ss:$9 sm:$0xff] %v4707
        %6872 = vst [vmem:[%s6563] ss:$9 sm:$0xff] %v4715
        %6874 = vst [vmem:[%s6566] ss:$9 sm:$0xff] %v4723
        %6876 = vst [vmem:[%s6569] ss:$9 sm:$0xff] %v4731
        %v6877 = vld [vmem:[#allocation1] sm:$0xff]
        %6879 = vst [vmem:[#allocation1] ss:$9 sm:$0xff] %v4739
        %6881 = vst [vmem:[%s6551] ss:$9 sm:$0xff] %v4747
        %6883 = vst [vmem:[%s6554] ss:$9 sm:$0xff] %v4754
        %6885 = vst [vmem:[%s6557] ss:$9 sm:$0xff] %v4762
        %6887 = vst [vmem:[%s6560] ss:$9 sm:$0xff] %v4771
        %6889 = vst [vmem:[%s6563] ss:$9 sm:$0xff] %v4778
        %6891 = vst [vmem:[%s6566] ss:$9 sm:$0xff] %v4786
        %6893 = vst [vmem:[%s6569] ss:$9 sm:$0xff] %v4794
        %v6894 = vld [vmem:[#allocation1] sm:$0xff]
        %6896 = vst [vmem:[#allocation1] ss:$9 sm:$0xff] %v4802
        %6898 = vst [vmem:[%s6551] ss:$9 sm:$0xff] %v4809
        %6900 = vst [vmem:[%s6554] ss:$9 sm:$0xff] %v4818
        %6902 = vst [vmem:[%s6557] ss:$9 sm:$0xff] %v4826
        %6904 = vst [vmem:[%s6560] ss:$9 sm:$0xff] %v4833
        %6906 = vst [vmem:[%s6563] ss:$9 sm:$0xff] %v4841
        %6908 = vst [vmem:[%s6566] ss:$9 sm:$0xff] %v4849
        %6910 = vst [vmem:[%s6569] ss:$9 sm:$0xff] %v4857
        %v6911 = vld [vmem:[#allocation1] sm:$0xff]
        %6913 = vst [vmem:[#allocation1] ss:$9 sm:$0xff] %v4865
        %6915 = vst [vmem:[%s6551] ss:$9 sm:$0xff] %v4873
        %6917 = vst [vmem:[%s6554] ss:$9 sm:$0xff] %v4881
        %6919 = vst [vmem:[%s6557] ss:$9 sm:$0xff] %v4888
        %6921 = vst [vmem:[%s6560] ss:$9 sm:$0xff] %v4896
        %6923 = vst [vmem:[%s6563] ss:$9 sm:$0xff] %v4904
        %6925 = vst [vmem:[%s6566] ss:$9 sm:$0xff] %v4912
        %6927 = vst [vmem:[%s6569] ss:$9 sm:$0xff] %v4920
        %v6928 = vld [vmem:[#allocation1] sm:$0xff]
        %6930 = vst [vmem:[#allocation1] ss:$9 sm:$0xff] %v4928
        %6932 = vst [vmem:[%s6551] ss:$9 sm:$0xff] %v4936
        %6934 = vst [vmem:[%s6554] ss:$9 sm:$0xff] %v4943
        %6936 = vst [vmem:[%s6557] ss:$9 sm:$0xff] %v4951
        %6938 = vst [vmem:[%s6560] ss:$9 sm:$0xff] %v4960
        %6940 = vst [vmem:[%s6563] ss:$9 sm:$0xff] %v4967
        %6942 = vst [vmem:[%s6566] ss:$9 sm:$0xff] %v4975
        %6944 = vst [vmem:[%s6569] ss:$9 sm:$0xff] %v4983
        %v6945 = vld [vmem:[#allocation1] sm:$0xff]
        %6947 = vst [vmem:[#allocation1] ss:$9 sm:$0xff] %v4991
        %6949 = vst [vmem:[%s6551] ss:$9 sm:$0xff] %v4998
        %6951 = vst [vmem:[%s6554] ss:$9 sm:$0xff] %v5007
        %6953 = vst [vmem:[%s6557] ss:$9 sm:$0xff] %v5015
        %6955 = vst [vmem:[%s6560] ss:$9 sm:$0xff] %v5022
        %6957 = vst [vmem:[%s6563] ss:$9 sm:$0xff] %v5030
        %6959 = vst [vmem:[%s6566] ss:$9 sm:$0xff] %v5038
        %6961 = vst [vmem:[%s6569] ss:$9 sm:$0xff] %v5046
        %v6962 = vld [vmem:[#allocation1] sm:$0xff]
        %6964 = vst [vmem:[#allocation1] ss:$9 sm:$0xff] %v5054
        %6966 = vst [vmem:[%s6551] ss:$9 sm:$0xff] %v5062
        %6968 = vst [vmem:[%s6554] ss:$9 sm:$0xff] %v5070
        %6970 = vst [vmem:[%s6557] ss:$9 sm:$0xff] %v5077
        %6972 = vst [vmem:[%s6560] ss:$9 sm:$0xff] %v5085
        %6974 = vst [vmem:[%s6563] ss:$9 sm:$0xff] %v5093
        %6976 = vst [vmem:[%s6566] ss:$9 sm:$0xff] %v5101
        %6978 = vst [vmem:[%s6569] ss:$9 sm:$0xff] %v5109
        %v6979 = vld [vmem:[#allocation1] sm:$0xff]
        %6981 = vst [vmem:[#allocation1] ss:$9 sm:$0xff] %v5117
        %6983 = vst [vmem:[%s6551] ss:$9 sm:$0xff] %v5125
        %6985 = vst [vmem:[%s6554] ss:$9 sm:$0xff] %v5132
        %6987 = vst [vmem:[%s6557] ss:$9 sm:$0xff] %v5140
        %6989 = vst [vmem:[%s6560] ss:$9 sm:$0xff] %v5149
        %6991 = vst [vmem:[%s6563] ss:$9 sm:$0xff] %v5156
        %6993 = vst [vmem:[%s6566] ss:$9 sm:$0xff] %v5164
        %6995 = vst [vmem:[%s6569] ss:$9 sm:$0xff] %v5172
        %v6996 = vld [vmem:[#allocation1] sm:$0xff]
        %6998 = vst [vmem:[#allocation1] ss:$9 sm:$0xff] %v5180
        %7000 = vst [vmem:[%s6551] ss:$9 sm:$0xff] %v5187
        %7002 = vst [vmem:[%s6554] ss:$9 sm:$0xff] %v5196
        %7004 = vst [vmem:[%s6557] ss:$9 sm:$0xff] %v5204
        %7006 = vst [vmem:[%s6560] ss:$9 sm:$0xff] %v5211
        %7008 = vst [vmem:[%s6563] ss:$9 sm:$0xff] %v5219
        %7010 = vst [vmem:[%s6566] ss:$9 sm:$0xff] %v5227
        %7012 = vst [vmem:[%s6569] ss:$9 sm:$0xff] %v5235
        %v7013 = vld [vmem:[#allocation1] sm:$0xff]
        %7015 = vst [vmem:[#allocation1] ss:$9 sm:$0xff] %v5244
        %7017 = vst [vmem:[%s6551] ss:$9 sm:$0xff] %v5251
        %7019 = vst [vmem:[%s6554] ss:$9 sm:$0xff] %v5259
        %7021 = vst [vmem:[%s6557] ss:$9 sm:$0xff] %v5267
        %7023 = vst [vmem:[%s6560] ss:$9 sm:$0xff] %v5275
        %7025 = vst [vmem:[%s6563] ss:$9 sm:$0xff] %v5282
        %7027 = vst [vmem:[%s6566] ss:$9 sm:$0xff] %v5291
        %7029 = vst [vmem:[%s6569] ss:$9 sm:$0xff] %v5299
        %v7030 = vld [vmem:[#allocation1] sm:$0xff]
        %7032 = vst [vmem:[#allocation1] ss:$9 sm:$0xff] %v5306
        %7034 = vst [vmem:[%s6551] ss:$9 sm:$0xff] %v5314
        %7036 = vst [vmem:[%s6554] ss:$9 sm:$0xff] %v5322
        %7038 = vst [vmem:[%s6557] ss:$9 sm:$0xff] %v5330
        %7040 = vst [vmem:[%s6560] ss:$9 sm:$0xff] %v5338
        %7042 = vst [vmem:[%s6563] ss:$9 sm:$0xff] %v5346
        %7044 = vst [vmem:[%s6566] ss:$9 sm:$0xff] %v5354
        %7046 = vst [vmem:[%s6569] ss:$9 sm:$0xff] %v5361
        %v7047 = vld [vmem:[#allocation1] sm:$0xff]
        %7049 = vst [vmem:[#allocation1] ss:$9 sm:$0xff] %v5369
        %7051 = vst [vmem:[%s6551] ss:$9 sm:$0xff] %v5377
        %7053 = vst [vmem:[%s6554] ss:$9 sm:$0xff] %v5385
        %7055 = vst [vmem:[%s6557] ss:$9 sm:$0xff] %v5393
        %7057 = vst [vmem:[%s6560] ss:$9 sm:$0xff] %v5401
        %7059 = vst [vmem:[%s6563] ss:$9 sm:$0xff] %v5409
        %7061 = vst [vmem:[%s6566] ss:$9 sm:$0xff] %v5416
        %7063 = vst [vmem:[%s6569] ss:$9 sm:$0xff] %v5424
        %v7064 = vld [vmem:[#allocation1] sm:$0xff]
        %7066 = vst [vmem:[#allocation1] ss:$9 sm:$0xff] %v5433
        %7068 = vst [vmem:[%s6551] ss:$9 sm:$0xff] %v5440
        %7070 = vst [vmem:[%s6554] ss:$9 sm:$0xff] %v5448
        %7072 = vst [vmem:[%s6557] ss:$9 sm:$0xff] %v5456
        %7074 = vst [vmem:[%s6560] ss:$9 sm:$0xff] %v5464
        %7076 = vst [vmem:[%s6563] ss:$9 sm:$0xff] %v5471
        %7078 = vst [vmem:[%s6566] ss:$9 sm:$0xff] %v5480
        %7080 = vst [vmem:[%s6569] ss:$9 sm:$0xff] %v5488
        %v7081 = vld [vmem:[#allocation1] sm:$0xff]
        %7083 = vst [vmem:[#allocation1] ss:$9 sm:$0xff] %v5495
        %7085 = vst [vmem:[%s6551] ss:$9 sm:$0xff] %v5503
        %7087 = vst [vmem:[%s6554] ss:$9 sm:$0xff] %v5511
        %7089 = vst [vmem:[%s6557] ss:$9 sm:$0xff] %v5519
        %7091 = vst [vmem:[%s6560] ss:$9 sm:$0xff] %v5527
        %7093 = vst [vmem:[%s6563] ss:$9 sm:$0xff] %v5535
        %7095 = vst [vmem:[%s6566] ss:$9 sm:$0xff] %v5543
        %7097 = vst [vmem:[%s6569] ss:$9 sm:$0xff] %v5550
        %v7098 = vld [vmem:[#allocation1] sm:$0xff]
        %7100 = vst [vmem:[#allocation1] ss:$9 sm:$0xff] %v5558
        %7102 = vst [vmem:[%s6551] ss:$9 sm:$0xff] %v5566
        %7104 = vst [vmem:[%s6554] ss:$9 sm:$0xff] %v5574
        %7106 = vst [vmem:[%s6557] ss:$9 sm:$0xff] %v5582
        %7108 = vst [vmem:[%s6560] ss:$9 sm:$0xff] %v5590
        %7110 = vst [vmem:[%s6563] ss:$9 sm:$0xff] %v5598
        %7112 = vst [vmem:[%s6566] ss:$9 sm:$0xff] %v5605
        %7114 = vst [vmem:[%s6569] ss:$9 sm:$0xff] %v5613
        %v7115 = vld [vmem:[#allocation1] sm:$0xff]
        %7117 = vst [vmem:[#allocation1] ss:$9 sm:$0xff] %v5622
        %7119 = vst [vmem:[%s6551] ss:$9 sm:$0xff] %v5629
        %7121 = vst [vmem:[%s6554] ss:$9 sm:$0xff] %v5637
        %7123 = vst [vmem:[%s6557] ss:$9 sm:$0xff] %v5645
        %7125 = vst [vmem:[%s6560] ss:$9 sm:$0xff] %v5653
        %7127 = vst [vmem:[%s6563] ss:$9 sm:$0xff] %v5660
        %7129 = vst [vmem:[%s6566] ss:$9 sm:$0xff] %v5669
        %7131 = vst [vmem:[%s6569] ss:$9 sm:$0xff] %v5677
        %v7132 = vld [vmem:[#allocation1] sm:$0xff]
        %7134 = vst [vmem:[#allocation1] ss:$9 sm:$0xff] %v5684
        %7136 = vst [vmem:[%s6551] ss:$9 sm:$0xff] %v5692
        %7138 = vst [vmem:[%s6554] ss:$9 sm:$0xff] %v5700
        %7140 = vst [vmem:[%s6557] ss:$9 sm:$0xff] %v5708
        %7142 = vst [vmem:[%s6560] ss:$9 sm:$0xff] %v5716
        %7144 = vst [vmem:[%s6563] ss:$9 sm:$0xff] %v5724
        %7146 = vst [vmem:[%s6566] ss:$9 sm:$0xff] %v5732
        %7148 = vst [vmem:[%s6569] ss:$9 sm:$0xff] %v5739
        %v7149 = vld [vmem:[#allocation1] sm:$0xff]
        %7151 = vst [vmem:[#allocation1] ss:$9 sm:$0xff] %v5747
        %7153 = vst [vmem:[%s6551] ss:$9 sm:$0xff] %v5755
        %7155 = vst [vmem:[%s6554] ss:$9 sm:$0xff] %v5763
        %7157 = vst [vmem:[%s6557] ss:$9 sm:$0xff] %v5771
        %7159 = vst [vmem:[%s6560] ss:$9 sm:$0xff] %v5779
        %7161 = vst [vmem:[%s6563] ss:$9 sm:$0xff] %v5787
        %7163 = vst [vmem:[%s6566] ss:$9 sm:$0xff] %v5794
        %7165 = vst [vmem:[%s6569] ss:$9 sm:$0xff] %v5802
        %v7166 = vld [vmem:[#allocation1] sm:$0xff]
        %7203 = vst [vmem:[#allocation1] ss:$9 sm:$0xff] %v2347
        %s7204 = scalar_lea.vmem [#allocation1], 1
        %7205 = vst [vmem:[%s7204] ss:$9 sm:$0xff] %v2351
        %s7206 = scalar_lea.vmem [#allocation1], 2
        %7207 = vst [vmem:[%s7206] ss:$9 sm:$0xff] %v2355
        %s7208 = scalar_lea.vmem [#allocation1], 3
        %7209 = vst [vmem:[%s7208] ss:$9 sm:$0xff] %v2358
        %s7210 = scalar_lea.vmem [#allocation1], 4
        %7211 = vst [vmem:[%s7210] ss:$9 sm:$0xff] %v2361
        %s7212 = scalar_lea.vmem [#allocation1], 5
        %7213 = vst [vmem:[%s7212] ss:$9 sm:$0xff] %v2364
        %s7214 = scalar_lea.vmem [#allocation1], 6
        %7215 = vst [vmem:[%s7214] ss:$9 sm:$0xff] %v2370
        %s7216 = scalar_lea.vmem [#allocation1], 7
        %7217 = vst [vmem:[%s7216] ss:$9 sm:$0xff] %v2373
        %v7218 = vld [vmem:[#allocation1] sm:$0xff]
        %7219 = vst [vmem:[#allocation1] ss:$9 sm:$0xff] %v2376
        %7220 = vst [vmem:[%s7204] ss:$9 sm:$0xff] %v2379
        %7221 = vst [vmem:[%s7206] ss:$9 sm:$0xff] %v2382
        %7222 = vst [vmem:[%s7208] ss:$9 sm:$0xff] %v2385
        %7223 = vst [vmem:[%s7210] ss:$9 sm:$0xff] %v2391
        %7224 = vst [vmem:[%s7212] ss:$9 sm:$0xff] %v2394
        %7225 = vst [vmem:[%s7214] ss:$9 sm:$0xff] %v2397
        %7226 = vst [vmem:[%s7216] ss:$9 sm:$0xff] %v2400
        %v7227 = vld [vmem:[#allocation1] sm:$0xff]
        %7228 = vst [vmem:[#allocation1] ss:$9 sm:$0xff] %v2403
        %7229 = vst [vmem:[%s7204] ss:$9 sm:$0xff] %v2406
        %7230 = vst [vmem:[%s7206] ss:$9 sm:$0xff] %v2412
        %7231 = vst [vmem:[%s7208] ss:$9 sm:$0xff] %v2415
        %7232 = vst [vmem:[%s7210] ss:$9 sm:$0xff] %v2418
        %7233 = vst [vmem:[%s7212] ss:$9 sm:$0xff] %v2421
        %7234 = vst [vmem:[%s7214] ss:$9 sm:$0xff] %v2424
        %7235 = vst [vmem:[%s7216] ss:$9 sm:$0xff] %v2427
        %v7236 = vld [vmem:[#allocation1] sm:$0xff]
        %7237 = vst [vmem:[#allocation1] ss:$9 sm:$0xff] %v2433
        %7238 = vst [vmem:[%s7204] ss:$9 sm:$0xff] %v2436
        %7239 = vst [vmem:[%s7206] ss:$9 sm:$0xff] %v2439
        %7240 = vst [vmem:[%s7208] ss:$9 sm:$0xff] %v2442
        %7241 = vst [vmem:[%s7210] ss:$9 sm:$0xff] %v2445
        %7242 = vst [vmem:[%s7212] ss:$9 sm:$0xff] %v2448
        %7243 = vst [vmem:[%s7214] ss:$9 sm:$0xff] %v2454
        %7244 = vst [vmem:[%s7216] ss:$9 sm:$0xff] %v2457
        %v7245 = vld [vmem:[#allocation1] sm:$0xff]
        %7246 = vst [vmem:[#allocation1] ss:$9 sm:$0xff] %v2460
        %7247 = vst [vmem:[%s7204] ss:$9 sm:$0xff] %v2463
        %7248 = vst [vmem:[%s7206] ss:$9 sm:$0xff] %v2466
        %7249 = vst [vmem:[%s7208] ss:$9 sm:$0xff] %v2469
        %7250 = vst [vmem:[%s7210] ss:$9 sm:$0xff] %v2475
        %7251 = vst [vmem:[%s7212] ss:$9 sm:$0xff] %v2478
        %7252 = vst [vmem:[%s7214] ss:$9 sm:$0xff] %v2481
        %7253 = vst [vmem:[%s7216] ss:$9 sm:$0xff] %v2484
        %v7254 = vld [vmem:[#allocation1] sm:$0xff]
        %7255 = vst [vmem:[#allocation1] ss:$9 sm:$0xff] %v2487
        %7256 = vst [vmem:[%s7204] ss:$9 sm:$0xff] %v2490
        %7257 = vst [vmem:[%s7206] ss:$9 sm:$0xff] %v2496
        %7258 = vst [vmem:[%s7208] ss:$9 sm:$0xff] %v2499
        %7259 = vst [vmem:[%s7210] ss:$9 sm:$0xff] %v2502
        %7260 = vst [vmem:[%s7212] ss:$9 sm:$0xff] %v2505
        %7261 = vst [vmem:[%s7214] ss:$9 sm:$0xff] %v2508
        %7262 = vst [vmem:[%s7216] ss:$9 sm:$0xff] %v2511
        %v7263 = vld [vmem:[#allocation1] sm:$0xff]
        %7264 = vst [vmem:[#allocation1] ss:$9 sm:$0xff] %v2517
        %7265 = vst [vmem:[%s7204] ss:$9 sm:$0xff] %v2520
        %7266 = vst [vmem:[%s7206] ss:$9 sm:$0xff] %v2523
        %7267 = vst [vmem:[%s7208] ss:$9 sm:$0xff] %v2526
        %7268 = vst [vmem:[%s7210] ss:$9 sm:$0xff] %v2529
        %7269 = vst [vmem:[%s7212] ss:$9 sm:$0xff] %v2532
        %7270 = vst [vmem:[%s7214] ss:$9 sm:$0xff] %v2538
        %7271 = vst [vmem:[%s7216] ss:$9 sm:$0xff] %v2541
        %v7272 = vld [vmem:[#allocation1] sm:$0xff]
        %7273 = vst [vmem:[#allocation1] ss:$9 sm:$0xff] %v2544
        %7274 = vst [vmem:[%s7204] ss:$9 sm:$0xff] %v2547
        %7275 = vst [vmem:[%s7206] ss:$9 sm:$0xff] %v2550
        %7276 = vst [vmem:[%s7208] ss:$9 sm:$0xff] %v2553
        %7277 = vst [vmem:[%s7210] ss:$9 sm:$0xff] %v2559
        %7278 = vst [vmem:[%s7212] ss:$9 sm:$0xff] %v2562
        %7279 = vst [vmem:[%s7214] ss:$9 sm:$0xff] %v2565
        %7280 = vst [vmem:[%s7216] ss:$9 sm:$0xff] %v2568
        %v7281 = vld [vmem:[#allocation1] sm:$0xff]
        %7282 = vst [vmem:[#allocation1] ss:$9 sm:$0xff] %v2571
        %7283 = vst [vmem:[%s7204] ss:$9 sm:$0xff] %v2574
        %7284 = vst [vmem:[%s7206] ss:$9 sm:$0xff] %v2580
        %7285 = vst [vmem:[%s7208] ss:$9 sm:$0xff] %v2583
        %7286 = vst [vmem:[%s7210] ss:$9 sm:$0xff] %v2586
        %7287 = vst [vmem:[%s7212] ss:$9 sm:$0xff] %v2589
        %7288 = vst [vmem:[%s7214] ss:$9 sm:$0xff] %v2592
        %7289 = vst [vmem:[%s7216] ss:$9 sm:$0xff] %v2595
        %v7290 = vld [vmem:[#allocation1] sm:$0xff]
        %7291 = vst [vmem:[#allocation1] ss:$9 sm:$0xff] %v2643
        %7292 = vst [vmem:[%s7204] ss:$9 sm:$0xff] %v2646
        %7293 = vst [vmem:[%s7206] ss:$9 sm:$0xff] %v2649
        %7294 = vst [vmem:[%s7208] ss:$9 sm:$0xff] %v2652
        %7295 = vst [vmem:[%s7210] ss:$9 sm:$0xff] %v2655
        %7296 = vst [vmem:[%s7212] ss:$9 sm:$0xff] %v2658
        %7297 = vst [vmem:[%s7214] ss:$9 sm:$0xff] %v2664
        %7298 = vst [vmem:[%s7216] ss:$9 sm:$0xff] %v2667
        %v7299 = vld [vmem:[#allocation1] sm:$0xff]
        %7300 = vst [vmem:[#allocation1] ss:$9 sm:$0xff] %v2670
        %7301 = vst [vmem:[%s7204] ss:$9 sm:$0xff] %v2673
        %7302 = vst [vmem:[%s7206] ss:$9 sm:$0xff] %v2676
        %7303 = vst [vmem:[%s7208] ss:$9 sm:$0xff] %v2679
        %7304 = vst [vmem:[%s7210] ss:$9 sm:$0xff] %v2685
        %7305 = vst [vmem:[%s7212] ss:$9 sm:$0xff] %v2688
        %7306 = vst [vmem:[%s7214] ss:$9 sm:$0xff] %v2691
        %7307 = vst [vmem:[%s7216] ss:$9 sm:$0xff] %v2694
        %v7308 = vld [vmem:[#allocation1] sm:$0xff]
        %7309 = vst [vmem:[#allocation1] ss:$9 sm:$0xff] %v2697
        %7310 = vst [vmem:[%s7204] ss:$9 sm:$0xff] %v2700
        %7311 = vst [vmem:[%s7206] ss:$9 sm:$0xff] %v2706
        %7312 = vst [vmem:[%s7208] ss:$9 sm:$0xff] %v2709
        %7313 = vst [vmem:[%s7210] ss:$9 sm:$0xff] %v2712
        %7314 = vst [vmem:[%s7212] ss:$9 sm:$0xff] %v2715
        %7315 = vst [vmem:[%s7214] ss:$9 sm:$0xff] %v2718
        %7316 = vst [vmem:[%s7216] ss:$9 sm:$0xff] %v2721
        %v7317 = vld [vmem:[#allocation1] sm:$0xff]
        %7318 = vst [vmem:[#allocation1] ss:$9 sm:$0xff] %v2727
        %7319 = vst [vmem:[%s7204] ss:$9 sm:$0xff] %v2730
        %7320 = vst [vmem:[%s7206] ss:$9 sm:$0xff] %v2733
        %7321 = vst [vmem:[%s7208] ss:$9 sm:$0xff] %v2736
        %7322 = vst [vmem:[%s7210] ss:$9 sm:$0xff] %v2739
        %7323 = vst [vmem:[%s7212] ss:$9 sm:$0xff] %v2742
        %7324 = vst [vmem:[%s7214] ss:$9 sm:$0xff] %v2748
        %7325 = vst [vmem:[%s7216] ss:$9 sm:$0xff] %v2751
        %v7326 = vld [vmem:[#allocation1] sm:$0xff]
        %7327 = vst [vmem:[#allocation1] ss:$9 sm:$0xff] %v2754
        %7328 = vst [vmem:[%s7204] ss:$9 sm:$0xff] %v2757
        %7329 = vst [vmem:[%s7206] ss:$9 sm:$0xff] %v2760
        %7330 = vst [vmem:[%s7208] ss:$9 sm:$0xff] %v2763
        %7331 = vst [vmem:[%s7210] ss:$9 sm:$0xff] %v2769
        %7332 = vst [vmem:[%s7212] ss:$9 sm:$0xff] %v2772
        %7333 = vst [vmem:[%s7214] ss:$9 sm:$0xff] %v2775
        %7334 = vst [vmem:[%s7216] ss:$9 sm:$0xff] %v2778
        %v7335 = vld [vmem:[#allocation1] sm:$0xff]
        %7336 = vst [vmem:[#allocation1] ss:$9 sm:$0xff] %v2781
        %7337 = vst [vmem:[%s7204] ss:$9 sm:$0xff] %v2784
        %7338 = vst [vmem:[%s7206] ss:$9 sm:$0xff] %v2790
        %7339 = vst [vmem:[%s7208] ss:$9 sm:$0xff] %v2793
        %7340 = vst [vmem:[%s7210] ss:$9 sm:$0xff] %v2796
        %7341 = vst [vmem:[%s7212] ss:$9 sm:$0xff] %v2799
        %7342 = vst [vmem:[%s7214] ss:$9 sm:$0xff] %v2802
        %7343 = vst [vmem:[%s7216] ss:$9 sm:$0xff] %v2805
        %v7344 = vld [vmem:[#allocation1] sm:$0xff]
        %7345 = vst [vmem:[#allocation1] ss:$9 sm:$0xff] %v2811
        %7346 = vst [vmem:[%s7204] ss:$9 sm:$0xff] %v2814
        %7347 = vst [vmem:[%s7206] ss:$9 sm:$0xff] %v2817
        %7348 = vst [vmem:[%s7208] ss:$9 sm:$0xff] %v2820
        %7349 = vst [vmem:[%s7210] ss:$9 sm:$0xff] %v2823
        %7350 = vst [vmem:[%s7212] ss:$9 sm:$0xff] %v2826
        %7351 = vst [vmem:[%s7214] ss:$9 sm:$0xff] %v2832
        %7352 = vst [vmem:[%s7216] ss:$9 sm:$0xff] %v2835
        %v7353 = vld [vmem:[#allocation1] sm:$0xff]
        %7354 = vst [vmem:[#allocation1] ss:$9 sm:$0xff] %v2838
        %7355 = vst [vmem:[%s7204] ss:$9 sm:$0xff] %v2841
        %7356 = vst [vmem:[%s7206] ss:$9 sm:$0xff] %v2844
        %7357 = vst [vmem:[%s7208] ss:$9 sm:$0xff] %v2847
        %7358 = vst [vmem:[%s7210] ss:$9 sm:$0xff] %v2853
        %7359 = vst [vmem:[%s7212] ss:$9 sm:$0xff] %v2856
        %7360 = vst [vmem:[%s7214] ss:$9 sm:$0xff] %v2859
        %7361 = vst [vmem:[%s7216] ss:$9 sm:$0xff] %v2862
        %v7362 = vld [vmem:[#allocation1] sm:$0xff]
        %7363 = vst [vmem:[#allocation1] ss:$9 sm:$0xff] %v2865
        %7364 = vst [vmem:[%s7204] ss:$9 sm:$0xff] %v2868
        %7365 = vst [vmem:[%s7206] ss:$9 sm:$0xff] %v2874
        %7366 = vst [vmem:[%s7208] ss:$9 sm:$0xff] %v2877
        %7367 = vst [vmem:[%s7210] ss:$9 sm:$0xff] %v2880
        %7368 = vst [vmem:[%s7212] ss:$9 sm:$0xff] %v2883
        %7369 = vst [vmem:[%s7214] ss:$9 sm:$0xff] %v2886
        %7370 = vst [vmem:[%s7216] ss:$9 sm:$0xff] %v2889
        %v7371 = vld [vmem:[#allocation1] sm:$0xff]
        %7372 = vst [vmem:[#allocation1] ss:$9 sm:$0xff] %v2937
        %7373 = vst [vmem:[%s7204] ss:$9 sm:$0xff] %v2940
        %7374 = vst [vmem:[%s7206] ss:$9 sm:$0xff] %v2943
        %7375 = vst [vmem:[%s7208] ss:$9 sm:$0xff] %v2946
        %7376 = vst [vmem:[%s7210] ss:$9 sm:$0xff] %v2949
        %7377 = vst [vmem:[%s7212] ss:$9 sm:$0xff] %v2952
        %7378 = vst [vmem:[%s7214] ss:$9 sm:$0xff] %v2958
        %7379 = vst [vmem:[%s7216] ss:$9 sm:$0xff] %v2961
        %v7380 = vld [vmem:[#allocation1] sm:$0xff]
        %7381 = vst [vmem:[#allocation1] ss:$9 sm:$0xff] %v2964
        %7382 = vst [vmem:[%s7204] ss:$9 sm:$0xff] %v2967
        %7383 = vst [vmem:[%s7206] ss:$9 sm:$0xff] %v2970
        %7384 = vst [vmem:[%s7208] ss:$9 sm:$0xff] %v2973
        %7385 = vst [vmem:[%s7210] ss:$9 sm:$0xff] %v2979
        %7386 = vst [vmem:[%s7212] ss:$9 sm:$0xff] %v2982
        %7387 = vst [vmem:[%s7214] ss:$9 sm:$0xff] %v2985
        %7388 = vst [vmem:[%s7216] ss:$9 sm:$0xff] %v2988
        %v7389 = vld [vmem:[#allocation1] sm:$0xff]
        %7390 = vst [vmem:[#allocation1] ss:$9 sm:$0xff] %v2991
        %7391 = vst [vmem:[%s7204] ss:$9 sm:$0xff] %v2994
        %7392 = vst [vmem:[%s7206] ss:$9 sm:$0xff] %v3000
        %7393 = vst [vmem:[%s7208] ss:$9 sm:$0xff] %v3003
        %7394 = vst [vmem:[%s7210] ss:$9 sm:$0xff] %v3006
        %7395 = vst [vmem:[%s7212] ss:$9 sm:$0xff] %v3009
        %7396 = vst [vmem:[%s7214] ss:$9 sm:$0xff] %v3012
        %7397 = vst [vmem:[%s7216] ss:$9 sm:$0xff] %v3015
        %v7398 = vld [vmem:[#allocation1] sm:$0xff]
        %7399 = vst [vmem:[#allocation1] ss:$9 sm:$0xff] %v3021
        %7400 = vst [vmem:[%s7204] ss:$9 sm:$0xff] %v3024
        %7401 = vst [vmem:[%s7206] ss:$9 sm:$0xff] %v3027
        %7402 = vst [vmem:[%s7208] ss:$9 sm:$0xff] %v3030
        %7403 = vst [vmem:[%s7210] ss:$9 sm:$0xff] %v3033
        %7404 = vst [vmem:[%s7212] ss:$9 sm:$0xff] %v3036
        %7405 = vst [vmem:[%s7214] ss:$9 sm:$0xff] %v3042
        %7406 = vst [vmem:[%s7216] ss:$9 sm:$0xff] %v3045
        %v7407 = vld [vmem:[#allocation1] sm:$0xff]
        %7408 = vst [vmem:[#allocation1] ss:$9 sm:$0xff] %v3048
        %7409 = vst [vmem:[%s7204] ss:$9 sm:$0xff] %v3051
        %7410 = vst [vmem:[%s7206] ss:$9 sm:$0xff] %v3054
        %7411 = vst [vmem:[%s7208] ss:$9 sm:$0xff] %v3057
        %7412 = vst [vmem:[%s7210] ss:$9 sm:$0xff] %v3063
        %7413 = vst [vmem:[%s7212] ss:$9 sm:$0xff] %v3066
        %7414 = vst [vmem:[%s7214] ss:$9 sm:$0xff] %v3069
        %7415 = vst [vmem:[%s7216] ss:$9 sm:$0xff] %v3072
        %v7416 = vld [vmem:[#allocation1] sm:$0xff]
        %7417 = vst [vmem:[#allocation1] ss:$9 sm:$0xff] %v3075
        %7418 = vst [vmem:[%s7204] ss:$9 sm:$0xff] %v3078
        %7419 = vst [vmem:[%s7206] ss:$9 sm:$0xff] %v3084
        %7420 = vst [vmem:[%s7208] ss:$9 sm:$0xff] %v3087
        %7421 = vst [vmem:[%s7210] ss:$9 sm:$0xff] %v3090
        %7422 = vst [vmem:[%s7212] ss:$9 sm:$0xff] %v3093
        %7423 = vst [vmem:[%s7214] ss:$9 sm:$0xff] %v3096
        %7424 = vst [vmem:[%s7216] ss:$9 sm:$0xff] %v3099
        %v7425 = vld [vmem:[#allocation1] sm:$0xff]
        %7426 = vst [vmem:[#allocation1] ss:$9 sm:$0xff] %v3105
        %7427 = vst [vmem:[%s7204] ss:$9 sm:$0xff] %v3108
        %7428 = vst [vmem:[%s7206] ss:$9 sm:$0xff] %v3111
        %7429 = vst [vmem:[%s7208] ss:$9 sm:$0xff] %v3114
        %7430 = vst [vmem:[%s7210] ss:$9 sm:$0xff] %v3117
        %7431 = vst [vmem:[%s7212] ss:$9 sm:$0xff] %v3120
        %7432 = vst [vmem:[%s7214] ss:$9 sm:$0xff] %v3126
        %7433 = vst [vmem:[%s7216] ss:$9 sm:$0xff] %v3129
        %v7434 = vld [vmem:[#allocation1] sm:$0xff]
        %7435 = vst [vmem:[#allocation1] ss:$9 sm:$0xff] %v3132
        %7436 = vst [vmem:[%s7204] ss:$9 sm:$0xff] %v3135
        %7437 = vst [vmem:[%s7206] ss:$9 sm:$0xff] %v3138
        %7438 = vst [vmem:[%s7208] ss:$9 sm:$0xff] %v3141
        %7439 = vst [vmem:[%s7210] ss:$9 sm:$0xff] %v3147
        %7440 = vst [vmem:[%s7212] ss:$9 sm:$0xff] %v3150
        %7441 = vst [vmem:[%s7214] ss:$9 sm:$0xff] %v3153
        %7442 = vst [vmem:[%s7216] ss:$9 sm:$0xff] %v3156
        %v7443 = vld [vmem:[#allocation1] sm:$0xff]
        %7444 = vst [vmem:[#allocation1] ss:$9 sm:$0xff] %v3159
        %7445 = vst [vmem:[%s7204] ss:$9 sm:$0xff] %v3162
        %7446 = vst [vmem:[%s7206] ss:$9 sm:$0xff] %v3168
        %7447 = vst [vmem:[%s7208] ss:$9 sm:$0xff] %v3171
        %7448 = vst [vmem:[%s7210] ss:$9 sm:$0xff] %v3174
        %7449 = vst [vmem:[%s7212] ss:$9 sm:$0xff] %v3177
        %7450 = vst [vmem:[%s7214] ss:$9 sm:$0xff] %v3180
        %7451 = vst [vmem:[%s7216] ss:$9 sm:$0xff] %v3183
        %v7452 = vld [vmem:[#allocation1] sm:$0xff]
        %7453 = vst [vmem:[#allocation1] ss:$9 sm:$0xff] %v3231
        %7454 = vst [vmem:[%s7204] ss:$9 sm:$0xff] %v3234
        %7455 = vst [vmem:[%s7206] ss:$9 sm:$0xff] %v3237
        %7456 = vst [vmem:[%s7208] ss:$9 sm:$0xff] %v3240
        %7457 = vst [vmem:[%s7210] ss:$9 sm:$0xff] %v3243
        %7458 = vst [vmem:[%s7212] ss:$9 sm:$0xff] %v3246
        %7459 = vst [vmem:[%s7214] ss:$9 sm:$0xff] %v3252
        %7460 = vst [vmem:[%s7216] ss:$9 sm:$0xff] %v3255
        %v7461 = vld [vmem:[#allocation1] sm:$0xff]
        %7462 = vst [vmem:[#allocation1] ss:$9 sm:$0xff] %v3258
        %7463 = vst [vmem:[%s7204] ss:$9 sm:$0xff] %v3261
        %7464 = vst [vmem:[%s7206] ss:$9 sm:$0xff] %v3264
        %7465 = vst [vmem:[%s7208] ss:$9 sm:$0xff] %v3267
        %7466 = vst [vmem:[%s7210] ss:$9 sm:$0xff] %v3273
        %7467 = vst [vmem:[%s7212] ss:$9 sm:$0xff] %v3276
        %7468 = vst [vmem:[%s7214] ss:$9 sm:$0xff] %v3279
        %7469 = vst [vmem:[%s7216] ss:$9 sm:$0xff] %v3282
        %v7470 = vld [vmem:[#allocation1] sm:$0xff]
        %7471 = vst [vmem:[#allocation1] ss:$9 sm:$0xff] %v3285
        %7472 = vst [vmem:[%s7204] ss:$9 sm:$0xff] %v3288
        %7473 = vst [vmem:[%s7206] ss:$9 sm:$0xff] %v3294
        %7474 = vst [vmem:[%s7208] ss:$9 sm:$0xff] %v3297
        %7475 = vst [vmem:[%s7210] ss:$9 sm:$0xff] %v3300
        %7476 = vst [vmem:[%s7212] ss:$9 sm:$0xff] %v3303
        %7477 = vst [vmem:[%s7214] ss:$9 sm:$0xff] %v3306
        %7478 = vst [vmem:[%s7216] ss:$9 sm:$0xff] %v3309
        %v7479 = vld [vmem:[#allocation1] sm:$0xff]
        %7480 = vst [vmem:[#allocation1] ss:$9 sm:$0xff] %v3315
        %7481 = vst [vmem:[%s7204] ss:$9 sm:$0xff] %v3318
        %7482 = vst [vmem:[%s7206] ss:$9 sm:$0xff] %v3321
        %7483 = vst [vmem:[%s7208] ss:$9 sm:$0xff] %v3324
        %7484 = vst [vmem:[%s7210] ss:$9 sm:$0xff] %v3327
        %7485 = vst [vmem:[%s7212] ss:$9 sm:$0xff] %v3330
        %7486 = vst [vmem:[%s7214] ss:$9 sm:$0xff] %v3336
        %7487 = vst [vmem:[%s7216] ss:$9 sm:$0xff] %v3339
        %v7488 = vld [vmem:[#allocation1] sm:$0xff]
        %7489 = vst [vmem:[#allocation1] ss:$9 sm:$0xff] %v3342
        %7490 = vst [vmem:[%s7204] ss:$9 sm:$0xff] %v3345
        %7491 = vst [vmem:[%s7206] ss:$9 sm:$0xff] %v3348
        %7492 = vst [vmem:[%s7208] ss:$9 sm:$0xff] %v3351
        %7493 = vst [vmem:[%s7210] ss:$9 sm:$0xff] %v3357
        %7494 = vst [vmem:[%s7212] ss:$9 sm:$0xff] %v3360
        %7495 = vst [vmem:[%s7214] ss:$9 sm:$0xff] %v3363
        %7496 = vst [vmem:[%s7216] ss:$9 sm:$0xff] %v3366
        %v7497 = vld [vmem:[#allocation1] sm:$0xff]
        %7498 = vst [vmem:[#allocation1] ss:$9 sm:$0xff] %v3369
        %7499 = vst [vmem:[%s7204] ss:$9 sm:$0xff] %v3372
        %7500 = vst [vmem:[%s7206] ss:$9 sm:$0xff] %v3378
        %7501 = vst [vmem:[%s7208] ss:$9 sm:$0xff] %v3381
        %7502 = vst [vmem:[%s7210] ss:$9 sm:$0xff] %v3384
        %7503 = vst [vmem:[%s7212] ss:$9 sm:$0xff] %v3387
        %7504 = vst [vmem:[%s7214] ss:$9 sm:$0xff] %v3390
        %7505 = vst [vmem:[%s7216] ss:$9 sm:$0xff] %v3393
        %v7506 = vld [vmem:[#allocation1] sm:$0xff]
        %7507 = vst [vmem:[#allocation1] ss:$9 sm:$0xff] %v3399
        %7508 = vst [vmem:[%s7204] ss:$9 sm:$0xff] %v3402
        %7509 = vst [vmem:[%s7206] ss:$9 sm:$0xff] %v3405
        %7510 = vst [vmem:[%s7208] ss:$9 sm:$0xff] %v3408
        %7511 = vst [vmem:[%s7210] ss:$9 sm:$0xff] %v3411
        %7512 = vst [vmem:[%s7212] ss:$9 sm:$0xff] %v3414
        %7513 = vst [vmem:[%s7214] ss:$9 sm:$0xff] %v3420
        %7514 = vst [vmem:[%s7216] ss:$9 sm:$0xff] %v3423
        %v7515 = vld [vmem:[#allocation1] sm:$0xff]
        %7516 = vst [vmem:[#allocation1] ss:$9 sm:$0xff] %v3426
        %7517 = vst [vmem:[%s7204] ss:$9 sm:$0xff] %v3429
        %7518 = vst [vmem:[%s7206] ss:$9 sm:$0xff] %v3432
        %7519 = vst [vmem:[%s7208] ss:$9 sm:$0xff] %v3435
        %7520 = vst [vmem:[%s7210] ss:$9 sm:$0xff] %v3441
        %7521 = vst [vmem:[%s7212] ss:$9 sm:$0xff] %v3444
        %7522 = vst [vmem:[%s7214] ss:$9 sm:$0xff] %v3447
        %7523 = vst [vmem:[%s7216] ss:$9 sm:$0xff] %v3450
        %v7524 = vld [vmem:[#allocation1] sm:$0xff]
        %7525 = vst [vmem:[#allocation1] ss:$9 sm:$0xff] %v3453
        %7526 = vst [vmem:[%s7204] ss:$9 sm:$0xff] %v3456
        %7527 = vst [vmem:[%s7206] ss:$9 sm:$0xff] %v3462
        %7528 = vst [vmem:[%s7208] ss:$9 sm:$0xff] %v3465
        %7529 = vst [vmem:[%s7210] ss:$9 sm:$0xff] %v3468
        %7530 = vst [vmem:[%s7212] ss:$9 sm:$0xff] %v3471
        %7531 = vst [vmem:[%s7214] ss:$9 sm:$0xff] %v3474
        %7532 = vst [vmem:[%s7216] ss:$9 sm:$0xff] %v3477
        %v7533 = vld [vmem:[#allocation1] sm:$0xff]
        %7570 = vst [vmem:[#allocation1] ss:$9 sm:$0xff] %v2367
        %s7571 = scalar_lea.vmem [#allocation1], 1
        %7572 = vst [vmem:[%s7571] ss:$9 sm:$0xff] %v2370
        %s7573 = scalar_lea.vmem [#allocation1], 2
        %7574 = vst [vmem:[%s7573] ss:$9 sm:$0xff] %v2373
        %s7575 = scalar_lea.vmem [#allocation1], 3
        %7576 = vst [vmem:[%s7575] ss:$9 sm:$0xff] %v2376
        %s7577 = scalar_lea.vmem [#allocation1], 4
        %7578 = vst [vmem:[%s7577] ss:$9 sm:$0xff] %v2379
        %s7579 = scalar_lea.vmem [#allocation1], 5
        %7580 = vst [vmem:[%s7579] ss:$9 sm:$0xff] %v2382
        %s7581 = scalar_lea.vmem [#allocation1], 6
        %7582 = vst [vmem:[%s7581] ss:$9 sm:$0xff] %v2388
        %s7583 = scalar_lea.vmem [#allocation1], 7
        %7584 = vst [vmem:[%s7583] ss:$9 sm:$0xff] %v2391
        %v7585 = vld [vmem:[#allocation1] sm:$0xff]
        %7586 = vst [vmem:[#allocation1] ss:$9 sm:$0xff] %v2394
        %7587 = vst [vmem:[%s7571] ss:$9 sm:$0xff] %v2397
        %7588 = vst [vmem:[%s7573] ss:$9 sm:$0xff] %v2400
        %7589 = vst [vmem:[%s7575] ss:$9 sm:$0xff] %v2403
        %7590 = vst [vmem:[%s7577] ss:$9 sm:$0xff] %v2409
        %7591 = vst [vmem:[%s7579] ss:$9 sm:$0xff] %v2412
        %7592 = vst [vmem:[%s7581] ss:$9 sm:$0xff] %v2415
        %7593 = vst [vmem:[%s7583] ss:$9 sm:$0xff] %v2418
        %v7594 = vld [vmem:[#allocation1] sm:$0xff]
        %7595 = vst [vmem:[#allocation1] ss:$9 sm:$0xff] %v2421
        %7596 = vst [vmem:[%s7571] ss:$9 sm:$0xff] %v2424
        %7597 = vst [vmem:[%s7573] ss:$9 sm:$0xff] %v2430
        %7598 = vst [vmem:[%s7575] ss:$9 sm:$0xff] %v2433
        %7599 = vst [vmem:[%s7577] ss:$9 sm:$0xff] %v2436
        %7600 = vst [vmem:[%s7579] ss:$9 sm:$0xff] %v2439
        %7601 = vst [vmem:[%s7581] ss:$9 sm:$0xff] %v2442
        %7602 = vst [vmem:[%s7583] ss:$9 sm:$0xff] %v2445
        %v7603 = vld [vmem:[#allocation1] sm:$0xff]
        %7604 = vst [vmem:[#allocation1] ss:$9 sm:$0xff] %v2451
        %7605 = vst [vmem:[%s7571] ss:$9 sm:$0xff] %v2454
        %7606 = vst [vmem:[%s7573] ss:$9 sm:$0xff] %v2457
        %7607 = vst [vmem:[%s7575] ss:$9 sm:$0xff] %v2460
        %7608 = vst [vmem:[%s7577] ss:$9 sm:$0xff] %v2463
        %7609 = vst [vmem:[%s7579] ss:$9 sm:$0xff] %v2466
        %7610 = vst [vmem:[%s7581] ss:$9 sm:$0xff] %v2472
        %7611 = vst [vmem:[%s7583] ss:$9 sm:$0xff] %v2475
        %v7612 = vld [vmem:[#allocation1] sm:$0xff]
        %7613 = vst [vmem:[#allocation1] ss:$9 sm:$0xff] %v2478
        %7614 = vst [vmem:[%s7571] ss:$9 sm:$0xff] %v2481
        %7615 = vst [vmem:[%s7573] ss:$9 sm:$0xff] %v2484
        %7616 = vst [vmem:[%s7575] ss:$9 sm:$0xff] %v2487
        %7617 = vst [vmem:[%s7577] ss:$9 sm:$0xff] %v2493
        %7618 = vst [vmem:[%s7579] ss:$9 sm:$0xff] %v2496
        %7619 = vst [vmem:[%s7581] ss:$9 sm:$0xff] %v2499
        %7620 = vst [vmem:[%s7583] ss:$9 sm:$0xff] %v2502
        %v7621 = vld [vmem:[#allocation1] sm:$0xff]
        %7622 = vst [vmem:[#allocation1] ss:$9 sm:$0xff] %v2505
        %7623 = vst [vmem:[%s7571] ss:$9 sm:$0xff] %v2508
        %7624 = vst [vmem:[%s7573] ss:$9 sm:$0xff] %v2514
        %7625 = vst [vmem:[%s7575] ss:$9 sm:$0xff] %v2517
        %7626 = vst [vmem:[%s7577] ss:$9 sm:$0xff] %v2520
        %7627 = vst [vmem:[%s7579] ss:$9 sm:$0xff] %v2523
        %7628 = vst [vmem:[%s7581] ss:$9 sm:$0xff] %v2526
        %7629 = vst [vmem:[%s7583] ss:$9 sm:$0xff] %v2529
        %v7630 = vld [vmem:[#allocation1] sm:$0xff]
        %7631 = vst [vmem:[#allocation1] ss:$9 sm:$0xff] %v2535
        %7632 = vst [vmem:[%s7571] ss:$9 sm:$0xff] %v2538
        %7633 = vst [vmem:[%s7573] ss:$9 sm:$0xff] %v2541
        %7634 = vst [vmem:[%s7575] ss:$9 sm:$0xff] %v2544
        %7635 = vst [vmem:[%s7577] ss:$9 sm:$0xff] %v2547
        %7636 = vst [vmem:[%s7579] ss:$9 sm:$0xff] %v2550
        %7637 = vst [vmem:[%s7581] ss:$9 sm:$0xff] %v2556
        %7638 = vst [vmem:[%s7583] ss:$9 sm:$0xff] %v2559
        %v7639 = vld [vmem:[#allocation1] sm:$0xff]
        %7640 = vst [vmem:[#allocation1] ss:$9 sm:$0xff] %v2562
        %7641 = vst [vmem:[%s7571] ss:$9 sm:$0xff] %v2565
        %7642 = vst [vmem:[%s7573] ss:$9 sm:$0xff] %v2568
        %7643 = vst [vmem:[%s7575] ss:$9 sm:$0xff] %v2571
        %7644 = vst [vmem:[%s7577] ss:$9 sm:$0xff] %v2577
        %7645 = vst [vmem:[%s7579] ss:$9 sm:$0xff] %v2580
        %7646 = vst [vmem:[%s7581] ss:$9 sm:$0xff] %v2583
        %7647 = vst [vmem:[%s7583] ss:$9 sm:$0xff] %v2586
        %v7648 = vld [vmem:[#allocation1] sm:$0xff]
        %7649 = vst [vmem:[#allocation1] ss:$9 sm:$0xff] %v2589
        %7650 = vst [vmem:[%s7571] ss:$9 sm:$0xff] %v2592
        %7651 = vst [vmem:[%s7573] ss:$9 sm:$0xff] %v2598
        %7652 = vst [vmem:[%s7575] ss:$9 sm:$0xff] %v2601
        %7653 = vst [vmem:[%s7577] ss:$9 sm:$0xff] %v2604
        %7654 = vst [vmem:[%s7579] ss:$9 sm:$0xff] %v2607
        %7655 = vst [vmem:[%s7581] ss:$9 sm:$0xff] %v2610
        %7656 = vst [vmem:[%s7583] ss:$9 sm:$0xff] %v2613
        %v7657 = vld [vmem:[#allocation1] sm:$0xff]
        %7658 = vst [vmem:[#allocation1] ss:$9 sm:$0xff] %v2661
        %7659 = vst [vmem:[%s7571] ss:$9 sm:$0xff] %v2664
        %7660 = vst [vmem:[%s7573] ss:$9 sm:$0xff] %v2667
        %7661 = vst [vmem:[%s7575] ss:$9 sm:$0xff] %v2670
        %7662 = vst [vmem:[%s7577] ss:$9 sm:$0xff] %v2673
        %7663 = vst [vmem:[%s7579] ss:$9 sm:$0xff] %v2676
        %7664 = vst [vmem:[%s7581] ss:$9 sm:$0xff] %v2682
        %7665 = vst [vmem:[%s7583] ss:$9 sm:$0xff] %v2685
        %v7666 = vld [vmem:[#allocation1] sm:$0xff]
        %7667 = vst [vmem:[#allocation1] ss:$9 sm:$0xff] %v2688
        %7668 = vst [vmem:[%s7571] ss:$9 sm:$0xff] %v2691
        %7669 = vst [vmem:[%s7573] ss:$9 sm:$0xff] %v2694
        %7670 = vst [vmem:[%s7575] ss:$9 sm:$0xff] %v2697
        %7671 = vst [vmem:[%s7577] ss:$9 sm:$0xff] %v2703
        %7672 = vst [vmem:[%s7579] ss:$9 sm:$0xff] %v2706
        %7673 = vst [vmem:[%s7581] ss:$9 sm:$0xff] %v2709
        %7674 = vst [vmem:[%s7583] ss:$9 sm:$0xff] %v2712
        %v7675 = vld [vmem:[#allocation1] sm:$0xff]
        %7676 = vst [vmem:[#allocation1] ss:$9 sm:$0xff] %v2715
        %7677 = vst [vmem:[%s7571] ss:$9 sm:$0xff] %v2718
        %7678 = vst [vmem:[%s7573] ss:$9 sm:$0xff] %v2724
        %7679 = vst [vmem:[%s7575] ss:$9 sm:$0xff] %v2727
        %7680 = vst [vmem:[%s7577] ss:$9 sm:$0xff] %v2730
        %7681 = vst [vmem:[%s7579] ss:$9 sm:$0xff] %v2733
        %7682 = vst [vmem:[%s7581] ss:$9 sm:$0xff] %v2736
        %7683 = vst [vmem:[%s7583] ss:$9 sm:$0xff] %v2739
        %v7684 = vld [vmem:[#allocation1] sm:$0xff]
        %7685 = vst [vmem:[#allocation1] ss:$9 sm:$0xff] %v2745
        %7686 = vst [vmem:[%s7571] ss:$9 sm:$0xff] %v2748
        %7687 = vst [vmem:[%s7573] ss:$9 sm:$0xff] %v2751
        %7688 = vst [vmem:[%s7575] ss:$9 sm:$0xff] %v2754
        %7689 = vst [vmem:[%s7577] ss:$9 sm:$0xff] %v2757
        %7690 = vst [vmem:[%s7579] ss:$9 sm:$0xff] %v2760
        %7691 = vst [vmem:[%s7581] ss:$9 sm:$0xff] %v2766
        %7692 = vst [vmem:[%s7583] ss:$9 sm:$0xff] %v2769
        %v7693 = vld [vmem:[#allocation1] sm:$0xff]
        %7694 = vst [vmem:[#allocation1] ss:$9 sm:$0xff] %v2772
        %7695 = vst [vmem:[%s7571] ss:$9 sm:$0xff] %v2775
        %7696 = vst [vmem:[%s7573] ss:$9 sm:$0xff] %v2778
        %7697 = vst [vmem:[%s7575] ss:$9 sm:$0xff] %v2781
        %7698 = vst [vmem:[%s7577] ss:$9 sm:$0xff] %v2787
        %7699 = vst [vmem:[%s7579] ss:$9 sm:$0xff] %v2790
        %7700 = vst [vmem:[%s7581] ss:$9 sm:$0xff] %v2793
        %7701 = vst [vmem:[%s7583] ss:$9 sm:$0xff] %v2796
        %v7702 = vld [vmem:[#allocation1] sm:$0xff]
        %7703 = vst [vmem:[#allocation1] ss:$9 sm:$0xff] %v2799
        %7704 = vst [vmem:[%s7571] ss:$9 sm:$0xff] %v2802
        %7705 = vst [vmem:[%s7573] ss:$9 sm:$0xff] %v2808
        %7706 = vst [vmem:[%s7575] ss:$9 sm:$0xff] %v2811
        %7707 = vst [vmem:[%s7577] ss:$9 sm:$0xff] %v2814
        %7708 = vst [vmem:[%s7579] ss:$9 sm:$0xff] %v2817
        %7709 = vst [vmem:[%s7581] ss:$9 sm:$0xff] %v2820
        %7710 = vst [vmem:[%s7583] ss:$9 sm:$0xff] %v2823
        %v7711 = vld [vmem:[#allocation1] sm:$0xff]
        %7712 = vst [vmem:[#allocation1] ss:$9 sm:$0xff] %v2829
        %7713 = vst [vmem:[%s7571] ss:$9 sm:$0xff] %v2832
        %7714 = vst [vmem:[%s7573] ss:$9 sm:$0xff] %v2835
        %7715 = vst [vmem:[%s7575] ss:$9 sm:$0xff] %v2838
        %7716 = vst [vmem:[%s7577] ss:$9 sm:$0xff] %v2841
        %7717 = vst [vmem:[%s7579] ss:$9 sm:$0xff] %v2844
        %7718 = vst [vmem:[%s7581] ss:$9 sm:$0xff] %v2850
        %7719 = vst [vmem:[%s7583] ss:$9 sm:$0xff] %v2853
        %v7720 = vld [vmem:[#allocation1] sm:$0xff]
        %7721 = vst [vmem:[#allocation1] ss:$9 sm:$0xff] %v2856
        %7722 = vst [vmem:[%s7571] ss:$9 sm:$0xff] %v2859
        %7723 = vst [vmem:[%s7573] ss:$9 sm:$0xff] %v2862
        %7724 = vst [vmem:[%s7575] ss:$9 sm:$0xff] %v2865
        %7725 = vst [vmem:[%s7577] ss:$9 sm:$0xff] %v2871
        %7726 = vst [vmem:[%s7579] ss:$9 sm:$0xff] %v2874
        %7727 = vst [vmem:[%s7581] ss:$9 sm:$0xff] %v2877
        %7728 = vst [vmem:[%s7583] ss:$9 sm:$0xff] %v2880
        %v7729 = vld [vmem:[#allocation1] sm:$0xff]
        %7730 = vst [vmem:[#allocation1] ss:$9 sm:$0xff] %v2883
        %7731 = vst [vmem:[%s7571] ss:$9 sm:$0xff] %v2886
        %7732 = vst [vmem:[%s7573] ss:$9 sm:$0xff] %v2892
        %7733 = vst [vmem:[%s7575] ss:$9 sm:$0xff] %v2895
        %7734 = vst [vmem:[%s7577] ss:$9 sm:$0xff] %v2898
        %7735 = vst [vmem:[%s7579] ss:$9 sm:$0xff] %v2901
        %7736 = vst [vmem:[%s7581] ss:$9 sm:$0xff] %v2904
        %7737 = vst [vmem:[%s7583] ss:$9 sm:$0xff] %v2907
        %v7738 = vld [vmem:[#allocation1] sm:$0xff]
        %7739 = vst [vmem:[#allocation1] ss:$9 sm:$0xff] %v2955
        %7740 = vst [vmem:[%s7571] ss:$9 sm:$0xff] %v2958
        %7741 = vst [vmem:[%s7573] ss:$9 sm:$0xff] %v2961
        %7742 = vst [vmem:[%s7575] ss:$9 sm:$0xff] %v2964
        %7743 = vst [vmem:[%s7577] ss:$9 sm:$0xff] %v2967
        %7744 = vst [vmem:[%s7579] ss:$9 sm:$0xff] %v2970
        %7745 = vst [vmem:[%s7581] ss:$9 sm:$0xff] %v2976
        %7746 = vst [vmem:[%s7583] ss:$9 sm:$0xff] %v2979
        %v7747 = vld [vmem:[#allocation1] sm:$0xff]
        %7748 = vst [vmem:[#allocation1] ss:$9 sm:$0xff] %v2982
        %7749 = vst [vmem:[%s7571] ss:$9 sm:$0xff] %v2985
        %7750 = vst [vmem:[%s7573] ss:$9 sm:$0xff] %v2988
        %7751 = vst [vmem:[%s7575] ss:$9 sm:$0xff] %v2991
        %7752 = vst [vmem:[%s7577] ss:$9 sm:$0xff] %v2997
        %7753 = vst [vmem:[%s7579] ss:$9 sm:$0xff] %v3000
        %7754 = vst [vmem:[%s7581] ss:$9 sm:$0xff] %v3003
        %7755 = vst [vmem:[%s7583] ss:$9 sm:$0xff] %v3006
        %v7756 = vld [vmem:[#allocation1] sm:$0xff]
        %7757 = vst [vmem:[#allocation1] ss:$9 sm:$0xff] %v3009
        %7758 = vst [vmem:[%s7571] ss:$9 sm:$0xff] %v3012
        %7759 = vst [vmem:[%s7573] ss:$9 sm:$0xff] %v3018
        %7760 = vst [vmem:[%s7575] ss:$9 sm:$0xff] %v3021
        %7761 = vst [vmem:[%s7577] ss:$9 sm:$0xff] %v3024
        %7762 = vst [vmem:[%s7579] ss:$9 sm:$0xff] %v3027
        %7763 = vst [vmem:[%s7581] ss:$9 sm:$0xff] %v3030
        %7764 = vst [vmem:[%s7583] ss:$9 sm:$0xff] %v3033
        %v7765 = vld [vmem:[#allocation1] sm:$0xff]
        %7766 = vst [vmem:[#allocation1] ss:$9 sm:$0xff] %v3039
        %7767 = vst [vmem:[%s7571] ss:$9 sm:$0xff] %v3042
        %7768 = vst [vmem:[%s7573] ss:$9 sm:$0xff] %v3045
        %7769 = vst [vmem:[%s7575] ss:$9 sm:$0xff] %v3048
        %7770 = vst [vmem:[%s7577] ss:$9 sm:$0xff] %v3051
        %7771 = vst [vmem:[%s7579] ss:$9 sm:$0xff] %v3054
        %7772 = vst [vmem:[%s7581] ss:$9 sm:$0xff] %v3060
        %7773 = vst [vmem:[%s7583] ss:$9 sm:$0xff] %v3063
        %v7774 = vld [vmem:[#allocation1] sm:$0xff]
        %7775 = vst [vmem:[#allocation1] ss:$9 sm:$0xff] %v3066
        %7776 = vst [vmem:[%s7571] ss:$9 sm:$0xff] %v3069
        %7777 = vst [vmem:[%s7573] ss:$9 sm:$0xff] %v3072
        %7778 = vst [vmem:[%s7575] ss:$9 sm:$0xff] %v3075
        %7779 = vst [vmem:[%s7577] ss:$9 sm:$0xff] %v3081
        %7780 = vst [vmem:[%s7579] ss:$9 sm:$0xff] %v3084
        %7781 = vst [vmem:[%s7581] ss:$9 sm:$0xff] %v3087
        %7782 = vst [vmem:[%s7583] ss:$9 sm:$0xff] %v3090
        %v7783 = vld [vmem:[#allocation1] sm:$0xff]
        %7784 = vst [vmem:[#allocation1] ss:$9 sm:$0xff] %v3093
        %7785 = vst [vmem:[%s7571] ss:$9 sm:$0xff] %v3096
        %7786 = vst [vmem:[%s7573] ss:$9 sm:$0xff] %v3102
        %7787 = vst [vmem:[%s7575] ss:$9 sm:$0xff] %v3105
        %7788 = vst [vmem:[%s7577] ss:$9 sm:$0xff] %v3108
        %7789 = vst [vmem:[%s7579] ss:$9 sm:$0xff] %v3111
        %7790 = vst [vmem:[%s7581] ss:$9 sm:$0xff] %v3114
        %7791 = vst [vmem:[%s7583] ss:$9 sm:$0xff] %v3117
        %v7792 = vld [vmem:[#allocation1] sm:$0xff]
        %7793 = vst [vmem:[#allocation1] ss:$9 sm:$0xff] %v3123
        %7794 = vst [vmem:[%s7571] ss:$9 sm:$0xff] %v3126
        %7795 = vst [vmem:[%s7573] ss:$9 sm:$0xff] %v3129
        %7796 = vst [vmem:[%s7575] ss:$9 sm:$0xff] %v3132
        %7797 = vst [vmem:[%s7577] ss:$9 sm:$0xff] %v3135
        %7798 = vst [vmem:[%s7579] ss:$9 sm:$0xff] %v3138
        %7799 = vst [vmem:[%s7581] ss:$9 sm:$0xff] %v3144
        %7800 = vst [vmem:[%s7583] ss:$9 sm:$0xff] %v3147
        %v7801 = vld [vmem:[#allocation1] sm:$0xff]
        %7802 = vst [vmem:[#allocation1] ss:$9 sm:$0xff] %v3150
        %7803 = vst [vmem:[%s7571] ss:$9 sm:$0xff] %v3153
        %7804 = vst [vmem:[%s7573] ss:$9 sm:$0xff] %v3156
        %7805 = vst [vmem:[%s7575] ss:$9 sm:$0xff] %v3159
        %7806 = vst [vmem:[%s7577] ss:$9 sm:$0xff] %v3165
        %7807 = vst [vmem:[%s7579] ss:$9 sm:$0xff] %v3168
        %7808 = vst [vmem:[%s7581] ss:$9 sm:$0xff] %v3171
        %7809 = vst [vmem:[%s7583] ss:$9 sm:$0xff] %v3174
        %v7810 = vld [vmem:[#allocation1] sm:$0xff]
        %7811 = vst [vmem:[#allocation1] ss:$9 sm:$0xff] %v3177
        %7812 = vst [vmem:[%s7571] ss:$9 sm:$0xff] %v3180
        %7813 = vst [vmem:[%s7573] ss:$9 sm:$0xff] %v3186
        %7814 = vst [vmem:[%s7575] ss:$9 sm:$0xff] %v3189
        %7815 = vst [vmem:[%s7577] ss:$9 sm:$0xff] %v3192
        %7816 = vst [vmem:[%s7579] ss:$9 sm:$0xff] %v3195
        %7817 = vst [vmem:[%s7581] ss:$9 sm:$0xff] %v3198
        %7818 = vst [vmem:[%s7583] ss:$9 sm:$0xff] %v3201
        %v7819 = vld [vmem:[#allocation1] sm:$0xff]
        %7820 = vst [vmem:[#allocation1] ss:$9 sm:$0xff] %v3249
        %7821 = vst [vmem:[%s7571] ss:$9 sm:$0xff] %v3252
        %7822 = vst [vmem:[%s7573] ss:$9 sm:$0xff] %v3255
        %7823 = vst [vmem:[%s7575] ss:$9 sm:$0xff] %v3258
        %7824 = vst [vmem:[%s7577] ss:$9 sm:$0xff] %v3261
        %7825 = vst [vmem:[%s7579] ss:$9 sm:$0xff] %v3264
        %7826 = vst [vmem:[%s7581] ss:$9 sm:$0xff] %v3270
        %7827 = vst [vmem:[%s7583] ss:$9 sm:$0xff] %v3273
        %v7828 = vld [vmem:[#allocation1] sm:$0xff]
        %7829 = vst [vmem:[#allocation1] ss:$9 sm:$0xff] %v3276
        %7830 = vst [vmem:[%s7571] ss:$9 sm:$0xff] %v3279
        %7831 = vst [vmem:[%s7573] ss:$9 sm:$0xff] %v3282
        %7832 = vst [vmem:[%s7575] ss:$9 sm:$0xff] %v3285
        %7833 = vst [vmem:[%s7577] ss:$9 sm:$0xff] %v3291
        %7834 = vst [vmem:[%s7579] ss:$9 sm:$0xff] %v3294
        %7835 = vst [vmem:[%s7581] ss:$9 sm:$0xff] %v3297
        %7836 = vst [vmem:[%s7583] ss:$9 sm:$0xff] %v3300
        %v7837 = vld [vmem:[#allocation1] sm:$0xff]
        %7838 = vst [vmem:[#allocation1] ss:$9 sm:$0xff] %v3303
        %7839 = vst [vmem:[%s7571] ss:$9 sm:$0xff] %v3306
        %7840 = vst [vmem:[%s7573] ss:$9 sm:$0xff] %v3312
        %7841 = vst [vmem:[%s7575] ss:$9 sm:$0xff] %v3315
        %7842 = vst [vmem:[%s7577] ss:$9 sm:$0xff] %v3318
        %7843 = vst [vmem:[%s7579] ss:$9 sm:$0xff] %v3321
        %7844 = vst [vmem:[%s7581] ss:$9 sm:$0xff] %v3324
        %7845 = vst [vmem:[%s7583] ss:$9 sm:$0xff] %v3327
        %v7846 = vld [vmem:[#allocation1] sm:$0xff]
        %7847 = vst [vmem:[#allocation1] ss:$9 sm:$0xff] %v3333
        %7848 = vst [vmem:[%s7571] ss:$9 sm:$0xff] %v3336
        %7849 = vst [vmem:[%s7573] ss:$9 sm:$0xff] %v3339
        %7850 = vst [vmem:[%s7575] ss:$9 sm:$0xff] %v3342
        %7851 = vst [vmem:[%s7577] ss:$9 sm:$0xff] %v3345
        %7852 = vst [vmem:[%s7579] ss:$9 sm:$0xff] %v3348
        %7853 = vst [vmem:[%s7581] ss:$9 sm:$0xff] %v3354
        %7854 = vst [vmem:[%s7583] ss:$9 sm:$0xff] %v3357
        %v7855 = vld [vmem:[#allocation1] sm:$0xff]
        %7856 = vst [vmem:[#allocation1] ss:$9 sm:$0xff] %v3360
        %7857 = vst [vmem:[%s7571] ss:$9 sm:$0xff] %v3363
        %7858 = vst [vmem:[%s7573] ss:$9 sm:$0xff] %v3366
        %7859 = vst [vmem:[%s7575] ss:$9 sm:$0xff] %v3369
        %7860 = vst [vmem:[%s7577] ss:$9 sm:$0xff] %v3375
        %7861 = vst [vmem:[%s7579] ss:$9 sm:$0xff] %v3378
        %7862 = vst [vmem:[%s7581] ss:$9 sm:$0xff] %v3381
        %7863 = vst [vmem:[%s7583] ss:$9 sm:$0xff] %v3384
        %v7864 = vld [vmem:[#allocation1] sm:$0xff]
        %7865 = vst [vmem:[#allocation1] ss:$9 sm:$0xff] %v3387
        %7866 = vst [vmem:[%s7571] ss:$9 sm:$0xff] %v3390
        %7867 = vst [vmem:[%s7573] ss:$9 sm:$0xff] %v3396
        %7868 = vst [vmem:[%s7575] ss:$9 sm:$0xff] %v3399
        %7869 = vst [vmem:[%s7577] ss:$9 sm:$0xff] %v3402
        %7870 = vst [vmem:[%s7579] ss:$9 sm:$0xff] %v3405
        %7871 = vst [vmem:[%s7581] ss:$9 sm:$0xff] %v3408
        %7872 = vst [vmem:[%s7583] ss:$9 sm:$0xff] %v3411
        %v7873 = vld [vmem:[#allocation1] sm:$0xff]
        %7874 = vst [vmem:[#allocation1] ss:$9 sm:$0xff] %v3417
        %7875 = vst [vmem:[%s7571] ss:$9 sm:$0xff] %v3420
        %7876 = vst [vmem:[%s7573] ss:$9 sm:$0xff] %v3423
        %7877 = vst [vmem:[%s7575] ss:$9 sm:$0xff] %v3426
        %7878 = vst [vmem:[%s7577] ss:$9 sm:$0xff] %v3429
        %7879 = vst [vmem:[%s7579] ss:$9 sm:$0xff] %v3432
        %7880 = vst [vmem:[%s7581] ss:$9 sm:$0xff] %v3438
        %7881 = vst [vmem:[%s7583] ss:$9 sm:$0xff] %v3441
        %v7882 = vld [vmem:[#allocation1] sm:$0xff]
        %7883 = vst [vmem:[#allocation1] ss:$9 sm:$0xff] %v3444
        %7884 = vst [vmem:[%s7571] ss:$9 sm:$0xff] %v3447
        %7885 = vst [vmem:[%s7573] ss:$9 sm:$0xff] %v3450
        %7886 = vst [vmem:[%s7575] ss:$9 sm:$0xff] %v3453
        %7887 = vst [vmem:[%s7577] ss:$9 sm:$0xff] %v3459
        %7888 = vst [vmem:[%s7579] ss:$9 sm:$0xff] %v3462
        %7889 = vst [vmem:[%s7581] ss:$9 sm:$0xff] %v3465
        %7890 = vst [vmem:[%s7583] ss:$9 sm:$0xff] %v3468
        %v7891 = vld [vmem:[#allocation1] sm:$0xff]
        %7892 = vst [vmem:[#allocation1] ss:$9 sm:$0xff] %v3471
        %7893 = vst [vmem:[%s7571] ss:$9 sm:$0xff] %v3474
        %7894 = vst [vmem:[%s7573] ss:$9 sm:$0xff] %v3480
        %7895 = vst [vmem:[%s7575] ss:$9 sm:$0xff] %v3483
        %7896 = vst [vmem:[%s7577] ss:$9 sm:$0xff] %v3486
        %7897 = vst [vmem:[%s7579] ss:$9 sm:$0xff] %v3489
        %7898 = vst [vmem:[%s7581] ss:$9 sm:$0xff] %v3492
        %7899 = vst [vmem:[%s7583] ss:$9 sm:$0xff] %v3495
        %v7900 = vld [vmem:[#allocation1] sm:$0xff]
        %7937 = vst [vmem:[#allocation1] ss:$9 sm:$0xff] %v3589
        %s7938 = scalar_lea.vmem [#allocation1], 1
        %7939 = vst [vmem:[%s7938] ss:$9 sm:$0xff] %v3597
        %s7940 = scalar_lea.vmem [#allocation1], 2
        %7941 = vst [vmem:[%s7940] ss:$9 sm:$0xff] %v3605
        %s7942 = scalar_lea.vmem [#allocation1], 3
        %7943 = vst [vmem:[%s7942] ss:$9 sm:$0xff] %v3613
        %s7944 = scalar_lea.vmem [#allocation1], 4
        %7945 = vst [vmem:[%s7944] ss:$9 sm:$0xff] %v3620
        %s7946 = scalar_lea.vmem [#allocation1], 5
        %7947 = vst [vmem:[%s7946] ss:$9 sm:$0xff] %v3628
        %s7948 = scalar_lea.vmem [#allocation1], 6
        %7949 = vst [vmem:[%s7948] ss:$9 sm:$0xff] %v3637
        %s7950 = scalar_lea.vmem [#allocation1], 7
        %7951 = vst [vmem:[%s7950] ss:$9 sm:$0xff] %v3644
        %v7952 = vld [vmem:[#allocation1] sm:$0xff]
        %7953 = vst [vmem:[#allocation1] ss:$9 sm:$0xff] %v3652
        %7954 = vst [vmem:[%s7938] ss:$9 sm:$0xff] %v3660
        %7955 = vst [vmem:[%s7940] ss:$9 sm:$0xff] %v3668
        %7956 = vst [vmem:[%s7942] ss:$9 sm:$0xff] %v3675
        %7957 = vst [vmem:[%s7944] ss:$9 sm:$0xff] %v3684
        %7958 = vst [vmem:[%s7946] ss:$9 sm:$0xff] %v3692
        %7959 = vst [vmem:[%s7948] ss:$9 sm:$0xff] %v3699
        %7960 = vst [vmem:[%s7950] ss:$9 sm:$0xff] %v3707
        %v7961 = vld [vmem:[#allocation1] sm:$0xff]
        %7962 = vst [vmem:[#allocation1] ss:$9 sm:$0xff] %v3715
        %7963 = vst [vmem:[%s7938] ss:$9 sm:$0xff] %v3723
        %7964 = vst [vmem:[%s7940] ss:$9 sm:$0xff] %v3731
        %7965 = vst [vmem:[%s7942] ss:$9 sm:$0xff] %v3739
        %7966 = vst [vmem:[%s7944] ss:$9 sm:$0xff] %v3747
        %7967 = vst [vmem:[%s7946] ss:$9 sm:$0xff] %v3754
        %7968 = vst [vmem:[%s7948] ss:$9 sm:$0xff] %v3762
        %7969 = vst [vmem:[%s7950] ss:$9 sm:$0xff] %v3770
        %v7970 = vld [vmem:[#allocation1] sm:$0xff]
        %7971 = vst [vmem:[#allocation1] ss:$9 sm:$0xff] %v3778
        %7972 = vst [vmem:[%s7938] ss:$9 sm:$0xff] %v3786
        %7973 = vst [vmem:[%s7940] ss:$9 sm:$0xff] %v3794
        %7974 = vst [vmem:[%s7942] ss:$9 sm:$0xff] %v3802
        %7975 = vst [vmem:[%s7944] ss:$9 sm:$0xff] %v3809
        %7976 = vst [vmem:[%s7946] ss:$9 sm:$0xff] %v3817
        %7977 = vst [vmem:[%s7948] ss:$9 sm:$0xff] %v3826
        %7978 = vst [vmem:[%s7950] ss:$9 sm:$0xff] %v3833
        %v7979 = vld [vmem:[#allocation1] sm:$0xff]
        %7980 = vst [vmem:[#allocation1] ss:$9 sm:$0xff] %v3841
        %7981 = vst [vmem:[%s7938] ss:$9 sm:$0xff] %v3849
        %7982 = vst [vmem:[%s7940] ss:$9 sm:$0xff] %v3857
        %7983 = vst [vmem:[%s7942] ss:$9 sm:$0xff] %v3864
        %7984 = vst [vmem:[%s7944] ss:$9 sm:$0xff] %v3873
        %7985 = vst [vmem:[%s7946] ss:$9 sm:$0xff] %v3881
        %7986 = vst [vmem:[%s7948] ss:$9 sm:$0xff] %v3888
        %7987 = vst [vmem:[%s7950] ss:$9 sm:$0xff] %v3896
        %v7988 = vld [vmem:[#allocation1] sm:$0xff]
        %7989 = vst [vmem:[#allocation1] ss:$9 sm:$0xff] %v3904
        %7990 = vst [vmem:[%s7938] ss:$9 sm:$0xff] %v3912
        %7991 = vst [vmem:[%s7940] ss:$9 sm:$0xff] %v3920
        %7992 = vst [vmem:[%s7942] ss:$9 sm:$0xff] %v3928
        %7993 = vst [vmem:[%s7944] ss:$9 sm:$0xff] %v3936
        %7994 = vst [vmem:[%s7946] ss:$9 sm:$0xff] %v3943
        %7995 = vst [vmem:[%s7948] ss:$9 sm:$0xff] %v3951
        %7996 = vst [vmem:[%s7950] ss:$9 sm:$0xff] %v3959
        %v7997 = vld [vmem:[#allocation1] sm:$0xff]
        %7998 = vst [vmem:[#allocation1] ss:$9 sm:$0xff] %v3967
        %7999 = vst [vmem:[%s7938] ss:$9 sm:$0xff] %v3975
        %8000 = vst [vmem:[%s7940] ss:$9 sm:$0xff] %v3983
        %8001 = vst [vmem:[%s7942] ss:$9 sm:$0xff] %v3991
        %8002 = vst [vmem:[%s7944] ss:$9 sm:$0xff] %v3998
        %8003 = vst [vmem:[%s7946] ss:$9 sm:$0xff] %v4006
        %8004 = vst [vmem:[%s7948] ss:$9 sm:$0xff] %v4015
        %8005 = vst [vmem:[%s7950] ss:$9 sm:$0xff] %v4022
        %v8006 = vld [vmem:[#allocation1] sm:$0xff]
        %8007 = vst [vmem:[#allocation1] ss:$9 sm:$0xff] %v4030
        %8008 = vst [vmem:[%s7938] ss:$9 sm:$0xff] %v4038
        %8009 = vst [vmem:[%s7940] ss:$9 sm:$0xff] %v4046
        %8010 = vst [vmem:[%s7942] ss:$9 sm:$0xff] %v4053
        %8011 = vst [vmem:[%s7944] ss:$9 sm:$0xff] %v4062
        %8012 = vst [vmem:[%s7946] ss:$9 sm:$0xff] %v4070
        %8013 = vst [vmem:[%s7948] ss:$9 sm:$0xff] %v4077
        %8014 = vst [vmem:[%s7950] ss:$9 sm:$0xff] %v4085
        %v8015 = vld [vmem:[#allocation1] sm:$0xff]
        %8016 = vst [vmem:[#allocation1] ss:$9 sm:$0xff] %v4093
        %8017 = vst [vmem:[%s7938] ss:$9 sm:$0xff] %v4101
        %8019 = vst [vmem:[%s7940] ss:$9 sm:$0xff] %v5810
        %8021 = vst [vmem:[%s7942] ss:$9 sm:$0xff] %v5818
        %8023 = vst [vmem:[%s7944] ss:$9 sm:$0xff] %v5826
        %8025 = vst [vmem:[%s7946] ss:$9 sm:$0xff] %v5833
        %8027 = vst [vmem:[%s7948] ss:$9 sm:$0xff] %v5841
        %8029 = vst [vmem:[%s7950] ss:$9 sm:$0xff] %v5849
        %v8030 = vld [vmem:[#allocation1] sm:$0xff]
        %8031 = vst [vmem:[#allocation1] ss:$9 sm:$0xff] %v4157
        %8032 = vst [vmem:[%s7938] ss:$9 sm:$0xff] %v4165
        %8033 = vst [vmem:[%s7940] ss:$9 sm:$0xff] %v4172
        %8034 = vst [vmem:[%s7942] ss:$9 sm:$0xff] %v4180
        %8035 = vst [vmem:[%s7944] ss:$9 sm:$0xff] %v4188
        %8036 = vst [vmem:[%s7946] ss:$9 sm:$0xff] %v4196
        %8037 = vst [vmem:[%s7948] ss:$9 sm:$0xff] %v4204
        %8038 = vst [vmem:[%s7950] ss:$9 sm:$0xff] %v4212
        %v8039 = vld [vmem:[#allocation1] sm:$0xff]
        %8040 = vst [vmem:[#allocation1] ss:$9 sm:$0xff] %v4220
        %8041 = vst [vmem:[%s7938] ss:$9 sm:$0xff] %v4227
        %8042 = vst [vmem:[%s7940] ss:$9 sm:$0xff] %v4235
        %8043 = vst [vmem:[%s7942] ss:$9 sm:$0xff] %v4243
        %8044 = vst [vmem:[%s7944] ss:$9 sm:$0xff] %v4251
        %8045 = vst [vmem:[%s7946] ss:$9 sm:$0xff] %v4259
        %8046 = vst [vmem:[%s7948] ss:$9 sm:$0xff] %v4267
        %8047 = vst [vmem:[%s7950] ss:$9 sm:$0xff] %v4275
        %v8048 = vld [vmem:[#allocation1] sm:$0xff]
        %8049 = vst [vmem:[#allocation1] ss:$9 sm:$0xff] %v4282
        %8050 = vst [vmem:[%s7938] ss:$9 sm:$0xff] %v4290
        %8051 = vst [vmem:[%s7940] ss:$9 sm:$0xff] %v4299
        %8052 = vst [vmem:[%s7942] ss:$9 sm:$0xff] %v4306
        %8053 = vst [vmem:[%s7944] ss:$9 sm:$0xff] %v4314
        %8054 = vst [vmem:[%s7946] ss:$9 sm:$0xff] %v4322
        %8055 = vst [vmem:[%s7948] ss:$9 sm:$0xff] %v4330
        %8056 = vst [vmem:[%s7950] ss:$9 sm:$0xff] %v4337
        %v8057 = vld [vmem:[#allocation1] sm:$0xff]
        %8058 = vst [vmem:[#allocation1] ss:$9 sm:$0xff] %v4346
        %8059 = vst [vmem:[%s7938] ss:$9 sm:$0xff] %v4354
        %8060 = vst [vmem:[%s7940] ss:$9 sm:$0xff] %v4361
        %8061 = vst [vmem:[%s7942] ss:$9 sm:$0xff] %v4369
        %8062 = vst [vmem:[%s7944] ss:$9 sm:$0xff] %v4377
        %8063 = vst [vmem:[%s7946] ss:$9 sm:$0xff] %v4385
        %8064 = vst [vmem:[%s7948] ss:$9 sm:$0xff] %v4393
        %8065 = vst [vmem:[%s7950] ss:$9 sm:$0xff] %v4401
        %v8066 = vld [vmem:[#allocation1] sm:$0xff]
        %8067 = vst [vmem:[#allocation1] ss:$9 sm:$0xff] %v4409
        %8068 = vst [vmem:[%s7938] ss:$9 sm:$0xff] %v4416
        %8069 = vst [vmem:[%s7940] ss:$9 sm:$0xff] %v4424
        %8070 = vst [vmem:[%s7942] ss:$9 sm:$0xff] %v4432
        %8071 = vst [vmem:[%s7944] ss:$9 sm:$0xff] %v4440
        %8072 = vst [vmem:[%s7946] ss:$9 sm:$0xff] %v4448
        %8073 = vst [vmem:[%s7948] ss:$9 sm:$0xff] %v4456
        %8074 = vst [vmem:[%s7950] ss:$9 sm:$0xff] %v4464
        %v8075 = vld [vmem:[#allocation1] sm:$0xff]
        %8076 = vst [vmem:[#allocation1] ss:$9 sm:$0xff] %v4471
        %8077 = vst [vmem:[%s7938] ss:$9 sm:$0xff] %v4479
        %8078 = vst [vmem:[%s7940] ss:$9 sm:$0xff] %v4488
        %8079 = vst [vmem:[%s7942] ss:$9 sm:$0xff] %v4495
        %8080 = vst [vmem:[%s7944] ss:$9 sm:$0xff] %v4503
        %8081 = vst [vmem:[%s7946] ss:$9 sm:$0xff] %v4511
        %8082 = vst [vmem:[%s7948] ss:$9 sm:$0xff] %v4519
        %8083 = vst [vmem:[%s7950] ss:$9 sm:$0xff] %v4526
        %v8084 = vld [vmem:[#allocation1] sm:$0xff]
        %8085 = vst [vmem:[#allocation1] ss:$9 sm:$0xff] %v4535
        %8086 = vst [vmem:[%s7938] ss:$9 sm:$0xff] %v4543
        %8087 = vst [vmem:[%s7940] ss:$9 sm:$0xff] %v4550
        %8088 = vst [vmem:[%s7942] ss:$9 sm:$0xff] %v4558
        %8089 = vst [vmem:[%s7944] ss:$9 sm:$0xff] %v4566
        %8090 = vst [vmem:[%s7946] ss:$9 sm:$0xff] %v4574
        %8091 = vst [vmem:[%s7948] ss:$9 sm:$0xff] %v4582
        %8092 = vst [vmem:[%s7950] ss:$9 sm:$0xff] %v4590
        %v8093 = vld [vmem:[#allocation1] sm:$0xff]
        %8094 = vst [vmem:[#allocation1] ss:$9 sm:$0xff] %v4598
        %8095 = vst [vmem:[%s7938] ss:$9 sm:$0xff] %v4605
        %8096 = vst [vmem:[%s7940] ss:$9 sm:$0xff] %v4613
        %8097 = vst [vmem:[%s7942] ss:$9 sm:$0xff] %v4621
        %8098 = vst [vmem:[%s7944] ss:$9 sm:$0xff] %v4629
        %8099 = vst [vmem:[%s7946] ss:$9 sm:$0xff] %v4637
        %8100 = vst [vmem:[%s7948] ss:$9 sm:$0xff] %v4645
        %8101 = vst [vmem:[%s7950] ss:$9 sm:$0xff] %v4653
        %v8102 = vld [vmem:[#allocation1] sm:$0xff]
        %8103 = vst [vmem:[#allocation1] ss:$9 sm:$0xff] %v4660
        %8104 = vst [vmem:[%s7938] ss:$9 sm:$0xff] %v4668
        %8106 = vst [vmem:[%s7940] ss:$9 sm:$0xff] %v5858
        %8108 = vst [vmem:[%s7942] ss:$9 sm:$0xff] %v5865
        %8110 = vst [vmem:[%s7944] ss:$9 sm:$0xff] %v5873
        %8112 = vst [vmem:[%s7946] ss:$9 sm:$0xff] %v5881
        %8114 = vst [vmem:[%s7948] ss:$9 sm:$0xff] %v5889
        %8116 = vst [vmem:[%s7950] ss:$9 sm:$0xff] %v5896
        %v8117 = vld [vmem:[#allocation1] sm:$0xff]
        %8118 = vst [vmem:[#allocation1] ss:$9 sm:$0xff] %v4723
        %8119 = vst [vmem:[%s7938] ss:$9 sm:$0xff] %v4731
        %8120 = vst [vmem:[%s7940] ss:$9 sm:$0xff] %v4739
        %8121 = vst [vmem:[%s7942] ss:$9 sm:$0xff] %v4747
        %8122 = vst [vmem:[%s7944] ss:$9 sm:$0xff] %v4754
        %8123 = vst [vmem:[%s7946] ss:$9 sm:$0xff] %v4762
        %8124 = vst [vmem:[%s7948] ss:$9 sm:$0xff] %v4771
        %8125 = vst [vmem:[%s7950] ss:$9 sm:$0xff] %v4778
        %v8126 = vld [vmem:[#allocation1] sm:$0xff]
        %8127 = vst [vmem:[#allocation1] ss:$9 sm:$0xff] %v4786
        %8128 = vst [vmem:[%s7938] ss:$9 sm:$0xff] %v4794
        %8129 = vst [vmem:[%s7940] ss:$9 sm:$0xff] %v4802
        %8130 = vst [vmem:[%s7942] ss:$9 sm:$0xff] %v4809
        %8131 = vst [vmem:[%s7944] ss:$9 sm:$0xff] %v4818
        %8132 = vst [vmem:[%s7946] ss:$9 sm:$0xff] %v4826
        %8133 = vst [vmem:[%s7948] ss:$9 sm:$0xff] %v4833
        %8134 = vst [vmem:[%s7950] ss:$9 sm:$0xff] %v4841
        %v8135 = vld [vmem:[#allocation1] sm:$0xff]
        %8136 = vst [vmem:[#allocation1] ss:$9 sm:$0xff] %v4849
        %8137 = vst [vmem:[%s7938] ss:$9 sm:$0xff] %v4857
        %8138 = vst [vmem:[%s7940] ss:$9 sm:$0xff] %v4865
        %8139 = vst [vmem:[%s7942] ss:$9 sm:$0xff] %v4873
        %8140 = vst [vmem:[%s7944] ss:$9 sm:$0xff] %v4881
        %8141 = vst [vmem:[%s7946] ss:$9 sm:$0xff] %v4888
        %8142 = vst [vmem:[%s7948] ss:$9 sm:$0xff] %v4896
        %8143 = vst [vmem:[%s7950] ss:$9 sm:$0xff] %v4904
        %v8144 = vld [vmem:[#allocation1] sm:$0xff]
        %8145 = vst [vmem:[#allocation1] ss:$9 sm:$0xff] %v4912
        %8146 = vst [vmem:[%s7938] ss:$9 sm:$0xff] %v4920
        %8147 = vst [vmem:[%s7940] ss:$9 sm:$0xff] %v4928
        %8148 = vst [vmem:[%s7942] ss:$9 sm:$0xff] %v4936
        %8149 = vst [vmem:[%s7944] ss:$9 sm:$0xff] %v4943
        %8150 = vst [vmem:[%s7946] ss:$9 sm:$0xff] %v4951
        %8151 = vst [vmem:[%s7948] ss:$9 sm:$0xff] %v4960
        %8152 = vst [vmem:[%s7950] ss:$9 sm:$0xff] %v4967
        %v8153 = vld [vmem:[#allocation1] sm:$0xff]
        %8154 = vst [vmem:[#allocation1] ss:$9 sm:$0xff] %v4975
        %8155 = vst [vmem:[%s7938] ss:$9 sm:$0xff] %v4983
        %8156 = vst [vmem:[%s7940] ss:$9 sm:$0xff] %v4991
        %8157 = vst [vmem:[%s7942] ss:$9 sm:$0xff] %v4998
        %8158 = vst [vmem:[%s7944] ss:$9 sm:$0xff] %v5007
        %8159 = vst [vmem:[%s7946] ss:$9 sm:$0xff] %v5015
        %8160 = vst [vmem:[%s7948] ss:$9 sm:$0xff] %v5022
        %8161 = vst [vmem:[%s7950] ss:$9 sm:$0xff] %v5030
        %v8162 = vld [vmem:[#allocation1] sm:$0xff]
        %8163 = vst [vmem:[#allocation1] ss:$9 sm:$0xff] %v5038
        %8164 = vst [vmem:[%s7938] ss:$9 sm:$0xff] %v5046
        %8165 = vst [vmem:[%s7940] ss:$9 sm:$0xff] %v5054
        %8166 = vst [vmem:[%s7942] ss:$9 sm:$0xff] %v5062
        %8167 = vst [vmem:[%s7944] ss:$9 sm:$0xff] %v5070
        %8168 = vst [vmem:[%s7946] ss:$9 sm:$0xff] %v5077
        %8169 = vst [vmem:[%s7948] ss:$9 sm:$0xff] %v5085
        %8170 = vst [vmem:[%s7950] ss:$9 sm:$0xff] %v5093
        %v8171 = vld [vmem:[#allocation1] sm:$0xff]
        %8172 = vst [vmem:[#allocation1] ss:$9 sm:$0xff] %v5101
        %8173 = vst [vmem:[%s7938] ss:$9 sm:$0xff] %v5109
        %8174 = vst [vmem:[%s7940] ss:$9 sm:$0xff] %v5117
        %8175 = vst [vmem:[%s7942] ss:$9 sm:$0xff] %v5125
        %8176 = vst [vmem:[%s7944] ss:$9 sm:$0xff] %v5132
        %8177 = vst [vmem:[%s7946] ss:$9 sm:$0xff] %v5140
        %8178 = vst [vmem:[%s7948] ss:$9 sm:$0xff] %v5149
        %8179 = vst [vmem:[%s7950] ss:$9 sm:$0xff] %v5156
        %v8180 = vld [vmem:[#allocation1] sm:$0xff]
        %8181 = vst [vmem:[#allocation1] ss:$9 sm:$0xff] %v5164
        %8182 = vst [vmem:[%s7938] ss:$9 sm:$0xff] %v5172
        %8183 = vst [vmem:[%s7940] ss:$9 sm:$0xff] %v5180
        %8184 = vst [vmem:[%s7942] ss:$9 sm:$0xff] %v5187
        %8185 = vst [vmem:[%s7944] ss:$9 sm:$0xff] %v5196
        %8186 = vst [vmem:[%s7946] ss:$9 sm:$0xff] %v5204
        %8187 = vst [vmem:[%s7948] ss:$9 sm:$0xff] %v5211
        %8188 = vst [vmem:[%s7950] ss:$9 sm:$0xff] %v5219
        %v8189 = vld [vmem:[#allocation1] sm:$0xff]
        %8190 = vst [vmem:[#allocation1] ss:$9 sm:$0xff] %v5227
        %8191 = vst [vmem:[%s7938] ss:$9 sm:$0xff] %v5235
        %8193 = vst [vmem:[%s7940] ss:$9 sm:$0xff] %v5904
        %8195 = vst [vmem:[%s7942] ss:$9 sm:$0xff] %v5912
        %8197 = vst [vmem:[%s7944] ss:$9 sm:$0xff] %v5920
        %8199 = vst [vmem:[%s7946] ss:$9 sm:$0xff] %v5927
        %8201 = vst [vmem:[%s7948] ss:$9 sm:$0xff] %v5935
        %8203 = vst [vmem:[%s7950] ss:$9 sm:$0xff] %v5943
        %v8204 = vld [vmem:[#allocation1] sm:$0xff]
        %8205 = vst [vmem:[#allocation1] ss:$9 sm:$0xff] %v5291
        %8206 = vst [vmem:[%s7938] ss:$9 sm:$0xff] %v5299
        %8207 = vst [vmem:[%s7940] ss:$9 sm:$0xff] %v5306
        %8208 = vst [vmem:[%s7942] ss:$9 sm:$0xff] %v5314
        %8209 = vst [vmem:[%s7944] ss:$9 sm:$0xff] %v5322
        %8210 = vst [vmem:[%s7946] ss:$9 sm:$0xff] %v5330
        %8211 = vst [vmem:[%s7948] ss:$9 sm:$0xff] %v5338
        %8212 = vst [vmem:[%s7950] ss:$9 sm:$0xff] %v5346
        %v8213 = vld [vmem:[#allocation1] sm:$0xff]
        %8214 = vst [vmem:[#allocation1] ss:$9 sm:$0xff] %v5354
        %8215 = vst [vmem:[%s7938] ss:$9 sm:$0xff] %v5361
        %8216 = vst [vmem:[%s7940] ss:$9 sm:$0xff] %v5369
        %8217 = vst [vmem:[%s7942] ss:$9 sm:$0xff] %v5377
        %8218 = vst [vmem:[%s7944] ss:$9 sm:$0xff] %v5385
        %8219 = vst [vmem:[%s7946] ss:$9 sm:$0xff] %v5393
        %8220 = vst [vmem:[%s7948] ss:$9 sm:$0xff] %v5401
        %8221 = vst [vmem:[%s7950] ss:$9 sm:$0xff] %v5409
        %v8222 = vld [vmem:[#allocation1] sm:$0xff]
        %8223 = vst [vmem:[#allocation1] ss:$9 sm:$0xff] %v5416
        %8224 = vst [vmem:[%s7938] ss:$9 sm:$0xff] %v5424
        %8225 = vst [vmem:[%s7940] ss:$9 sm:$0xff] %v5433
        %8226 = vst [vmem:[%s7942] ss:$9 sm:$0xff] %v5440
        %8227 = vst [vmem:[%s7944] ss:$9 sm:$0xff] %v5448
        %8228 = vst [vmem:[%s7946] ss:$9 sm:$0xff] %v5456
        %8229 = vst [vmem:[%s7948] ss:$9 sm:$0xff] %v5464
        %8230 = vst [vmem:[%s7950] ss:$9 sm:$0xff] %v5471
        %v8231 = vld [vmem:[#allocation1] sm:$0xff]
        %8232 = vst [vmem:[#allocation1] ss:$9 sm:$0xff] %v5480
        %8233 = vst [vmem:[%s7938] ss:$9 sm:$0xff] %v5488
        %8234 = vst [vmem:[%s7940] ss:$9 sm:$0xff] %v5495
        %8235 = vst [vmem:[%s7942] ss:$9 sm:$0xff] %v5503
        %8236 = vst [vmem:[%s7944] ss:$9 sm:$0xff] %v5511
        %8237 = vst [vmem:[%s7946] ss:$9 sm:$0xff] %v5519
        %8238 = vst [vmem:[%s7948] ss:$9 sm:$0xff] %v5527
        %8239 = vst [vmem:[%s7950] ss:$9 sm:$0xff] %v5535
        %v8240 = vld [vmem:[#allocation1] sm:$0xff]
        %8241 = vst [vmem:[#allocation1] ss:$9 sm:$0xff] %v5543
        %8242 = vst [vmem:[%s7938] ss:$9 sm:$0xff] %v5550
        %8243 = vst [vmem:[%s7940] ss:$9 sm:$0xff] %v5558
        %8244 = vst [vmem:[%s7942] ss:$9 sm:$0xff] %v5566
        %8245 = vst [vmem:[%s7944] ss:$9 sm:$0xff] %v5574
        %8246 = vst [vmem:[%s7946] ss:$9 sm:$0xff] %v5582
        %8247 = vst [vmem:[%s7948] ss:$9 sm:$0xff] %v5590
        %8248 = vst [vmem:[%s7950] ss:$9 sm:$0xff] %v5598
        %v8249 = vld [vmem:[#allocation1] sm:$0xff]
        %8250 = vst [vmem:[#allocation1] ss:$9 sm:$0xff] %v5605
        %8251 = vst [vmem:[%s7938] ss:$9 sm:$0xff] %v5613
        %8252 = vst [vmem:[%s7940] ss:$9 sm:$0xff] %v5622
        %8253 = vst [vmem:[%s7942] ss:$9 sm:$0xff] %v5629
        %8254 = vst [vmem:[%s7944] ss:$9 sm:$0xff] %v5637
        %8255 = vst [vmem:[%s7946] ss:$9 sm:$0xff] %v5645
        %8256 = vst [vmem:[%s7948] ss:$9 sm:$0xff] %v5653
        %8257 = vst [vmem:[%s7950] ss:$9 sm:$0xff] %v5660
        %v8258 = vld [vmem:[#allocation1] sm:$0xff]
        %8259 = vst [vmem:[#allocation1] ss:$9 sm:$0xff] %v5669
        %8260 = vst [vmem:[%s7938] ss:$9 sm:$0xff] %v5677
        %8261 = vst [vmem:[%s7940] ss:$9 sm:$0xff] %v5684
        %8262 = vst [vmem:[%s7942] ss:$9 sm:$0xff] %v5692
        %8263 = vst [vmem:[%s7944] ss:$9 sm:$0xff] %v5700
        %8264 = vst [vmem:[%s7946] ss:$9 sm:$0xff] %v5708
        %8265 = vst [vmem:[%s7948] ss:$9 sm:$0xff] %v5716
        %8266 = vst [vmem:[%s7950] ss:$9 sm:$0xff] %v5724
        %v8267 = vld [vmem:[#allocation1] sm:$0xff]
        %8268 = vst [vmem:[#allocation1] ss:$9 sm:$0xff] %v5732
        %8269 = vst [vmem:[%s7938] ss:$9 sm:$0xff] %v5739
        %8270 = vst [vmem:[%s7940] ss:$9 sm:$0xff] %v5747
        %8271 = vst [vmem:[%s7942] ss:$9 sm:$0xff] %v5755
        %8272 = vst [vmem:[%s7944] ss:$9 sm:$0xff] %v5763
        %8273 = vst [vmem:[%s7946] ss:$9 sm:$0xff] %v5771
        %8274 = vst [vmem:[%s7948] ss:$9 sm:$0xff] %v5779
        %8275 = vst [vmem:[%s7950] ss:$9 sm:$0xff] %v5787
        %v8276 = vld [vmem:[#allocation1] sm:$0xff]
        %8277 = vst [vmem:[#allocation1] ss:$9 sm:$0xff] %v5794
        %8278 = vst [vmem:[%s7938] ss:$9 sm:$0xff] %v5802
        %8280 = vst [vmem:[%s7940] ss:$9 sm:$0xff] %v5952
        %8282 = vst [vmem:[%s7942] ss:$9 sm:$0xff] %v5959
        %8284 = vst [vmem:[%s7944] ss:$9 sm:$0xff] %v5967
        %8286 = vst [vmem:[%s7946] ss:$9 sm:$0xff] %v5975
        %8288 = vst [vmem:[%s7948] ss:$9 sm:$0xff] %v5983
        %8290 = vst [vmem:[%s7950] ss:$9 sm:$0xff] %v5990
        %v8291 = vld [vmem:[#allocation1] sm:$0xff]
        %8328 = vst [vmem:[#allocation1] ss:$9 sm:$0xff] %v2370
        %s8329 = scalar_lea.vmem [#allocation1], 1
        %8330 = vst [vmem:[%s8329] ss:$9 sm:$0xff] %v2373
        %s8331 = scalar_lea.vmem [#allocation1], 2
        %8332 = vst [vmem:[%s8331] ss:$9 sm:$0xff] %v2376
        %s8333 = scalar_lea.vmem [#allocation1], 3
        %8334 = vst [vmem:[%s8333] ss:$9 sm:$0xff] %v2379
        %s8335 = scalar_lea.vmem [#allocation1], 4
        %8336 = vst [vmem:[%s8335] ss:$9 sm:$0xff] %v2382
        %s8337 = scalar_lea.vmem [#allocation1], 5
        %8338 = vst [vmem:[%s8337] ss:$9 sm:$0xff] %v2385
        %s8339 = scalar_lea.vmem [#allocation1], 6
        %8340 = vst [vmem:[%s8339] ss:$9 sm:$0xff] %v2391
        %s8341 = scalar_lea.vmem [#allocation1], 7
        %8342 = vst [vmem:[%s8341] ss:$9 sm:$0xff] %v2394
        %v8343 = vld [vmem:[#allocation1] sm:$0xff]
        %8344 = vst [vmem:[#allocation1] ss:$9 sm:$0xff] %v2397
        %8345 = vst [vmem:[%s8329] ss:$9 sm:$0xff] %v2400
        %8346 = vst [vmem:[%s8331] ss:$9 sm:$0xff] %v2403
        %8347 = vst [vmem:[%s8333] ss:$9 sm:$0xff] %v2406
        %8348 = vst [vmem:[%s8335] ss:$9 sm:$0xff] %v2412
        %8349 = vst [vmem:[%s8337] ss:$9 sm:$0xff] %v2415
        %8350 = vst [vmem:[%s8339] ss:$9 sm:$0xff] %v2418
        %8351 = vst [vmem:[%s8341] ss:$9 sm:$0xff] %v2421
        %v8352 = vld [vmem:[#allocation1] sm:$0xff]
        %8353 = vst [vmem:[#allocation1] ss:$9 sm:$0xff] %v2424
        %8354 = vst [vmem:[%s8329] ss:$9 sm:$0xff] %v2427
        %8355 = vst [vmem:[%s8331] ss:$9 sm:$0xff] %v2433
        %8356 = vst [vmem:[%s8333] ss:$9 sm:$0xff] %v2436
        %8357 = vst [vmem:[%s8335] ss:$9 sm:$0xff] %v2439
        %8358 = vst [vmem:[%s8337] ss:$9 sm:$0xff] %v2442
        %8359 = vst [vmem:[%s8339] ss:$9 sm:$0xff] %v2445
        %8360 = vst [vmem:[%s8341] ss:$9 sm:$0xff] %v2448
        %v8361 = vld [vmem:[#allocation1] sm:$0xff]
        %8362 = vst [vmem:[#allocation1] ss:$9 sm:$0xff] %v2454
        %8363 = vst [vmem:[%s8329] ss:$9 sm:$0xff] %v2457
        %8364 = vst [vmem:[%s8331] ss:$9 sm:$0xff] %v2460
        %8365 = vst [vmem:[%s8333] ss:$9 sm:$0xff] %v2463
        %8366 = vst [vmem:[%s8335] ss:$9 sm:$0xff] %v2466
        %8367 = vst [vmem:[%s8337] ss:$9 sm:$0xff] %v2469
        %8368 = vst [vmem:[%s8339] ss:$9 sm:$0xff] %v2475
        %8369 = vst [vmem:[%s8341] ss:$9 sm:$0xff] %v2478
        %v8370 = vld [vmem:[#allocation1] sm:$0xff]
        %8371 = vst [vmem:[#allocation1] ss:$9 sm:$0xff] %v2481
        %8372 = vst [vmem:[%s8329] ss:$9 sm:$0xff] %v2484
        %8373 = vst [vmem:[%s8331] ss:$9 sm:$0xff] %v2487
        %8374 = vst [vmem:[%s8333] ss:$9 sm:$0xff] %v2490
        %8375 = vst [vmem:[%s8335] ss:$9 sm:$0xff] %v2496
        %8376 = vst [vmem:[%s8337] ss:$9 sm:$0xff] %v2499
        %8377 = vst [vmem:[%s8339] ss:$9 sm:$0xff] %v2502
        %8378 = vst [vmem:[%s8341] ss:$9 sm:$0xff] %v2505
        %v8379 = vld [vmem:[#allocation1] sm:$0xff]
        %8380 = vst [vmem:[#allocation1] ss:$9 sm:$0xff] %v2508
        %8381 = vst [vmem:[%s8329] ss:$9 sm:$0xff] %v2511
        %8382 = vst [vmem:[%s8331] ss:$9 sm:$0xff] %v2517
        %8383 = vst [vmem:[%s8333] ss:$9 sm:$0xff] %v2520
        %8384 = vst [vmem:[%s8335] ss:$9 sm:$0xff] %v2523
        %8385 = vst [vmem:[%s8337] ss:$9 sm:$0xff] %v2526
        %8386 = vst [vmem:[%s8339] ss:$9 sm:$0xff] %v2529
        %8387 = vst [vmem:[%s8341] ss:$9 sm:$0xff] %v2532
        %v8388 = vld [vmem:[#allocation1] sm:$0xff]
        %8389 = vst [vmem:[#allocation1] ss:$9 sm:$0xff] %v2538
        %8390 = vst [vmem:[%s8329] ss:$9 sm:$0xff] %v2541
        %8391 = vst [vmem:[%s8331] ss:$9 sm:$0xff] %v2544
        %8392 = vst [vmem:[%s8333] ss:$9 sm:$0xff] %v2547
        %8393 = vst [vmem:[%s8335] ss:$9 sm:$0xff] %v2550
        %8394 = vst [vmem:[%s8337] ss:$9 sm:$0xff] %v2553
        %8395 = vst [vmem:[%s8339] ss:$9 sm:$0xff] %v2559
        %8396 = vst [vmem:[%s8341] ss:$9 sm:$0xff] %v2562
        %v8397 = vld [vmem:[#allocation1] sm:$0xff]
        %8398 = vst [vmem:[#allocation1] ss:$9 sm:$0xff] %v2565
        %8399 = vst [vmem:[%s8329] ss:$9 sm:$0xff] %v2568
        %8400 = vst [vmem:[%s8331] ss:$9 sm:$0xff] %v2571
        %8401 = vst [vmem:[%s8333] ss:$9 sm:$0xff] %v2574
        %8402 = vst [vmem:[%s8335] ss:$9 sm:$0xff] %v2580
        %8403 = vst [vmem:[%s8337] ss:$9 sm:$0xff] %v2583
        %8404 = vst [vmem:[%s8339] ss:$9 sm:$0xff] %v2586
        %8405 = vst [vmem:[%s8341] ss:$9 sm:$0xff] %v2589
        %v8406 = vld [vmem:[#allocation1] sm:$0xff]
        %8407 = vst [vmem:[#allocation1] ss:$9 sm:$0xff] %v2592
        %8408 = vst [vmem:[%s8329] ss:$9 sm:$0xff] %v2595
        %8409 = vst [vmem:[%s8331] ss:$9 sm:$0xff] %v2601
        %8410 = vst [vmem:[%s8333] ss:$9 sm:$0xff] %v2604
        %8411 = vst [vmem:[%s8335] ss:$9 sm:$0xff] %v2607
        %8412 = vst [vmem:[%s8337] ss:$9 sm:$0xff] %v2610
        %8413 = vst [vmem:[%s8339] ss:$9 sm:$0xff] %v2613
        %8414 = vst [vmem:[%s8341] ss:$9 sm:$0xff] %v2616
        %v8415 = vld [vmem:[#allocation1] sm:$0xff]
        %8416 = vst [vmem:[#allocation1] ss:$9 sm:$0xff] %v2664
        %8417 = vst [vmem:[%s8329] ss:$9 sm:$0xff] %v2667
        %8418 = vst [vmem:[%s8331] ss:$9 sm:$0xff] %v2670
        %8419 = vst [vmem:[%s8333] ss:$9 sm:$0xff] %v2673
        %8420 = vst [vmem:[%s8335] ss:$9 sm:$0xff] %v2676
        %8421 = vst [vmem:[%s8337] ss:$9 sm:$0xff] %v2679
        %8422 = vst [vmem:[%s8339] ss:$9 sm:$0xff] %v2685
        %8423 = vst [vmem:[%s8341] ss:$9 sm:$0xff] %v2688
        %v8424 = vld [vmem:[#allocation1] sm:$0xff]
        %8425 = vst [vmem:[#allocation1] ss:$9 sm:$0xff] %v2691
        %8426 = vst [vmem:[%s8329] ss:$9 sm:$0xff] %v2694
        %8427 = vst [vmem:[%s8331] ss:$9 sm:$0xff] %v2697
        %8428 = vst [vmem:[%s8333] ss:$9 sm:$0xff] %v2700
        %8429 = vst [vmem:[%s8335] ss:$9 sm:$0xff] %v2706
        %8430 = vst [vmem:[%s8337] ss:$9 sm:$0xff] %v2709
        %8431 = vst [vmem:[%s8339] ss:$9 sm:$0xff] %v2712
        %8432 = vst [vmem:[%s8341] ss:$9 sm:$0xff] %v2715
        %v8433 = vld [vmem:[#allocation1] sm:$0xff]
        %8434 = vst [vmem:[#allocation1] ss:$9 sm:$0xff] %v2718
        %8435 = vst [vmem:[%s8329] ss:$9 sm:$0xff] %v2721
        %8436 = vst [vmem:[%s8331] ss:$9 sm:$0xff] %v2727
        %8437 = vst [vmem:[%s8333] ss:$9 sm:$0xff] %v2730
        %8438 = vst [vmem:[%s8335] ss:$9 sm:$0xff] %v2733
        %8439 = vst [vmem:[%s8337] ss:$9 sm:$0xff] %v2736
        %8440 = vst [vmem:[%s8339] ss:$9 sm:$0xff] %v2739
        %8441 = vst [vmem:[%s8341] ss:$9 sm:$0xff] %v2742
        %v8442 = vld [vmem:[#allocation1] sm:$0xff]
        %8443 = vst [vmem:[#allocation1] ss:$9 sm:$0xff] %v2748
        %8444 = vst [vmem:[%s8329] ss:$9 sm:$0xff] %v2751
        %8445 = vst [vmem:[%s8331] ss:$9 sm:$0xff] %v2754
        %8446 = vst [vmem:[%s8333] ss:$9 sm:$0xff] %v2757
        %8447 = vst [vmem:[%s8335] ss:$9 sm:$0xff] %v2760
        %8448 = vst [vmem:[%s8337] ss:$9 sm:$0xff] %v2763
        %8449 = vst [vmem:[%s8339] ss:$9 sm:$0xff] %v2769
        %8450 = vst [vmem:[%s8341] ss:$9 sm:$0xff] %v2772
        %v8451 = vld [vmem:[#allocation1] sm:$0xff]
        %8452 = vst [vmem:[#allocation1] ss:$9 sm:$0xff] %v2775
        %8453 = vst [vmem:[%s8329] ss:$9 sm:$0xff] %v2778
        %8454 = vst [vmem:[%s8331] ss:$9 sm:$0xff] %v2781
        %8455 = vst [vmem:[%s8333] ss:$9 sm:$0xff] %v2784
        %8456 = vst [vmem:[%s8335] ss:$9 sm:$0xff] %v2790
        %8457 = vst [vmem:[%s8337] ss:$9 sm:$0xff] %v2793
        %8458 = vst [vmem:[%s8339] ss:$9 sm:$0xff] %v2796
        %8459 = vst [vmem:[%s8341] ss:$9 sm:$0xff] %v2799
        %v8460 = vld [vmem:[#allocation1] sm:$0xff]
        %8461 = vst [vmem:[#allocation1] ss:$9 sm:$0xff] %v2802
        %8462 = vst [vmem:[%s8329] ss:$9 sm:$0xff] %v2805
        %8463 = vst [vmem:[%s8331] ss:$9 sm:$0xff] %v2811
        %8464 = vst [vmem:[%s8333] ss:$9 sm:$0xff] %v2814
        %8465 = vst [vmem:[%s8335] ss:$9 sm:$0xff] %v2817
        %8466 = vst [vmem:[%s8337] ss:$9 sm:$0xff] %v2820
        %8467 = vst [vmem:[%s8339] ss:$9 sm:$0xff] %v2823
        %8468 = vst [vmem:[%s8341] ss:$9 sm:$0xff] %v2826
        %v8469 = vld [vmem:[#allocation1] sm:$0xff]
        %8470 = vst [vmem:[#allocation1] ss:$9 sm:$0xff] %v2832
        %8471 = vst [vmem:[%s8329] ss:$9 sm:$0xff] %v2835
        %8472 = vst [vmem:[%s8331] ss:$9 sm:$0xff] %v2838
        %8473 = vst [vmem:[%s8333] ss:$9 sm:$0xff] %v2841
        %8474 = vst [vmem:[%s8335] ss:$9 sm:$0xff] %v2844
        %8475 = vst [vmem:[%s8337] ss:$9 sm:$0xff] %v2847
        %8476 = vst [vmem:[%s8339] ss:$9 sm:$0xff] %v2853
        %8477 = vst [vmem:[%s8341] ss:$9 sm:$0xff] %v2856
        %v8478 = vld [vmem:[#allocation1] sm:$0xff]
        %8479 = vst [vmem:[#allocation1] ss:$9 sm:$0xff] %v2859
        %8480 = vst [vmem:[%s8329] ss:$9 sm:$0xff] %v2862
        %8481 = vst [vmem:[%s8331] ss:$9 sm:$0xff] %v2865
        %8482 = vst [vmem:[%s8333] ss:$9 sm:$0xff] %v2868
        %8483 = vst [vmem:[%s8335] ss:$9 sm:$0xff] %v2874
        %8484 = vst [vmem:[%s8337] ss:$9 sm:$0xff] %v2877
        %8485 = vst [vmem:[%s8339] ss:$9 sm:$0xff] %v2880
        %8486 = vst [vmem:[%s8341] ss:$9 sm:$0xff] %v2883
        %v8487 = vld [vmem:[#allocation1] sm:$0xff]
        %8488 = vst [vmem:[#allocation1] ss:$9 sm:$0xff] %v2886
        %8489 = vst [vmem:[%s8329] ss:$9 sm:$0xff] %v2889
        %8490 = vst [vmem:[%s8331] ss:$9 sm:$0xff] %v2895
        %8491 = vst [vmem:[%s8333] ss:$9 sm:$0xff] %v2898
        %8492 = vst [vmem:[%s8335] ss:$9 sm:$0xff] %v2901
        %8493 = vst [vmem:[%s8337] ss:$9 sm:$0xff] %v2904
        %8494 = vst [vmem:[%s8339] ss:$9 sm:$0xff] %v2907
        %8495 = vst [vmem:[%s8341] ss:$9 sm:$0xff] %v2910
        %v8496 = vld [vmem:[#allocation1] sm:$0xff]
        %8497 = vst [vmem:[#allocation1] ss:$9 sm:$0xff] %v2958
        %8498 = vst [vmem:[%s8329] ss:$9 sm:$0xff] %v2961
        %8499 = vst [vmem:[%s8331] ss:$9 sm:$0xff] %v2964
        %8500 = vst [vmem:[%s8333] ss:$9 sm:$0xff] %v2967
        %8501 = vst [vmem:[%s8335] ss:$9 sm:$0xff] %v2970
        %8502 = vst [vmem:[%s8337] ss:$9 sm:$0xff] %v2973
        %8503 = vst [vmem:[%s8339] ss:$9 sm:$0xff] %v2979
        %8504 = vst [vmem:[%s8341] ss:$9 sm:$0xff] %v2982
        %v8505 = vld [vmem:[#allocation1] sm:$0xff]
        %8506 = vst [vmem:[#allocation1] ss:$9 sm:$0xff] %v2985
        %8507 = vst [vmem:[%s8329] ss:$9 sm:$0xff] %v2988
        %8508 = vst [vmem:[%s8331] ss:$9 sm:$0xff] %v2991
        %8509 = vst [vmem:[%s8333] ss:$9 sm:$0xff] %v2994
        %8510 = vst [vmem:[%s8335] ss:$9 sm:$0xff] %v3000
        %8511 = vst [vmem:[%s8337] ss:$9 sm:$0xff] %v3003
        %8512 = vst [vmem:[%s8339] ss:$9 sm:$0xff] %v3006
        %8513 = vst [vmem:[%s8341] ss:$9 sm:$0xff] %v3009
        %v8514 = vld [vmem:[#allocation1] sm:$0xff]
        %8515 = vst [vmem:[#allocation1] ss:$9 sm:$0xff] %v3012
        %8516 = vst [vmem:[%s8329] ss:$9 sm:$0xff] %v3015
        %8517 = vst [vmem:[%s8331] ss:$9 sm:$0xff] %v3021
        %8518 = vst [vmem:[%s8333] ss:$9 sm:$0xff] %v3024
        %8519 = vst [vmem:[%s8335] ss:$9 sm:$0xff] %v3027
        %8520 = vst [vmem:[%s8337] ss:$9 sm:$0xff] %v3030
        %8521 = vst [vmem:[%s8339] ss:$9 sm:$0xff] %v3033
        %8522 = vst [vmem:[%s8341] ss:$9 sm:$0xff] %v3036
        %v8523 = vld [vmem:[#allocation1] sm:$0xff]
        %8524 = vst [vmem:[#allocation1] ss:$9 sm:$0xff] %v3042
        %8525 = vst [vmem:[%s8329] ss:$9 sm:$0xff] %v3045
        %8526 = vst [vmem:[%s8331] ss:$9 sm:$0xff] %v3048
        %8527 = vst [vmem:[%s8333] ss:$9 sm:$0xff] %v3051
        %8528 = vst [vmem:[%s8335] ss:$9 sm:$0xff] %v3054
        %8529 = vst [vmem:[%s8337] ss:$9 sm:$0xff] %v3057
        %8530 = vst [vmem:[%s8339] ss:$9 sm:$0xff] %v3063
        %8531 = vst [vmem:[%s8341] ss:$9 sm:$0xff] %v3066
        %v8532 = vld [vmem:[#allocation1] sm:$0xff]
        %8533 = vst [vmem:[#allocation1] ss:$9 sm:$0xff] %v3069
        %8534 = vst [vmem:[%s8329] ss:$9 sm:$0xff] %v3072
        %8535 = vst [vmem:[%s8331] ss:$9 sm:$0xff] %v3075
        %8536 = vst [vmem:[%s8333] ss:$9 sm:$0xff] %v3078
        %8537 = vst [vmem:[%s8335] ss:$9 sm:$0xff] %v3084
        %8538 = vst [vmem:[%s8337] ss:$9 sm:$0xff] %v3087
        %8539 = vst [vmem:[%s8339] ss:$9 sm:$0xff] %v3090
        %8540 = vst [vmem:[%s8341] ss:$9 sm:$0xff] %v3093
        %v8541 = vld [vmem:[#allocation1] sm:$0xff]
        %8542 = vst [vmem:[#allocation1] ss:$9 sm:$0xff] %v3096
        %8543 = vst [vmem:[%s8329] ss:$9 sm:$0xff] %v3099
        %8544 = vst [vmem:[%s8331] ss:$9 sm:$0xff] %v3105
        %8545 = vst [vmem:[%s8333] ss:$9 sm:$0xff] %v3108
        %8546 = vst [vmem:[%s8335] ss:$9 sm:$0xff] %v3111
        %8547 = vst [vmem:[%s8337] ss:$9 sm:$0xff] %v3114
        %8548 = vst [vmem:[%s8339] ss:$9 sm:$0xff] %v3117
        %8549 = vst [vmem:[%s8341] ss:$9 sm:$0xff] %v3120
        %v8550 = vld [vmem:[#allocation1] sm:$0xff]
        %8551 = vst [vmem:[#allocation1] ss:$9 sm:$0xff] %v3126
        %8552 = vst [vmem:[%s8329] ss:$9 sm:$0xff] %v3129
        %8553 = vst [vmem:[%s8331] ss:$9 sm:$0xff] %v3132
        %8554 = vst [vmem:[%s8333] ss:$9 sm:$0xff] %v3135
        %8555 = vst [vmem:[%s8335] ss:$9 sm:$0xff] %v3138
        %8556 = vst [vmem:[%s8337] ss:$9 sm:$0xff] %v3141
        %8557 = vst [vmem:[%s8339] ss:$9 sm:$0xff] %v3147
        %8558 = vst [vmem:[%s8341] ss:$9 sm:$0xff] %v3150
        %v8559 = vld [vmem:[#allocation1] sm:$0xff]
        %8560 = vst [vmem:[#allocation1] ss:$9 sm:$0xff] %v3153
        %8561 = vst [vmem:[%s8329] ss:$9 sm:$0xff] %v3156
        %8562 = vst [vmem:[%s8331] ss:$9 sm:$0xff] %v3159
        %8563 = vst [vmem:[%s8333] ss:$9 sm:$0xff] %v3162
        %8564 = vst [vmem:[%s8335] ss:$9 sm:$0xff] %v3168
        %8565 = vst [vmem:[%s8337] ss:$9 sm:$0xff] %v3171
        %8566 = vst [vmem:[%s8339] ss:$9 sm:$0xff] %v3174
        %8567 = vst [vmem:[%s8341] ss:$9 sm:$0xff] %v3177
        %v8568 = vld [vmem:[#allocation1] sm:$0xff]
        %8569 = vst [vmem:[#allocation1] ss:$9 sm:$0xff] %v3180
        %8570 = vst [vmem:[%s8329] ss:$9 sm:$0xff] %v3183
        %8571 = vst [vmem:[%s8331] ss:$9 sm:$0xff] %v3189
        %8572 = vst [vmem:[%s8333] ss:$9 sm:$0xff] %v3192
        %8573 = vst [vmem:[%s8335] ss:$9 sm:$0xff] %v3195
        %8574 = vst [vmem:[%s8337] ss:$9 sm:$0xff] %v3198
        %8575 = vst [vmem:[%s8339] ss:$9 sm:$0xff] %v3201
        %8576 = vst [vmem:[%s8341] ss:$9 sm:$0xff] %v3204
        %v8577 = vld [vmem:[#allocation1] sm:$0xff]
        %8578 = vst [vmem:[#allocation1] ss:$9 sm:$0xff] %v3252
        %8579 = vst [vmem:[%s8329] ss:$9 sm:$0xff] %v3255
        %8580 = vst [vmem:[%s8331] ss:$9 sm:$0xff] %v3258
        %8581 = vst [vmem:[%s8333] ss:$9 sm:$0xff] %v3261
        %8582 = vst [vmem:[%s8335] ss:$9 sm:$0xff] %v3264
        %8583 = vst [vmem:[%s8337] ss:$9 sm:$0xff] %v3267
        %8584 = vst [vmem:[%s8339] ss:$9 sm:$0xff] %v3273
        %8585 = vst [vmem:[%s8341] ss:$9 sm:$0xff] %v3276
        %v8586 = vld [vmem:[#allocation1] sm:$0xff]
        %8587 = vst [vmem:[#allocation1] ss:$9 sm:$0xff] %v3279
        %8588 = vst [vmem:[%s8329] ss:$9 sm:$0xff] %v3282
        %8589 = vst [vmem:[%s8331] ss:$9 sm:$0xff] %v3285
        %8590 = vst [vmem:[%s8333] ss:$9 sm:$0xff] %v3288
        %8591 = vst [vmem:[%s8335] ss:$9 sm:$0xff] %v3294
        %8592 = vst [vmem:[%s8337] ss:$9 sm:$0xff] %v3297
        %8593 = vst [vmem:[%s8339] ss:$9 sm:$0xff] %v3300
        %8594 = vst [vmem:[%s8341] ss:$9 sm:$0xff] %v3303
        %v8595 = vld [vmem:[#allocation1] sm:$0xff]
        %8596 = vst [vmem:[#allocation1] ss:$9 sm:$0xff] %v3306
        %8597 = vst [vmem:[%s8329] ss:$9 sm:$0xff] %v3309
        %8598 = vst [vmem:[%s8331] ss:$9 sm:$0xff] %v3315
        %8599 = vst [vmem:[%s8333] ss:$9 sm:$0xff] %v3318
        %8600 = vst [vmem:[%s8335] ss:$9 sm:$0xff] %v3321
        %8601 = vst [vmem:[%s8337] ss:$9 sm:$0xff] %v3324
        %8602 = vst [vmem:[%s8339] ss:$9 sm:$0xff] %v3327
        %8603 = vst [vmem:[%s8341] ss:$9 sm:$0xff] %v3330
        %v8604 = vld [vmem:[#allocation1] sm:$0xff]
        %8605 = vst [vmem:[#allocation1] ss:$9 sm:$0xff] %v3336
        %8606 = vst [vmem:[%s8329] ss:$9 sm:$0xff] %v3339
        %8607 = vst [vmem:[%s8331] ss:$9 sm:$0xff] %v3342
        %8608 = vst [vmem:[%s8333] ss:$9 sm:$0xff] %v3345
        %8609 = vst [vmem:[%s8335] ss:$9 sm:$0xff] %v3348
        %8610 = vst [vmem:[%s8337] ss:$9 sm:$0xff] %v3351
        %8611 = vst [vmem:[%s8339] ss:$9 sm:$0xff] %v3357
        %8612 = vst [vmem:[%s8341] ss:$9 sm:$0xff] %v3360
        %v8613 = vld [vmem:[#allocation1] sm:$0xff]
        %8614 = vst [vmem:[#allocation1] ss:$9 sm:$0xff] %v3363
        %8615 = vst [vmem:[%s8329] ss:$9 sm:$0xff] %v3366
        %8616 = vst [vmem:[%s8331] ss:$9 sm:$0xff] %v3369
        %8617 = vst [vmem:[%s8333] ss:$9 sm:$0xff] %v3372
        %8618 = vst [vmem:[%s8335] ss:$9 sm:$0xff] %v3378
        %8619 = vst [vmem:[%s8337] ss:$9 sm:$0xff] %v3381
        %8620 = vst [vmem:[%s8339] ss:$9 sm:$0xff] %v3384
        %8621 = vst [vmem:[%s8341] ss:$9 sm:$0xff] %v3387
        %v8622 = vld [vmem:[#allocation1] sm:$0xff]
        %8623 = vst [vmem:[#allocation1] ss:$9 sm:$0xff] %v3390
        %8624 = vst [vmem:[%s8329] ss:$9 sm:$0xff] %v3393
        %8625 = vst [vmem:[%s8331] ss:$9 sm:$0xff] %v3399
        %8626 = vst [vmem:[%s8333] ss:$9 sm:$0xff] %v3402
        %8627 = vst [vmem:[%s8335] ss:$9 sm:$0xff] %v3405
        %8628 = vst [vmem:[%s8337] ss:$9 sm:$0xff] %v3408
        %8629 = vst [vmem:[%s8339] ss:$9 sm:$0xff] %v3411
        %8630 = vst [vmem:[%s8341] ss:$9 sm:$0xff] %v3414
        %v8631 = vld [vmem:[#allocation1] sm:$0xff]
        %8632 = vst [vmem:[#allocation1] ss:$9 sm:$0xff] %v3420
        %8633 = vst [vmem:[%s8329] ss:$9 sm:$0xff] %v3423
        %8634 = vst [vmem:[%s8331] ss:$9 sm:$0xff] %v3426
        %8635 = vst [vmem:[%s8333] ss:$9 sm:$0xff] %v3429
        %8636 = vst [vmem:[%s8335] ss:$9 sm:$0xff] %v3432
        %8637 = vst [vmem:[%s8337] ss:$9 sm:$0xff] %v3435
        %8638 = vst [vmem:[%s8339] ss:$9 sm:$0xff] %v3441
        %8639 = vst [vmem:[%s8341] ss:$9 sm:$0xff] %v3444
        %v8640 = vld [vmem:[#allocation1] sm:$0xff]
        %8641 = vst [vmem:[#allocation1] ss:$9 sm:$0xff] %v3447
        %8642 = vst [vmem:[%s8329] ss:$9 sm:$0xff] %v3450
        %8643 = vst [vmem:[%s8331] ss:$9 sm:$0xff] %v3453
        %8644 = vst [vmem:[%s8333] ss:$9 sm:$0xff] %v3456
        %8645 = vst [vmem:[%s8335] ss:$9 sm:$0xff] %v3462
        %8646 = vst [vmem:[%s8337] ss:$9 sm:$0xff] %v3465
        %8647 = vst [vmem:[%s8339] ss:$9 sm:$0xff] %v3468
        %8648 = vst [vmem:[%s8341] ss:$9 sm:$0xff] %v3471
        %v8649 = vld [vmem:[#allocation1] sm:$0xff]
        %8650 = vst [vmem:[#allocation1] ss:$9 sm:$0xff] %v3474
        %8651 = vst [vmem:[%s8329] ss:$9 sm:$0xff] %v3477
        %8652 = vst [vmem:[%s8331] ss:$9 sm:$0xff] %v3483
        %8653 = vst [vmem:[%s8333] ss:$9 sm:$0xff] %v3486
        %8654 = vst [vmem:[%s8335] ss:$9 sm:$0xff] %v3489
        %8655 = vst [vmem:[%s8337] ss:$9 sm:$0xff] %v3492
        %8656 = vst [vmem:[%s8339] ss:$9 sm:$0xff] %v3495
        %8657 = vst [vmem:[%s8341] ss:$9 sm:$0xff] %v3498
        %v8658 = vld [vmem:[#allocation1] sm:$0xff]
        %8695 = vst [vmem:[#allocation1] ss:$9 sm:$0xff] %v2388
        %s8696 = scalar_lea.vmem [#allocation1], 1
        %8697 = vst [vmem:[%s8696] ss:$9 sm:$0xff] %v2391
        %s8698 = scalar_lea.vmem [#allocation1], 2
        %8699 = vst [vmem:[%s8698] ss:$9 sm:$0xff] %v2394
        %s8700 = scalar_lea.vmem [#allocation1], 3
        %8701 = vst [vmem:[%s8700] ss:$9 sm:$0xff] %v2397
        %s8702 = scalar_lea.vmem [#allocation1], 4
        %8703 = vst [vmem:[%s8702] ss:$9 sm:$0xff] %v2400
        %s8704 = scalar_lea.vmem [#allocation1], 5
        %8705 = vst [vmem:[%s8704] ss:$9 sm:$0xff] %v2403
        %s8706 = scalar_lea.vmem [#allocation1], 6
        %8707 = vst [vmem:[%s8706] ss:$9 sm:$0xff] %v2409
        %s8708 = scalar_lea.vmem [#allocation1], 7
        %8709 = vst [vmem:[%s8708] ss:$9 sm:$0xff] %v2412
        %v8710 = vld [vmem:[#allocation1] sm:$0xff]
        %8711 = vst [vmem:[#allocation1] ss:$9 sm:$0xff] %v2415
        %8712 = vst [vmem:[%s8696] ss:$9 sm:$0xff] %v2418
        %8713 = vst [vmem:[%s8698] ss:$9 sm:$0xff] %v2421
        %8714 = vst [vmem:[%s8700] ss:$9 sm:$0xff] %v2424
        %8715 = vst [vmem:[%s8702] ss:$9 sm:$0xff] %v2430
        %8716 = vst [vmem:[%s8704] ss:$9 sm:$0xff] %v2433
        %8717 = vst [vmem:[%s8706] ss:$9 sm:$0xff] %v2436
        %8718 = vst [vmem:[%s8708] ss:$9 sm:$0xff] %v2439
        %v8719 = vld [vmem:[#allocation1] sm:$0xff]
        %8720 = vst [vmem:[#allocation1] ss:$9 sm:$0xff] %v2442
        %8721 = vst [vmem:[%s8696] ss:$9 sm:$0xff] %v2445
        %8722 = vst [vmem:[%s8698] ss:$9 sm:$0xff] %v2451
        %8723 = vst [vmem:[%s8700] ss:$9 sm:$0xff] %v2454
        %8724 = vst [vmem:[%s8702] ss:$9 sm:$0xff] %v2457
        %8725 = vst [vmem:[%s8704] ss:$9 sm:$0xff] %v2460
        %8726 = vst [vmem:[%s8706] ss:$9 sm:$0xff] %v2463
        %8727 = vst [vmem:[%s8708] ss:$9 sm:$0xff] %v2466
        %v8728 = vld [vmem:[#allocation1] sm:$0xff]
        %8729 = vst [vmem:[#allocation1] ss:$9 sm:$0xff] %v2472
        %8730 = vst [vmem:[%s8696] ss:$9 sm:$0xff] %v2475
        %8731 = vst [vmem:[%s8698] ss:$9 sm:$0xff] %v2478
        %8732 = vst [vmem:[%s8700] ss:$9 sm:$0xff] %v2481
        %8733 = vst [vmem:[%s8702] ss:$9 sm:$0xff] %v2484
        %8734 = vst [vmem:[%s8704] ss:$9 sm:$0xff] %v2487
        %8735 = vst [vmem:[%s8706] ss:$9 sm:$0xff] %v2493
        %8736 = vst [vmem:[%s8708] ss:$9 sm:$0xff] %v2496
        %v8737 = vld [vmem:[#allocation1] sm:$0xff]
        %8738 = vst [vmem:[#allocation1] ss:$9 sm:$0xff] %v2499
        %8739 = vst [vmem:[%s8696] ss:$9 sm:$0xff] %v2502
        %8740 = vst [vmem:[%s8698] ss:$9 sm:$0xff] %v2505
        %8741 = vst [vmem:[%s8700] ss:$9 sm:$0xff] %v2508
        %8742 = vst [vmem:[%s8702] ss:$9 sm:$0xff] %v2514
        %8743 = vst [vmem:[%s8704] ss:$9 sm:$0xff] %v2517
        %8744 = vst [vmem:[%s8706] ss:$9 sm:$0xff] %v2520
        %8745 = vst [vmem:[%s8708] ss:$9 sm:$0xff] %v2523
        %v8746 = vld [vmem:[#allocation1] sm:$0xff]
        %8747 = vst [vmem:[#allocation1] ss:$9 sm:$0xff] %v2526
        %8748 = vst [vmem:[%s8696] ss:$9 sm:$0xff] %v2529
        %8749 = vst [vmem:[%s8698] ss:$9 sm:$0xff] %v2535
        %8750 = vst [vmem:[%s8700] ss:$9 sm:$0xff] %v2538
        %8751 = vst [vmem:[%s8702] ss:$9 sm:$0xff] %v2541
        %8752 = vst [vmem:[%s8704] ss:$9 sm:$0xff] %v2544
        %8753 = vst [vmem:[%s8706] ss:$9 sm:$0xff] %v2547
        %8754 = vst [vmem:[%s8708] ss:$9 sm:$0xff] %v2550
        %v8755 = vld [vmem:[#allocation1] sm:$0xff]
        %8756 = vst [vmem:[#allocation1] ss:$9 sm:$0xff] %v2556
        %8757 = vst [vmem:[%s8696] ss:$9 sm:$0xff] %v2559
        %8758 = vst [vmem:[%s8698] ss:$9 sm:$0xff] %v2562
        %8759 = vst [vmem:[%s8700] ss:$9 sm:$0xff] %v2565
        %8760 = vst [vmem:[%s8702] ss:$9 sm:$0xff] %v2568
        %8761 = vst [vmem:[%s8704] ss:$9 sm:$0xff] %v2571
        %8762 = vst [vmem:[%s8706] ss:$9 sm:$0xff] %v2577
        %8763 = vst [vmem:[%s8708] ss:$9 sm:$0xff] %v2580
        %v8764 = vld [vmem:[#allocation1] sm:$0xff]
        %8765 = vst [vmem:[#allocation1] ss:$9 sm:$0xff] %v2583
        %8766 = vst [vmem:[%s8696] ss:$9 sm:$0xff] %v2586
        %8767 = vst [vmem:[%s8698] ss:$9 sm:$0xff] %v2589
        %8768 = vst [vmem:[%s8700] ss:$9 sm:$0xff] %v2592
        %8769 = vst [vmem:[%s8702] ss:$9 sm:$0xff] %v2598
        %8770 = vst [vmem:[%s8704] ss:$9 sm:$0xff] %v2601
        %8771 = vst [vmem:[%s8706] ss:$9 sm:$0xff] %v2604
        %8772 = vst [vmem:[%s8708] ss:$9 sm:$0xff] %v2607
        %v8773 = vld [vmem:[#allocation1] sm:$0xff]
        %8774 = vst [vmem:[#allocation1] ss:$9 sm:$0xff] %v2610
        %8775 = vst [vmem:[%s8696] ss:$9 sm:$0xff] %v2613
        %8776 = vst [vmem:[%s8698] ss:$9 sm:$0xff] %v2619
        %8777 = vst [vmem:[%s8700] ss:$9 sm:$0xff] %v2622
        %8778 = vst [vmem:[%s8702] ss:$9 sm:$0xff] %v2625
        %8779 = vst [vmem:[%s8704] ss:$9 sm:$0xff] %v2628
        %8780 = vst [vmem:[%s8706] ss:$9 sm:$0xff] %v2631
        %8781 = vst [vmem:[%s8708] ss:$9 sm:$0xff] %v2634
        %v8782 = vld [vmem:[#allocation1] sm:$0xff]
        %8783 = vst [vmem:[#allocation1] ss:$9 sm:$0xff] %v2682
        %8784 = vst [vmem:[%s8696] ss:$9 sm:$0xff] %v2685
        %8785 = vst [vmem:[%s8698] ss:$9 sm:$0xff] %v2688
        %8786 = vst [vmem:[%s8700] ss:$9 sm:$0xff] %v2691
        %8787 = vst [vmem:[%s8702] ss:$9 sm:$0xff] %v2694
        %8788 = vst [vmem:[%s8704] ss:$9 sm:$0xff] %v2697
        %8789 = vst [vmem:[%s8706] ss:$9 sm:$0xff] %v2703
        %8790 = vst [vmem:[%s8708] ss:$9 sm:$0xff] %v2706
        %v8791 = vld [vmem:[#allocation1] sm:$0xff]
        %8792 = vst [vmem:[#allocation1] ss:$9 sm:$0xff] %v2709
        %8793 = vst [vmem:[%s8696] ss:$9 sm:$0xff] %v2712
        %8794 = vst [vmem:[%s8698] ss:$9 sm:$0xff] %v2715
        %8795 = vst [vmem:[%s8700] ss:$9 sm:$0xff] %v2718
        %8796 = vst [vmem:[%s8702] ss:$9 sm:$0xff] %v2724
        %8797 = vst [vmem:[%s8704] ss:$9 sm:$0xff] %v2727
        %8798 = vst [vmem:[%s8706] ss:$9 sm:$0xff] %v2730
        %8799 = vst [vmem:[%s8708] ss:$9 sm:$0xff] %v2733
        %v8800 = vld [vmem:[#allocation1] sm:$0xff]
        %8801 = vst [vmem:[#allocation1] ss:$9 sm:$0xff] %v2736
        %8802 = vst [vmem:[%s8696] ss:$9 sm:$0xff] %v2739
        %8803 = vst [vmem:[%s8698] ss:$9 sm:$0xff] %v2745
        %8804 = vst [vmem:[%s8700] ss:$9 sm:$0xff] %v2748
        %8805 = vst [vmem:[%s8702] ss:$9 sm:$0xff] %v2751
        %8806 = vst [vmem:[%s8704] ss:$9 sm:$0xff] %v2754
        %8807 = vst [vmem:[%s8706] ss:$9 sm:$0xff] %v2757
        %8808 = vst [vmem:[%s8708] ss:$9 sm:$0xff] %v2760
        %v8809 = vld [vmem:[#allocation1] sm:$0xff]
        %8810 = vst [vmem:[#allocation1] ss:$9 sm:$0xff] %v2766
        %8811 = vst [vmem:[%s8696] ss:$9 sm:$0xff] %v2769
        %8812 = vst [vmem:[%s8698] ss:$9 sm:$0xff] %v2772
        %8813 = vst [vmem:[%s8700] ss:$9 sm:$0xff] %v2775
        %8814 = vst [vmem:[%s8702] ss:$9 sm:$0xff] %v2778
        %8815 = vst [vmem:[%s8704] ss:$9 sm:$0xff] %v2781
        %8816 = vst [vmem:[%s8706] ss:$9 sm:$0xff] %v2787
        %8817 = vst [vmem:[%s8708] ss:$9 sm:$0xff] %v2790
        %v8818 = vld [vmem:[#allocation1] sm:$0xff]
        %8819 = vst [vmem:[#allocation1] ss:$9 sm:$0xff] %v2793
        %8820 = vst [vmem:[%s8696] ss:$9 sm:$0xff] %v2796
        %8821 = vst [vmem:[%s8698] ss:$9 sm:$0xff] %v2799
        %8822 = vst [vmem:[%s8700] ss:$9 sm:$0xff] %v2802
        %8823 = vst [vmem:[%s8702] ss:$9 sm:$0xff] %v2808
        %8824 = vst [vmem:[%s8704] ss:$9 sm:$0xff] %v2811
        %8825 = vst [vmem:[%s8706] ss:$9 sm:$0xff] %v2814
        %8826 = vst [vmem:[%s8708] ss:$9 sm:$0xff] %v2817
        %v8827 = vld [vmem:[#allocation1] sm:$0xff]
        %8828 = vst [vmem:[#allocation1] ss:$9 sm:$0xff] %v2820
        %8829 = vst [vmem:[%s8696] ss:$9 sm:$0xff] %v2823
        %8830 = vst [vmem:[%s8698] ss:$9 sm:$0xff] %v2829
        %8831 = vst [vmem:[%s8700] ss:$9 sm:$0xff] %v2832
        %8832 = vst [vmem:[%s8702] ss:$9 sm:$0xff] %v2835
        %8833 = vst [vmem:[%s8704] ss:$9 sm:$0xff] %v2838
        %8834 = vst [vmem:[%s8706] ss:$9 sm:$0xff] %v2841
        %8835 = vst [vmem:[%s8708] ss:$9 sm:$0xff] %v2844
        %v8836 = vld [vmem:[#allocation1] sm:$0xff]
        %8837 = vst [vmem:[#allocation1] ss:$9 sm:$0xff] %v2850
        %8838 = vst [vmem:[%s8696] ss:$9 sm:$0xff] %v2853
        %8839 = vst [vmem:[%s8698] ss:$9 sm:$0xff] %v2856
        %8840 = vst [vmem:[%s8700] ss:$9 sm:$0xff] %v2859
        %8841 = vst [vmem:[%s8702] ss:$9 sm:$0xff] %v2862
        %8842 = vst [vmem:[%s8704] ss:$9 sm:$0xff] %v2865
        %8843 = vst [vmem:[%s8706] ss:$9 sm:$0xff] %v2871
        %8844 = vst [vmem:[%s8708] ss:$9 sm:$0xff] %v2874
        %v8845 = vld [vmem:[#allocation1] sm:$0xff]
        %8846 = vst [vmem:[#allocation1] ss:$9 sm:$0xff] %v2877
        %8847 = vst [vmem:[%s8696] ss:$9 sm:$0xff] %v2880
        %8848 = vst [vmem:[%s8698] ss:$9 sm:$0xff] %v2883
        %8849 = vst [vmem:[%s8700] ss:$9 sm:$0xff] %v2886
        %8850 = vst [vmem:[%s8702] ss:$9 sm:$0xff] %v2892
        %8851 = vst [vmem:[%s8704] ss:$9 sm:$0xff] %v2895
        %8852 = vst [vmem:[%s8706] ss:$9 sm:$0xff] %v2898
        %8853 = vst [vmem:[%s8708] ss:$9 sm:$0xff] %v2901
        %v8854 = vld [vmem:[#allocation1] sm:$0xff]
        %8855 = vst [vmem:[#allocation1] ss:$9 sm:$0xff] %v2904
        %8856 = vst [vmem:[%s8696] ss:$9 sm:$0xff] %v2907
        %8857 = vst [vmem:[%s8698] ss:$9 sm:$0xff] %v2913
        %8858 = vst [vmem:[%s8700] ss:$9 sm:$0xff] %v2916
        %8859 = vst [vmem:[%s8702] ss:$9 sm:$0xff] %v2919
        %8860 = vst [vmem:[%s8704] ss:$9 sm:$0xff] %v2922
        %8861 = vst [vmem:[%s8706] ss:$9 sm:$0xff] %v2925
        %8862 = vst [vmem:[%s8708] ss:$9 sm:$0xff] %v2928
        %v8863 = vld [vmem:[#allocation1] sm:$0xff]
        %8864 = vst [vmem:[#allocation1] ss:$9 sm:$0xff] %v2976
        %8865 = vst [vmem:[%s8696] ss:$9 sm:$0xff] %v2979
        %8866 = vst [vmem:[%s8698] ss:$9 sm:$0xff] %v2982
        %8867 = vst [vmem:[%s8700] ss:$9 sm:$0xff] %v2985
        %8868 = vst [vmem:[%s8702] ss:$9 sm:$0xff] %v2988
        %8869 = vst [vmem:[%s8704] ss:$9 sm:$0xff] %v2991
        %8870 = vst [vmem:[%s8706] ss:$9 sm:$0xff] %v2997
        %8871 = vst [vmem:[%s8708] ss:$9 sm:$0xff] %v3000
        %v8872 = vld [vmem:[#allocation1] sm:$0xff]
        %8873 = vst [vmem:[#allocation1] ss:$9 sm:$0xff] %v3003
        %8874 = vst [vmem:[%s8696] ss:$9 sm:$0xff] %v3006
        %8875 = vst [vmem:[%s8698] ss:$9 sm:$0xff] %v3009
        %8876 = vst [vmem:[%s8700] ss:$9 sm:$0xff] %v3012
        %8877 = vst [vmem:[%s8702] ss:$9 sm:$0xff] %v3018
        %8878 = vst [vmem:[%s8704] ss:$9 sm:$0xff] %v3021
        %8879 = vst [vmem:[%s8706] ss:$9 sm:$0xff] %v3024
        %8880 = vst [vmem:[%s8708] ss:$9 sm:$0xff] %v3027
        %v8881 = vld [vmem:[#allocation1] sm:$0xff]
        %8882 = vst [vmem:[#allocation1] ss:$9 sm:$0xff] %v3030
        %8883 = vst [vmem:[%s8696] ss:$9 sm:$0xff] %v3033
        %8884 = vst [vmem:[%s8698] ss:$9 sm:$0xff] %v3039
        %8885 = vst [vmem:[%s8700] ss:$9 sm:$0xff] %v3042
        %8886 = vst [vmem:[%s8702] ss:$9 sm:$0xff] %v3045
        %8887 = vst [vmem:[%s8704] ss:$9 sm:$0xff] %v3048
        %8888 = vst [vmem:[%s8706] ss:$9 sm:$0xff] %v3051
        %8889 = vst [vmem:[%s8708] ss:$9 sm:$0xff] %v3054
        %v8890 = vld [vmem:[#allocation1] sm:$0xff]
        %8891 = vst [vmem:[#allocation1] ss:$9 sm:$0xff] %v3060
        %8892 = vst [vmem:[%s8696] ss:$9 sm:$0xff] %v3063
        %8893 = vst [vmem:[%s8698] ss:$9 sm:$0xff] %v3066
        %8894 = vst [vmem:[%s8700] ss:$9 sm:$0xff] %v3069
        %8895 = vst [vmem:[%s8702] ss:$9 sm:$0xff] %v3072
        %8896 = vst [vmem:[%s8704] ss:$9 sm:$0xff] %v3075
        %8897 = vst [vmem:[%s8706] ss:$9 sm:$0xff] %v3081
        %8898 = vst [vmem:[%s8708] ss:$9 sm:$0xff] %v3084
        %v8899 = vld [vmem:[#allocation1] sm:$0xff]
        %8900 = vst [vmem:[#allocation1] ss:$9 sm:$0xff] %v3087
        %8901 = vst [vmem:[%s8696] ss:$9 sm:$0xff] %v3090
        %8902 = vst [vmem:[%s8698] ss:$9 sm:$0xff] %v3093
        %8903 = vst [vmem:[%s8700] ss:$9 sm:$0xff] %v3096
        %8904 = vst [vmem:[%s8702] ss:$9 sm:$0xff] %v3102
        %8905 = vst [vmem:[%s8704] ss:$9 sm:$0xff] %v3105
        %8906 = vst [vmem:[%s8706] ss:$9 sm:$0xff] %v3108
        %8907 = vst [vmem:[%s8708] ss:$9 sm:$0xff] %v3111
        %v8908 = vld [vmem:[#allocation1] sm:$0xff]
        %8909 = vst [vmem:[#allocation1] ss:$9 sm:$0xff] %v3114
        %8910 = vst [vmem:[%s8696] ss:$9 sm:$0xff] %v3117
        %8911 = vst [vmem:[%s8698] ss:$9 sm:$0xff] %v3123
        %8912 = vst [vmem:[%s8700] ss:$9 sm:$0xff] %v3126
        %8913 = vst [vmem:[%s8702] ss:$9 sm:$0xff] %v3129
        %8914 = vst [vmem:[%s8704] ss:$9 sm:$0xff] %v3132
        %8915 = vst [vmem:[%s8706] ss:$9 sm:$0xff] %v3135
        %8916 = vst [vmem:[%s8708] ss:$9 sm:$0xff] %v3138
        %v8917 = vld [vmem:[#allocation1] sm:$0xff]
        %8918 = vst [vmem:[#allocation1] ss:$9 sm:$0xff] %v3144
        %8919 = vst [vmem:[%s8696] ss:$9 sm:$0xff] %v3147
        %8920 = vst [vmem:[%s8698] ss:$9 sm:$0xff] %v3150
        %8921 = vst [vmem:[%s8700] ss:$9 sm:$0xff] %v3153
        %8922 = vst [vmem:[%s8702] ss:$9 sm:$0xff] %v3156
        %8923 = vst [vmem:[%s8704] ss:$9 sm:$0xff] %v3159
        %8924 = vst [vmem:[%s8706] ss:$9 sm:$0xff] %v3165
        %8925 = vst [vmem:[%s8708] ss:$9 sm:$0xff] %v3168
        %v8926 = vld [vmem:[#allocation1] sm:$0xff]
        %8927 = vst [vmem:[#allocation1] ss:$9 sm:$0xff] %v3171
        %8928 = vst [vmem:[%s8696] ss:$9 sm:$0xff] %v3174
        %8929 = vst [vmem:[%s8698] ss:$9 sm:$0xff] %v3177
        %8930 = vst [vmem:[%s8700] ss:$9 sm:$0xff] %v3180
        %8931 = vst [vmem:[%s8702] ss:$9 sm:$0xff] %v3186
        %8932 = vst [vmem:[%s8704] ss:$9 sm:$0xff] %v3189
        %8933 = vst [vmem:[%s8706] ss:$9 sm:$0xff] %v3192
        %8934 = vst [vmem:[%s8708] ss:$9 sm:$0xff] %v3195
        %v8935 = vld [vmem:[#allocation1] sm:$0xff]
        %8936 = vst [vmem:[#allocation1] ss:$9 sm:$0xff] %v3198
        %8937 = vst [vmem:[%s8696] ss:$9 sm:$0xff] %v3201
        %8938 = vst [vmem:[%s8698] ss:$9 sm:$0xff] %v3207
        %8939 = vst [vmem:[%s8700] ss:$9 sm:$0xff] %v3210
        %8940 = vst [vmem:[%s8702] ss:$9 sm:$0xff] %v3213
        %8941 = vst [vmem:[%s8704] ss:$9 sm:$0xff] %v3216
        %8942 = vst [vmem:[%s8706] ss:$9 sm:$0xff] %v3219
        %8943 = vst [vmem:[%s8708] ss:$9 sm:$0xff] %v3222
        %v8944 = vld [vmem:[#allocation1] sm:$0xff]
        %8945 = vst [vmem:[#allocation1] ss:$9 sm:$0xff] %v3270
        %8946 = vst [vmem:[%s8696] ss:$9 sm:$0xff] %v3273
        %8947 = vst [vmem:[%s8698] ss:$9 sm:$0xff] %v3276
        %8948 = vst [vmem:[%s8700] ss:$9 sm:$0xff] %v3279
        %8949 = vst [vmem:[%s8702] ss:$9 sm:$0xff] %v3282
        %8950 = vst [vmem:[%s8704] ss:$9 sm:$0xff] %v3285
        %8951 = vst [vmem:[%s8706] ss:$9 sm:$0xff] %v3291
        %8952 = vst [vmem:[%s8708] ss:$9 sm:$0xff] %v3294
        %v8953 = vld [vmem:[#allocation1] sm:$0xff]
        %8954 = vst [vmem:[#allocation1] ss:$9 sm:$0xff] %v3297
        %8955 = vst [vmem:[%s8696] ss:$9 sm:$0xff] %v3300
        %8956 = vst [vmem:[%s8698] ss:$9 sm:$0xff] %v3303
        %8957 = vst [vmem:[%s8700] ss:$9 sm:$0xff] %v3306
        %8958 = vst [vmem:[%s8702] ss:$9 sm:$0xff] %v3312
        %8959 = vst [vmem:[%s8704] ss:$9 sm:$0xff] %v3315
        %8960 = vst [vmem:[%s8706] ss:$9 sm:$0xff] %v3318
        %8961 = vst [vmem:[%s8708] ss:$9 sm:$0xff] %v3321
        %v8962 = vld [vmem:[#allocation1] sm:$0xff]
        %8963 = vst [vmem:[#allocation1] ss:$9 sm:$0xff] %v3324
        %8964 = vst [vmem:[%s8696] ss:$9 sm:$0xff] %v3327
        %8965 = vst [vmem:[%s8698] ss:$9 sm:$0xff] %v3333
        %8966 = vst [vmem:[%s8700] ss:$9 sm:$0xff] %v3336
        %8967 = vst [vmem:[%s8702] ss:$9 sm:$0xff] %v3339
        %8968 = vst [vmem:[%s8704] ss:$9 sm:$0xff] %v3342
        %8969 = vst [vmem:[%s8706] ss:$9 sm:$0xff] %v3345
        %8970 = vst [vmem:[%s8708] ss:$9 sm:$0xff] %v3348
        %v8971 = vld [vmem:[#allocation1] sm:$0xff]
        %8972 = vst [vmem:[#allocation1] ss:$9 sm:$0xff] %v3354
        %8973 = vst [vmem:[%s8696] ss:$9 sm:$0xff] %v3357
        %8974 = vst [vmem:[%s8698] ss:$9 sm:$0xff] %v3360
        %8975 = vst [vmem:[%s8700] ss:$9 sm:$0xff] %v3363
        %8976 = vst [vmem:[%s8702] ss:$9 sm:$0xff] %v3366
        %8977 = vst [vmem:[%s8704] ss:$9 sm:$0xff] %v3369
        %8978 = vst [vmem:[%s8706] ss:$9 sm:$0xff] %v3375
        %8979 = vst [vmem:[%s8708] ss:$9 sm:$0xff] %v3378
        %v8980 = vld [vmem:[#allocation1] sm:$0xff]
        %8981 = vst [vmem:[#allocation1] ss:$9 sm:$0xff] %v3381
        %8982 = vst [vmem:[%s8696] ss:$9 sm:$0xff] %v3384
        %8983 = vst [vmem:[%s8698] ss:$9 sm:$0xff] %v3387
        %8984 = vst [vmem:[%s8700] ss:$9 sm:$0xff] %v3390
        %8985 = vst [vmem:[%s8702] ss:$9 sm:$0xff] %v3396
        %8986 = vst [vmem:[%s8704] ss:$9 sm:$0xff] %v3399
        %8987 = vst [vmem:[%s8706] ss:$9 sm:$0xff] %v3402
        %8988 = vst [vmem:[%s8708] ss:$9 sm:$0xff] %v3405
        %v8989 = vld [vmem:[#allocation1] sm:$0xff]
        %8990 = vst [vmem:[#allocation1] ss:$9 sm:$0xff] %v3408
        %8991 = vst [vmem:[%s8696] ss:$9 sm:$0xff] %v3411
        %8992 = vst [vmem:[%s8698] ss:$9 sm:$0xff] %v3417
        %8993 = vst [vmem:[%s8700] ss:$9 sm:$0xff] %v3420
        %8994 = vst [vmem:[%s8702] ss:$9 sm:$0xff] %v3423
        %8995 = vst [vmem:[%s8704] ss:$9 sm:$0xff] %v3426
        %8996 = vst [vmem:[%s8706] ss:$9 sm:$0xff] %v3429
        %8997 = vst [vmem:[%s8708] ss:$9 sm:$0xff] %v3432
        %v8998 = vld [vmem:[#allocation1] sm:$0xff]
        %8999 = vst [vmem:[#allocation1] ss:$9 sm:$0xff] %v3438
        %9000 = vst [vmem:[%s8696] ss:$9 sm:$0xff] %v3441
        %9001 = vst [vmem:[%s8698] ss:$9 sm:$0xff] %v3444
        %9002 = vst [vmem:[%s8700] ss:$9 sm:$0xff] %v3447
        %9003 = vst [vmem:[%s8702] ss:$9 sm:$0xff] %v3450
        %9004 = vst [vmem:[%s8704] ss:$9 sm:$0xff] %v3453
        %9005 = vst [vmem:[%s8706] ss:$9 sm:$0xff] %v3459
        %9006 = vst [vmem:[%s8708] ss:$9 sm:$0xff] %v3462
        %v9007 = vld [vmem:[#allocation1] sm:$0xff]
        %9008 = vst [vmem:[#allocation1] ss:$9 sm:$0xff] %v3465
        %9009 = vst [vmem:[%s8696] ss:$9 sm:$0xff] %v3468
        %9010 = vst [vmem:[%s8698] ss:$9 sm:$0xff] %v3471
        %9011 = vst [vmem:[%s8700] ss:$9 sm:$0xff] %v3474
        %9012 = vst [vmem:[%s8702] ss:$9 sm:$0xff] %v3480
        %9013 = vst [vmem:[%s8704] ss:$9 sm:$0xff] %v3483
        %9014 = vst [vmem:[%s8706] ss:$9 sm:$0xff] %v3486
        %9015 = vst [vmem:[%s8708] ss:$9 sm:$0xff] %v3489
        %v9016 = vld [vmem:[#allocation1] sm:$0xff]
        %9017 = vst [vmem:[#allocation1] ss:$9 sm:$0xff] %v3492
        %9018 = vst [vmem:[%s8696] ss:$9 sm:$0xff] %v3495
        %9019 = vst [vmem:[%s8698] ss:$9 sm:$0xff] %v3501
        %9020 = vst [vmem:[%s8700] ss:$9 sm:$0xff] %v3504
        %9021 = vst [vmem:[%s8702] ss:$9 sm:$0xff] %v3507
        %9022 = vst [vmem:[%s8704] ss:$9 sm:$0xff] %v3510
        %9023 = vst [vmem:[%s8706] ss:$9 sm:$0xff] %v3513
        %9024 = vst [vmem:[%s8708] ss:$9 sm:$0xff] %v3516
        %v9025 = vld [vmem:[#allocation1] sm:$0xff]
        %9062 = vst [vmem:[#allocation1] ss:$9 sm:$0xff] %v3637
        %s9063 = scalar_lea.vmem [#allocation1], 1
        %9064 = vst [vmem:[%s9063] ss:$9 sm:$0xff] %v3644
        %s9065 = scalar_lea.vmem [#allocation1], 2
        %9066 = vst [vmem:[%s9065] ss:$9 sm:$0xff] %v3652
        %s9067 = scalar_lea.vmem [#allocation1], 3
        %9068 = vst [vmem:[%s9067] ss:$9 sm:$0xff] %v3660
        %s9069 = scalar_lea.vmem [#allocation1], 4
        %9070 = vst [vmem:[%s9069] ss:$9 sm:$0xff] %v3668
        %s9071 = scalar_lea.vmem [#allocation1], 5
        %9072 = vst [vmem:[%s9071] ss:$9 sm:$0xff] %v3675
        %s9073 = scalar_lea.vmem [#allocation1], 6
        %9074 = vst [vmem:[%s9073] ss:$9 sm:$0xff] %v3684
        %s9075 = scalar_lea.vmem [#allocation1], 7
        %9076 = vst [vmem:[%s9075] ss:$9 sm:$0xff] %v3692
        %v9077 = vld [vmem:[#allocation1] sm:$0xff]
        %9078 = vst [vmem:[#allocation1] ss:$9 sm:$0xff] %v3699
        %9079 = vst [vmem:[%s9063] ss:$9 sm:$0xff] %v3707
        %9080 = vst [vmem:[%s9065] ss:$9 sm:$0xff] %v3715
        %9081 = vst [vmem:[%s9067] ss:$9 sm:$0xff] %v3723
        %9082 = vst [vmem:[%s9069] ss:$9 sm:$0xff] %v3731
        %9083 = vst [vmem:[%s9071] ss:$9 sm:$0xff] %v3739
        %9084 = vst [vmem:[%s9073] ss:$9 sm:$0xff] %v3747
        %9085 = vst [vmem:[%s9075] ss:$9 sm:$0xff] %v3754
        %v9086 = vld [vmem:[#allocation1] sm:$0xff]
        %9087 = vst [vmem:[#allocation1] ss:$9 sm:$0xff] %v3762
        %9088 = vst [vmem:[%s9063] ss:$9 sm:$0xff] %v3770
        %9089 = vst [vmem:[%s9065] ss:$9 sm:$0xff] %v3778
        %9090 = vst [vmem:[%s9067] ss:$9 sm:$0xff] %v3786
        %9091 = vst [vmem:[%s9069] ss:$9 sm:$0xff] %v3794
        %9092 = vst [vmem:[%s9071] ss:$9 sm:$0xff] %v3802
        %9093 = vst [vmem:[%s9073] ss:$9 sm:$0xff] %v3809
        %9094 = vst [vmem:[%s9075] ss:$9 sm:$0xff] %v3817
        %v9095 = vld [vmem:[#allocation1] sm:$0xff]
        %9096 = vst [vmem:[#allocation1] ss:$9 sm:$0xff] %v3826
        %9097 = vst [vmem:[%s9063] ss:$9 sm:$0xff] %v3833
        %9098 = vst [vmem:[%s9065] ss:$9 sm:$0xff] %v3841
        %9099 = vst [vmem:[%s9067] ss:$9 sm:$0xff] %v3849
        %9100 = vst [vmem:[%s9069] ss:$9 sm:$0xff] %v3857
        %9101 = vst [vmem:[%s9071] ss:$9 sm:$0xff] %v3864
        %9102 = vst [vmem:[%s9073] ss:$9 sm:$0xff] %v3873
        %9103 = vst [vmem:[%s9075] ss:$9 sm:$0xff] %v3881
        %v9104 = vld [vmem:[#allocation1] sm:$0xff]
        %9105 = vst [vmem:[#allocation1] ss:$9 sm:$0xff] %v3888
        %9106 = vst [vmem:[%s9063] ss:$9 sm:$0xff] %v3896
        %9107 = vst [vmem:[%s9065] ss:$9 sm:$0xff] %v3904
        %9108 = vst [vmem:[%s9067] ss:$9 sm:$0xff] %v3912
        %9109 = vst [vmem:[%s9069] ss:$9 sm:$0xff] %v3920
        %9110 = vst [vmem:[%s9071] ss:$9 sm:$0xff] %v3928
        %9111 = vst [vmem:[%s9073] ss:$9 sm:$0xff] %v3936
        %9112 = vst [vmem:[%s9075] ss:$9 sm:$0xff] %v3943
        %v9113 = vld [vmem:[#allocation1] sm:$0xff]
        %9114 = vst [vmem:[#allocation1] ss:$9 sm:$0xff] %v3951
        %9115 = vst [vmem:[%s9063] ss:$9 sm:$0xff] %v3959
        %9116 = vst [vmem:[%s9065] ss:$9 sm:$0xff] %v3967
        %9117 = vst [vmem:[%s9067] ss:$9 sm:$0xff] %v3975
        %9118 = vst [vmem:[%s9069] ss:$9 sm:$0xff] %v3983
        %9119 = vst [vmem:[%s9071] ss:$9 sm:$0xff] %v3991
        %9120 = vst [vmem:[%s9073] ss:$9 sm:$0xff] %v3998
        %9121 = vst [vmem:[%s9075] ss:$9 sm:$0xff] %v4006
        %v9122 = vld [vmem:[#allocation1] sm:$0xff]
        %9123 = vst [vmem:[#allocation1] ss:$9 sm:$0xff] %v4015
        %9124 = vst [vmem:[%s9063] ss:$9 sm:$0xff] %v4022
        %9125 = vst [vmem:[%s9065] ss:$9 sm:$0xff] %v4030
        %9126 = vst [vmem:[%s9067] ss:$9 sm:$0xff] %v4038
        %9127 = vst [vmem:[%s9069] ss:$9 sm:$0xff] %v4046
        %9128 = vst [vmem:[%s9071] ss:$9 sm:$0xff] %v4053
        %9129 = vst [vmem:[%s9073] ss:$9 sm:$0xff] %v4062
        %9130 = vst [vmem:[%s9075] ss:$9 sm:$0xff] %v4070
        %v9131 = vld [vmem:[#allocation1] sm:$0xff]
        %9132 = vst [vmem:[#allocation1] ss:$9 sm:$0xff] %v4077
        %9133 = vst [vmem:[%s9063] ss:$9 sm:$0xff] %v4085
        %9134 = vst [vmem:[%s9065] ss:$9 sm:$0xff] %v4093
        %9135 = vst [vmem:[%s9067] ss:$9 sm:$0xff] %v4101
        %9136 = vst [vmem:[%s9069] ss:$9 sm:$0xff] %v5810
        %9137 = vst [vmem:[%s9071] ss:$9 sm:$0xff] %v5818
        %9138 = vst [vmem:[%s9073] ss:$9 sm:$0xff] %v5826
        %9139 = vst [vmem:[%s9075] ss:$9 sm:$0xff] %v5833
        %v9140 = vld [vmem:[#allocation1] sm:$0xff]
        %9141 = vst [vmem:[#allocation1] ss:$9 sm:$0xff] %v5841
        %9142 = vst [vmem:[%s9063] ss:$9 sm:$0xff] %v5849
        %9144 = vst [vmem:[%s9065] ss:$9 sm:$0xff] %v5998
        %9146 = vst [vmem:[%s9067] ss:$9 sm:$0xff] %v6006
        %9148 = vst [vmem:[%s9069] ss:$9 sm:$0xff] %v6014
        %9150 = vst [vmem:[%s9071] ss:$9 sm:$0xff] %v6022
        %9152 = vst [vmem:[%s9073] ss:$9 sm:$0xff] %v6029
        %9154 = vst [vmem:[%s9075] ss:$9 sm:$0xff] %v6037
        %v9155 = vld [vmem:[#allocation1] sm:$0xff]
        %9156 = vst [vmem:[#allocation1] ss:$9 sm:$0xff] %v4204
        %9157 = vst [vmem:[%s9063] ss:$9 sm:$0xff] %v4212
        %9158 = vst [vmem:[%s9065] ss:$9 sm:$0xff] %v4220
        %9159 = vst [vmem:[%s9067] ss:$9 sm:$0xff] %v4227
        %9160 = vst [vmem:[%s9069] ss:$9 sm:$0xff] %v4235
        %9161 = vst [vmem:[%s9071] ss:$9 sm:$0xff] %v4243
        %9162 = vst [vmem:[%s9073] ss:$9 sm:$0xff] %v4251
        %9163 = vst [vmem:[%s9075] ss:$9 sm:$0xff] %v4259
        %v9164 = vld [vmem:[#allocation1] sm:$0xff]
        %9165 = vst [vmem:[#allocation1] ss:$9 sm:$0xff] %v4267
        %9166 = vst [vmem:[%s9063] ss:$9 sm:$0xff] %v4275
        %9167 = vst [vmem:[%s9065] ss:$9 sm:$0xff] %v4282
        %9168 = vst [vmem:[%s9067] ss:$9 sm:$0xff] %v4290
        %9169 = vst [vmem:[%s9069] ss:$9 sm:$0xff] %v4299
        %9170 = vst [vmem:[%s9071] ss:$9 sm:$0xff] %v4306
        %9171 = vst [vmem:[%s9073] ss:$9 sm:$0xff] %v4314
        %9172 = vst [vmem:[%s9075] ss:$9 sm:$0xff] %v4322
        %v9173 = vld [vmem:[#allocation1] sm:$0xff]
        %9174 = vst [vmem:[#allocation1] ss:$9 sm:$0xff] %v4330
        %9175 = vst [vmem:[%s9063] ss:$9 sm:$0xff] %v4337
        %9176 = vst [vmem:[%s9065] ss:$9 sm:$0xff] %v4346
        %9177 = vst [vmem:[%s9067] ss:$9 sm:$0xff] %v4354
        %9178 = vst [vmem:[%s9069] ss:$9 sm:$0xff] %v4361
        %9179 = vst [vmem:[%s9071] ss:$9 sm:$0xff] %v4369
        %9180 = vst [vmem:[%s9073] ss:$9 sm:$0xff] %v4377
        %9181 = vst [vmem:[%s9075] ss:$9 sm:$0xff] %v4385
        %v9182 = vld [vmem:[#allocation1] sm:$0xff]
        %9183 = vst [vmem:[#allocation1] ss:$9 sm:$0xff] %v4393
        %9184 = vst [vmem:[%s9063] ss:$9 sm:$0xff] %v4401
        %9185 = vst [vmem:[%s9065] ss:$9 sm:$0xff] %v4409
        %9186 = vst [vmem:[%s9067] ss:$9 sm:$0xff] %v4416
        %9187 = vst [vmem:[%s9069] ss:$9 sm:$0xff] %v4424
        %9188 = vst [vmem:[%s9071] ss:$9 sm:$0xff] %v4432
        %9189 = vst [vmem:[%s9073] ss:$9 sm:$0xff] %v4440
        %9190 = vst [vmem:[%s9075] ss:$9 sm:$0xff] %v4448
        %v9191 = vld [vmem:[#allocation1] sm:$0xff]
        %9192 = vst [vmem:[#allocation1] ss:$9 sm:$0xff] %v4456
        %9193 = vst [vmem:[%s9063] ss:$9 sm:$0xff] %v4464
        %9194 = vst [vmem:[%s9065] ss:$9 sm:$0xff] %v4471
        %9195 = vst [vmem:[%s9067] ss:$9 sm:$0xff] %v4479
        %9196 = vst [vmem:[%s9069] ss:$9 sm:$0xff] %v4488
        %9197 = vst [vmem:[%s9071] ss:$9 sm:$0xff] %v4495
        %9198 = vst [vmem:[%s9073] ss:$9 sm:$0xff] %v4503
        %9199 = vst [vmem:[%s9075] ss:$9 sm:$0xff] %v4511
        %v9200 = vld [vmem:[#allocation1] sm:$0xff]
        %9201 = vst [vmem:[#allocation1] ss:$9 sm:$0xff] %v4519
        %9202 = vst [vmem:[%s9063] ss:$9 sm:$0xff] %v4526
        %9203 = vst [vmem:[%s9065] ss:$9 sm:$0xff] %v4535
        %9204 = vst [vmem:[%s9067] ss:$9 sm:$0xff] %v4543
        %9205 = vst [vmem:[%s9069] ss:$9 sm:$0xff] %v4550
        %9206 = vst [vmem:[%s9071] ss:$9 sm:$0xff] %v4558
        %9207 = vst [vmem:[%s9073] ss:$9 sm:$0xff] %v4566
        %9208 = vst [vmem:[%s9075] ss:$9 sm:$0xff] %v4574
        %v9209 = vld [vmem:[#allocation1] sm:$0xff]
        %9210 = vst [vmem:[#allocation1] ss:$9 sm:$0xff] %v4582
        %9211 = vst [vmem:[%s9063] ss:$9 sm:$0xff] %v4590
        %9212 = vst [vmem:[%s9065] ss:$9 sm:$0xff] %v4598
        %9213 = vst [vmem:[%s9067] ss:$9 sm:$0xff] %v4605
        %9214 = vst [vmem:[%s9069] ss:$9 sm:$0xff] %v4613
        %9215 = vst [vmem:[%s9071] ss:$9 sm:$0xff] %v4621
        %9216 = vst [vmem:[%s9073] ss:$9 sm:$0xff] %v4629
        %9217 = vst [vmem:[%s9075] ss:$9 sm:$0xff] %v4637
        %v9218 = vld [vmem:[#allocation1] sm:$0xff]
        %9219 = vst [vmem:[#allocation1] ss:$9 sm:$0xff] %v4645
        %9220 = vst [vmem:[%s9063] ss:$9 sm:$0xff] %v4653
        %9221 = vst [vmem:[%s9065] ss:$9 sm:$0xff] %v4660
        %9222 = vst [vmem:[%s9067] ss:$9 sm:$0xff] %v4668
        %9223 = vst [vmem:[%s9069] ss:$9 sm:$0xff] %v5858
        %9224 = vst [vmem:[%s9071] ss:$9 sm:$0xff] %v5865
        %9225 = vst [vmem:[%s9073] ss:$9 sm:$0xff] %v5873
        %9226 = vst [vmem:[%s9075] ss:$9 sm:$0xff] %v5881
        %v9227 = vld [vmem:[#allocation1] sm:$0xff]
        %9228 = vst [vmem:[#allocation1] ss:$9 sm:$0xff] %v5889
        %9229 = vst [vmem:[%s9063] ss:$9 sm:$0xff] %v5896
        %9231 = vst [vmem:[%s9065] ss:$9 sm:$0xff] %v6046
        %9233 = vst [vmem:[%s9067] ss:$9 sm:$0xff] %v6054
        %9235 = vst [vmem:[%s9069] ss:$9 sm:$0xff] %v6061
        %9237 = vst [vmem:[%s9071] ss:$9 sm:$0xff] %v6069
        %9239 = vst [vmem:[%s9073] ss:$9 sm:$0xff] %v6077
        %9241 = vst [vmem:[%s9075] ss:$9 sm:$0xff] %v6085
        %v9242 = vld [vmem:[#allocation1] sm:$0xff]
        %9243 = vst [vmem:[#allocation1] ss:$9 sm:$0xff] %v4771
        %9244 = vst [vmem:[%s9063] ss:$9 sm:$0xff] %v4778
        %9245 = vst [vmem:[%s9065] ss:$9 sm:$0xff] %v4786
        %9246 = vst [vmem:[%s9067] ss:$9 sm:$0xff] %v4794
        %9247 = vst [vmem:[%s9069] ss:$9 sm:$0xff] %v4802
        %9248 = vst [vmem:[%s9071] ss:$9 sm:$0xff] %v4809
        %9249 = vst [vmem:[%s9073] ss:$9 sm:$0xff] %v4818
        %9250 = vst [vmem:[%s9075] ss:$9 sm:$0xff] %v4826
        %v9251 = vld [vmem:[#allocation1] sm:$0xff]
        %9252 = vst [vmem:[#allocation1] ss:$9 sm:$0xff] %v4833
        %9253 = vst [vmem:[%s9063] ss:$9 sm:$0xff] %v4841
        %9254 = vst [vmem:[%s9065] ss:$9 sm:$0xff] %v4849
        %9255 = vst [vmem:[%s9067] ss:$9 sm:$0xff] %v4857
        %9256 = vst [vmem:[%s9069] ss:$9 sm:$0xff] %v4865
        %9257 = vst [vmem:[%s9071] ss:$9 sm:$0xff] %v4873
        %9258 = vst [vmem:[%s9073] ss:$9 sm:$0xff] %v4881
        %9259 = vst [vmem:[%s9075] ss:$9 sm:$0xff] %v4888
        %v9260 = vld [vmem:[#allocation1] sm:$0xff]
        %9261 = vst [vmem:[#allocation1] ss:$9 sm:$0xff] %v4896
        %9262 = vst [vmem:[%s9063] ss:$9 sm:$0xff] %v4904
        %9263 = vst [vmem:[%s9065] ss:$9 sm:$0xff] %v4912
        %9264 = vst [vmem:[%s9067] ss:$9 sm:$0xff] %v4920
        %9265 = vst [vmem:[%s9069] ss:$9 sm:$0xff] %v4928
        %9266 = vst [vmem:[%s9071] ss:$9 sm:$0xff] %v4936
        %9267 = vst [vmem:[%s9073] ss:$9 sm:$0xff] %v4943
        %9268 = vst [vmem:[%s9075] ss:$9 sm:$0xff] %v4951
        %v9269 = vld [vmem:[#allocation1] sm:$0xff]
        %9270 = vst [vmem:[#allocation1] ss:$9 sm:$0xff] %v4960
        %9271 = vst [vmem:[%s9063] ss:$9 sm:$0xff] %v4967
        %9272 = vst [vmem:[%s9065] ss:$9 sm:$0xff] %v4975
        %9273 = vst [vmem:[%s9067] ss:$9 sm:$0xff] %v4983
        %9274 = vst [vmem:[%s9069] ss:$9 sm:$0xff] %v4991
        %9275 = vst [vmem:[%s9071] ss:$9 sm:$0xff] %v4998
        %9276 = vst [vmem:[%s9073] ss:$9 sm:$0xff] %v5007
        %9277 = vst [vmem:[%s9075] ss:$9 sm:$0xff] %v5015
        %v9278 = vld [vmem:[#allocation1] sm:$0xff]
        %9279 = vst [vmem:[#allocation1] ss:$9 sm:$0xff] %v5022
        %9280 = vst [vmem:[%s9063] ss:$9 sm:$0xff] %v5030
        %9281 = vst [vmem:[%s9065] ss:$9 sm:$0xff] %v5038
        %9282 = vst [vmem:[%s9067] ss:$9 sm:$0xff] %v5046
        %9283 = vst [vmem:[%s9069] ss:$9 sm:$0xff] %v5054
        %9284 = vst [vmem:[%s9071] ss:$9 sm:$0xff] %v5062
        %9285 = vst [vmem:[%s9073] ss:$9 sm:$0xff] %v5070
        %9286 = vst [vmem:[%s9075] ss:$9 sm:$0xff] %v5077
        %v9287 = vld [vmem:[#allocation1] sm:$0xff]
        %9288 = vst [vmem:[#allocation1] ss:$9 sm:$0xff] %v5085
        %9289 = vst [vmem:[%s9063] ss:$9 sm:$0xff] %v5093
        %9290 = vst [vmem:[%s9065] ss:$9 sm:$0xff] %v5101
        %9291 = vst [vmem:[%s9067] ss:$9 sm:$0xff] %v5109
        %9292 = vst [vmem:[%s9069] ss:$9 sm:$0xff] %v5117
        %9293 = vst [vmem:[%s9071] ss:$9 sm:$0xff] %v5125
        %9294 = vst [vmem:[%s9073] ss:$9 sm:$0xff] %v5132
        %9295 = vst [vmem:[%s9075] ss:$9 sm:$0xff] %v5140
        %v9296 = vld [vmem:[#allocation1] sm:$0xff]
        %9297 = vst [vmem:[#allocation1] ss:$9 sm:$0xff] %v5149
        %9298 = vst [vmem:[%s9063] ss:$9 sm:$0xff] %v5156
        %9299 = vst [vmem:[%s9065] ss:$9 sm:$0xff] %v5164
        %9300 = vst [vmem:[%s9067] ss:$9 sm:$0xff] %v5172
        %9301 = vst [vmem:[%s9069] ss:$9 sm:$0xff] %v5180
        %9302 = vst [vmem:[%s9071] ss:$9 sm:$0xff] %v5187
        %9303 = vst [vmem:[%s9073] ss:$9 sm:$0xff] %v5196
        %9304 = vst [vmem:[%s9075] ss:$9 sm:$0xff] %v5204
        %v9305 = vld [vmem:[#allocation1] sm:$0xff]
        %9306 = vst [vmem:[#allocation1] ss:$9 sm:$0xff] %v5211
        %9307 = vst [vmem:[%s9063] ss:$9 sm:$0xff] %v5219
        %9308 = vst [vmem:[%s9065] ss:$9 sm:$0xff] %v5227
        %9309 = vst [vmem:[%s9067] ss:$9 sm:$0xff] %v5235
        %9310 = vst [vmem:[%s9069] ss:$9 sm:$0xff] %v5904
        %9311 = vst [vmem:[%s9071] ss:$9 sm:$0xff] %v5912
        %9312 = vst [vmem:[%s9073] ss:$9 sm:$0xff] %v5920
        %9313 = vst [vmem:[%s9075] ss:$9 sm:$0xff] %v5927
        %v9314 = vld [vmem:[#allocation1] sm:$0xff]
        %9315 = vst [vmem:[#allocation1] ss:$9 sm:$0xff] %v5935
        %9316 = vst [vmem:[%s9063] ss:$9 sm:$0xff] %v5943
        %9318 = vst [vmem:[%s9065] ss:$9 sm:$0xff] %v6093
        %9320 = vst [vmem:[%s9067] ss:$9 sm:$0xff] %v6101
        %9322 = vst [vmem:[%s9069] ss:$9 sm:$0xff] %v6109
        %9324 = vst [vmem:[%s9071] ss:$9 sm:$0xff] %v6117
        %9326 = vst [vmem:[%s9073] ss:$9 sm:$0xff] %v6124
        %9328 = vst [vmem:[%s9075] ss:$9 sm:$0xff] %v6132
        %v9329 = vld [vmem:[#allocation1] sm:$0xff]
        %9330 = vst [vmem:[#allocation1] ss:$9 sm:$0xff] %v5338
        %9331 = vst [vmem:[%s9063] ss:$9 sm:$0xff] %v5346
        %9332 = vst [vmem:[%s9065] ss:$9 sm:$0xff] %v5354
        %9333 = vst [vmem:[%s9067] ss:$9 sm:$0xff] %v5361
        %9334 = vst [vmem:[%s9069] ss:$9 sm:$0xff] %v5369
        %9335 = vst [vmem:[%s9071] ss:$9 sm:$0xff] %v5377
        %9336 = vst [vmem:[%s9073] ss:$9 sm:$0xff] %v5385
        %9337 = vst [vmem:[%s9075] ss:$9 sm:$0xff] %v5393
        %v9338 = vld [vmem:[#allocation1] sm:$0xff]
        %9339 = vst [vmem:[#allocation1] ss:$9 sm:$0xff] %v5401
        %9340 = vst [vmem:[%s9063] ss:$9 sm:$0xff] %v5409
        %9341 = vst [vmem:[%s9065] ss:$9 sm:$0xff] %v5416
        %9342 = vst [vmem:[%s9067] ss:$9 sm:$0xff] %v5424
        %9343 = vst [vmem:[%s9069] ss:$9 sm:$0xff] %v5433
        %9344 = vst [vmem:[%s9071] ss:$9 sm:$0xff] %v5440
        %9345 = vst [vmem:[%s9073] ss:$9 sm:$0xff] %v5448
        %9346 = vst [vmem:[%s9075] ss:$9 sm:$0xff] %v5456
        %v9347 = vld [vmem:[#allocation1] sm:$0xff]
        %9348 = vst [vmem:[#allocation1] ss:$9 sm:$0xff] %v5464
        %9349 = vst [vmem:[%s9063] ss:$9 sm:$0xff] %v5471
        %9350 = vst [vmem:[%s9065] ss:$9 sm:$0xff] %v5480
        %9351 = vst [vmem:[%s9067] ss:$9 sm:$0xff] %v5488
        %9352 = vst [vmem:[%s9069] ss:$9 sm:$0xff] %v5495
        %9353 = vst [vmem:[%s9071] ss:$9 sm:$0xff] %v5503
        %9354 = vst [vmem:[%s9073] ss:$9 sm:$0xff] %v5511
        %9355 = vst [vmem:[%s9075] ss:$9 sm:$0xff] %v5519
        %v9356 = vld [vmem:[#allocation1] sm:$0xff]
        %9357 = vst [vmem:[#allocation1] ss:$9 sm:$0xff] %v5527
        %9358 = vst [vmem:[%s9063] ss:$9 sm:$0xff] %v5535
        %9359 = vst [vmem:[%s9065] ss:$9 sm:$0xff] %v5543
        %9360 = vst [vmem:[%s9067] ss:$9 sm:$0xff] %v5550
        %9361 = vst [vmem:[%s9069] ss:$9 sm:$0xff] %v5558
        %9362 = vst [vmem:[%s9071] ss:$9 sm:$0xff] %v5566
        %9363 = vst [vmem:[%s9073] ss:$9 sm:$0xff] %v5574
        %9364 = vst [vmem:[%s9075] ss:$9 sm:$0xff] %v5582
        %v9365 = vld [vmem:[#allocation1] sm:$0xff]
        %9366 = vst [vmem:[#allocation1] ss:$9 sm:$0xff] %v5590
        %9367 = vst [vmem:[%s9063] ss:$9 sm:$0xff] %v5598
        %9368 = vst [vmem:[%s9065] ss:$9 sm:$0xff] %v5605
        %9369 = vst [vmem:[%s9067] ss:$9 sm:$0xff] %v5613
        %9370 = vst [vmem:[%s9069] ss:$9 sm:$0xff] %v5622
        %9371 = vst [vmem:[%s9071] ss:$9 sm:$0xff] %v5629
        %9372 = vst [vmem:[%s9073] ss:$9 sm:$0xff] %v5637
        %9373 = vst [vmem:[%s9075] ss:$9 sm:$0xff] %v5645
        %v9374 = vld [vmem:[#allocation1] sm:$0xff]
        %9375 = vst [vmem:[#allocation1] ss:$9 sm:$0xff] %v5653
        %9376 = vst [vmem:[%s9063] ss:$9 sm:$0xff] %v5660
        %9377 = vst [vmem:[%s9065] ss:$9 sm:$0xff] %v5669
        %9378 = vst [vmem:[%s9067] ss:$9 sm:$0xff] %v5677
        %9379 = vst [vmem:[%s9069] ss:$9 sm:$0xff] %v5684
        %9380 = vst [vmem:[%s9071] ss:$9 sm:$0xff] %v5692
        %9381 = vst [vmem:[%s9073] ss:$9 sm:$0xff] %v5700
        %9382 = vst [vmem:[%s9075] ss:$9 sm:$0xff] %v5708
        %v9383 = vld [vmem:[#allocation1] sm:$0xff]
        %9384 = vst [vmem:[#allocation1] ss:$9 sm:$0xff] %v5716
        %9385 = vst [vmem:[%s9063] ss:$9 sm:$0xff] %v5724
        %9386 = vst [vmem:[%s9065] ss:$9 sm:$0xff] %v5732
        %9387 = vst [vmem:[%s9067] ss:$9 sm:$0xff] %v5739
        %9388 = vst [vmem:[%s9069] ss:$9 sm:$0xff] %v5747
        %9389 = vst [vmem:[%s9071] ss:$9 sm:$0xff] %v5755
        %9390 = vst [vmem:[%s9073] ss:$9 sm:$0xff] %v5763
        %9391 = vst [vmem:[%s9075] ss:$9 sm:$0xff] %v5771
        %v9392 = vld [vmem:[#allocation1] sm:$0xff]
        %9393 = vst [vmem:[#allocation1] ss:$9 sm:$0xff] %v5779
        %9394 = vst [vmem:[%s9063] ss:$9 sm:$0xff] %v5787
        %9395 = vst [vmem:[%s9065] ss:$9 sm:$0xff] %v5794
        %9396 = vst [vmem:[%s9067] ss:$9 sm:$0xff] %v5802
        %9397 = vst [vmem:[%s9069] ss:$9 sm:$0xff] %v5952
        %9398 = vst [vmem:[%s9071] ss:$9 sm:$0xff] %v5959
        %9399 = vst [vmem:[%s9073] ss:$9 sm:$0xff] %v5967
        %9400 = vst [vmem:[%s9075] ss:$9 sm:$0xff] %v5975
        %v9401 = vld [vmem:[#allocation1] sm:$0xff]
        %9402 = vst [vmem:[#allocation1] ss:$9 sm:$0xff] %v5983
        %9403 = vst [vmem:[%s9063] ss:$9 sm:$0xff] %v5990
        %9405 = vst [vmem:[%s9065] ss:$9 sm:$0xff] %v6141
        %9407 = vst [vmem:[%s9067] ss:$9 sm:$0xff] %v6149
        %9409 = vst [vmem:[%s9069] ss:$9 sm:$0xff] %v6156
        %9411 = vst [vmem:[%s9071] ss:$9 sm:$0xff] %v6164
        %9413 = vst [vmem:[%s9073] ss:$9 sm:$0xff] %v6172
        %9415 = vst [vmem:[%s9075] ss:$9 sm:$0xff] %v6180
        %v9416 = vld [vmem:[#allocation1] sm:$0xff]
        %9453 = vst [vmem:[#allocation1] ss:$9 sm:$0xff] %v2391
        %s9454 = scalar_lea.vmem [#allocation1], 1
        %9455 = vst [vmem:[%s9454] ss:$9 sm:$0xff] %v2394
        %s9456 = scalar_lea.vmem [#allocation1], 2
        %9457 = vst [vmem:[%s9456] ss:$9 sm:$0xff] %v2397
        %s9458 = scalar_lea.vmem [#allocation1], 3
        %9459 = vst [vmem:[%s9458] ss:$9 sm:$0xff] %v2400
        %s9460 = scalar_lea.vmem [#allocation1], 4
        %9461 = vst [vmem:[%s9460] ss:$9 sm:$0xff] %v2403
        %s9462 = scalar_lea.vmem [#allocation1], 5
        %9463 = vst [vmem:[%s9462] ss:$9 sm:$0xff] %v2406
        %s9464 = scalar_lea.vmem [#allocation1], 6
        %9465 = vst [vmem:[%s9464] ss:$9 sm:$0xff] %v2412
        %s9466 = scalar_lea.vmem [#allocation1], 7
        %9467 = vst [vmem:[%s9466] ss:$9 sm:$0xff] %v2415
        %v9468 = vld [vmem:[#allocation1] sm:$0xff]
        %9469 = vst [vmem:[#allocation1] ss:$9 sm:$0xff] %v2418
        %9470 = vst [vmem:[%s9454] ss:$9 sm:$0xff] %v2421
        %9471 = vst [vmem:[%s9456] ss:$9 sm:$0xff] %v2424
        %9472 = vst [vmem:[%s9458] ss:$9 sm:$0xff] %v2427
        %9473 = vst [vmem:[%s9460] ss:$9 sm:$0xff] %v2433
        %9474 = vst [vmem:[%s9462] ss:$9 sm:$0xff] %v2436
        %9475 = vst [vmem:[%s9464] ss:$9 sm:$0xff] %v2439
        %9476 = vst [vmem:[%s9466] ss:$9 sm:$0xff] %v2442
        %v9477 = vld [vmem:[#allocation1] sm:$0xff]
        %9478 = vst [vmem:[#allocation1] ss:$9 sm:$0xff] %v2445
        %9479 = vst [vmem:[%s9454] ss:$9 sm:$0xff] %v2448
        %9480 = vst [vmem:[%s9456] ss:$9 sm:$0xff] %v2454
        %9481 = vst [vmem:[%s9458] ss:$9 sm:$0xff] %v2457
        %9482 = vst [vmem:[%s9460] ss:$9 sm:$0xff] %v2460
        %9483 = vst [vmem:[%s9462] ss:$9 sm:$0xff] %v2463
        %9484 = vst [vmem:[%s9464] ss:$9 sm:$0xff] %v2466
        %9485 = vst [vmem:[%s9466] ss:$9 sm:$0xff] %v2469
        %v9486 = vld [vmem:[#allocation1] sm:$0xff]
        %9487 = vst [vmem:[#allocation1] ss:$9 sm:$0xff] %v2475
        %9488 = vst [vmem:[%s9454] ss:$9 sm:$0xff] %v2478
        %9489 = vst [vmem:[%s9456] ss:$9 sm:$0xff] %v2481
        %9490 = vst [vmem:[%s9458] ss:$9 sm:$0xff] %v2484
        %9491 = vst [vmem:[%s9460] ss:$9 sm:$0xff] %v2487
        %9492 = vst [vmem:[%s9462] ss:$9 sm:$0xff] %v2490
        %9493 = vst [vmem:[%s9464] ss:$9 sm:$0xff] %v2496
        %9494 = vst [vmem:[%s9466] ss:$9 sm:$0xff] %v2499
        %v9495 = vld [vmem:[#allocation1] sm:$0xff]
        %9496 = vst [vmem:[#allocation1] ss:$9 sm:$0xff] %v2502
        %9497 = vst [vmem:[%s9454] ss:$9 sm:$0xff] %v2505
        %9498 = vst [vmem:[%s9456] ss:$9 sm:$0xff] %v2508
        %9499 = vst [vmem:[%s9458] ss:$9 sm:$0xff] %v2511
        %9500 = vst [vmem:[%s9460] ss:$9 sm:$0xff] %v2517
        %9501 = vst [vmem:[%s9462] ss:$9 sm:$0xff] %v2520
        %9502 = vst [vmem:[%s9464] ss:$9 sm:$0xff] %v2523
        %9503 = vst [vmem:[%s9466] ss:$9 sm:$0xff] %v2526
        %v9504 = vld [vmem:[#allocation1] sm:$0xff]
        %9505 = vst [vmem:[#allocation1] ss:$9 sm:$0xff] %v2529
        %9506 = vst [vmem:[%s9454] ss:$9 sm:$0xff] %v2532
        %9507 = vst [vmem:[%s9456] ss:$9 sm:$0xff] %v2538
        %9508 = vst [vmem:[%s9458] ss:$9 sm:$0xff] %v2541
        %9509 = vst [vmem:[%s9460] ss:$9 sm:$0xff] %v2544
        %9510 = vst [vmem:[%s9462] ss:$9 sm:$0xff] %v2547
        %9511 = vst [vmem:[%s9464] ss:$9 sm:$0xff] %v2550
        %9512 = vst [vmem:[%s9466] ss:$9 sm:$0xff] %v2553
        %v9513 = vld [vmem:[#allocation1] sm:$0xff]
        %9514 = vst [vmem:[#allocation1] ss:$9 sm:$0xff] %v2559
        %9515 = vst [vmem:[%s9454] ss:$9 sm:$0xff] %v2562
        %9516 = vst [vmem:[%s9456] ss:$9 sm:$0xff] %v2565
        %9517 = vst [vmem:[%s9458] ss:$9 sm:$0xff] %v2568
        %9518 = vst [vmem:[%s9460] ss:$9 sm:$0xff] %v2571
        %9519 = vst [vmem:[%s9462] ss:$9 sm:$0xff] %v2574
        %9520 = vst [vmem:[%s9464] ss:$9 sm:$0xff] %v2580
        %9521 = vst [vmem:[%s9466] ss:$9 sm:$0xff] %v2583
        %v9522 = vld [vmem:[#allocation1] sm:$0xff]
        %9523 = vst [vmem:[#allocation1] ss:$9 sm:$0xff] %v2586
        %9524 = vst [vmem:[%s9454] ss:$9 sm:$0xff] %v2589
        %9525 = vst [vmem:[%s9456] ss:$9 sm:$0xff] %v2592
        %9526 = vst [vmem:[%s9458] ss:$9 sm:$0xff] %v2595
        %9527 = vst [vmem:[%s9460] ss:$9 sm:$0xff] %v2601
        %9528 = vst [vmem:[%s9462] ss:$9 sm:$0xff] %v2604
        %9529 = vst [vmem:[%s9464] ss:$9 sm:$0xff] %v2607
        %9530 = vst [vmem:[%s9466] ss:$9 sm:$0xff] %v2610
        %v9531 = vld [vmem:[#allocation1] sm:$0xff]
        %9532 = vst [vmem:[#allocation1] ss:$9 sm:$0xff] %v2613
        %9533 = vst [vmem:[%s9454] ss:$9 sm:$0xff] %v2616
        %9534 = vst [vmem:[%s9456] ss:$9 sm:$0xff] %v2622
        %9535 = vst [vmem:[%s9458] ss:$9 sm:$0xff] %v2625
        %9536 = vst [vmem:[%s9460] ss:$9 sm:$0xff] %v2628
        %9537 = vst [vmem:[%s9462] ss:$9 sm:$0xff] %v2631
        %9538 = vst [vmem:[%s9464] ss:$9 sm:$0xff] %v2634
        %9539 = vst [vmem:[%s9466] ss:$9 sm:$0xff] %v2637
        %v9540 = vld [vmem:[#allocation1] sm:$0xff]
        %9541 = vst [vmem:[#allocation1] ss:$9 sm:$0xff] %v2685
        %9542 = vst [vmem:[%s9454] ss:$9 sm:$0xff] %v2688
        %9543 = vst [vmem:[%s9456] ss:$9 sm:$0xff] %v2691
        %9544 = vst [vmem:[%s9458] ss:$9 sm:$0xff] %v2694
        %9545 = vst [vmem:[%s9460] ss:$9 sm:$0xff] %v2697
        %9546 = vst [vmem:[%s9462] ss:$9 sm:$0xff] %v2700
        %9547 = vst [vmem:[%s9464] ss:$9 sm:$0xff] %v2706
        %9548 = vst [vmem:[%s9466] ss:$9 sm:$0xff] %v2709
        %v9549 = vld [vmem:[#allocation1] sm:$0xff]
        %9550 = vst [vmem:[#allocation1] ss:$9 sm:$0xff] %v2712
        %9551 = vst [vmem:[%s9454] ss:$9 sm:$0xff] %v2715
        %9552 = vst [vmem:[%s9456] ss:$9 sm:$0xff] %v2718
        %9553 = vst [vmem:[%s9458] ss:$9 sm:$0xff] %v2721
        %9554 = vst [vmem:[%s9460] ss:$9 sm:$0xff] %v2727
        %9555 = vst [vmem:[%s9462] ss:$9 sm:$0xff] %v2730
        %9556 = vst [vmem:[%s9464] ss:$9 sm:$0xff] %v2733
        %9557 = vst [vmem:[%s9466] ss:$9 sm:$0xff] %v2736
        %v9558 = vld [vmem:[#allocation1] sm:$0xff]
        %9559 = vst [vmem:[#allocation1] ss:$9 sm:$0xff] %v2739
        %9560 = vst [vmem:[%s9454] ss:$9 sm:$0xff] %v2742
        %9561 = vst [vmem:[%s9456] ss:$9 sm:$0xff] %v2748
        %9562 = vst [vmem:[%s9458] ss:$9 sm:$0xff] %v2751
        %9563 = vst [vmem:[%s9460] ss:$9 sm:$0xff] %v2754
        %9564 = vst [vmem:[%s9462] ss:$9 sm:$0xff] %v2757
        %9565 = vst [vmem:[%s9464] ss:$9 sm:$0xff] %v2760
        %9566 = vst [vmem:[%s9466] ss:$9 sm:$0xff] %v2763
        %v9567 = vld [vmem:[#allocation1] sm:$0xff]
        %9568 = vst [vmem:[#allocation1] ss:$9 sm:$0xff] %v2769
        %9569 = vst [vmem:[%s9454] ss:$9 sm:$0xff] %v2772
        %9570 = vst [vmem:[%s9456] ss:$9 sm:$0xff] %v2775
        %9571 = vst [vmem:[%s9458] ss:$9 sm:$0xff] %v2778
        %9572 = vst [vmem:[%s9460] ss:$9 sm:$0xff] %v2781
        %9573 = vst [vmem:[%s9462] ss:$9 sm:$0xff] %v2784
        %9574 = vst [vmem:[%s9464] ss:$9 sm:$0xff] %v2790
        %9575 = vst [vmem:[%s9466] ss:$9 sm:$0xff] %v2793
        %v9576 = vld [vmem:[#allocation1] sm:$0xff]
        %9577 = vst [vmem:[#allocation1] ss:$9 sm:$0xff] %v2796
        %9578 = vst [vmem:[%s9454] ss:$9 sm:$0xff] %v2799
        %9579 = vst [vmem:[%s9456] ss:$9 sm:$0xff] %v2802
        %9580 = vst [vmem:[%s9458] ss:$9 sm:$0xff] %v2805
        %9581 = vst [vmem:[%s9460] ss:$9 sm:$0xff] %v2811
        %9582 = vst [vmem:[%s9462] ss:$9 sm:$0xff] %v2814
        %9583 = vst [vmem:[%s9464] ss:$9 sm:$0xff] %v2817
        %9584 = vst [vmem:[%s9466] ss:$9 sm:$0xff] %v2820
        %v9585 = vld [vmem:[#allocation1] sm:$0xff]
        %9586 = vst [vmem:[#allocation1] ss:$9 sm:$0xff] %v2823
        %9587 = vst [vmem:[%s9454] ss:$9 sm:$0xff] %v2826
        %9588 = vst [vmem:[%s9456] ss:$9 sm:$0xff] %v2832
        %9589 = vst [vmem:[%s9458] ss:$9 sm:$0xff] %v2835
        %9590 = vst [vmem:[%s9460] ss:$9 sm:$0xff] %v2838
        %9591 = vst [vmem:[%s9462] ss:$9 sm:$0xff] %v2841
        %9592 = vst [vmem:[%s9464] ss:$9 sm:$0xff] %v2844
        %9593 = vst [vmem:[%s9466] ss:$9 sm:$0xff] %v2847
        %v9594 = vld [vmem:[#allocation1] sm:$0xff]
        %9595 = vst [vmem:[#allocation1] ss:$9 sm:$0xff] %v2853
        %9596 = vst [vmem:[%s9454] ss:$9 sm:$0xff] %v2856
        %9597 = vst [vmem:[%s9456] ss:$9 sm:$0xff] %v2859
        %9598 = vst [vmem:[%s9458] ss:$9 sm:$0xff] %v2862
        %9599 = vst [vmem:[%s9460] ss:$9 sm:$0xff] %v2865
        %9600 = vst [vmem:[%s9462] ss:$9 sm:$0xff] %v2868
        %9601 = vst [vmem:[%s9464] ss:$9 sm:$0xff] %v2874
        %9602 = vst [vmem:[%s9466] ss:$9 sm:$0xff] %v2877
        %v9603 = vld [vmem:[#allocation1] sm:$0xff]
        %9604 = vst [vmem:[#allocation1] ss:$9 sm:$0xff] %v2880
        %9605 = vst [vmem:[%s9454] ss:$9 sm:$0xff] %v2883
        %9606 = vst [vmem:[%s9456] ss:$9 sm:$0xff] %v2886
        %9607 = vst [vmem:[%s9458] ss:$9 sm:$0xff] %v2889
        %9608 = vst [vmem:[%s9460] ss:$9 sm:$0xff] %v2895
        %9609 = vst [vmem:[%s9462] ss:$9 sm:$0xff] %v2898
        %9610 = vst [vmem:[%s9464] ss:$9 sm:$0xff] %v2901
        %9611 = vst [vmem:[%s9466] ss:$9 sm:$0xff] %v2904
        %v9612 = vld [vmem:[#allocation1] sm:$0xff]
        %9613 = vst [vmem:[#allocation1] ss:$9 sm:$0xff] %v2907
        %9614 = vst [vmem:[%s9454] ss:$9 sm:$0xff] %v2910
        %9615 = vst [vmem:[%s9456] ss:$9 sm:$0xff] %v2916
        %9616 = vst [vmem:[%s9458] ss:$9 sm:$0xff] %v2919
        %9617 = vst [vmem:[%s9460] ss:$9 sm:$0xff] %v2922
        %9618 = vst [vmem:[%s9462] ss:$9 sm:$0xff] %v2925
        %9619 = vst [vmem:[%s9464] ss:$9 sm:$0xff] %v2928
        %9620 = vst [vmem:[%s9466] ss:$9 sm:$0xff] %v2931
        %v9621 = vld [vmem:[#allocation1] sm:$0xff]
        %9622 = vst [vmem:[#allocation1] ss:$9 sm:$0xff] %v2979
        %9623 = vst [vmem:[%s9454] ss:$9 sm:$0xff] %v2982
        %9624 = vst [vmem:[%s9456] ss:$9 sm:$0xff] %v2985
        %9625 = vst [vmem:[%s9458] ss:$9 sm:$0xff] %v2988
        %9626 = vst [vmem:[%s9460] ss:$9 sm:$0xff] %v2991
        %9627 = vst [vmem:[%s9462] ss:$9 sm:$0xff] %v2994
        %9628 = vst [vmem:[%s9464] ss:$9 sm:$0xff] %v3000
        %9629 = vst [vmem:[%s9466] ss:$9 sm:$0xff] %v3003
        %v9630 = vld [vmem:[#allocation1] sm:$0xff]
        %9631 = vst [vmem:[#allocation1] ss:$9 sm:$0xff] %v3006
        %9632 = vst [vmem:[%s9454] ss:$9 sm:$0xff] %v3009
        %9633 = vst [vmem:[%s9456] ss:$9 sm:$0xff] %v3012
        %9634 = vst [vmem:[%s9458] ss:$9 sm:$0xff] %v3015
        %9635 = vst [vmem:[%s9460] ss:$9 sm:$0xff] %v3021
        %9636 = vst [vmem:[%s9462] ss:$9 sm:$0xff] %v3024
        %9637 = vst [vmem:[%s9464] ss:$9 sm:$0xff] %v3027
        %9638 = vst [vmem:[%s9466] ss:$9 sm:$0xff] %v3030
        %v9639 = vld [vmem:[#allocation1] sm:$0xff]
        %9640 = vst [vmem:[#allocation1] ss:$9 sm:$0xff] %v3033
        %9641 = vst [vmem:[%s9454] ss:$9 sm:$0xff] %v3036
        %9642 = vst [vmem:[%s9456] ss:$9 sm:$0xff] %v3042
        %9643 = vst [vmem:[%s9458] ss:$9 sm:$0xff] %v3045
        %9644 = vst [vmem:[%s9460] ss:$9 sm:$0xff] %v3048
        %9645 = vst [vmem:[%s9462] ss:$9 sm:$0xff] %v3051
        %9646 = vst [vmem:[%s9464] ss:$9 sm:$0xff] %v3054
        %9647 = vst [vmem:[%s9466] ss:$9 sm:$0xff] %v3057
        %v9648 = vld [vmem:[#allocation1] sm:$0xff]
        %9649 = vst [vmem:[#allocation1] ss:$9 sm:$0xff] %v3063
        %9650 = vst [vmem:[%s9454] ss:$9 sm:$0xff] %v3066
        %9651 = vst [vmem:[%s9456] ss:$9 sm:$0xff] %v3069
        %9652 = vst [vmem:[%s9458] ss:$9 sm:$0xff] %v3072
        %9653 = vst [vmem:[%s9460] ss:$9 sm:$0xff] %v3075
        %9654 = vst [vmem:[%s9462] ss:$9 sm:$0xff] %v3078
        %9655 = vst [vmem:[%s9464] ss:$9 sm:$0xff] %v3084
        %9656 = vst [vmem:[%s9466] ss:$9 sm:$0xff] %v3087
        %v9657 = vld [vmem:[#allocation1] sm:$0xff]
        %9658 = vst [vmem:[#allocation1] ss:$9 sm:$0xff] %v3090
        %9659 = vst [vmem:[%s9454] ss:$9 sm:$0xff] %v3093
        %9660 = vst [vmem:[%s9456] ss:$9 sm:$0xff] %v3096
        %9661 = vst [vmem:[%s9458] ss:$9 sm:$0xff] %v3099
        %9662 = vst [vmem:[%s9460] ss:$9 sm:$0xff] %v3105
        %9663 = vst [vmem:[%s9462] ss:$9 sm:$0xff] %v3108
        %9664 = vst [vmem:[%s9464] ss:$9 sm:$0xff] %v3111
        %9665 = vst [vmem:[%s9466] ss:$9 sm:$0xff] %v3114
        %v9666 = vld [vmem:[#allocation1] sm:$0xff]
        %9667 = vst [vmem:[#allocation1] ss:$9 sm:$0xff] %v3117
        %9668 = vst [vmem:[%s9454] ss:$9 sm:$0xff] %v3120
        %9669 = vst [vmem:[%s9456] ss:$9 sm:$0xff] %v3126
        %9670 = vst [vmem:[%s9458] ss:$9 sm:$0xff] %v3129
        %9671 = vst [vmem:[%s9460] ss:$9 sm:$0xff] %v3132
        %9672 = vst [vmem:[%s9462] ss:$9 sm:$0xff] %v3135
        %9673 = vst [vmem:[%s9464] ss:$9 sm:$0xff] %v3138
        %9674 = vst [vmem:[%s9466] ss:$9 sm:$0xff] %v3141
        %v9675 = vld [vmem:[#allocation1] sm:$0xff]
        %9676 = vst [vmem:[#allocation1] ss:$9 sm:$0xff] %v3147
        %9677 = vst [vmem:[%s9454] ss:$9 sm:$0xff] %v3150
        %9678 = vst [vmem:[%s9456] ss:$9 sm:$0xff] %v3153
        %9679 = vst [vmem:[%s9458] ss:$9 sm:$0xff] %v3156
        %9680 = vst [vmem:[%s9460] ss:$9 sm:$0xff] %v3159
        %9681 = vst [vmem:[%s9462] ss:$9 sm:$0xff] %v3162
        %9682 = vst [vmem:[%s9464] ss:$9 sm:$0xff] %v3168
        %9683 = vst [vmem:[%s9466] ss:$9 sm:$0xff] %v3171
        %v9684 = vld [vmem:[#allocation1] sm:$0xff]
        %9685 = vst [vmem:[#allocation1] ss:$9 sm:$0xff] %v3174
        %9686 = vst [vmem:[%s9454] ss:$9 sm:$0xff] %v3177
        %9687 = vst [vmem:[%s9456] ss:$9 sm:$0xff] %v3180
        %9688 = vst [vmem:[%s9458] ss:$9 sm:$0xff] %v3183
        %9689 = vst [vmem:[%s9460] ss:$9 sm:$0xff] %v3189
        %9690 = vst [vmem:[%s9462] ss:$9 sm:$0xff] %v3192
        %9691 = vst [vmem:[%s9464] ss:$9 sm:$0xff] %v3195
        %9692 = vst [vmem:[%s9466] ss:$9 sm:$0xff] %v3198
        %v9693 = vld [vmem:[#allocation1] sm:$0xff]
        %9694 = vst [vmem:[#allocation1] ss:$9 sm:$0xff] %v3201
        %9695 = vst [vmem:[%s9454] ss:$9 sm:$0xff] %v3204
        %9696 = vst [vmem:[%s9456] ss:$9 sm:$0xff] %v3210
        %9697 = vst [vmem:[%s9458] ss:$9 sm:$0xff] %v3213
        %9698 = vst [vmem:[%s9460] ss:$9 sm:$0xff] %v3216
        %9699 = vst [vmem:[%s9462] ss:$9 sm:$0xff] %v3219
        %9700 = vst [vmem:[%s9464] ss:$9 sm:$0xff] %v3222
        %9701 = vst [vmem:[%s9466] ss:$9 sm:$0xff] %v3225
        %v9702 = vld [vmem:[#allocation1] sm:$0xff]
        %9703 = vst [vmem:[#allocation1] ss:$9 sm:$0xff] %v3273
        %9704 = vst [vmem:[%s9454] ss:$9 sm:$0xff] %v3276
        %9705 = vst [vmem:[%s9456] ss:$9 sm:$0xff] %v3279
        %9706 = vst [vmem:[%s9458] ss:$9 sm:$0xff] %v3282
        %9707 = vst [vmem:[%s9460] ss:$9 sm:$0xff] %v3285
        %9708 = vst [vmem:[%s9462] ss:$9 sm:$0xff] %v3288
        %9709 = vst [vmem:[%s9464] ss:$9 sm:$0xff] %v3294
        %9710 = vst [vmem:[%s9466] ss:$9 sm:$0xff] %v3297
        %v9711 = vld [vmem:[#allocation1] sm:$0xff]
        %9712 = vst [vmem:[#allocation1] ss:$9 sm:$0xff] %v3300
        %9713 = vst [vmem:[%s9454] ss:$9 sm:$0xff] %v3303
        %9714 = vst [vmem:[%s9456] ss:$9 sm:$0xff] %v3306
        %9715 = vst [vmem:[%s9458] ss:$9 sm:$0xff] %v3309
        %9716 = vst [vmem:[%s9460] ss:$9 sm:$0xff] %v3315
        %9717 = vst [vmem:[%s9462] ss:$9 sm:$0xff] %v3318
        %9718 = vst [vmem:[%s9464] ss:$9 sm:$0xff] %v3321
        %9719 = vst [vmem:[%s9466] ss:$9 sm:$0xff] %v3324
        %v9720 = vld [vmem:[#allocation1] sm:$0xff]
        %9721 = vst [vmem:[#allocation1] ss:$9 sm:$0xff] %v3327
        %9722 = vst [vmem:[%s9454] ss:$9 sm:$0xff] %v3330
        %9723 = vst [vmem:[%s9456] ss:$9 sm:$0xff] %v3336
        %9724 = vst [vmem:[%s9458] ss:$9 sm:$0xff] %v3339
        %9725 = vst [vmem:[%s9460] ss:$9 sm:$0xff] %v3342
        %9726 = vst [vmem:[%s9462] ss:$9 sm:$0xff] %v3345
        %9727 = vst [vmem:[%s9464] ss:$9 sm:$0xff] %v3348
        %9728 = vst [vmem:[%s9466] ss:$9 sm:$0xff] %v3351
        %v9729 = vld [vmem:[#allocation1] sm:$0xff]
        %9730 = vst [vmem:[#allocation1] ss:$9 sm:$0xff] %v3357
        %9731 = vst [vmem:[%s9454] ss:$9 sm:$0xff] %v3360
        %9732 = vst [vmem:[%s9456] ss:$9 sm:$0xff] %v3363
        %9733 = vst [vmem:[%s9458] ss:$9 sm:$0xff] %v3366
        %9734 = vst [vmem:[%s9460] ss:$9 sm:$0xff] %v3369
        %9735 = vst [vmem:[%s9462] ss:$9 sm:$0xff] %v3372
        %9736 = vst [vmem:[%s9464] ss:$9 sm:$0xff] %v3378
        %9737 = vst [vmem:[%s9466] ss:$9 sm:$0xff] %v3381
        %v9738 = vld [vmem:[#allocation1] sm:$0xff]
        %9739 = vst [vmem:[#allocation1] ss:$9 sm:$0xff] %v3384
        %9740 = vst [vmem:[%s9454] ss:$9 sm:$0xff] %v3387
        %9741 = vst [vmem:[%s9456] ss:$9 sm:$0xff] %v3390
        %9742 = vst [vmem:[%s9458] ss:$9 sm:$0xff] %v3393
        %9743 = vst [vmem:[%s9460] ss:$9 sm:$0xff] %v3399
        %9744 = vst [vmem:[%s9462] ss:$9 sm:$0xff] %v3402
        %9745 = vst [vmem:[%s9464] ss:$9 sm:$0xff] %v3405
        %9746 = vst [vmem:[%s9466] ss:$9 sm:$0xff] %v3408
        %v9747 = vld [vmem:[#allocation1] sm:$0xff]
        %9748 = vst [vmem:[#allocation1] ss:$9 sm:$0xff] %v3411
        %9749 = vst [vmem:[%s9454] ss:$9 sm:$0xff] %v3414
        %9750 = vst [vmem:[%s9456] ss:$9 sm:$0xff] %v3420
        %9751 = vst [vmem:[%s9458] ss:$9 sm:$0xff] %v3423
        %9752 = vst [vmem:[%s9460] ss:$9 sm:$0xff] %v3426
        %9753 = vst [vmem:[%s9462] ss:$9 sm:$0xff] %v3429
        %9754 = vst [vmem:[%s9464] ss:$9 sm:$0xff] %v3432
        %9755 = vst [vmem:[%s9466] ss:$9 sm:$0xff] %v3435
        %v9756 = vld [vmem:[#allocation1] sm:$0xff]
        %9757 = vst [vmem:[#allocation1] ss:$9 sm:$0xff] %v3441
        %9758 = vst [vmem:[%s9454] ss:$9 sm:$0xff] %v3444
        %9759 = vst [vmem:[%s9456] ss:$9 sm:$0xff] %v3447
        %9760 = vst [vmem:[%s9458] ss:$9 sm:$0xff] %v3450
        %9761 = vst [vmem:[%s9460] ss:$9 sm:$0xff] %v3453
        %9762 = vst [vmem:[%s9462] ss:$9 sm:$0xff] %v3456
        %9763 = vst [vmem:[%s9464] ss:$9 sm:$0xff] %v3462
        %9764 = vst [vmem:[%s9466] ss:$9 sm:$0xff] %v3465
        %v9765 = vld [vmem:[#allocation1] sm:$0xff]
        %9766 = vst [vmem:[#allocation1] ss:$9 sm:$0xff] %v3468
        %9767 = vst [vmem:[%s9454] ss:$9 sm:$0xff] %v3471
        %9768 = vst [vmem:[%s9456] ss:$9 sm:$0xff] %v3474
        %9769 = vst [vmem:[%s9458] ss:$9 sm:$0xff] %v3477
        %9770 = vst [vmem:[%s9460] ss:$9 sm:$0xff] %v3483
        %9771 = vst [vmem:[%s9462] ss:$9 sm:$0xff] %v3486
        %9772 = vst [vmem:[%s9464] ss:$9 sm:$0xff] %v3489
        %9773 = vst [vmem:[%s9466] ss:$9 sm:$0xff] %v3492
        %v9774 = vld [vmem:[#allocation1] sm:$0xff]
        %9775 = vst [vmem:[#allocation1] ss:$9 sm:$0xff] %v3495
        %9776 = vst [vmem:[%s9454] ss:$9 sm:$0xff] %v3498
        %9777 = vst [vmem:[%s9456] ss:$9 sm:$0xff] %v3504
        %9778 = vst [vmem:[%s9458] ss:$9 sm:$0xff] %v3507
        %9779 = vst [vmem:[%s9460] ss:$9 sm:$0xff] %v3510
        %9780 = vst [vmem:[%s9462] ss:$9 sm:$0xff] %v3513
        %9781 = vst [vmem:[%s9464] ss:$9 sm:$0xff] %v3516
        %9782 = vst [vmem:[%s9466] ss:$9 sm:$0xff] %v3519
        %v9783 = vld [vmem:[#allocation1] sm:$0xff]
        %v9820 = vld [vmem:[%s3] sm:$0xf]
        %v9821 = vld [vmem:[%s3 + $0x4] sm:$0xf]
        %v9822 = vld [vmem:[%s3 + $0x8] sm:$0xf]
        %v9823 = vld [vmem:[%s3 + $0xc] sm:$0xf]
        %v9824 = vld [vmem:[%s3 + $0x10] sm:$0xf]
        %v9825 = vld [vmem:[%s3 + $0x14] sm:$0xf]
        %v9826 = vld [vmem:[%s3 + $0x18] sm:$0xf]
        %v9827 = vld [vmem:[%s3 + $0x1c] sm:$0xf]
        %v9828 = vld [vmem:[%s3 + $0x20] sm:$0xf]
        %v9829 = vld [vmem:[%s3 + $0x24] sm:$0xf]
        %v9830 = vld [vmem:[%s3 + $0x28] sm:$0xf]
        %v9831 = vld [vmem:[%s3 + $0x2c] sm:$0xf]
        %v9832 = vld [vmem:[%s3 + $0x30] sm:$0xf]
        %v9833 = vld [vmem:[%s3 + $0x34] sm:$0xf]
        %v9834 = vld [vmem:[%s3 + $0x38] sm:$0xf]
        %v9835 = vld [vmem:[%s3 + $0x3c] sm:$0xf]
        %v9836 = vld [vmem:[%s3 + $0x40] sm:$0xf]
        %v9837 = vld [vmem:[%s3 + $0x44] sm:$0xf]
        %v9838 = vld [vmem:[%s3 + $0x48] sm:$0xf]
        %v9839 = vld [vmem:[%s3 + $0x4c] sm:$0xf]
        %v9840 = vld [vmem:[%s3 + $0x50] sm:$0xf]
        %v9841 = vld [vmem:[%s3 + $0x54] sm:$0xf]
        %v9842 = vld [vmem:[%s3 + $0x58] sm:$0xf]
        %v9843 = vld [vmem:[%s3 + $0x5c] sm:$0xf]
        %v9844 = vld [vmem:[%s3 + $0x60] sm:$0xf]
        %v9845 = vld [vmem:[%s3 + $0x64] sm:$0xf]
        %v9846 = vld [vmem:[%s3 + $0x68] sm:$0xf]
        %v9847 = vld [vmem:[%s3 + $0x6c] sm:$0xf]
        %v9848 = vld [vmem:[%s3 + $0x70] sm:$0xf]
        %v9849 = vld [vmem:[%s3 + $0x74] sm:$0xf]
        %v9850 = vld [vmem:[%s3 + $0x78] sm:$0xf]
        %v9851 = vld [vmem:[%s3 + $0x7c] sm:$0xf]
        %v9852 = vld [vmem:[%s3 + $0x80] sm:$0xf]
        %v9853 = vld [vmem:[%s3 + $0x84] sm:$0xf]
        %v9854 = vld [vmem:[%s3 + $0x88] sm:$0xf]
        %v9855 = vld [vmem:[%s3 + $0x8c] sm:$0xf]
        %v9856 = vld [vmem:[%s3 + $0x90] sm:$0xf]
        %v9857 = vld [vmem:[%s3 + $0x94] sm:$0xf]
        %v9858 = vld [vmem:[%s3 + $0x98] sm:$0xf]
        %v9859 = vld [vmem:[%s3 + $0x9c] sm:$0xf]
        %v9860 = vld [vmem:[%s3 + $0xa0] sm:$0xf]
        %v9861 = vld [vmem:[%s3 + $0xa4] sm:$0xf]
        %v9862 = vld [vmem:[%s3 + $0xa8] sm:$0xf]
        %v9863 = vld [vmem:[%s3 + $0xac] sm:$0xf]
        %v9864 = vld [vmem:[%s3 + $0xb0] sm:$0xf]
        %v9865 = vld [vmem:[%s3 + $0xb4] sm:$0xf]
        %v9866 = vld [vmem:[%s3 + $0xb8] sm:$0xf]
        %v9867 = vld [vmem:[%s3 + $0xbc] sm:$0xf]
        %v9868 = vld [vmem:[%s3 + $0xc0] sm:$0xf]
        %v9869 = vld [vmem:[%s3 + $0xc4] sm:$0xf]
        %v9870 = vld [vmem:[%s3 + $0xc8] sm:$0xf]
        %v9871 = vld [vmem:[%s3 + $0xcc] sm:$0xf]
        %v9872 = vld [vmem:[%s3 + $0xd0] sm:$0xf]
        %v9873 = vld [vmem:[%s3 + $0xd4] sm:$0xf]
        %v9874 = vld [vmem:[%s3 + $0xd8] sm:$0xf]
        %v9875 = vld [vmem:[%s3 + $0xdc] sm:$0xf]
        %v9876 = vld [vmem:[%s3 + $0xe0] sm:$0xf]
        %v9877 = vld [vmem:[%s3 + $0xe4] sm:$0xf]
        %v9878 = vld [vmem:[%s3 + $0xe8] sm:$0xf]
        %v9879 = vld [vmem:[%s3 + $0xec] sm:$0xf]
        %v9880 = vld [vmem:[%s3 + $0xf0] sm:$0xf]
        %v9881 = vld [vmem:[%s3 + $0xf4] sm:$0xf]
        %v9882 = vld [vmem:[%s3 + $0xf8] sm:$0xf]
        %v9883 = vld [vmem:[%s3 + $0xfc] sm:$0xf]
        %v9884 = vld [vmem:[%s3 + $0x100] sm:$0xf]
        %v9885 = vld [vmem:[%s3 + $0x104] sm:$0xf]
        %v9886 = vld [vmem:[%s3 + $0x108] sm:$0xf]
        %v9887 = vld [vmem:[%s3 + $0x10c] sm:$0xf]
        %v9888 = vld [vmem:[%s3 + $0x110] sm:$0xf]
        %v9889 = vld [vmem:[%s3 + $0x114] sm:$0xf]
        %v9890 = vld [vmem:[%s3 + $0x118] sm:$0xf]
        %v9891 = vld [vmem:[%s3 + $0x11c] sm:$0xf]
        %v9892 = vld [vmem:[%s3 + $0x120] sm:$0xf]
        %v9893 = vld [vmem:[%s3 + $0x124] sm:$0xf]
        %v9894 = vld [vmem:[%s3 + $0x128] sm:$0xf]
        %v9895 = vld [vmem:[%s3 + $0x12c] sm:$0xf]
        %v9896 = vld [vmem:[%s3 + $0x130] sm:$0xf]
        %v9897 = vld [vmem:[%s3 + $0x134] sm:$0xf]
        %v9898 = vld [vmem:[%s3 + $0x138] sm:$0xf]
        %v9899 = vld [vmem:[%s3 + $0x13c] sm:$0xf]
        %v9900 = vld [vmem:[%s3 + $0x140] sm:$0xf]
        %v9901 = vld [vmem:[%s3 + $0x144] sm:$0xf]
        %v9902 = vld [vmem:[%s3 + $0x148] sm:$0xf]
        %v9903 = vld [vmem:[%s3 + $0x14c] sm:$0xf]
        %v9904 = vld [vmem:[%s3 + $0x150] sm:$0xf]
        %v9905 = vld [vmem:[%s3 + $0x154] sm:$0xf]
        %v9906 = vld [vmem:[%s3 + $0x158] sm:$0xf]
        %v9907 = vld [vmem:[%s3 + $0x15c] sm:$0xf]
        %v9908 = vld [vmem:[%s3 + $0x160] sm:$0xf]
        %v9909 = vld [vmem:[%s3 + $0x164] sm:$0xf]
        %v9910 = vld [vmem:[%s3 + $0x168] sm:$0xf]
        %v9911 = vld [vmem:[%s3 + $0x16c] sm:$0xf]
        %v9912 = vld [vmem:[%s3 + $0x170] sm:$0xf]
        %v9913 = vld [vmem:[%s3 + $0x174] sm:$0xf]
        %v9914 = vld [vmem:[%s3 + $0x178] sm:$0xf]
        %v9915 = vld [vmem:[%s3 + $0x17c] sm:$0xf]
        %v9916 = vld [vmem:[%s3 + $0x180] sm:$0xf]
        %v9917 = vld [vmem:[%s3 + $0x184] sm:$0xf]
        %v9918 = vld [vmem:[%s3 + $0x188] sm:$0xf]
        %v9919 = vld [vmem:[%s3 + $0x18c] sm:$0xf]
        %v9920 = vld [vmem:[%s3 + $0x190] sm:$0xf]
        %v9921 = vld [vmem:[%s3 + $0x194] sm:$0xf]
        %v9922 = vld [vmem:[%s3 + $0x198] sm:$0xf]
        %v9923 = vld [vmem:[%s3 + $0x19c] sm:$0xf]
        %v9924 = vld [vmem:[%s3 + $0x1a0] sm:$0xf]
        %v9925 = vld [vmem:[%s3 + $0x1a4] sm:$0xf]
        %v9926 = vld [vmem:[%s3 + $0x1a8] sm:$0xf]
        %v9927 = vld [vmem:[%s3 + $0x1ac] sm:$0xf]
        %v9928 = vld [vmem:[%s3 + $0x1b0] sm:$0xf]
        %v9929 = vld [vmem:[%s3 + $0x1b4] sm:$0xf]
        %v9930 = vld [vmem:[%s3 + $0x1b8] sm:$0xf]
        %v9931 = vld [vmem:[%s3 + $0x1bc] sm:$0xf]
        %v9932 = vld [vmem:[%s3 + $0x1c0] sm:$0xf]
        %v9933 = vld [vmem:[%s3 + $0x1c4] sm:$0xf]
        %v9934 = vld [vmem:[%s3 + $0x1c8] sm:$0xf]
        %v9935 = vld [vmem:[%s3 + $0x1cc] sm:$0xf]
        %v9936 = vld [vmem:[%s3 + $0x1d0] sm:$0xf]
        %v9937 = vld [vmem:[%s3 + $0x1d4] sm:$0xf]
        %v9938 = vld [vmem:[%s3 + $0x1d8] sm:$0xf]
        %v9939 = vld [vmem:[%s3 + $0x1dc] sm:$0xf]
        %v9940 = vld [vmem:[%s3 + $0x1e0] sm:$0xf]
        %v9941 = vld [vmem:[%s3 + $0x1e4] sm:$0xf]
        %v9942 = vld [vmem:[%s3 + $0x1e8] sm:$0xf]
        %v9943 = vld [vmem:[%s3 + $0x1ec] sm:$0xf]
        %v9944 = vld [vmem:[%s3 + $0x1f0] sm:$0xf]
        %v9945 = vld [vmem:[%s3 + $0x1f4] sm:$0xf]
        %v9946 = vld [vmem:[%s3 + $0x1f8] sm:$0xf]
        %v9947 = vld [vmem:[%s3 + $0x1fc] sm:$0xf]
        %v9948 = vld [vmem:[%s3 + $0x200] sm:$0xf]
        %v9949 = vld [vmem:[%s3 + $0x204] sm:$0xf]
        %v9950 = vld [vmem:[%s3 + $0x208] sm:$0xf]
        %v9951 = vld [vmem:[%s3 + $0x20c] sm:$0xf]
        %v9952 = vld [vmem:[%s3 + $0x210] sm:$0xf]
        %v9953 = vld [vmem:[%s3 + $0x214] sm:$0xf]
        %v9954 = vld [vmem:[%s3 + $0x218] sm:$0xf]
        %v9955 = vld [vmem:[%s3 + $0x21c] sm:$0xf]
        %v9956 = vld [vmem:[%s3 + $0x220] sm:$0xf]
        %v9957 = vld [vmem:[%s3 + $0x224] sm:$0xf]
        %v9958 = vld [vmem:[%s3 + $0x228] sm:$0xf]
        %v9959 = vld [vmem:[%s3 + $0x22c] sm:$0xf]
        %v9960 = vld [vmem:[%s3 + $0x230] sm:$0xf]
        %v9961 = vld [vmem:[%s3 + $0x234] sm:$0xf]
        %v9962 = vld [vmem:[%s3 + $0x238] sm:$0xf]
        %v9963 = vld [vmem:[%s3 + $0x23c] sm:$0xf]
        %v9964 = vld [vmem:[%s4] sm:$0x1]
        %v9966 = vperm.slane %v9964, 0
        %v10112 = vunpack.c.l.b16 %v9820
        %v10113 = vunpack.c.l.b16 %v9821
        %v10114 = vunpack.c.l.b16 %v9822
        %v10115 = vunpack.c.l.b16 %v9823
        %v10116 = vunpack.c.l.b16 %v9824
        %v10117 = vunpack.c.l.b16 %v9825
        %v10118 = vunpack.c.l.b16 %v9826
        %v10119 = vunpack.c.l.b16 %v9827
        %v10120 = vunpack.c.l.b16 %v9828
        %v10121 = vunpack.c.l.b16 %v9829
        %v10122 = vunpack.c.l.b16 %v9830
        %v10123 = vunpack.c.l.b16 %v9831
        %v10124 = vunpack.c.l.b16 %v9832
        %v10125 = vunpack.c.l.b16 %v9833
        %v10126 = vunpack.c.l.b16 %v9834
        %v10127 = vunpack.c.l.b16 %v9835
        %v10128 = vunpack.c.l.b16 %v9836
        %v10129 = vunpack.c.l.b16 %v9837
        %v10130 = vunpack.c.l.b16 %v9838
        %v10131 = vunpack.c.l.b16 %v9839
        %v10132 = vunpack.c.l.b16 %v9840
        %v10133 = vunpack.c.l.b16 %v9841
        %v10134 = vunpack.c.l.b16 %v9842
        %v10135 = vunpack.c.l.b16 %v9843
        %v10136 = vunpack.c.l.b16 %v9844
        %v10137 = vunpack.c.l.b16 %v9845
        %v10138 = vunpack.c.l.b16 %v9846
        %v10139 = vunpack.c.l.b16 %v9847
        %v10140 = vunpack.c.l.b16 %v9848
        %v10141 = vunpack.c.l.b16 %v9849
        %v10142 = vunpack.c.l.b16 %v9850
        %v10143 = vunpack.c.l.b16 %v9851
        %v10144 = vunpack.c.l.b16 %v9852
        %v10145 = vunpack.c.l.b16 %v9853
        %v10146 = vunpack.c.l.b16 %v9854
        %v10147 = vunpack.c.l.b16 %v9855
        %v10148 = vunpack.c.l.b16 %v9856
        %v10149 = vunpack.c.l.b16 %v9857
        %v10150 = vunpack.c.l.b16 %v9858
        %v10151 = vunpack.c.l.b16 %v9859
        %v10152 = vunpack.c.l.b16 %v9860
        %v10153 = vunpack.c.l.b16 %v9861
        %v10154 = vunpack.c.l.b16 %v9862
        %v10155 = vunpack.c.l.b16 %v9863
        %v10156 = vunpack.c.l.b16 %v9864
        %v10157 = vunpack.c.l.b16 %v9865
        %v10158 = vunpack.c.l.b16 %v9866
        %v10159 = vunpack.c.l.b16 %v9867
        %v10160 = vunpack.c.l.b16 %v9868
        %v10161 = vunpack.c.l.b16 %v9869
        %v10162 = vunpack.c.l.b16 %v9870
        %v10163 = vunpack.c.l.b16 %v9871
        %v10164 = vunpack.c.l.b16 %v9872
        %v10165 = vunpack.c.l.b16 %v9873
        %v10166 = vunpack.c.l.b16 %v9874
        %v10167 = vunpack.c.l.b16 %v9875
        %v10168 = vunpack.c.l.b16 %v9876
        %v10169 = vunpack.c.l.b16 %v9877
        %v10170 = vunpack.c.l.b16 %v9878
        %v10171 = vunpack.c.l.b16 %v9879
        %v10172 = vunpack.c.l.b16 %v9880
        %v10173 = vunpack.c.l.b16 %v9881
        %v10174 = vunpack.c.l.b16 %v9882
        %v10175 = vunpack.c.l.b16 %v9883
        %v10176 = vunpack.c.l.b16 %v9884
        %v10177 = vunpack.c.l.b16 %v9885
        %v10178 = vunpack.c.l.b16 %v9886
        %v10179 = vunpack.c.l.b16 %v9887
        %v10180 = vunpack.c.l.b16 %v9888
        %v10181 = vunpack.c.l.b16 %v9889
        %v10182 = vunpack.c.l.b16 %v9890
        %v10183 = vunpack.c.l.b16 %v9891
        %v10184 = vunpack.c.l.b16 %v9892
        %v10185 = vunpack.c.l.b16 %v9893
        %v10186 = vunpack.c.l.b16 %v9894
        %v10187 = vunpack.c.l.b16 %v9895
        %v10188 = vunpack.c.l.b16 %v9896
        %v10189 = vunpack.c.l.b16 %v9897
        %v10190 = vunpack.c.l.b16 %v9898
        %v10191 = vunpack.c.l.b16 %v9899
        %v10192 = vunpack.c.l.b16 %v9900
        %v10193 = vunpack.c.l.b16 %v9901
        %v10194 = vunpack.c.l.b16 %v9902
        %v10195 = vunpack.c.l.b16 %v9903
        %v10196 = vunpack.c.l.b16 %v9904
        %v10197 = vunpack.c.l.b16 %v9905
        %v10198 = vunpack.c.l.b16 %v9906
        %v10199 = vunpack.c.l.b16 %v9907
        %v10200 = vunpack.c.l.b16 %v9908
        %v10201 = vunpack.c.l.b16 %v9909
        %v10202 = vunpack.c.l.b16 %v9910
        %v10203 = vunpack.c.l.b16 %v9911
        %v10204 = vunpack.c.l.b16 %v9912
        %v10205 = vunpack.c.l.b16 %v9913
        %v10206 = vunpack.c.l.b16 %v9914
        %v10207 = vunpack.c.l.b16 %v9915
        %v10208 = vunpack.c.l.b16 %v9916
        %v10209 = vunpack.c.l.b16 %v9917
        %v10210 = vunpack.c.l.b16 %v9918
        %v10211 = vunpack.c.l.b16 %v9919
        %v10212 = vunpack.c.l.b16 %v9920
        %v10213 = vunpack.c.l.b16 %v9921
        %v10214 = vunpack.c.l.b16 %v9922
        %v10215 = vunpack.c.l.b16 %v9923
        %v10216 = vunpack.c.l.b16 %v9924
        %v10217 = vunpack.c.l.b16 %v9925
        %v10218 = vunpack.c.l.b16 %v9926
        %v10219 = vunpack.c.l.b16 %v9927
        %v10220 = vunpack.c.l.b16 %v9928
        %v10221 = vunpack.c.l.b16 %v9929
        %v10222 = vunpack.c.l.b16 %v9930
        %v10223 = vunpack.c.l.b16 %v9931
        %v10224 = vunpack.c.l.b16 %v9932
        %v10225 = vunpack.c.l.b16 %v9933
        %v10226 = vunpack.c.l.b16 %v9934
        %v10227 = vunpack.c.l.b16 %v9935
        %v10228 = vunpack.c.l.b16 %v9936
        %v10229 = vunpack.c.l.b16 %v9937
        %v10230 = vunpack.c.l.b16 %v9938
        %v10231 = vunpack.c.l.b16 %v9939
        %v10232 = vunpack.c.l.b16 %v9940
        %v10233 = vunpack.c.l.b16 %v9941
        %v10234 = vunpack.c.l.b16 %v9942
        %v10235 = vunpack.c.l.b16 %v9943
        %v10236 = vunpack.c.l.b16 %v9944
        %v10237 = vunpack.c.l.b16 %v9945
        %v10238 = vunpack.c.l.b16 %v9946
        %v10239 = vunpack.c.l.b16 %v9947
        %v10240 = vunpack.c.l.b16 %v9948
        %v10241 = vunpack.c.l.b16 %v9949
        %v10242 = vunpack.c.l.b16 %v9950
        %v10243 = vunpack.c.l.b16 %v9951
        %v10244 = vunpack.c.l.b16 %v9952
        %v10245 = vunpack.c.l.b16 %v9953
        %v10246 = vunpack.c.l.b16 %v9954
        %v10247 = vunpack.c.l.b16 %v9955
        %v10248 = vunpack.c.l.b16 %v9956
        %v10249 = vunpack.c.l.b16 %v9957
        %v10250 = vunpack.c.l.b16 %v9958
        %v10251 = vunpack.c.l.b16 %v9959
        %v10252 = vunpack.c.l.b16 %v9960
        %v10253 = vunpack.c.l.b16 %v9961
        %v10254 = vunpack.c.l.b16 %v9962
        %v10255 = vunpack.c.l.b16 %v9963
        %v10256 = vpack.c.b16 %v10113, %v10112
        %v10257 = vpack.c.b16 %v10115, %v10114
        %v10258 = vpack.c.b16 %v10117, %v10116
        %v10259 = vpack.c.b16 %v10119, %v10118
        %v10260 = vpack.c.b16 %v10121, %v10120
        %v10261 = vpack.c.b16 %v10123, %v10122
        %v10262 = vpack.c.b16 %v10125, %v10124
        %v10263 = vpack.c.b16 %v10127, %v10126
        %v10264 = vpack.c.b16 %v10129, %v10128
        %v10265 = vpack.c.b16 %v10131, %v10130
        %v10266 = vpack.c.b16 %v10133, %v10132
        %v10267 = vpack.c.b16 %v10135, %v10134
        %v10268 = vpack.c.b16 %v10137, %v10136
        %v10269 = vpack.c.b16 %v10139, %v10138
        %v10270 = vpack.c.b16 %v10141, %v10140
        %v10271 = vpack.c.b16 %v10143, %v10142
        %v10272 = vpack.c.b16 %v10145, %v10144
        %v10273 = vpack.c.b16 %v10147, %v10146
        %v10274 = vpack.c.b16 %v10149, %v10148
        %v10275 = vpack.c.b16 %v10151, %v10150
        %v10276 = vpack.c.b16 %v10153, %v10152
        %v10277 = vpack.c.b16 %v10155, %v10154
        %v10278 = vpack.c.b16 %v10157, %v10156
        %v10279 = vpack.c.b16 %v10159, %v10158
        %v10280 = vpack.c.b16 %v10161, %v10160
        %v10281 = vpack.c.b16 %v10163, %v10162
        %v10282 = vpack.c.b16 %v10165, %v10164
        %v10283 = vpack.c.b16 %v10167, %v10166
        %v10284 = vpack.c.b16 %v10169, %v10168
        %v10285 = vpack.c.b16 %v10171, %v10170
        %v10286 = vpack.c.b16 %v10173, %v10172
        %v10287 = vpack.c.b16 %v10175, %v10174
        %v10288 = vpack.c.b16 %v10177, %v10176
        %v10289 = vpack.c.b16 %v10179, %v10178
        %v10290 = vpack.c.b16 %v10181, %v10180
        %v10291 = vpack.c.b16 %v10183, %v10182
        %v10292 = vpack.c.b16 %v10185, %v10184
        %v10293 = vpack.c.b16 %v10187, %v10186
        %v10294 = vpack.c.b16 %v10189, %v10188
        %v10295 = vpack.c.b16 %v10191, %v10190
        %v10296 = vpack.c.b16 %v10193, %v10192
        %v10297 = vpack.c.b16 %v10195, %v10194
        %v10298 = vpack.c.b16 %v10197, %v10196
        %v10299 = vpack.c.b16 %v10199, %v10198
        %v10300 = vpack.c.b16 %v10201, %v10200
        %v10301 = vpack.c.b16 %v10203, %v10202
        %v10302 = vpack.c.b16 %v10205, %v10204
        %v10303 = vpack.c.b16 %v10207, %v10206
        %v10304 = vpack.c.b16 %v10209, %v10208
        %v10305 = vpack.c.b16 %v10211, %v10210
        %v10306 = vpack.c.b16 %v10213, %v10212
        %v10307 = vpack.c.b16 %v10215, %v10214
        %v10308 = vpack.c.b16 %v10217, %v10216
        %v10309 = vpack.c.b16 %v10219, %v10218
        %v10310 = vpack.c.b16 %v10221, %v10220
        %v10311 = vpack.c.b16 %v10223, %v10222
        %v10312 = vpack.c.b16 %v10225, %v10224
        %v10313 = vpack.c.b16 %v10227, %v10226
        %v10314 = vpack.c.b16 %v10229, %v10228
        %v10315 = vpack.c.b16 %v10231, %v10230
        %v10316 = vpack.c.b16 %v10233, %v10232
        %v10317 = vpack.c.b16 %v10235, %v10234
        %v10318 = vpack.c.b16 %v10237, %v10236
        %v10319 = vpack.c.b16 %v10239, %v10238
        %v10320 = vpack.c.b16 %v10241, %v10240
        %v10321 = vpack.c.b16 %v10243, %v10242
        %v10322 = vpack.c.b16 %v10245, %v10244
        %v10323 = vpack.c.b16 %v10247, %v10246
        %v10324 = vpack.c.b16 %v10249, %v10248
        %v10325 = vpack.c.b16 %v10251, %v10250
        %v10326 = vpack.c.b16 %v10253, %v10252
        %v10327 = vpack.c.b16 %v10255, %v10254
        %10400 = vmatpush.bf16.msra.mxu0 %v10263
        %10401 = vmatpush.bf16.msra.mxu0 %v10262
        %10402 = vmatpush.bf16.msra.mxu0 %v10261
        %10403 = vmatpush.bf16.msra.mxu0 %v10260
        %10404 = vmatpush.bf16.msra.mxu0 %v10259
        %10405 = vmatpush.bf16.msra.mxu0 %v10258
        %10406 = vmatpush.bf16.msra.mxu0 %v10257
        %10407 = vmatpush.bf16.msra.mxu0 %v10256
        %10408 = vmatmul.bf16.gmra.mxu0 %v6196
        %v10409 = vpop.f32.mrf.mxu0
        %v10410 = vadd.f32 %v9966, %v10409
        %v10411 = vpop.f32.mrf.mxu0
        %v10412 = vadd.f32 %v9966, %v10411
        %10413 = vmatmul.bf16.gmra.mxu0 %v6205
        %v10414 = vpop.f32.mrf.mxu0
        %v10415 = vadd.f32 %v9966, %v10414
        %v10416 = vpop.f32.mrf.mxu0
        %v10417 = vadd.f32 %v9966, %v10416
        %10418 = vmatmul.bf16.gmra.mxu0 %v6214
        %v10419 = vpop.f32.mrf.mxu0
        %v10420 = vadd.f32 %v9966, %v10419
        %v10421 = vpop.f32.mrf.mxu0
        %v10422 = vadd.f32 %v9966, %v10421
        %10423 = vmatmul.bf16.gmra.mxu0 %v6223
        %v10424 = vpop.f32.mrf.mxu0
        %v10425 = vadd.f32 %v9966, %v10424
        %v10426 = vpop.f32.mrf.mxu0
        %v10427 = vadd.f32 %v9966, %v10426
        %10428 = vmatmul.bf16.gmra.mxu0 %v6232
        %v10429 = vpop.f32.mrf.mxu0
        %v10430 = vadd.f32 %v9966, %v10429
        %v10431 = vpop.f32.mrf.mxu0
        %v10432 = vadd.f32 %v9966, %v10431
        %10433 = vmatmul.bf16.gmra.mxu0 %v6241
        %v10434 = vpop.f32.mrf.mxu0
        %v10435 = vadd.f32 %v9966, %v10434
        %v10436 = vpop.f32.mrf.mxu0
        %v10437 = vadd.f32 %v9966, %v10436
        %10438 = vmatmul.bf16.gmra.mxu0 %v6250
        %v10439 = vpop.f32.mrf.mxu0
        %v10440 = vadd.f32 %v9966, %v10439
        %v10441 = vpop.f32.mrf.mxu0
        %v10442 = vadd.f32 %v9966, %v10441
        %10443 = vmatmul.bf16.gmra.mxu0 %v6259
        %v10444 = vpop.f32.mrf.mxu0
        %v10445 = vadd.f32 %v9966, %v10444
        %v10446 = vpop.f32.mrf.mxu0
        %v10447 = vadd.f32 %v9966, %v10446
        %10448 = vmatmul.bf16.gmra.mxu0 %v6268
        %v10449 = vpop.f32.mrf.mxu0
        %v10450 = vadd.f32 %v9966, %v10449
        %v10451 = vpop.f32.mrf.mxu0
        %v10452 = vadd.f32 %v9966, %v10451
        %10453 = vmatmul.bf16.gmra.mxu0 %v6277
        %v10454 = vpop.f32.mrf.mxu0
        %v10455 = vadd.f32 %v9966, %v10454
        %v10456 = vpop.f32.mrf.mxu0
        %v10457 = vadd.f32 %v9966, %v10456
        %10458 = vmatmul.bf16.gmra.mxu0 %v6286
        %v10459 = vpop.f32.mrf.mxu0
        %v10460 = vadd.f32 %v9966, %v10459
        %v10461 = vpop.f32.mrf.mxu0
        %v10462 = vadd.f32 %v9966, %v10461
        %10463 = vmatmul.bf16.gmra.mxu0 %v6295
        %v10464 = vpop.f32.mrf.mxu0
        %v10465 = vadd.f32 %v9966, %v10464
        %v10466 = vpop.f32.mrf.mxu0
        %v10467 = vadd.f32 %v9966, %v10466
        %10468 = vmatmul.bf16.gmra.mxu0 %v6304
        %v10469 = vpop.f32.mrf.mxu0
        %v10470 = vadd.f32 %v9966, %v10469
        %v10471 = vpop.f32.mrf.mxu0
        %v10472 = vadd.f32 %v9966, %v10471
        %10473 = vmatmul.bf16.gmra.mxu0 %v6313
        %v10474 = vpop.f32.mrf.mxu0
        %v10475 = vadd.f32 %v9966, %v10474
        %v10476 = vpop.f32.mrf.mxu0
        %v10477 = vadd.f32 %v9966, %v10476
        %10478 = vmatmul.bf16.gmra.mxu0 %v6322
        %v10479 = vpop.f32.mrf.mxu0
        %v10480 = vadd.f32 %v9966, %v10479
        %v10481 = vpop.f32.mrf.mxu0
        %v10482 = vadd.f32 %v9966, %v10481
        %10483 = vmatmul.bf16.gmra.mxu0 %v6331
        %v10484 = vpop.f32.mrf.mxu0
        %v10485 = vadd.f32 %v9966, %v10484
        %v10486 = vpop.f32.mrf.mxu0
        %v10487 = vadd.f32 %v9966, %v10486
        %10488 = vmatmul.bf16.gmra.mxu0 %v6340
        %v10489 = vpop.f32.mrf.mxu0
        %v10490 = vadd.f32 %v9966, %v10489
        %v10491 = vpop.f32.mrf.mxu0
        %v10492 = vadd.f32 %v9966, %v10491
        %10493 = vmatmul.bf16.gmra.mxu0 %v6349
        %v10494 = vpop.f32.mrf.mxu0
        %v10495 = vadd.f32 %v9966, %v10494
        %v10496 = vpop.f32.mrf.mxu0
        %v10497 = vadd.f32 %v9966, %v10496
        %10498 = vmatmul.bf16.gmra.mxu0 %v6358
        %v10499 = vpop.f32.mrf.mxu0
        %v10500 = vadd.f32 %v9966, %v10499
        %v10501 = vpop.f32.mrf.mxu0
        %v10502 = vadd.f32 %v9966, %v10501
        %10503 = vmatmul.bf16.gmra.mxu0 %v6367
        %v10504 = vpop.f32.mrf.mxu0
        %v10505 = vadd.f32 %v9966, %v10504
        %v10506 = vpop.f32.mrf.mxu0
        %v10507 = vadd.f32 %v9966, %v10506
        %10508 = vmatmul.bf16.gmra.mxu0 %v6376
        %v10509 = vpop.f32.mrf.mxu0
        %v10510 = vadd.f32 %v9966, %v10509
        %v10511 = vpop.f32.mrf.mxu0
        %v10512 = vadd.f32 %v9966, %v10511
        %10513 = vmatmul.bf16.gmra.mxu0 %v6385
        %v10514 = vpop.f32.mrf.mxu0
        %v10515 = vadd.f32 %v9966, %v10514
        %v10516 = vpop.f32.mrf.mxu0
        %v10517 = vadd.f32 %v9966, %v10516
        %10518 = vmatmul.bf16.gmra.mxu0 %v6394
        %v10519 = vpop.f32.mrf.mxu0
        %v10520 = vadd.f32 %v9966, %v10519
        %v10521 = vpop.f32.mrf.mxu0
        %v10522 = vadd.f32 %v9966, %v10521
        %10523 = vmatmul.bf16.gmra.mxu0 %v6403
        %v10524 = vpop.f32.mrf.mxu0
        %v10525 = vadd.f32 %v9966, %v10524
        %v10526 = vpop.f32.mrf.mxu0
        %v10527 = vadd.f32 %v9966, %v10526
        %10528 = vmatmul.bf16.gmra.mxu0 %v6412
        %v10529 = vpop.f32.mrf.mxu0
        %v10530 = vadd.f32 %v9966, %v10529
        %v10531 = vpop.f32.mrf.mxu0
        %v10532 = vadd.f32 %v9966, %v10531
        %10533 = vmatmul.bf16.gmra.mxu0 %v6421
        %v10534 = vpop.f32.mrf.mxu0
        %v10535 = vadd.f32 %v9966, %v10534
        %v10536 = vpop.f32.mrf.mxu0
        %v10537 = vadd.f32 %v9966, %v10536
        %10538 = vmatmul.bf16.gmra.mxu0 %v6430
        %v10539 = vpop.f32.mrf.mxu0
        %v10540 = vadd.f32 %v9966, %v10539
        %v10541 = vpop.f32.mrf.mxu0
        %v10542 = vadd.f32 %v9966, %v10541
        %10543 = vmatmul.bf16.gmra.mxu0 %v6439
        %v10544 = vpop.f32.mrf.mxu0
        %v10545 = vadd.f32 %v9966, %v10544
        %v10546 = vpop.f32.mrf.mxu0
        %v10547 = vadd.f32 %v9966, %v10546
        %10548 = vmatmul.bf16.gmra.mxu0 %v6448
        %v10549 = vpop.f32.mrf.mxu0
        %v10550 = vadd.f32 %v9966, %v10549
        %v10551 = vpop.f32.mrf.mxu0
        %v10552 = vadd.f32 %v9966, %v10551
        %10553 = vmatmul.bf16.gmra.mxu0 %v6457
        %v10554 = vpop.f32.mrf.mxu0
        %v10555 = vadd.f32 %v9966, %v10554
        %v10556 = vpop.f32.mrf.mxu0
        %v10557 = vadd.f32 %v9966, %v10556
        %10558 = vmatmul.bf16.gmra.mxu0 %v6466
        %v10559 = vpop.f32.mrf.mxu0
        %v10560 = vadd.f32 %v9966, %v10559
        %v10561 = vpop.f32.mrf.mxu0
        %v10562 = vadd.f32 %v9966, %v10561
        %10563 = vmatmul.bf16.gmra.mxu0 %v6475
        %v10564 = vpop.f32.mrf.mxu0
        %v10565 = vadd.f32 %v9966, %v10564
        %v10566 = vpop.f32.mrf.mxu0
        %v10567 = vadd.f32 %v9966, %v10566
        %10568 = vmatmul.bf16.gmra.mxu0 %v6484
        %v10569 = vpop.f32.mrf.mxu0
        %v10570 = vadd.f32 %v9966, %v10569
        %v10571 = vpop.f32.mrf.mxu0
        %v10572 = vadd.f32 %v9966, %v10571
        %10573 = vmatmul.bf16.gmra.mxu0 %v6493
        %v10574 = vpop.f32.mrf.mxu0
        %v10575 = vadd.f32 %v9966, %v10574
        %v10576 = vpop.f32.mrf.mxu0
        %v10577 = vadd.f32 %v9966, %v10576
        %10578 = vmatmul.bf16.gmra.mxu0 %v6502
        %v10579 = vpop.f32.mrf.mxu0
        %v10580 = vadd.f32 %v9966, %v10579
        %v10581 = vpop.f32.mrf.mxu0
        %v10582 = vadd.f32 %v9966, %v10581
        %10583 = vmatmul.bf16.gmra.mxu0 %v6511
        %v10584 = vpop.f32.mrf.mxu0
        %v10585 = vadd.f32 %v9966, %v10584
        %v10586 = vpop.f32.mrf.mxu0
        %v10587 = vadd.f32 %v9966, %v10586
        %10588 = vdwg.mxu0
        %10589 = vmatpush.bf16.msra.mxu0 %v10271
        %10590 = vmatpush.bf16.msra.mxu0 %v10270
        %10591 = vmatpush.bf16.msra.mxu0 %v10269
        %10592 = vmatpush.bf16.msra.mxu0 %v10268
        %10593 = vmatpush.bf16.msra.mxu0 %v10267
        %10594 = vmatpush.bf16.msra.mxu0 %v10266
        %10595 = vmatpush.bf16.msra.mxu0 %v10265
        %10596 = vmatpush.bf16.msra.mxu0 %v10264
        %10597 = vmatmul.bf16.gmra.mxu0 %v6571
        %v10598 = vpop.f32.mrf.mxu0
        %v10599 = vadd.f32 %v10410, %v10598
        %v10600 = vpop.f32.mrf.mxu0
        %v10601 = vadd.f32 %v10412, %v10600
        %10602 = vmatmul.bf16.gmra.mxu0 %v6588
        %v10603 = vpop.f32.mrf.mxu0
        %v10604 = vadd.f32 %v10415, %v10603
        %v10605 = vpop.f32.mrf.mxu0
        %v10606 = vadd.f32 %v10417, %v10605
        %10607 = vmatmul.bf16.gmra.mxu0 %v6605
        %v10608 = vpop.f32.mrf.mxu0
        %v10609 = vadd.f32 %v10420, %v10608
        %v10610 = vpop.f32.mrf.mxu0
        %v10611 = vadd.f32 %v10422, %v10610
        %10612 = vmatmul.bf16.gmra.mxu0 %v6622
        %v10613 = vpop.f32.mrf.mxu0
        %v10614 = vadd.f32 %v10425, %v10613
        %v10615 = vpop.f32.mrf.mxu0
        %v10616 = vadd.f32 %v10427, %v10615
        %10617 = vmatmul.bf16.gmra.mxu0 %v6639
        %v10618 = vpop.f32.mrf.mxu0
        %v10619 = vadd.f32 %v10430, %v10618
        %v10620 = vpop.f32.mrf.mxu0
        %v10621 = vadd.f32 %v10432, %v10620
        %10622 = vmatmul.bf16.gmra.mxu0 %v6656
        %v10623 = vpop.f32.mrf.mxu0
        %v10624 = vadd.f32 %v10435, %v10623
        %v10625 = vpop.f32.mrf.mxu0
        %v10626 = vadd.f32 %v10437, %v10625
        %10627 = vmatmul.bf16.gmra.mxu0 %v6673
        %v10628 = vpop.f32.mrf.mxu0
        %v10629 = vadd.f32 %v10440, %v10628
        %v10630 = vpop.f32.mrf.mxu0
        %v10631 = vadd.f32 %v10442, %v10630
        %10632 = vmatmul.bf16.gmra.mxu0 %v6690
        %v10633 = vpop.f32.mrf.mxu0
        %v10634 = vadd.f32 %v10445, %v10633
        %v10635 = vpop.f32.mrf.mxu0
        %v10636 = vadd.f32 %v10447, %v10635
        %10637 = vmatmul.bf16.gmra.mxu0 %v6707
        %v10638 = vpop.f32.mrf.mxu0
        %v10639 = vadd.f32 %v10450, %v10638
        %v10640 = vpop.f32.mrf.mxu0
        %v10641 = vadd.f32 %v10452, %v10640
        %10642 = vmatmul.bf16.gmra.mxu0 %v6724
        %v10643 = vpop.f32.mrf.mxu0
        %v10644 = vadd.f32 %v10455, %v10643
        %v10645 = vpop.f32.mrf.mxu0
        %v10646 = vadd.f32 %v10457, %v10645
        %10647 = vmatmul.bf16.gmra.mxu0 %v6741
        %v10648 = vpop.f32.mrf.mxu0
        %v10649 = vadd.f32 %v10460, %v10648
        %v10650 = vpop.f32.mrf.mxu0
        %v10651 = vadd.f32 %v10462, %v10650
        %10652 = vmatmul.bf16.gmra.mxu0 %v6758
        %v10653 = vpop.f32.mrf.mxu0
        %v10654 = vadd.f32 %v10465, %v10653
        %v10655 = vpop.f32.mrf.mxu0
        %v10656 = vadd.f32 %v10467, %v10655
        %10657 = vmatmul.bf16.gmra.mxu0 %v6775
        %v10658 = vpop.f32.mrf.mxu0
        %v10659 = vadd.f32 %v10470, %v10658
        %v10660 = vpop.f32.mrf.mxu0
        %v10661 = vadd.f32 %v10472, %v10660
        %10662 = vmatmul.bf16.gmra.mxu0 %v6792
        %v10663 = vpop.f32.mrf.mxu0
        %v10664 = vadd.f32 %v10475, %v10663
        %v10665 = vpop.f32.mrf.mxu0
        %v10666 = vadd.f32 %v10477, %v10665
        %10667 = vmatmul.bf16.gmra.mxu0 %v6809
        %v10668 = vpop.f32.mrf.mxu0
        %v10669 = vadd.f32 %v10480, %v10668
        %v10670 = vpop.f32.mrf.mxu0
        %v10671 = vadd.f32 %v10482, %v10670
        %10672 = vmatmul.bf16.gmra.mxu0 %v6826
        %v10673 = vpop.f32.mrf.mxu0
        %v10674 = vadd.f32 %v10485, %v10673
        %v10675 = vpop.f32.mrf.mxu0
        %v10676 = vadd.f32 %v10487, %v10675
        %10677 = vmatmul.bf16.gmra.mxu0 %v6843
        %v10678 = vpop.f32.mrf.mxu0
        %v10679 = vadd.f32 %v10490, %v10678
        %v10680 = vpop.f32.mrf.mxu0
        %v10681 = vadd.f32 %v10492, %v10680
        %10682 = vmatmul.bf16.gmra.mxu0 %v6860
        %v10683 = vpop.f32.mrf.mxu0
        %v10684 = vadd.f32 %v10495, %v10683
        %v10685 = vpop.f32.mrf.mxu0
        %v10686 = vadd.f32 %v10497, %v10685
        %10687 = vmatmul.bf16.gmra.mxu0 %v6877
        %v10688 = vpop.f32.mrf.mxu0
        %v10689 = vadd.f32 %v10500, %v10688
        %v10690 = vpop.f32.mrf.mxu0
        %v10691 = vadd.f32 %v10502, %v10690
        %10692 = vmatmul.bf16.gmra.mxu0 %v6894
        %v10693 = vpop.f32.mrf.mxu0
        %v10694 = vadd.f32 %v10505, %v10693
        %v10695 = vpop.f32.mrf.mxu0
        %v10696 = vadd.f32 %v10507, %v10695
        %10697 = vmatmul.bf16.gmra.mxu0 %v6911
        %v10698 = vpop.f32.mrf.mxu0
        %v10699 = vadd.f32 %v10510, %v10698
        %v10700 = vpop.f32.mrf.mxu0
        %v10701 = vadd.f32 %v10512, %v10700
        %10702 = vmatmul.bf16.gmra.mxu0 %v6928
        %v10703 = vpop.f32.mrf.mxu0
        %v10704 = vadd.f32 %v10515, %v10703
        %v10705 = vpop.f32.mrf.mxu0
        %v10706 = vadd.f32 %v10517, %v10705
        %10707 = vmatmul.bf16.gmra.mxu0 %v6945
        %v10708 = vpop.f32.mrf.mxu0
        %v10709 = vadd.f32 %v10520, %v10708
        %v10710 = vpop.f32.mrf.mxu0
        %v10711 = vadd.f32 %v10522, %v10710
        %10712 = vmatmul.bf16.gmra.mxu0 %v6962
        %v10713 = vpop.f32.mrf.mxu0
        %v10714 = vadd.f32 %v10525, %v10713
        %v10715 = vpop.f32.mrf.mxu0
        %v10716 = vadd.f32 %v10527, %v10715
        %10717 = vmatmul.bf16.gmra.mxu0 %v6979
        %v10718 = vpop.f32.mrf.mxu0
        %v10719 = vadd.f32 %v10530, %v10718
        %v10720 = vpop.f32.mrf.mxu0
        %v10721 = vadd.f32 %v10532, %v10720
        %10722 = vmatmul.bf16.gmra.mxu0 %v6996
        %v10723 = vpop.f32.mrf.mxu0
        %v10724 = vadd.f32 %v10535, %v10723
        %v10725 = vpop.f32.mrf.mxu0
        %v10726 = vadd.f32 %v10537, %v10725
        %10727 = vmatmul.bf16.gmra.mxu0 %v7013
        %v10728 = vpop.f32.mrf.mxu0
        %v10729 = vadd.f32 %v10540, %v10728
        %v10730 = vpop.f32.mrf.mxu0
        %v10731 = vadd.f32 %v10542, %v10730
        %10732 = vmatmul.bf16.gmra.mxu0 %v7030
        %v10733 = vpop.f32.mrf.mxu0
        %v10734 = vadd.f32 %v10545, %v10733
        %v10735 = vpop.f32.mrf.mxu0
        %v10736 = vadd.f32 %v10547, %v10735
        %10737 = vmatmul.bf16.gmra.mxu0 %v7047
        %v10738 = vpop.f32.mrf.mxu0
        %v10739 = vadd.f32 %v10550, %v10738
        %v10740 = vpop.f32.mrf.mxu0
        %v10741 = vadd.f32 %v10552, %v10740
        %10742 = vmatmul.bf16.gmra.mxu0 %v7064
        %v10743 = vpop.f32.mrf.mxu0
        %v10744 = vadd.f32 %v10555, %v10743
        %v10745 = vpop.f32.mrf.mxu0
        %v10746 = vadd.f32 %v10557, %v10745
        %10747 = vmatmul.bf16.gmra.mxu0 %v7081
        %v10748 = vpop.f32.mrf.mxu0
        %v10749 = vadd.f32 %v10560, %v10748
        %v10750 = vpop.f32.mrf.mxu0
        %v10751 = vadd.f32 %v10562, %v10750
        %10752 = vmatmul.bf16.gmra.mxu0 %v7098
        %v10753 = vpop.f32.mrf.mxu0
        %v10754 = vadd.f32 %v10565, %v10753
        %v10755 = vpop.f32.mrf.mxu0
        %v10756 = vadd.f32 %v10567, %v10755
        %10757 = vmatmul.bf16.gmra.mxu0 %v7115
        %v10758 = vpop.f32.mrf.mxu0
        %v10759 = vadd.f32 %v10570, %v10758
        %v10760 = vpop.f32.mrf.mxu0
        %v10761 = vadd.f32 %v10572, %v10760
        %10762 = vmatmul.bf16.gmra.mxu0 %v7132
        %v10763 = vpop.f32.mrf.mxu0
        %v10764 = vadd.f32 %v10575, %v10763
        %v10765 = vpop.f32.mrf.mxu0
        %v10766 = vadd.f32 %v10577, %v10765
        %10767 = vmatmul.bf16.gmra.mxu0 %v7149
        %v10768 = vpop.f32.mrf.mxu0
        %v10769 = vadd.f32 %v10580, %v10768
        %v10770 = vpop.f32.mrf.mxu0
        %v10771 = vadd.f32 %v10582, %v10770
        %10772 = vmatmul.bf16.gmra.mxu0 %v7166
        %v10773 = vpop.f32.mrf.mxu0
        %v10774 = vadd.f32 %v10585, %v10773
        %v10775 = vpop.f32.mrf.mxu0
        %v10776 = vadd.f32 %v10587, %v10775
        %10777 = vdwg.mxu0
        %10778 = vmatpush.bf16.msra.mxu0 %v10279
        %10779 = vmatpush.bf16.msra.mxu0 %v10278
        %10780 = vmatpush.bf16.msra.mxu0 %v10277
        %10781 = vmatpush.bf16.msra.mxu0 %v10276
        %10782 = vmatpush.bf16.msra.mxu0 %v10275
        %10783 = vmatpush.bf16.msra.mxu0 %v10274
        %10784 = vmatpush.bf16.msra.mxu0 %v10273
        %10785 = vmatpush.bf16.msra.mxu0 %v10272
        %10786 = vmatmul.bf16.gmra.mxu0 %v7218
        %v10787 = vpop.f32.mrf.mxu0
        %v10788 = vadd.f32 %v10599, %v10787
        %v10789 = vpop.f32.mrf.mxu0
        %v10790 = vadd.f32 %v10601, %v10789
        %10791 = vmatmul.bf16.gmra.mxu0 %v7227
        %v10792 = vpop.f32.mrf.mxu0
        %v10793 = vadd.f32 %v10604, %v10792
        %v10794 = vpop.f32.mrf.mxu0
        %v10795 = vadd.f32 %v10606, %v10794
        %10796 = vmatmul.bf16.gmra.mxu0 %v7236
        %v10797 = vpop.f32.mrf.mxu0
        %v10798 = vadd.f32 %v10609, %v10797
        %v10799 = vpop.f32.mrf.mxu0
        %v10800 = vadd.f32 %v10611, %v10799
        %10801 = vmatmul.bf16.gmra.mxu0 %v7245
        %v10802 = vpop.f32.mrf.mxu0
        %v10803 = vadd.f32 %v10614, %v10802
        %v10804 = vpop.f32.mrf.mxu0
        %v10805 = vadd.f32 %v10616, %v10804
        %10806 = vmatmul.bf16.gmra.mxu0 %v7254
        %v10807 = vpop.f32.mrf.mxu0
        %v10808 = vadd.f32 %v10619, %v10807
        %v10809 = vpop.f32.mrf.mxu0
        %v10810 = vadd.f32 %v10621, %v10809
        %10811 = vmatmul.bf16.gmra.mxu0 %v7263
        %v10812 = vpop.f32.mrf.mxu0
        %v10813 = vadd.f32 %v10624, %v10812
        %v10814 = vpop.f32.mrf.mxu0
        %v10815 = vadd.f32 %v10626, %v10814
        %10816 = vmatmul.bf16.gmra.mxu0 %v7272
        %v10817 = vpop.f32.mrf.mxu0
        %v10818 = vadd.f32 %v10629, %v10817
        %v10819 = vpop.f32.mrf.mxu0
        %v10820 = vadd.f32 %v10631, %v10819
        %10821 = vmatmul.bf16.gmra.mxu0 %v7281
        %v10822 = vpop.f32.mrf.mxu0
        %v10823 = vadd.f32 %v10634, %v10822
        %v10824 = vpop.f32.mrf.mxu0
        %v10825 = vadd.f32 %v10636, %v10824
        %10826 = vmatmul.bf16.gmra.mxu0 %v7290
        %v10827 = vpop.f32.mrf.mxu0
        %v10828 = vadd.f32 %v10639, %v10827
        %v10829 = vpop.f32.mrf.mxu0
        %v10830 = vadd.f32 %v10641, %v10829
        %10831 = vmatmul.bf16.gmra.mxu0 %v7299
        %v10832 = vpop.f32.mrf.mxu0
        %v10833 = vadd.f32 %v10644, %v10832
        %v10834 = vpop.f32.mrf.mxu0
        %v10835 = vadd.f32 %v10646, %v10834
        %10836 = vmatmul.bf16.gmra.mxu0 %v7308
        %v10837 = vpop.f32.mrf.mxu0
        %v10838 = vadd.f32 %v10649, %v10837
        %v10839 = vpop.f32.mrf.mxu0
        %v10840 = vadd.f32 %v10651, %v10839
        %10841 = vmatmul.bf16.gmra.mxu0 %v7317
        %v10842 = vpop.f32.mrf.mxu0
        %v10843 = vadd.f32 %v10654, %v10842
        %v10844 = vpop.f32.mrf.mxu0
        %v10845 = vadd.f32 %v10656, %v10844
        %10846 = vmatmul.bf16.gmra.mxu0 %v7326
        %v10847 = vpop.f32.mrf.mxu0
        %v10848 = vadd.f32 %v10659, %v10847
        %v10849 = vpop.f32.mrf.mxu0
        %v10850 = vadd.f32 %v10661, %v10849
        %10851 = vmatmul.bf16.gmra.mxu0 %v7335
        %v10852 = vpop.f32.mrf.mxu0
        %v10853 = vadd.f32 %v10664, %v10852
        %v10854 = vpop.f32.mrf.mxu0
        %v10855 = vadd.f32 %v10666, %v10854
        %10856 = vmatmul.bf16.gmra.mxu0 %v7344
        %v10857 = vpop.f32.mrf.mxu0
        %v10858 = vadd.f32 %v10669, %v10857
        %v10859 = vpop.f32.mrf.mxu0
        %v10860 = vadd.f32 %v10671, %v10859
        %10861 = vmatmul.bf16.gmra.mxu0 %v7353
        %v10862 = vpop.f32.mrf.mxu0
        %v10863 = vadd.f32 %v10674, %v10862
        %v10864 = vpop.f32.mrf.mxu0
        %v10865 = vadd.f32 %v10676, %v10864
        %10866 = vmatmul.bf16.gmra.mxu0 %v7362
        %v10867 = vpop.f32.mrf.mxu0
        %v10868 = vadd.f32 %v10679, %v10867
        %v10869 = vpop.f32.mrf.mxu0
        %v10870 = vadd.f32 %v10681, %v10869
        %10871 = vmatmul.bf16.gmra.mxu0 %v7371
        %v10872 = vpop.f32.mrf.mxu0
        %v10873 = vadd.f32 %v10684, %v10872
        %v10874 = vpop.f32.mrf.mxu0
        %v10875 = vadd.f32 %v10686, %v10874
        %10876 = vmatmul.bf16.gmra.mxu0 %v7380
        %v10877 = vpop.f32.mrf.mxu0
        %v10878 = vadd.f32 %v10689, %v10877
        %v10879 = vpop.f32.mrf.mxu0
        %v10880 = vadd.f32 %v10691, %v10879
        %10881 = vmatmul.bf16.gmra.mxu0 %v7389
        %v10882 = vpop.f32.mrf.mxu0
        %v10883 = vadd.f32 %v10694, %v10882
        %v10884 = vpop.f32.mrf.mxu0
        %v10885 = vadd.f32 %v10696, %v10884
        %10886 = vmatmul.bf16.gmra.mxu0 %v7398
        %v10887 = vpop.f32.mrf.mxu0
        %v10888 = vadd.f32 %v10699, %v10887
        %v10889 = vpop.f32.mrf.mxu0
        %v10890 = vadd.f32 %v10701, %v10889
        %10891 = vmatmul.bf16.gmra.mxu0 %v7407
        %v10892 = vpop.f32.mrf.mxu0
        %v10893 = vadd.f32 %v10704, %v10892
        %v10894 = vpop.f32.mrf.mxu0
        %v10895 = vadd.f32 %v10706, %v10894
        %10896 = vmatmul.bf16.gmra.mxu0 %v7416
        %v10897 = vpop.f32.mrf.mxu0
        %v10898 = vadd.f32 %v10709, %v10897
        %v10899 = vpop.f32.mrf.mxu0
        %v10900 = vadd.f32 %v10711, %v10899
        %10901 = vmatmul.bf16.gmra.mxu0 %v7425
        %v10902 = vpop.f32.mrf.mxu0
        %v10903 = vadd.f32 %v10714, %v10902
        %v10904 = vpop.f32.mrf.mxu0
        %v10905 = vadd.f32 %v10716, %v10904
        %10906 = vmatmul.bf16.gmra.mxu0 %v7434
        %v10907 = vpop.f32.mrf.mxu0
        %v10908 = vadd.f32 %v10719, %v10907
        %v10909 = vpop.f32.mrf.mxu0
        %v10910 = vadd.f32 %v10721, %v10909
        %10911 = vmatmul.bf16.gmra.mxu0 %v7443
        %v10912 = vpop.f32.mrf.mxu0
        %v10913 = vadd.f32 %v10724, %v10912
        %v10914 = vpop.f32.mrf.mxu0
        %v10915 = vadd.f32 %v10726, %v10914
        %10916 = vmatmul.bf16.gmra.mxu0 %v7452
        %v10917 = vpop.f32.mrf.mxu0
        %v10918 = vadd.f32 %v10729, %v10917
        %v10919 = vpop.f32.mrf.mxu0
        %v10920 = vadd.f32 %v10731, %v10919
        %10921 = vmatmul.bf16.gmra.mxu0 %v7461
        %v10922 = vpop.f32.mrf.mxu0
        %v10923 = vadd.f32 %v10734, %v10922
        %v10924 = vpop.f32.mrf.mxu0
        %v10925 = vadd.f32 %v10736, %v10924
        %10926 = vmatmul.bf16.gmra.mxu0 %v7470
        %v10927 = vpop.f32.mrf.mxu0
        %v10928 = vadd.f32 %v10739, %v10927
        %v10929 = vpop.f32.mrf.mxu0
        %v10930 = vadd.f32 %v10741, %v10929
        %10931 = vmatmul.bf16.gmra.mxu0 %v7479
        %v10932 = vpop.f32.mrf.mxu0
        %v10933 = vadd.f32 %v10744, %v10932
        %v10934 = vpop.f32.mrf.mxu0
        %v10935 = vadd.f32 %v10746, %v10934
        %10936 = vmatmul.bf16.gmra.mxu0 %v7488
        %v10937 = vpop.f32.mrf.mxu0
        %v10938 = vadd.f32 %v10749, %v10937
        %v10939 = vpop.f32.mrf.mxu0
        %v10940 = vadd.f32 %v10751, %v10939
        %10941 = vmatmul.bf16.gmra.mxu0 %v7497
        %v10942 = vpop.f32.mrf.mxu0
        %v10943 = vadd.f32 %v10754, %v10942
        %v10944 = vpop.f32.mrf.mxu0
        %v10945 = vadd.f32 %v10756, %v10944
        %10946 = vmatmul.bf16.gmra.mxu0 %v7506
        %v10947 = vpop.f32.mrf.mxu0
        %v10948 = vadd.f32 %v10759, %v10947
        %v10949 = vpop.f32.mrf.mxu0
        %v10950 = vadd.f32 %v10761, %v10949
        %10951 = vmatmul.bf16.gmra.mxu0 %v7515
        %v10952 = vpop.f32.mrf.mxu0
        %v10953 = vadd.f32 %v10764, %v10952
        %v10954 = vpop.f32.mrf.mxu0
        %v10955 = vadd.f32 %v10766, %v10954
        %10956 = vmatmul.bf16.gmra.mxu0 %v7524
        %v10957 = vpop.f32.mrf.mxu0
        %v10958 = vadd.f32 %v10769, %v10957
        %v10959 = vpop.f32.mrf.mxu0
        %v10960 = vadd.f32 %v10771, %v10959
        %10961 = vmatmul.bf16.gmra.mxu0 %v7533
        %v10962 = vpop.f32.mrf.mxu0
        %v10963 = vadd.f32 %v10774, %v10962
        %v10964 = vpop.f32.mrf.mxu0
        %v10965 = vadd.f32 %v10776, %v10964
        %10966 = vdwg.mxu0
        %10967 = vmatpush.bf16.msra.mxu0 %v10287
        %10968 = vmatpush.bf16.msra.mxu0 %v10286
        %10969 = vmatpush.bf16.msra.mxu0 %v10285
        %10970 = vmatpush.bf16.msra.mxu0 %v10284
        %10971 = vmatpush.bf16.msra.mxu0 %v10283
        %10972 = vmatpush.bf16.msra.mxu0 %v10282
        %10973 = vmatpush.bf16.msra.mxu0 %v10281
        %10974 = vmatpush.bf16.msra.mxu0 %v10280
        %10975 = vmatmul.bf16.gmra.mxu0 %v7585
        %v10976 = vpop.f32.mrf.mxu0
        %v10977 = vadd.f32 %v10788, %v10976
        %v10978 = vpop.f32.mrf.mxu0
        %v10979 = vadd.f32 %v10790, %v10978
        %10980 = vmatmul.bf16.gmra.mxu0 %v7594
        %v10981 = vpop.f32.mrf.mxu0
        %v10982 = vadd.f32 %v10793, %v10981
        %v10983 = vpop.f32.mrf.mxu0
        %v10984 = vadd.f32 %v10795, %v10983
        %10985 = vmatmul.bf16.gmra.mxu0 %v7603
        %v10986 = vpop.f32.mrf.mxu0
        %v10987 = vadd.f32 %v10798, %v10986
        %v10988 = vpop.f32.mrf.mxu0
        %v10989 = vadd.f32 %v10800, %v10988
        %10990 = vmatmul.bf16.gmra.mxu0 %v7612
        %v10991 = vpop.f32.mrf.mxu0
        %v10992 = vadd.f32 %v10803, %v10991
        %v10993 = vpop.f32.mrf.mxu0
        %v10994 = vadd.f32 %v10805, %v10993
        %10995 = vmatmul.bf16.gmra.mxu0 %v7621
        %v10996 = vpop.f32.mrf.mxu0
        %v10997 = vadd.f32 %v10808, %v10996
        %v10998 = vpop.f32.mrf.mxu0
        %v10999 = vadd.f32 %v10810, %v10998
        %11000 = vmatmul.bf16.gmra.mxu0 %v7630
        %v11001 = vpop.f32.mrf.mxu0
        %v11002 = vadd.f32 %v10813, %v11001
        %v11003 = vpop.f32.mrf.mxu0
        %v11004 = vadd.f32 %v10815, %v11003
        %11005 = vmatmul.bf16.gmra.mxu0 %v7639
        %v11006 = vpop.f32.mrf.mxu0
        %v11007 = vadd.f32 %v10818, %v11006
        %v11008 = vpop.f32.mrf.mxu0
        %v11009 = vadd.f32 %v10820, %v11008
        %11010 = vmatmul.bf16.gmra.mxu0 %v7648
        %v11011 = vpop.f32.mrf.mxu0
        %v11012 = vadd.f32 %v10823, %v11011
        %v11013 = vpop.f32.mrf.mxu0
        %v11014 = vadd.f32 %v10825, %v11013
        %11015 = vmatmul.bf16.gmra.mxu0 %v7657
        %v11016 = vpop.f32.mrf.mxu0
        %v11017 = vadd.f32 %v10828, %v11016
        %v11018 = vpop.f32.mrf.mxu0
        %v11019 = vadd.f32 %v10830, %v11018
        %11020 = vmatmul.bf16.gmra.mxu0 %v7666
        %v11021 = vpop.f32.mrf.mxu0
        %v11022 = vadd.f32 %v10833, %v11021
        %v11023 = vpop.f32.mrf.mxu0
        %v11024 = vadd.f32 %v10835, %v11023
        %11025 = vmatmul.bf16.gmra.mxu0 %v7675
        %v11026 = vpop.f32.mrf.mxu0
        %v11027 = vadd.f32 %v10838, %v11026
        %v11028 = vpop.f32.mrf.mxu0
        %v11029 = vadd.f32 %v10840, %v11028
        %11030 = vmatmul.bf16.gmra.mxu0 %v7684
        %v11031 = vpop.f32.mrf.mxu0
        %v11032 = vadd.f32 %v10843, %v11031
        %v11033 = vpop.f32.mrf.mxu0
        %v11034 = vadd.f32 %v10845, %v11033
        %11035 = vmatmul.bf16.gmra.mxu0 %v7693
        %v11036 = vpop.f32.mrf.mxu0
        %v11037 = vadd.f32 %v10848, %v11036
        %v11038 = vpop.f32.mrf.mxu0
        %v11039 = vadd.f32 %v10850, %v11038
        %11040 = vmatmul.bf16.gmra.mxu0 %v7702
        %v11041 = vpop.f32.mrf.mxu0
        %v11042 = vadd.f32 %v10853, %v11041
        %v11043 = vpop.f32.mrf.mxu0
        %v11044 = vadd.f32 %v10855, %v11043
        %11045 = vmatmul.bf16.gmra.mxu0 %v7711
        %v11046 = vpop.f32.mrf.mxu0
        %v11047 = vadd.f32 %v10858, %v11046
        %v11048 = vpop.f32.mrf.mxu0
        %v11049 = vadd.f32 %v10860, %v11048
        %11050 = vmatmul.bf16.gmra.mxu0 %v7720
        %v11051 = vpop.f32.mrf.mxu0
        %v11052 = vadd.f32 %v10863, %v11051
        %v11053 = vpop.f32.mrf.mxu0
        %v11054 = vadd.f32 %v10865, %v11053
        %11055 = vmatmul.bf16.gmra.mxu0 %v7729
        %v11056 = vpop.f32.mrf.mxu0
        %v11057 = vadd.f32 %v10868, %v11056
        %v11058 = vpop.f32.mrf.mxu0
        %v11059 = vadd.f32 %v10870, %v11058
        %11060 = vmatmul.bf16.gmra.mxu0 %v7738
        %v11061 = vpop.f32.mrf.mxu0
        %v11062 = vadd.f32 %v10873, %v11061
        %v11063 = vpop.f32.mrf.mxu0
        %v11064 = vadd.f32 %v10875, %v11063
        %11065 = vmatmul.bf16.gmra.mxu0 %v7747
        %v11066 = vpop.f32.mrf.mxu0
        %v11067 = vadd.f32 %v10878, %v11066
        %v11068 = vpop.f32.mrf.mxu0
        %v11069 = vadd.f32 %v10880, %v11068
        %11070 = vmatmul.bf16.gmra.mxu0 %v7756
        %v11071 = vpop.f32.mrf.mxu0
        %v11072 = vadd.f32 %v10883, %v11071
        %v11073 = vpop.f32.mrf.mxu0
        %v11074 = vadd.f32 %v10885, %v11073
        %11075 = vmatmul.bf16.gmra.mxu0 %v7765
        %v11076 = vpop.f32.mrf.mxu0
        %v11077 = vadd.f32 %v10888, %v11076
        %v11078 = vpop.f32.mrf.mxu0
        %v11079 = vadd.f32 %v10890, %v11078
        %11080 = vmatmul.bf16.gmra.mxu0 %v7774
        %v11081 = vpop.f32.mrf.mxu0
        %v11082 = vadd.f32 %v10893, %v11081
        %v11083 = vpop.f32.mrf.mxu0
        %v11084 = vadd.f32 %v10895, %v11083
        %11085 = vmatmul.bf16.gmra.mxu0 %v7783
        %v11086 = vpop.f32.mrf.mxu0
        %v11087 = vadd.f32 %v10898, %v11086
        %v11088 = vpop.f32.mrf.mxu0
        %v11089 = vadd.f32 %v10900, %v11088
        %11090 = vmatmul.bf16.gmra.mxu0 %v7792
        %v11091 = vpop.f32.mrf.mxu0
        %v11092 = vadd.f32 %v10903, %v11091
        %v11093 = vpop.f32.mrf.mxu0
        %v11094 = vadd.f32 %v10905, %v11093
        %11095 = vmatmul.bf16.gmra.mxu0 %v7801
        %v11096 = vpop.f32.mrf.mxu0
        %v11097 = vadd.f32 %v10908, %v11096
        %v11098 = vpop.f32.mrf.mxu0
        %v11099 = vadd.f32 %v10910, %v11098
        %11100 = vmatmul.bf16.gmra.mxu0 %v7810
        %v11101 = vpop.f32.mrf.mxu0
        %v11102 = vadd.f32 %v10913, %v11101
        %v11103 = vpop.f32.mrf.mxu0
        %v11104 = vadd.f32 %v10915, %v11103
        %11105 = vmatmul.bf16.gmra.mxu0 %v7819
        %v11106 = vpop.f32.mrf.mxu0
        %v11107 = vadd.f32 %v10918, %v11106
        %v11108 = vpop.f32.mrf.mxu0
        %v11109 = vadd.f32 %v10920, %v11108
        %11110 = vmatmul.bf16.gmra.mxu0 %v7828
        %v11111 = vpop.f32.mrf.mxu0
        %v11112 = vadd.f32 %v10923, %v11111
        %v11113 = vpop.f32.mrf.mxu0
        %v11114 = vadd.f32 %v10925, %v11113
        %11115 = vmatmul.bf16.gmra.mxu0 %v7837
        %v11116 = vpop.f32.mrf.mxu0
        %v11117 = vadd.f32 %v10928, %v11116
        %v11118 = vpop.f32.mrf.mxu0
        %v11119 = vadd.f32 %v10930, %v11118
        %11120 = vmatmul.bf16.gmra.mxu0 %v7846
        %v11121 = vpop.f32.mrf.mxu0
        %v11122 = vadd.f32 %v10933, %v11121
        %v11123 = vpop.f32.mrf.mxu0
        %v11124 = vadd.f32 %v10935, %v11123
        %11125 = vmatmul.bf16.gmra.mxu0 %v7855
        %v11126 = vpop.f32.mrf.mxu0
        %v11127 = vadd.f32 %v10938, %v11126
        %v11128 = vpop.f32.mrf.mxu0
        %v11129 = vadd.f32 %v10940, %v11128
        %11130 = vmatmul.bf16.gmra.mxu0 %v7864
        %v11131 = vpop.f32.mrf.mxu0
        %v11132 = vadd.f32 %v10943, %v11131
        %v11133 = vpop.f32.mrf.mxu0
        %v11134 = vadd.f32 %v10945, %v11133
        %11135 = vmatmul.bf16.gmra.mxu0 %v7873
        %v11136 = vpop.f32.mrf.mxu0
        %v11137 = vadd.f32 %v10948, %v11136
        %v11138 = vpop.f32.mrf.mxu0
        %v11139 = vadd.f32 %v10950, %v11138
        %11140 = vmatmul.bf16.gmra.mxu0 %v7882
        %v11141 = vpop.f32.mrf.mxu0
        %v11142 = vadd.f32 %v10953, %v11141
        %v11143 = vpop.f32.mrf.mxu0
        %v11144 = vadd.f32 %v10955, %v11143
        %11145 = vmatmul.bf16.gmra.mxu0 %v7891
        %v11146 = vpop.f32.mrf.mxu0
        %v11147 = vadd.f32 %v10958, %v11146
        %v11148 = vpop.f32.mrf.mxu0
        %v11149 = vadd.f32 %v10960, %v11148
        %11150 = vmatmul.bf16.gmra.mxu0 %v7900
        %v11151 = vpop.f32.mrf.mxu0
        %v11152 = vadd.f32 %v10963, %v11151
        %v11153 = vpop.f32.mrf.mxu0
        %v11154 = vadd.f32 %v10965, %v11153
        %11155 = vdwg.mxu0
        %11156 = vmatpush.bf16.msra.mxu0 %v10295
        %11157 = vmatpush.bf16.msra.mxu0 %v10294
        %11158 = vmatpush.bf16.msra.mxu0 %v10293
        %11159 = vmatpush.bf16.msra.mxu0 %v10292
        %11160 = vmatpush.bf16.msra.mxu0 %v10291
        %11161 = vmatpush.bf16.msra.mxu0 %v10290
        %11162 = vmatpush.bf16.msra.mxu0 %v10289
        %11163 = vmatpush.bf16.msra.mxu0 %v10288
        %11164 = vmatmul.bf16.gmra.mxu0 %v7952
        %v11165 = vpop.f32.mrf.mxu0
        %v11166 = vadd.f32 %v10977, %v11165
        %v11167 = vpop.f32.mrf.mxu0
        %v11168 = vadd.f32 %v10979, %v11167
        %11169 = vmatmul.bf16.gmra.mxu0 %v7961
        %v11170 = vpop.f32.mrf.mxu0
        %v11171 = vadd.f32 %v10982, %v11170
        %v11172 = vpop.f32.mrf.mxu0
        %v11173 = vadd.f32 %v10984, %v11172
        %11174 = vmatmul.bf16.gmra.mxu0 %v7970
        %v11175 = vpop.f32.mrf.mxu0
        %v11176 = vadd.f32 %v10987, %v11175
        %v11177 = vpop.f32.mrf.mxu0
        %v11178 = vadd.f32 %v10989, %v11177
        %11179 = vmatmul.bf16.gmra.mxu0 %v7979
        %v11180 = vpop.f32.mrf.mxu0
        %v11181 = vadd.f32 %v10992, %v11180
        %v11182 = vpop.f32.mrf.mxu0
        %v11183 = vadd.f32 %v10994, %v11182
        %11184 = vmatmul.bf16.gmra.mxu0 %v7988
        %v11185 = vpop.f32.mrf.mxu0
        %v11186 = vadd.f32 %v10997, %v11185
        %v11187 = vpop.f32.mrf.mxu0
        %v11188 = vadd.f32 %v10999, %v11187
        %11189 = vmatmul.bf16.gmra.mxu0 %v7997
        %v11190 = vpop.f32.mrf.mxu0
        %v11191 = vadd.f32 %v11002, %v11190
        %v11192 = vpop.f32.mrf.mxu0
        %v11193 = vadd.f32 %v11004, %v11192
        %11194 = vmatmul.bf16.gmra.mxu0 %v8006
        %v11195 = vpop.f32.mrf.mxu0
        %v11196 = vadd.f32 %v11007, %v11195
        %v11197 = vpop.f32.mrf.mxu0
        %v11198 = vadd.f32 %v11009, %v11197
        %11199 = vmatmul.bf16.gmra.mxu0 %v8015
        %v11200 = vpop.f32.mrf.mxu0
        %v11201 = vadd.f32 %v11012, %v11200
        %v11202 = vpop.f32.mrf.mxu0
        %v11203 = vadd.f32 %v11014, %v11202
        %11204 = vmatmul.bf16.gmra.mxu0 %v8030
        %v11205 = vpop.f32.mrf.mxu0
        %v11206 = vadd.f32 %v11017, %v11205
        %v11207 = vpop.f32.mrf.mxu0
        %v11208 = vadd.f32 %v11019, %v11207
        %11209 = vmatmul.bf16.gmra.mxu0 %v8039
        %v11210 = vpop.f32.mrf.mxu0
        %v11211 = vadd.f32 %v11022, %v11210
        %v11212 = vpop.f32.mrf.mxu0
        %v11213 = vadd.f32 %v11024, %v11212
        %11214 = vmatmul.bf16.gmra.mxu0 %v8048
        %v11215 = vpop.f32.mrf.mxu0
        %v11216 = vadd.f32 %v11027, %v11215
        %v11217 = vpop.f32.mrf.mxu0
        %v11218 = vadd.f32 %v11029, %v11217
        %11219 = vmatmul.bf16.gmra.mxu0 %v8057
        %v11220 = vpop.f32.mrf.mxu0
        %v11221 = vadd.f32 %v11032, %v11220
        %v11222 = vpop.f32.mrf.mxu0
        %v11223 = vadd.f32 %v11034, %v11222
        %11224 = vmatmul.bf16.gmra.mxu0 %v8066
        %v11225 = vpop.f32.mrf.mxu0
        %v11226 = vadd.f32 %v11037, %v11225
        %v11227 = vpop.f32.mrf.mxu0
        %v11228 = vadd.f32 %v11039, %v11227
        %11229 = vmatmul.bf16.gmra.mxu0 %v8075
        %v11230 = vpop.f32.mrf.mxu0
        %v11231 = vadd.f32 %v11042, %v11230
        %v11232 = vpop.f32.mrf.mxu0
        %v11233 = vadd.f32 %v11044, %v11232
        %11234 = vmatmul.bf16.gmra.mxu0 %v8084
        %v11235 = vpop.f32.mrf.mxu0
        %v11236 = vadd.f32 %v11047, %v11235
        %v11237 = vpop.f32.mrf.mxu0
        %v11238 = vadd.f32 %v11049, %v11237
        %11239 = vmatmul.bf16.gmra.mxu0 %v8093
        %v11240 = vpop.f32.mrf.mxu0
        %v11241 = vadd.f32 %v11052, %v11240
        %v11242 = vpop.f32.mrf.mxu0
        %v11243 = vadd.f32 %v11054, %v11242
        %11244 = vmatmul.bf16.gmra.mxu0 %v8102
        %v11245 = vpop.f32.mrf.mxu0
        %v11246 = vadd.f32 %v11057, %v11245
        %v11247 = vpop.f32.mrf.mxu0
        %v11248 = vadd.f32 %v11059, %v11247
        %11249 = vmatmul.bf16.gmra.mxu0 %v8117
        %v11250 = vpop.f32.mrf.mxu0
        %v11251 = vadd.f32 %v11062, %v11250
        %v11252 = vpop.f32.mrf.mxu0
        %v11253 = vadd.f32 %v11064, %v11252
        %11254 = vmatmul.bf16.gmra.mxu0 %v8126
        %v11255 = vpop.f32.mrf.mxu0
        %v11256 = vadd.f32 %v11067, %v11255
        %v11257 = vpop.f32.mrf.mxu0
        %v11258 = vadd.f32 %v11069, %v11257
        %11259 = vmatmul.bf16.gmra.mxu0 %v8135
        %v11260 = vpop.f32.mrf.mxu0
        %v11261 = vadd.f32 %v11072, %v11260
        %v11262 = vpop.f32.mrf.mxu0
        %v11263 = vadd.f32 %v11074, %v11262
        %11264 = vmatmul.bf16.gmra.mxu0 %v8144
        %v11265 = vpop.f32.mrf.mxu0
        %v11266 = vadd.f32 %v11077, %v11265
        %v11267 = vpop.f32.mrf.mxu0
        %v11268 = vadd.f32 %v11079, %v11267
        %11269 = vmatmul.bf16.gmra.mxu0 %v8153
        %v11270 = vpop.f32.mrf.mxu0
        %v11271 = vadd.f32 %v11082, %v11270
        %v11272 = vpop.f32.mrf.mxu0
        %v11273 = vadd.f32 %v11084, %v11272
        %11274 = vmatmul.bf16.gmra.mxu0 %v8162
        %v11275 = vpop.f32.mrf.mxu0
        %v11276 = vadd.f32 %v11087, %v11275
        %v11277 = vpop.f32.mrf.mxu0
        %v11278 = vadd.f32 %v11089, %v11277
        %11279 = vmatmul.bf16.gmra.mxu0 %v8171
        %v11280 = vpop.f32.mrf.mxu0
        %v11281 = vadd.f32 %v11092, %v11280
        %v11282 = vpop.f32.mrf.mxu0
        %v11283 = vadd.f32 %v11094, %v11282
        %11284 = vmatmul.bf16.gmra.mxu0 %v8180
        %v11285 = vpop.f32.mrf.mxu0
        %v11286 = vadd.f32 %v11097, %v11285
        %v11287 = vpop.f32.mrf.mxu0
        %v11288 = vadd.f32 %v11099, %v11287
        %11289 = vmatmul.bf16.gmra.mxu0 %v8189
        %v11290 = vpop.f32.mrf.mxu0
        %v11291 = vadd.f32 %v11102, %v11290
        %v11292 = vpop.f32.mrf.mxu0
        %v11293 = vadd.f32 %v11104, %v11292
        %11294 = vmatmul.bf16.gmra.mxu0 %v8204
        %v11295 = vpop.f32.mrf.mxu0
        %v11296 = vadd.f32 %v11107, %v11295
        %v11297 = vpop.f32.mrf.mxu0
        %v11298 = vadd.f32 %v11109, %v11297
        %11299 = vmatmul.bf16.gmra.mxu0 %v8213
        %v11300 = vpop.f32.mrf.mxu0
        %v11301 = vadd.f32 %v11112, %v11300
        %v11302 = vpop.f32.mrf.mxu0
        %v11303 = vadd.f32 %v11114, %v11302
        %11304 = vmatmul.bf16.gmra.mxu0 %v8222
        %v11305 = vpop.f32.mrf.mxu0
        %v11306 = vadd.f32 %v11117, %v11305
        %v11307 = vpop.f32.mrf.mxu0
        %v11308 = vadd.f32 %v11119, %v11307
        %11309 = vmatmul.bf16.gmra.mxu0 %v8231
        %v11310 = vpop.f32.mrf.mxu0
        %v11311 = vadd.f32 %v11122, %v11310
        %v11312 = vpop.f32.mrf.mxu0
        %v11313 = vadd.f32 %v11124, %v11312
        %11314 = vmatmul.bf16.gmra.mxu0 %v8240
        %v11315 = vpop.f32.mrf.mxu0
        %v11316 = vadd.f32 %v11127, %v11315
        %v11317 = vpop.f32.mrf.mxu0
        %v11318 = vadd.f32 %v11129, %v11317
        %11319 = vmatmul.bf16.gmra.mxu0 %v8249
        %v11320 = vpop.f32.mrf.mxu0
        %v11321 = vadd.f32 %v11132, %v11320
        %v11322 = vpop.f32.mrf.mxu0
        %v11323 = vadd.f32 %v11134, %v11322
        %11324 = vmatmul.bf16.gmra.mxu0 %v8258
        %v11325 = vpop.f32.mrf.mxu0
        %v11326 = vadd.f32 %v11137, %v11325
        %v11327 = vpop.f32.mrf.mxu0
        %v11328 = vadd.f32 %v11139, %v11327
        %11329 = vmatmul.bf16.gmra.mxu0 %v8267
        %v11330 = vpop.f32.mrf.mxu0
        %v11331 = vadd.f32 %v11142, %v11330
        %v11332 = vpop.f32.mrf.mxu0
        %v11333 = vadd.f32 %v11144, %v11332
        %11334 = vmatmul.bf16.gmra.mxu0 %v8276
        %v11335 = vpop.f32.mrf.mxu0
        %v11336 = vadd.f32 %v11147, %v11335
        %v11337 = vpop.f32.mrf.mxu0
        %v11338 = vadd.f32 %v11149, %v11337
        %11339 = vmatmul.bf16.gmra.mxu0 %v8291
        %v11340 = vpop.f32.mrf.mxu0
        %v11341 = vadd.f32 %v11152, %v11340
        %v11342 = vpop.f32.mrf.mxu0
        %v11343 = vadd.f32 %v11154, %v11342
        %11344 = vdwg.mxu0
        %11345 = vmatpush.bf16.msra.mxu0 %v10303
        %11346 = vmatpush.bf16.msra.mxu0 %v10302
        %11347 = vmatpush.bf16.msra.mxu0 %v10301
        %11348 = vmatpush.bf16.msra.mxu0 %v10300
        %11349 = vmatpush.bf16.msra.mxu0 %v10299
        %11350 = vmatpush.bf16.msra.mxu0 %v10298
        %11351 = vmatpush.bf16.msra.mxu0 %v10297
        %11352 = vmatpush.bf16.msra.mxu0 %v10296
        %11353 = vmatmul.bf16.gmra.mxu0 %v8343
        %v11354 = vpop.f32.mrf.mxu0
        %v11355 = vadd.f32 %v11166, %v11354
        %v11356 = vpop.f32.mrf.mxu0
        %v11357 = vadd.f32 %v11168, %v11356
        %11358 = vmatmul.bf16.gmra.mxu0 %v8352
        %v11359 = vpop.f32.mrf.mxu0
        %v11360 = vadd.f32 %v11171, %v11359
        %v11361 = vpop.f32.mrf.mxu0
        %v11362 = vadd.f32 %v11173, %v11361
        %11363 = vmatmul.bf16.gmra.mxu0 %v8361
        %v11364 = vpop.f32.mrf.mxu0
        %v11365 = vadd.f32 %v11176, %v11364
        %v11366 = vpop.f32.mrf.mxu0
        %v11367 = vadd.f32 %v11178, %v11366
        %11368 = vmatmul.bf16.gmra.mxu0 %v8370
        %v11369 = vpop.f32.mrf.mxu0
        %v11370 = vadd.f32 %v11181, %v11369
        %v11371 = vpop.f32.mrf.mxu0
        %v11372 = vadd.f32 %v11183, %v11371
        %11373 = vmatmul.bf16.gmra.mxu0 %v8379
        %v11374 = vpop.f32.mrf.mxu0
        %v11375 = vadd.f32 %v11186, %v11374
        %v11376 = vpop.f32.mrf.mxu0
        %v11377 = vadd.f32 %v11188, %v11376
        %11378 = vmatmul.bf16.gmra.mxu0 %v8388
        %v11379 = vpop.f32.mrf.mxu0
        %v11380 = vadd.f32 %v11191, %v11379
        %v11381 = vpop.f32.mrf.mxu0
        %v11382 = vadd.f32 %v11193, %v11381
        %11383 = vmatmul.bf16.gmra.mxu0 %v8397
        %v11384 = vpop.f32.mrf.mxu0
        %v11385 = vadd.f32 %v11196, %v11384
        %v11386 = vpop.f32.mrf.mxu0
        %v11387 = vadd.f32 %v11198, %v11386
        %11388 = vmatmul.bf16.gmra.mxu0 %v8406
        %v11389 = vpop.f32.mrf.mxu0
        %v11390 = vadd.f32 %v11201, %v11389
        %v11391 = vpop.f32.mrf.mxu0
        %v11392 = vadd.f32 %v11203, %v11391
        %11393 = vmatmul.bf16.gmra.mxu0 %v8415
        %v11394 = vpop.f32.mrf.mxu0
        %v11395 = vadd.f32 %v11206, %v11394
        %v11396 = vpop.f32.mrf.mxu0
        %v11397 = vadd.f32 %v11208, %v11396
        %11398 = vmatmul.bf16.gmra.mxu0 %v8424
        %v11399 = vpop.f32.mrf.mxu0
        %v11400 = vadd.f32 %v11211, %v11399
        %v11401 = vpop.f32.mrf.mxu0
        %v11402 = vadd.f32 %v11213, %v11401
        %11403 = vmatmul.bf16.gmra.mxu0 %v8433
        %v11404 = vpop.f32.mrf.mxu0
        %v11405 = vadd.f32 %v11216, %v11404
        %v11406 = vpop.f32.mrf.mxu0
        %v11407 = vadd.f32 %v11218, %v11406
        %11408 = vmatmul.bf16.gmra.mxu0 %v8442
        %v11409 = vpop.f32.mrf.mxu0
        %v11410 = vadd.f32 %v11221, %v11409
        %v11411 = vpop.f32.mrf.mxu0
        %v11412 = vadd.f32 %v11223, %v11411
        %11413 = vmatmul.bf16.gmra.mxu0 %v8451
        %v11414 = vpop.f32.mrf.mxu0
        %v11415 = vadd.f32 %v11226, %v11414
        %v11416 = vpop.f32.mrf.mxu0
        %v11417 = vadd.f32 %v11228, %v11416
        %11418 = vmatmul.bf16.gmra.mxu0 %v8460
        %v11419 = vpop.f32.mrf.mxu0
        %v11420 = vadd.f32 %v11231, %v11419
        %v11421 = vpop.f32.mrf.mxu0
        %v11422 = vadd.f32 %v11233, %v11421
        %11423 = vmatmul.bf16.gmra.mxu0 %v8469
        %v11424 = vpop.f32.mrf.mxu0
        %v11425 = vadd.f32 %v11236, %v11424
        %v11426 = vpop.f32.mrf.mxu0
        %v11427 = vadd.f32 %v11238, %v11426
        %11428 = vmatmul.bf16.gmra.mxu0 %v8478
        %v11429 = vpop.f32.mrf.mxu0
        %v11430 = vadd.f32 %v11241, %v11429
        %v11431 = vpop.f32.mrf.mxu0
        %v11432 = vadd.f32 %v11243, %v11431
        %11433 = vmatmul.bf16.gmra.mxu0 %v8487
        %v11434 = vpop.f32.mrf.mxu0
        %v11435 = vadd.f32 %v11246, %v11434
        %v11436 = vpop.f32.mrf.mxu0
        %v11437 = vadd.f32 %v11248, %v11436
        %11438 = vmatmul.bf16.gmra.mxu0 %v8496
        %v11439 = vpop.f32.mrf.mxu0
        %v11440 = vadd.f32 %v11251, %v11439
        %v11441 = vpop.f32.mrf.mxu0
        %v11442 = vadd.f32 %v11253, %v11441
        %11443 = vmatmul.bf16.gmra.mxu0 %v8505
        %v11444 = vpop.f32.mrf.mxu0
        %v11445 = vadd.f32 %v11256, %v11444
        %v11446 = vpop.f32.mrf.mxu0
        %v11447 = vadd.f32 %v11258, %v11446
        %11448 = vmatmul.bf16.gmra.mxu0 %v8514
        %v11449 = vpop.f32.mrf.mxu0
        %v11450 = vadd.f32 %v11261, %v11449
        %v11451 = vpop.f32.mrf.mxu0
        %v11452 = vadd.f32 %v11263, %v11451
        %11453 = vmatmul.bf16.gmra.mxu0 %v8523
        %v11454 = vpop.f32.mrf.mxu0
        %v11455 = vadd.f32 %v11266, %v11454
        %v11456 = vpop.f32.mrf.mxu0
        %v11457 = vadd.f32 %v11268, %v11456
        %11458 = vmatmul.bf16.gmra.mxu0 %v8532
        %v11459 = vpop.f32.mrf.mxu0
        %v11460 = vadd.f32 %v11271, %v11459
        %v11461 = vpop.f32.mrf.mxu0
        %v11462 = vadd.f32 %v11273, %v11461
        %11463 = vmatmul.bf16.gmra.mxu0 %v8541
        %v11464 = vpop.f32.mrf.mxu0
        %v11465 = vadd.f32 %v11276, %v11464
        %v11466 = vpop.f32.mrf.mxu0
        %v11467 = vadd.f32 %v11278, %v11466
        %11468 = vmatmul.bf16.gmra.mxu0 %v8550
        %v11469 = vpop.f32.mrf.mxu0
        %v11470 = vadd.f32 %v11281, %v11469
        %v11471 = vpop.f32.mrf.mxu0
        %v11472 = vadd.f32 %v11283, %v11471
        %11473 = vmatmul.bf16.gmra.mxu0 %v8559
        %v11474 = vpop.f32.mrf.mxu0
        %v11475 = vadd.f32 %v11286, %v11474
        %v11476 = vpop.f32.mrf.mxu0
        %v11477 = vadd.f32 %v11288, %v11476
        %11478 = vmatmul.bf16.gmra.mxu0 %v8568
        %v11479 = vpop.f32.mrf.mxu0
        %v11480 = vadd.f32 %v11291, %v11479
        %v11481 = vpop.f32.mrf.mxu0
        %v11482 = vadd.f32 %v11293, %v11481
        %11483 = vmatmul.bf16.gmra.mxu0 %v8577
        %v11484 = vpop.f32.mrf.mxu0
        %v11485 = vadd.f32 %v11296, %v11484
        %v11486 = vpop.f32.mrf.mxu0
        %v11487 = vadd.f32 %v11298, %v11486
        %11488 = vmatmul.bf16.gmra.mxu0 %v8586
        %v11489 = vpop.f32.mrf.mxu0
        %v11490 = vadd.f32 %v11301, %v11489
        %v11491 = vpop.f32.mrf.mxu0
        %v11492 = vadd.f32 %v11303, %v11491
        %11493 = vmatmul.bf16.gmra.mxu0 %v8595
        %v11494 = vpop.f32.mrf.mxu0
        %v11495 = vadd.f32 %v11306, %v11494
        %v11496 = vpop.f32.mrf.mxu0
        %v11497 = vadd.f32 %v11308, %v11496
        %11498 = vmatmul.bf16.gmra.mxu0 %v8604
        %v11499 = vpop.f32.mrf.mxu0
        %v11500 = vadd.f32 %v11311, %v11499
        %v11501 = vpop.f32.mrf.mxu0
        %v11502 = vadd.f32 %v11313, %v11501
        %11503 = vmatmul.bf16.gmra.mxu0 %v8613
        %v11504 = vpop.f32.mrf.mxu0
        %v11505 = vadd.f32 %v11316, %v11504
        %v11506 = vpop.f32.mrf.mxu0
        %v11507 = vadd.f32 %v11318, %v11506
        %11508 = vmatmul.bf16.gmra.mxu0 %v8622
        %v11509 = vpop.f32.mrf.mxu0
        %v11510 = vadd.f32 %v11321, %v11509
        %v11511 = vpop.f32.mrf.mxu0
        %v11512 = vadd.f32 %v11323, %v11511
        %11513 = vmatmul.bf16.gmra.mxu0 %v8631
        %v11514 = vpop.f32.mrf.mxu0
        %v11515 = vadd.f32 %v11326, %v11514
        %v11516 = vpop.f32.mrf.mxu0
        %v11517 = vadd.f32 %v11328, %v11516
        %11518 = vmatmul.bf16.gmra.mxu0 %v8640
        %v11519 = vpop.f32.mrf.mxu0
        %v11520 = vadd.f32 %v11331, %v11519
        %v11521 = vpop.f32.mrf.mxu0
        %v11522 = vadd.f32 %v11333, %v11521
        %11523 = vmatmul.bf16.gmra.mxu0 %v8649
        %v11524 = vpop.f32.mrf.mxu0
        %v11525 = vadd.f32 %v11336, %v11524
        %v11526 = vpop.f32.mrf.mxu0
        %v11527 = vadd.f32 %v11338, %v11526
        %11528 = vmatmul.bf16.gmra.mxu0 %v8658
        %v11529 = vpop.f32.mrf.mxu0
        %v11530 = vadd.f32 %v11341, %v11529
        %v11531 = vpop.f32.mrf.mxu0
        %v11532 = vadd.f32 %v11343, %v11531
        %11533 = vdwg.mxu0
        %11534 = vmatpush.bf16.msra.mxu0 %v10311
        %11535 = vmatpush.bf16.msra.mxu0 %v10310
        %11536 = vmatpush.bf16.msra.mxu0 %v10309
        %11537 = vmatpush.bf16.msra.mxu0 %v10308
        %11538 = vmatpush.bf16.msra.mxu0 %v10307
        %11539 = vmatpush.bf16.msra.mxu0 %v10306
        %11540 = vmatpush.bf16.msra.mxu0 %v10305
        %11541 = vmatpush.bf16.msra.mxu0 %v10304
        %11542 = vmatmul.bf16.gmra.mxu0 %v8710
        %v11543 = vpop.f32.mrf.mxu0
        %v11544 = vadd.f32 %v11355, %v11543
        %v11545 = vpop.f32.mrf.mxu0
        %v11546 = vadd.f32 %v11357, %v11545
        %11547 = vmatmul.bf16.gmra.mxu0 %v8719
        %v11548 = vpop.f32.mrf.mxu0
        %v11549 = vadd.f32 %v11360, %v11548
        %v11550 = vpop.f32.mrf.mxu0
        %v11551 = vadd.f32 %v11362, %v11550
        %11552 = vmatmul.bf16.gmra.mxu0 %v8728
        %v11553 = vpop.f32.mrf.mxu0
        %v11554 = vadd.f32 %v11365, %v11553
        %v11555 = vpop.f32.mrf.mxu0
        %v11556 = vadd.f32 %v11367, %v11555
        %11557 = vmatmul.bf16.gmra.mxu0 %v8737
        %v11558 = vpop.f32.mrf.mxu0
        %v11559 = vadd.f32 %v11370, %v11558
        %v11560 = vpop.f32.mrf.mxu0
        %v11561 = vadd.f32 %v11372, %v11560
        %11562 = vmatmul.bf16.gmra.mxu0 %v8746
        %v11563 = vpop.f32.mrf.mxu0
        %v11564 = vadd.f32 %v11375, %v11563
        %v11565 = vpop.f32.mrf.mxu0
        %v11566 = vadd.f32 %v11377, %v11565
        %11567 = vmatmul.bf16.gmra.mxu0 %v8755
        %v11568 = vpop.f32.mrf.mxu0
        %v11569 = vadd.f32 %v11380, %v11568
        %v11570 = vpop.f32.mrf.mxu0
        %v11571 = vadd.f32 %v11382, %v11570
        %11572 = vmatmul.bf16.gmra.mxu0 %v8764
        %v11573 = vpop.f32.mrf.mxu0
        %v11574 = vadd.f32 %v11385, %v11573
        %v11575 = vpop.f32.mrf.mxu0
        %v11576 = vadd.f32 %v11387, %v11575
        %11577 = vmatmul.bf16.gmra.mxu0 %v8773
        %v11578 = vpop.f32.mrf.mxu0
        %v11579 = vadd.f32 %v11390, %v11578
        %v11580 = vpop.f32.mrf.mxu0
        %v11581 = vadd.f32 %v11392, %v11580
        %11582 = vmatmul.bf16.gmra.mxu0 %v8782
        %v11583 = vpop.f32.mrf.mxu0
        %v11584 = vadd.f32 %v11395, %v11583
        %v11585 = vpop.f32.mrf.mxu0
        %v11586 = vadd.f32 %v11397, %v11585
        %11587 = vmatmul.bf16.gmra.mxu0 %v8791
        %v11588 = vpop.f32.mrf.mxu0
        %v11589 = vadd.f32 %v11400, %v11588
        %v11590 = vpop.f32.mrf.mxu0
        %v11591 = vadd.f32 %v11402, %v11590
        %11592 = vmatmul.bf16.gmra.mxu0 %v8800
        %v11593 = vpop.f32.mrf.mxu0
        %v11594 = vadd.f32 %v11405, %v11593
        %v11595 = vpop.f32.mrf.mxu0
        %v11596 = vadd.f32 %v11407, %v11595
        %11597 = vmatmul.bf16.gmra.mxu0 %v8809
        %v11598 = vpop.f32.mrf.mxu0
        %v11599 = vadd.f32 %v11410, %v11598
        %v11600 = vpop.f32.mrf.mxu0
        %v11601 = vadd.f32 %v11412, %v11600
        %11602 = vmatmul.bf16.gmra.mxu0 %v8818
        %v11603 = vpop.f32.mrf.mxu0
        %v11604 = vadd.f32 %v11415, %v11603
        %v11605 = vpop.f32.mrf.mxu0
        %v11606 = vadd.f32 %v11417, %v11605
        %11607 = vmatmul.bf16.gmra.mxu0 %v8827
        %v11608 = vpop.f32.mrf.mxu0
        %v11609 = vadd.f32 %v11420, %v11608
        %v11610 = vpop.f32.mrf.mxu0
        %v11611 = vadd.f32 %v11422, %v11610
        %11612 = vmatmul.bf16.gmra.mxu0 %v8836
        %v11613 = vpop.f32.mrf.mxu0
        %v11614 = vadd.f32 %v11425, %v11613
        %v11615 = vpop.f32.mrf.mxu0
        %v11616 = vadd.f32 %v11427, %v11615
        %11617 = vmatmul.bf16.gmra.mxu0 %v8845
        %v11618 = vpop.f32.mrf.mxu0
        %v11619 = vadd.f32 %v11430, %v11618
        %v11620 = vpop.f32.mrf.mxu0
        %v11621 = vadd.f32 %v11432, %v11620
        %11622 = vmatmul.bf16.gmra.mxu0 %v8854
        %v11623 = vpop.f32.mrf.mxu0
        %v11624 = vadd.f32 %v11435, %v11623
        %v11625 = vpop.f32.mrf.mxu0
        %v11626 = vadd.f32 %v11437, %v11625
        %11627 = vmatmul.bf16.gmra.mxu0 %v8863
        %v11628 = vpop.f32.mrf.mxu0
        %v11629 = vadd.f32 %v11440, %v11628
        %v11630 = vpop.f32.mrf.mxu0
        %v11631 = vadd.f32 %v11442, %v11630
        %11632 = vmatmul.bf16.gmra.mxu0 %v8872
        %v11633 = vpop.f32.mrf.mxu0
        %v11634 = vadd.f32 %v11445, %v11633
        %v11635 = vpop.f32.mrf.mxu0
        %v11636 = vadd.f32 %v11447, %v11635
        %11637 = vmatmul.bf16.gmra.mxu0 %v8881
        %v11638 = vpop.f32.mrf.mxu0
        %v11639 = vadd.f32 %v11450, %v11638
        %v11640 = vpop.f32.mrf.mxu0
        %v11641 = vadd.f32 %v11452, %v11640
        %11642 = vmatmul.bf16.gmra.mxu0 %v8890
        %v11643 = vpop.f32.mrf.mxu0
        %v11644 = vadd.f32 %v11455, %v11643
        %v11645 = vpop.f32.mrf.mxu0
        %v11646 = vadd.f32 %v11457, %v11645
        %11647 = vmatmul.bf16.gmra.mxu0 %v8899
        %v11648 = vpop.f32.mrf.mxu0
        %v11649 = vadd.f32 %v11460, %v11648
        %v11650 = vpop.f32.mrf.mxu0
        %v11651 = vadd.f32 %v11462, %v11650
        %11652 = vmatmul.bf16.gmra.mxu0 %v8908
        %v11653 = vpop.f32.mrf.mxu0
        %v11654 = vadd.f32 %v11465, %v11653
        %v11655 = vpop.f32.mrf.mxu0
        %v11656 = vadd.f32 %v11467, %v11655
        %11657 = vmatmul.bf16.gmra.mxu0 %v8917
        %v11658 = vpop.f32.mrf.mxu0
        %v11659 = vadd.f32 %v11470, %v11658
        %v11660 = vpop.f32.mrf.mxu0
        %v11661 = vadd.f32 %v11472, %v11660
        %11662 = vmatmul.bf16.gmra.mxu0 %v8926
        %v11663 = vpop.f32.mrf.mxu0
        %v11664 = vadd.f32 %v11475, %v11663
        %v11665 = vpop.f32.mrf.mxu0
        %v11666 = vadd.f32 %v11477, %v11665
        %11667 = vmatmul.bf16.gmra.mxu0 %v8935
        %v11668 = vpop.f32.mrf.mxu0
        %v11669 = vadd.f32 %v11480, %v11668
        %v11670 = vpop.f32.mrf.mxu0
        %v11671 = vadd.f32 %v11482, %v11670
        %11672 = vmatmul.bf16.gmra.mxu0 %v8944
        %v11673 = vpop.f32.mrf.mxu0
        %v11674 = vadd.f32 %v11485, %v11673
        %v11675 = vpop.f32.mrf.mxu0
        %v11676 = vadd.f32 %v11487, %v11675
        %11677 = vmatmul.bf16.gmra.mxu0 %v8953
        %v11678 = vpop.f32.mrf.mxu0
        %v11679 = vadd.f32 %v11490, %v11678
        %v11680 = vpop.f32.mrf.mxu0
        %v11681 = vadd.f32 %v11492, %v11680
        %11682 = vmatmul.bf16.gmra.mxu0 %v8962
        %v11683 = vpop.f32.mrf.mxu0
        %v11684 = vadd.f32 %v11495, %v11683
        %v11685 = vpop.f32.mrf.mxu0
        %v11686 = vadd.f32 %v11497, %v11685
        %11687 = vmatmul.bf16.gmra.mxu0 %v8971
        %v11688 = vpop.f32.mrf.mxu0
        %v11689 = vadd.f32 %v11500, %v11688
        %v11690 = vpop.f32.mrf.mxu0
        %v11691 = vadd.f32 %v11502, %v11690
        %11692 = vmatmul.bf16.gmra.mxu0 %v8980
        %v11693 = vpop.f32.mrf.mxu0
        %v11694 = vadd.f32 %v11505, %v11693
        %v11695 = vpop.f32.mrf.mxu0
        %v11696 = vadd.f32 %v11507, %v11695
        %11697 = vmatmul.bf16.gmra.mxu0 %v8989
        %v11698 = vpop.f32.mrf.mxu0
        %v11699 = vadd.f32 %v11510, %v11698
        %v11700 = vpop.f32.mrf.mxu0
        %v11701 = vadd.f32 %v11512, %v11700
        %11702 = vmatmul.bf16.gmra.mxu0 %v8998
        %v11703 = vpop.f32.mrf.mxu0
        %v11704 = vadd.f32 %v11515, %v11703
        %v11705 = vpop.f32.mrf.mxu0
        %v11706 = vadd.f32 %v11517, %v11705
        %11707 = vmatmul.bf16.gmra.mxu0 %v9007
        %v11708 = vpop.f32.mrf.mxu0
        %v11709 = vadd.f32 %v11520, %v11708
        %v11710 = vpop.f32.mrf.mxu0
        %v11711 = vadd.f32 %v11522, %v11710
        %11712 = vmatmul.bf16.gmra.mxu0 %v9016
        %v11713 = vpop.f32.mrf.mxu0
        %v11714 = vadd.f32 %v11525, %v11713
        %v11715 = vpop.f32.mrf.mxu0
        %v11716 = vadd.f32 %v11527, %v11715
        %11717 = vmatmul.bf16.gmra.mxu0 %v9025
        %v11718 = vpop.f32.mrf.mxu0
        %v11719 = vadd.f32 %v11530, %v11718
        %v11720 = vpop.f32.mrf.mxu0
        %v11721 = vadd.f32 %v11532, %v11720
        %11722 = vdwg.mxu0
        %11723 = vmatpush.bf16.msra.mxu0 %v10319
        %11724 = vmatpush.bf16.msra.mxu0 %v10318
        %11725 = vmatpush.bf16.msra.mxu0 %v10317
        %11726 = vmatpush.bf16.msra.mxu0 %v10316
        %11727 = vmatpush.bf16.msra.mxu0 %v10315
        %11728 = vmatpush.bf16.msra.mxu0 %v10314
        %11729 = vmatpush.bf16.msra.mxu0 %v10313
        %11730 = vmatpush.bf16.msra.mxu0 %v10312
        %11731 = vmatmul.bf16.gmra.mxu0 %v9077
        %v11732 = vpop.f32.mrf.mxu0
        %v11733 = vadd.f32 %v11544, %v11732
        %v11734 = vpop.f32.mrf.mxu0
        %v11735 = vadd.f32 %v11546, %v11734
        %11736 = vmatmul.bf16.gmra.mxu0 %v9086
        %v11737 = vpop.f32.mrf.mxu0
        %v11738 = vadd.f32 %v11549, %v11737
        %v11739 = vpop.f32.mrf.mxu0
        %v11740 = vadd.f32 %v11551, %v11739
        %11741 = vmatmul.bf16.gmra.mxu0 %v9095
        %v11742 = vpop.f32.mrf.mxu0
        %v11743 = vadd.f32 %v11554, %v11742
        %v11744 = vpop.f32.mrf.mxu0
        %v11745 = vadd.f32 %v11556, %v11744
        %11746 = vmatmul.bf16.gmra.mxu0 %v9104
        %v11747 = vpop.f32.mrf.mxu0
        %v11748 = vadd.f32 %v11559, %v11747
        %v11749 = vpop.f32.mrf.mxu0
        %v11750 = vadd.f32 %v11561, %v11749
        %11751 = vmatmul.bf16.gmra.mxu0 %v9113
        %v11752 = vpop.f32.mrf.mxu0
        %v11753 = vadd.f32 %v11564, %v11752
        %v11754 = vpop.f32.mrf.mxu0
        %v11755 = vadd.f32 %v11566, %v11754
        %11756 = vmatmul.bf16.gmra.mxu0 %v9122
        %v11757 = vpop.f32.mrf.mxu0
        %v11758 = vadd.f32 %v11569, %v11757
        %v11759 = vpop.f32.mrf.mxu0
        %v11760 = vadd.f32 %v11571, %v11759
        %11761 = vmatmul.bf16.gmra.mxu0 %v9131
        %v11762 = vpop.f32.mrf.mxu0
        %v11763 = vadd.f32 %v11574, %v11762
        %v11764 = vpop.f32.mrf.mxu0
        %v11765 = vadd.f32 %v11576, %v11764
        %11766 = vmatmul.bf16.gmra.mxu0 %v9140
        %v11767 = vpop.f32.mrf.mxu0
        %v11768 = vadd.f32 %v11579, %v11767
        %v11769 = vpop.f32.mrf.mxu0
        %v11770 = vadd.f32 %v11581, %v11769
        %11771 = vmatmul.bf16.gmra.mxu0 %v9155
        %v11772 = vpop.f32.mrf.mxu0
        %v11773 = vadd.f32 %v11584, %v11772
        %v11774 = vpop.f32.mrf.mxu0
        %v11775 = vadd.f32 %v11586, %v11774
        %11776 = vmatmul.bf16.gmra.mxu0 %v9164
        %v11777 = vpop.f32.mrf.mxu0
        %v11778 = vadd.f32 %v11589, %v11777
        %v11779 = vpop.f32.mrf.mxu0
        %v11780 = vadd.f32 %v11591, %v11779
        %11781 = vmatmul.bf16.gmra.mxu0 %v9173
        %v11782 = vpop.f32.mrf.mxu0
        %v11783 = vadd.f32 %v11594, %v11782
        %v11784 = vpop.f32.mrf.mxu0
        %v11785 = vadd.f32 %v11596, %v11784
        %11786 = vmatmul.bf16.gmra.mxu0 %v9182
        %v11787 = vpop.f32.mrf.mxu0
        %v11788 = vadd.f32 %v11599, %v11787
        %v11789 = vpop.f32.mrf.mxu0
        %v11790 = vadd.f32 %v11601, %v11789
        %11791 = vmatmul.bf16.gmra.mxu0 %v9191
        %v11792 = vpop.f32.mrf.mxu0
        %v11793 = vadd.f32 %v11604, %v11792
        %v11794 = vpop.f32.mrf.mxu0
        %v11795 = vadd.f32 %v11606, %v11794
        %11796 = vmatmul.bf16.gmra.mxu0 %v9200
        %v11797 = vpop.f32.mrf.mxu0
        %v11798 = vadd.f32 %v11609, %v11797
        %v11799 = vpop.f32.mrf.mxu0
        %v11800 = vadd.f32 %v11611, %v11799
        %11801 = vmatmul.bf16.gmra.mxu0 %v9209
        %v11802 = vpop.f32.mrf.mxu0
        %v11803 = vadd.f32 %v11614, %v11802
        %v11804 = vpop.f32.mrf.mxu0
        %v11805 = vadd.f32 %v11616, %v11804
        %11806 = vmatmul.bf16.gmra.mxu0 %v9218
        %v11807 = vpop.f32.mrf.mxu0
        %v11808 = vadd.f32 %v11619, %v11807
        %v11809 = vpop.f32.mrf.mxu0
        %v11810 = vadd.f32 %v11621, %v11809
        %11811 = vmatmul.bf16.gmra.mxu0 %v9227
        %v11812 = vpop.f32.mrf.mxu0
        %v11813 = vadd.f32 %v11624, %v11812
        %v11814 = vpop.f32.mrf.mxu0
        %v11815 = vadd.f32 %v11626, %v11814
        %11816 = vmatmul.bf16.gmra.mxu0 %v9242
        %v11817 = vpop.f32.mrf.mxu0
        %v11818 = vadd.f32 %v11629, %v11817
        %v11819 = vpop.f32.mrf.mxu0
        %v11820 = vadd.f32 %v11631, %v11819
        %11821 = vmatmul.bf16.gmra.mxu0 %v9251
        %v11822 = vpop.f32.mrf.mxu0
        %v11823 = vadd.f32 %v11634, %v11822
        %v11824 = vpop.f32.mrf.mxu0
        %v11825 = vadd.f32 %v11636, %v11824
        %11826 = vmatmul.bf16.gmra.mxu0 %v9260
        %v11827 = vpop.f32.mrf.mxu0
        %v11828 = vadd.f32 %v11639, %v11827
        %v11829 = vpop.f32.mrf.mxu0
        %v11830 = vadd.f32 %v11641, %v11829
        %11831 = vmatmul.bf16.gmra.mxu0 %v9269
        %v11832 = vpop.f32.mrf.mxu0
        %v11833 = vadd.f32 %v11644, %v11832
        %v11834 = vpop.f32.mrf.mxu0
        %v11835 = vadd.f32 %v11646, %v11834
        %11836 = vmatmul.bf16.gmra.mxu0 %v9278
        %v11837 = vpop.f32.mrf.mxu0
        %v11838 = vadd.f32 %v11649, %v11837
        %v11839 = vpop.f32.mrf.mxu0
        %v11840 = vadd.f32 %v11651, %v11839
        %11841 = vmatmul.bf16.gmra.mxu0 %v9287
        %v11842 = vpop.f32.mrf.mxu0
        %v11843 = vadd.f32 %v11654, %v11842
        %v11844 = vpop.f32.mrf.mxu0
        %v11845 = vadd.f32 %v11656, %v11844
        %11846 = vmatmul.bf16.gmra.mxu0 %v9296
        %v11847 = vpop.f32.mrf.mxu0
        %v11848 = vadd.f32 %v11659, %v11847
        %v11849 = vpop.f32.mrf.mxu0
        %v11850 = vadd.f32 %v11661, %v11849
        %11851 = vmatmul.bf16.gmra.mxu0 %v9305
        %v11852 = vpop.f32.mrf.mxu0
        %v11853 = vadd.f32 %v11664, %v11852
        %v11854 = vpop.f32.mrf.mxu0
        %v11855 = vadd.f32 %v11666, %v11854
        %11856 = vmatmul.bf16.gmra.mxu0 %v9314
        %v11857 = vpop.f32.mrf.mxu0
        %v11858 = vadd.f32 %v11669, %v11857
        %v11859 = vpop.f32.mrf.mxu0
        %v11860 = vadd.f32 %v11671, %v11859
        %11861 = vmatmul.bf16.gmra.mxu0 %v9329
        %v11862 = vpop.f32.mrf.mxu0
        %v11863 = vadd.f32 %v11674, %v11862
        %v11864 = vpop.f32.mrf.mxu0
        %v11865 = vadd.f32 %v11676, %v11864
        %11866 = vmatmul.bf16.gmra.mxu0 %v9338
        %v11867 = vpop.f32.mrf.mxu0
        %v11868 = vadd.f32 %v11679, %v11867
        %v11869 = vpop.f32.mrf.mxu0
        %v11870 = vadd.f32 %v11681, %v11869
        %11871 = vmatmul.bf16.gmra.mxu0 %v9347
        %v11872 = vpop.f32.mrf.mxu0
        %v11873 = vadd.f32 %v11684, %v11872
        %v11874 = vpop.f32.mrf.mxu0
        %v11875 = vadd.f32 %v11686, %v11874
        %11876 = vmatmul.bf16.gmra.mxu0 %v9356
        %v11877 = vpop.f32.mrf.mxu0
        %v11878 = vadd.f32 %v11689, %v11877
        %v11879 = vpop.f32.mrf.mxu0
        %v11880 = vadd.f32 %v11691, %v11879
        %11881 = vmatmul.bf16.gmra.mxu0 %v9365
        %v11882 = vpop.f32.mrf.mxu0
        %v11883 = vadd.f32 %v11694, %v11882
        %v11884 = vpop.f32.mrf.mxu0
        %v11885 = vadd.f32 %v11696, %v11884
        %11886 = vmatmul.bf16.gmra.mxu0 %v9374
        %v11887 = vpop.f32.mrf.mxu0
        %v11888 = vadd.f32 %v11699, %v11887
        %v11889 = vpop.f32.mrf.mxu0
        %v11890 = vadd.f32 %v11701, %v11889
        %11891 = vmatmul.bf16.gmra.mxu0 %v9383
        %v11892 = vpop.f32.mrf.mxu0
        %v11893 = vadd.f32 %v11704, %v11892
        %v11894 = vpop.f32.mrf.mxu0
        %v11895 = vadd.f32 %v11706, %v11894
        %11896 = vmatmul.bf16.gmra.mxu0 %v9392
        %v11897 = vpop.f32.mrf.mxu0
        %v11898 = vadd.f32 %v11709, %v11897
        %v11899 = vpop.f32.mrf.mxu0
        %v11900 = vadd.f32 %v11711, %v11899
        %11901 = vmatmul.bf16.gmra.mxu0 %v9401
        %v11902 = vpop.f32.mrf.mxu0
        %v11903 = vadd.f32 %v11714, %v11902
        %v11904 = vpop.f32.mrf.mxu0
        %v11905 = vadd.f32 %v11716, %v11904
        %11906 = vmatmul.bf16.gmra.mxu0 %v9416
        %v11907 = vpop.f32.mrf.mxu0
        %v11908 = vadd.f32 %v11719, %v11907
        %v11909 = vpop.f32.mrf.mxu0
        %v11910 = vadd.f32 %v11721, %v11909
        %11911 = vdwg.mxu0
        %11912 = vmatpush.bf16.msra.mxu0 %v10327
        %11913 = vmatpush.bf16.msra.mxu0 %v10326
        %11914 = vmatpush.bf16.msra.mxu0 %v10325
        %11915 = vmatpush.bf16.msra.mxu0 %v10324
        %11916 = vmatpush.bf16.msra.mxu0 %v10323
        %11917 = vmatpush.bf16.msra.mxu0 %v10322
        %11918 = vmatpush.bf16.msra.mxu0 %v10321
        %11919 = vmatpush.bf16.msra.mxu0 %v10320
        %11920 = vmatmul.bf16.gmra.mxu0 %v9468
        %v11921 = vpop.f32.mrf.mxu0
        %v11922 = vadd.f32 %v11733, %v11921
        %v11923 = vpop.f32.mrf.mxu0
        %v11924 = vadd.f32 %v11735, %v11923
        %11925 = vmatmul.bf16.gmra.mxu0 %v9477
        %v11926 = vpop.f32.mrf.mxu0
        %v11927 = vadd.f32 %v11738, %v11926
        %v11928 = vpop.f32.mrf.mxu0
        %v11929 = vadd.f32 %v11740, %v11928
        %11930 = vmatmul.bf16.gmra.mxu0 %v9486
        %v11931 = vpop.f32.mrf.mxu0
        %v11932 = vadd.f32 %v11743, %v11931
        %v11933 = vpop.f32.mrf.mxu0
        %v11934 = vadd.f32 %v11745, %v11933
        %11935 = vmatmul.bf16.gmra.mxu0 %v9495
        %v11936 = vpop.f32.mrf.mxu0
        %v11937 = vadd.f32 %v11748, %v11936
        %v11938 = vpop.f32.mrf.mxu0
        %v11939 = vadd.f32 %v11750, %v11938
        %11940 = vmatmul.bf16.gmra.mxu0 %v9504
        %v11941 = vpop.f32.mrf.mxu0
        %v11942 = vadd.f32 %v11753, %v11941
        %v11943 = vpop.f32.mrf.mxu0
        %v11944 = vadd.f32 %v11755, %v11943
        %11945 = vmatmul.bf16.gmra.mxu0 %v9513
        %v11946 = vpop.f32.mrf.mxu0
        %v11947 = vadd.f32 %v11758, %v11946
        %v11948 = vpop.f32.mrf.mxu0
        %v11949 = vadd.f32 %v11760, %v11948
        %11950 = vmatmul.bf16.gmra.mxu0 %v9522
        %v11951 = vpop.f32.mrf.mxu0
        %v11952 = vadd.f32 %v11763, %v11951
        %v11953 = vpop.f32.mrf.mxu0
        %v11954 = vadd.f32 %v11765, %v11953
        %11955 = vmatmul.bf16.gmra.mxu0 %v9531
        %v11956 = vpop.f32.mrf.mxu0
        %v11957 = vadd.f32 %v11768, %v11956
        %v11958 = vpop.f32.mrf.mxu0
        %v11959 = vadd.f32 %v11770, %v11958
        %11960 = vmatmul.bf16.gmra.mxu0 %v9540
        %v11961 = vpop.f32.mrf.mxu0
        %v11962 = vadd.f32 %v11773, %v11961
        %v11963 = vpop.f32.mrf.mxu0
        %v11964 = vadd.f32 %v11775, %v11963
        %11965 = vmatmul.bf16.gmra.mxu0 %v9549
        %v11966 = vpop.f32.mrf.mxu0
        %v11967 = vadd.f32 %v11778, %v11966
        %v11968 = vpop.f32.mrf.mxu0
        %v11969 = vadd.f32 %v11780, %v11968
        %11970 = vmatmul.bf16.gmra.mxu0 %v9558
        %v11971 = vpop.f32.mrf.mxu0
        %v11972 = vadd.f32 %v11783, %v11971
        %v11973 = vpop.f32.mrf.mxu0
        %v11974 = vadd.f32 %v11785, %v11973
        %11975 = vmatmul.bf16.gmra.mxu0 %v9567
        %v11976 = vpop.f32.mrf.mxu0
        %v11977 = vadd.f32 %v11788, %v11976
        %v11978 = vpop.f32.mrf.mxu0
        %v11979 = vadd.f32 %v11790, %v11978
        %11980 = vmatmul.bf16.gmra.mxu0 %v9576
        %v11981 = vpop.f32.mrf.mxu0
        %v11982 = vadd.f32 %v11793, %v11981
        %v11983 = vpop.f32.mrf.mxu0
        %v11984 = vadd.f32 %v11795, %v11983
        %11985 = vmatmul.bf16.gmra.mxu0 %v9585
        %v11986 = vpop.f32.mrf.mxu0
        %v11987 = vadd.f32 %v11798, %v11986
        %v11988 = vpop.f32.mrf.mxu0
        %v11989 = vadd.f32 %v11800, %v11988
        %11990 = vmatmul.bf16.gmra.mxu0 %v9594
        %v11991 = vpop.f32.mrf.mxu0
        %v11992 = vadd.f32 %v11803, %v11991
        %v11993 = vpop.f32.mrf.mxu0
        %v11994 = vadd.f32 %v11805, %v11993
        %11995 = vmatmul.bf16.gmra.mxu0 %v9603
        %v11996 = vpop.f32.mrf.mxu0
        %v11997 = vadd.f32 %v11808, %v11996
        %v11998 = vpop.f32.mrf.mxu0
        %v11999 = vadd.f32 %v11810, %v11998
        %12000 = vmatmul.bf16.gmra.mxu0 %v9612
        %v12001 = vpop.f32.mrf.mxu0
        %v12002 = vadd.f32 %v11813, %v12001
        %v12003 = vpop.f32.mrf.mxu0
        %v12004 = vadd.f32 %v11815, %v12003
        %12005 = vmatmul.bf16.gmra.mxu0 %v9621
        %v12006 = vpop.f32.mrf.mxu0
        %v12007 = vadd.f32 %v11818, %v12006
        %v12008 = vpop.f32.mrf.mxu0
        %v12009 = vadd.f32 %v11820, %v12008
        %12010 = vmatmul.bf16.gmra.mxu0 %v9630
        %v12011 = vpop.f32.mrf.mxu0
        %v12012 = vadd.f32 %v11823, %v12011
        %v12013 = vpop.f32.mrf.mxu0
        %v12014 = vadd.f32 %v11825, %v12013
        %12015 = vmatmul.bf16.gmra.mxu0 %v9639
        %v12016 = vpop.f32.mrf.mxu0
        %v12017 = vadd.f32 %v11828, %v12016
        %v12018 = vpop.f32.mrf.mxu0
        %v12019 = vadd.f32 %v11830, %v12018
        %12020 = vmatmul.bf16.gmra.mxu0 %v9648
        %v12021 = vpop.f32.mrf.mxu0
        %v12022 = vadd.f32 %v11833, %v12021
        %v12023 = vpop.f32.mrf.mxu0
        %v12024 = vadd.f32 %v11835, %v12023
        %12025 = vmatmul.bf16.gmra.mxu0 %v9657
        %v12026 = vpop.f32.mrf.mxu0
        %v12027 = vadd.f32 %v11838, %v12026
        %v12028 = vpop.f32.mrf.mxu0
        %v12029 = vadd.f32 %v11840, %v12028
        %12030 = vmatmul.bf16.gmra.mxu0 %v9666
        %v12031 = vpop.f32.mrf.mxu0
        %v12032 = vadd.f32 %v11843, %v12031
        %v12033 = vpop.f32.mrf.mxu0
        %v12034 = vadd.f32 %v11845, %v12033
        %12035 = vmatmul.bf16.gmra.mxu0 %v9675
        %v12036 = vpop.f32.mrf.mxu0
        %v12037 = vadd.f32 %v11848, %v12036
        %v12038 = vpop.f32.mrf.mxu0
        %v12039 = vadd.f32 %v11850, %v12038
        %12040 = vmatmul.bf16.gmra.mxu0 %v9684
        %v12041 = vpop.f32.mrf.mxu0
        %v12042 = vadd.f32 %v11853, %v12041
        %v12043 = vpop.f32.mrf.mxu0
        %v12044 = vadd.f32 %v11855, %v12043
        %12045 = vmatmul.bf16.gmra.mxu0 %v9693
        %v12046 = vpop.f32.mrf.mxu0
        %v12047 = vadd.f32 %v11858, %v12046
        %v12048 = vpop.f32.mrf.mxu0
        %v12049 = vadd.f32 %v11860, %v12048
        %12050 = vmatmul.bf16.gmra.mxu0 %v9702
        %v12051 = vpop.f32.mrf.mxu0
        %v12052 = vadd.f32 %v11863, %v12051
        %v12053 = vpop.f32.mrf.mxu0
        %v12054 = vadd.f32 %v11865, %v12053
        %12055 = vmatmul.bf16.gmra.mxu0 %v9711
        %v12056 = vpop.f32.mrf.mxu0
        %v12057 = vadd.f32 %v11868, %v12056
        %v12058 = vpop.f32.mrf.mxu0
        %v12059 = vadd.f32 %v11870, %v12058
        %12060 = vmatmul.bf16.gmra.mxu0 %v9720
        %v12061 = vpop.f32.mrf.mxu0
        %v12062 = vadd.f32 %v11873, %v12061
        %v12063 = vpop.f32.mrf.mxu0
        %v12064 = vadd.f32 %v11875, %v12063
        %12065 = vmatmul.bf16.gmra.mxu0 %v9729
        %v12066 = vpop.f32.mrf.mxu0
        %v12067 = vadd.f32 %v11878, %v12066
        %v12068 = vpop.f32.mrf.mxu0
        %v12069 = vadd.f32 %v11880, %v12068
        %12070 = vmatmul.bf16.gmra.mxu0 %v9738
        %v12071 = vpop.f32.mrf.mxu0
        %v12072 = vadd.f32 %v11883, %v12071
        %v12073 = vpop.f32.mrf.mxu0
        %v12074 = vadd.f32 %v11885, %v12073
        %12075 = vmatmul.bf16.gmra.mxu0 %v9747
        %v12076 = vpop.f32.mrf.mxu0
        %v12077 = vadd.f32 %v11888, %v12076
        %v12078 = vpop.f32.mrf.mxu0
        %v12079 = vadd.f32 %v11890, %v12078
        %12080 = vmatmul.bf16.gmra.mxu0 %v9756
        %v12081 = vpop.f32.mrf.mxu0
        %v12082 = vadd.f32 %v11893, %v12081
        %v12083 = vpop.f32.mrf.mxu0
        %v12084 = vadd.f32 %v11895, %v12083
        %12085 = vmatmul.bf16.gmra.mxu0 %v9765
        %v12086 = vpop.f32.mrf.mxu0
        %v12087 = vadd.f32 %v11898, %v12086
        %v12088 = vpop.f32.mrf.mxu0
        %v12089 = vadd.f32 %v11900, %v12088
        %12090 = vmatmul.bf16.gmra.mxu0 %v9774
        %v12091 = vpop.f32.mrf.mxu0
        %v12092 = vadd.f32 %v11903, %v12091
        %v12093 = vpop.f32.mrf.mxu0
        %v12094 = vadd.f32 %v11905, %v12093
        %12095 = vmatmul.bf16.gmra.mxu0 %v9783
        %v12096 = vpop.f32.mrf.mxu0
        %v12097 = vadd.f32 %v11908, %v12096
        %v12098 = vpop.f32.mrf.mxu0
        %v12099 = vadd.f32 %v11910, %v12098
        %12100 = vdwg.mxu0
        %v12101 = vmax.f32 %v11922, 0.0
        %v12102 = vmax.f32 %v11924, 0.0
        %v12103 = vmax.f32 %v11927, 0.0
        %v12104 = vmax.f32 %v11929, 0.0
        %v12105 = vmax.f32 %v11932, 0.0
        %v12106 = vmax.f32 %v11934, 0.0
        %v12107 = vmax.f32 %v11937, 0.0
        %v12108 = vmax.f32 %v11939, 0.0
        %v12109 = vmax.f32 %v11942, 0.0
        %v12110 = vmax.f32 %v11944, 0.0
        %v12111 = vmax.f32 %v11947, 0.0
        %v12112 = vmax.f32 %v11949, 0.0
        %v12113 = vmax.f32 %v11952, 0.0
        %v12114 = vmax.f32 %v11954, 0.0
        %v12115 = vmax.f32 %v11957, 0.0
        %v12116 = vmax.f32 %v11959, 0.0
        %v12117 = vmax.f32 %v11962, 0.0
        %v12118 = vmax.f32 %v11964, 0.0
        %v12119 = vmax.f32 %v11967, 0.0
        %v12120 = vmax.f32 %v11969, 0.0
        %v12121 = vmax.f32 %v11972, 0.0
        %v12122 = vmax.f32 %v11974, 0.0
        %v12123 = vmax.f32 %v11977, 0.0
        %v12124 = vmax.f32 %v11979, 0.0
        %v12125 = vmax.f32 %v11982, 0.0
        %v12126 = vmax.f32 %v11984, 0.0
        %v12127 = vmax.f32 %v11987, 0.0
        %v12128 = vmax.f32 %v11989, 0.0
        %v12129 = vmax.f32 %v11992, 0.0
        %v12130 = vmax.f32 %v11994, 0.0
        %v12131 = vmax.f32 %v11997, 0.0
        %v12132 = vmax.f32 %v11999, 0.0
        %v12133 = vmax.f32 %v12002, 0.0
        %v12134 = vmax.f32 %v12004, 0.0
        %v12135 = vmax.f32 %v12007, 0.0
        %v12136 = vmax.f32 %v12009, 0.0
        %v12137 = vmax.f32 %v12012, 0.0
        %v12138 = vmax.f32 %v12014, 0.0
        %v12139 = vmax.f32 %v12017, 0.0
        %v12140 = vmax.f32 %v12019, 0.0
        %v12141 = vmax.f32 %v12022, 0.0
        %v12142 = vmax.f32 %v12024, 0.0
        %v12143 = vmax.f32 %v12027, 0.0
        %v12144 = vmax.f32 %v12029, 0.0
        %v12145 = vmax.f32 %v12032, 0.0
        %v12146 = vmax.f32 %v12034, 0.0
        %v12147 = vmax.f32 %v12037, 0.0
        %v12148 = vmax.f32 %v12039, 0.0
        %v12149 = vmax.f32 %v12042, 0.0
        %v12150 = vmax.f32 %v12044, 0.0
        %v12151 = vmax.f32 %v12047, 0.0
        %v12152 = vmax.f32 %v12049, 0.0
        %v12153 = vmax.f32 %v12052, 0.0
        %v12154 = vmax.f32 %v12054, 0.0
        %v12155 = vmax.f32 %v12057, 0.0
        %v12156 = vmax.f32 %v12059, 0.0
        %v12157 = vmax.f32 %v12062, 0.0
        %v12158 = vmax.f32 %v12064, 0.0
        %v12159 = vmax.f32 %v12067, 0.0
        %v12160 = vmax.f32 %v12069, 0.0
        %v12161 = vmax.f32 %v12072, 0.0
        %v12162 = vmax.f32 %v12074, 0.0
        %v12163 = vmax.f32 %v12077, 0.0
        %v12164 = vmax.f32 %v12079, 0.0
        %v12165 = vmax.f32 %v12082, 0.0
        %v12166 = vmax.f32 %v12084, 0.0
        %v12167 = vmax.f32 %v12087, 0.0
        %v12168 = vmax.f32 %v12089, 0.0
        %v12169 = vmax.f32 %v12092, 0.0
        %v12170 = vmax.f32 %v12094, 0.0
        %v12171 = vmax.f32 %v12097, 0.0
        %v12172 = vmax.f32 %v12099, 0.0
        %v12173 = vadd.f32 %v12101, %v12102
        %v12174 = vadd.f32 %v12173, %v12103
        %v12175 = vadd.f32 %v12174, %v12104
        %v12176 = vadd.f32 %v12175, %v12105
        %v12177 = vadd.f32 %v12176, %v12106
        %v12178 = vadd.f32 %v12177, %v12107
        %v12179 = vadd.f32 %v12178, %v12108
        %v12180 = vadd.f32 %v12179, %v12109
        %v12181 = vadd.f32 %v12180, %v12110
        %v12182 = vadd.f32 %v12181, %v12111
        %v12183 = vadd.f32 %v12182, %v12112
        %v12184 = vadd.f32 %v12183, %v12113
        %v12185 = vadd.f32 %v12184, %v12114
        %v12186 = vadd.f32 %v12185, %v12115
        %v12187 = vadd.f32 %v12186, %v12116
        %v12188 = vadd.f32 %v12187, %v12117
        %v12189 = vadd.f32 %v12188, %v12118
        %v12190 = vrot.slane %v12189, 4
        %v12191 = vadd.f32 %v12189, %v12190
        %v12192 = vrot.slane %v12191, 2
        %v12193 = vadd.f32 %v12191, %v12192
        %v12194 = vrot.slane %v12193, 1
        %v12195 = vadd.f32 %v12193, %v12194
        %v12196 = vadd.f32 %v12119, %v12120
        %v12197 = vadd.f32 %v12196, %v12121
        %v12198 = vadd.f32 %v12197, %v12122
        %v12199 = vadd.f32 %v12198, %v12123
        %v12200 = vadd.f32 %v12199, %v12124
        %v12201 = vadd.f32 %v12200, %v12125
        %v12202 = vadd.f32 %v12201, %v12126
        %v12203 = vadd.f32 %v12202, %v12127
        %v12204 = vadd.f32 %v12203, %v12128
        %v12205 = vadd.f32 %v12204, %v12129
        %v12206 = vadd.f32 %v12205, %v12130
        %v12207 = vadd.f32 %v12206, %v12131
        %v12208 = vadd.f32 %v12207, %v12132
        %v12209 = vadd.f32 %v12208, %v12133
        %v12210 = vadd.f32 %v12209, %v12134
        %v12211 = vadd.f32 %v12210, %v12135
        %v12212 = vadd.f32 %v12211, %v12136
        %v12213 = vrot.slane %v12212, 4
        %v12214 = vadd.f32 %v12212, %v12213
        %v12215 = vrot.slane %v12214, 2
        %v12216 = vadd.f32 %v12214, %v12215
        %v12217 = vrot.slane %v12216, 1
        %v12218 = vadd.f32 %v12216, %v12217
        %v12219 = vadd.f32 %v12137, %v12138
        %v12220 = vadd.f32 %v12219, %v12139
        %v12221 = vadd.f32 %v12220, %v12140
        %v12222 = vadd.f32 %v12221, %v12141
        %v12223 = vadd.f32 %v12222, %v12142
        %v12224 = vadd.f32 %v12223, %v12143
        %v12225 = vadd.f32 %v12224, %v12144
        %v12226 = vadd.f32 %v12225, %v12145
        %v12227 = vadd.f32 %v12226, %v12146
        %v12228 = vadd.f32 %v12227, %v12147
        %v12229 = vadd.f32 %v12228, %v12148
        %v12230 = vadd.f32 %v12229, %v12149
        %v12231 = vadd.f32 %v12230, %v12150
        %v12232 = vadd.f32 %v12231, %v12151
        %v12233 = vadd.f32 %v12232, %v12152
        %v12234 = vadd.f32 %v12233, %v12153
        %v12235 = vadd.f32 %v12234, %v12154
        %v12236 = vrot.slane %v12235, 4
        %v12237 = vadd.f32 %v12235, %v12236
        %v12238 = vrot.slane %v12237, 2
        %v12239 = vadd.f32 %v12237, %v12238
        %v12240 = vrot.slane %v12239, 1
        %v12241 = vadd.f32 %v12239, %v12240
        %v12242 = vadd.f32 %v12155, %v12156
        %v12243 = vadd.f32 %v12242, %v12157
        %v12244 = vadd.f32 %v12243, %v12158
        %v12245 = vadd.f32 %v12244, %v12159
        %v12246 = vadd.f32 %v12245, %v12160
        %v12247 = vadd.f32 %v12246, %v12161
        %v12248 = vadd.f32 %v12247, %v12162
        %v12249 = vadd.f32 %v12248, %v12163
        %v12250 = vadd.f32 %v12249, %v12164
        %v12251 = vadd.f32 %v12250, %v12165
        %v12252 = vadd.f32 %v12251, %v12166
        %v12253 = vadd.f32 %v12252, %v12167
        %v12254 = vadd.f32 %v12253, %v12168
        %v12255 = vadd.f32 %v12254, %v12169
        %v12256 = vadd.f32 %v12255, %v12170
        %v12257 = vadd.f32 %v12256, %v12171
        %v12258 = vadd.f32 %v12257, %v12172
        %v12259 = vrot.slane %v12258, 4
        %v12260 = vadd.f32 %v12258, %v12259
        %v12261 = vrot.slane %v12260, 2
        %v12262 = vadd.f32 %v12260, %v12261
        %v12263 = vrot.slane %v12262, 1
        %v12264 = vadd.f32 %v12262, %v12263
        %v12265 = vmul.f32 %v12195, 0.0069444445
        %v12266 = vmul.f32 %v12218, 0.0069444445
        %v12267 = vmul.f32 %v12241, 0.0069444445
        %v12268 = vmul.f32 %v12264, 0.0069444445
        %v12269 = vpack.c.bf16 %v12265, %v12265
        %v12270 = vpack.c.bf16 %v12266, %v12266
        %v12271 = vpack.c.bf16 %v12267, %v12267
        %v12272 = vpack.c.bf16 %v12268, %v12268
        %v12273 = vld [vmem:[%s5] sm:$0xf]
        %v12274 = vld [vmem:[%s5 + $0x4] sm:$0xf]
        %v12275 = vld [vmem:[%s5 + $0x8] sm:$0xf]
        %v12276 = vld [vmem:[%s5 + $0xc] sm:$0xf]
        %v12277 = vld [vmem:[%s5 + $0x10] sm:$0xf]
        %v12278 = vld [vmem:[%s5 + $0x14] sm:$0xf]
        %v12279 = vld [vmem:[%s5 + $0x18] sm:$0xf]
        %v12280 = vld [vmem:[%s5 + $0x1c] sm:$0xf]
        %v12281 = vld [vmem:[%s5 + $0x20] sm:$0xf]
        %v12282 = vld [vmem:[%s5 + $0x24] sm:$0xf]
        %v12283 = vld [vmem:[%s5 + $0x28] sm:$0xf]
        %v12284 = vld [vmem:[%s5 + $0x2c] sm:$0xf]
        %v12285 = vld [vmem:[%s5 + $0x30] sm:$0xf]
        %v12286 = vld [vmem:[%s5 + $0x34] sm:$0xf]
        %v12287 = vld [vmem:[%s5 + $0x38] sm:$0xf]
        %v12288 = vld [vmem:[%s5 + $0x3c] sm:$0xf]
        %v12289 = vld [vmem:[%s6] sm:$0x1]
        %v12291 = vperm.slane %v12289, 0
        %v12297 = vunpack.c.l.b16 %v12269
        %v12298 = vunpack.c.l.b16 %v12270
        %v12299 = vunpack.c.l.b16 %v12271
        %v12300 = vunpack.c.l.b16 %v12272
        %v12301 = vsel %vm2344, %v12298, %v12297
        %v12302 = vsel %vm2348, %v12299, %v12301
        %v12303 = vsel %vm2352, %v12300, %v12302
        %v12304 = vpack.c.b16 %v12303, %v12303
        %v12322 = vunpack.c.l.b16 %v12273
        %v12323 = vunpack.c.l.b16 %v12274
        %v12324 = vunpack.c.l.b16 %v12275
        %v12325 = vunpack.c.l.b16 %v12276
        %v12326 = vunpack.c.l.b16 %v12277
        %v12327 = vunpack.c.l.b16 %v12278
        %v12328 = vunpack.c.l.b16 %v12279
        %v12329 = vunpack.c.l.b16 %v12280
        %v12330 = vunpack.c.l.b16 %v12281
        %v12331 = vunpack.c.l.b16 %v12282
        %v12332 = vunpack.c.l.b16 %v12283
        %v12333 = vunpack.c.l.b16 %v12284
        %v12334 = vunpack.c.l.b16 %v12285
        %v12335 = vunpack.c.l.b16 %v12286
        %v12336 = vunpack.c.l.b16 %v12287
        %v12337 = vunpack.c.l.b16 %v12288
        %v12338 = vpack.c.b16 %v12323, %v12322
        %v12339 = vpack.c.b16 %v12325, %v12324
        %v12340 = vpack.c.b16 %v12327, %v12326
        %v12341 = vpack.c.b16 %v12329, %v12328
        %v12342 = vpack.c.b16 %v12331, %v12330
        %v12343 = vpack.c.b16 %v12333, %v12332
        %v12344 = vpack.c.b16 %v12335, %v12334
        %v12345 = vpack.c.b16 %v12337, %v12336
        %12354 = vmatpush.bf16.msra.mxu0 %v12345
        %12355 = vmatpush.bf16.msra.mxu0 %v12344
        %12356 = vmatpush.bf16.msra.mxu0 %v12343
        %12357 = vmatpush.bf16.msra.mxu0 %v12342
        %12358 = vmatpush.bf16.msra.mxu0 %v12341
        %12359 = vmatpush.bf16.msra.mxu0 %v12340
        %12360 = vmatpush.bf16.msra.mxu0 %v12339
        %12361 = vmatpush.bf16.msra.mxu0 %v12338
        %12362 = vmatmul.bf16.gmra.mxu0 %v12304
        %v12363 = vpop.f32.mrf.mxu0
        %v12364 = vadd.f32 %v12291, %v12363
        %v12365 = vpop.f32.mrf.mxu0
        %12366 = vdwg.mxu0
        %v12367 = vmax.f32 %v12364, 0.0
        %v12368 = vpack.c.bf16 %v12367, %v12367
        %v12369 = vld [vmem:[%s7] sm:$0xf]
        %v12370 = vld [vmem:[%s7 + $0x4] sm:$0xf]
        %v12371 = vld [vmem:[%s7 + $0x8] sm:$0xf]
        %v12372 = vld [vmem:[%s7 + $0xc] sm:$0xf]
        %v12373 = vld [vmem:[%s7 + $0x10] sm:$0xf]
        %v12374 = vld [vmem:[%s7 + $0x14] sm:$0xf]
        %v12375 = vld [vmem:[%s7 + $0x18] sm:$0xf]
        %v12376 = vld [vmem:[%s7 + $0x1c] sm:$0xf]
        %v12377 = vld [vmem:[%s7 + $0x20] sm:$0xf]
        %v12378 = vld [vmem:[%s7 + $0x24] sm:$0xf]
        %v12379 = vld [vmem:[%s7 + $0x28] sm:$0xf]
        %v12380 = vld [vmem:[%s7 + $0x2c] sm:$0xf]
        %v12381 = vld [vmem:[%s7 + $0x30] sm:$0xf]
        %v12382 = vld [vmem:[%s7 + $0x34] sm:$0xf]
        %v12383 = vld [vmem:[%s7 + $0x38] sm:$0xf]
        %v12384 = vld [vmem:[%s7 + $0x3c] sm:$0xf]
        %v12385 = vld [vmem:[%s8] sm:$0x1]
        %v12387 = vperm.slane %v12385, 0
        %v12405 = vunpack.c.l.b16 %v12369
        %v12406 = vunpack.c.l.b16 %v12370
        %v12407 = vunpack.c.l.b16 %v12371
        %v12408 = vunpack.c.l.b16 %v12372
        %v12409 = vunpack.c.l.b16 %v12373
        %v12410 = vunpack.c.l.b16 %v12374
        %v12411 = vunpack.c.l.b16 %v12375
        %v12412 = vunpack.c.l.b16 %v12376
        %v12413 = vunpack.c.l.b16 %v12377
        %v12414 = vunpack.c.l.b16 %v12378
        %v12415 = vunpack.c.l.b16 %v12379
        %v12416 = vunpack.c.l.b16 %v12380
        %v12417 = vunpack.c.l.b16 %v12381
        %v12418 = vunpack.c.l.b16 %v12382
        %v12419 = vunpack.c.l.b16 %v12383
        %v12420 = vunpack.c.l.b16 %v12384
        %v12421 = vpack.c.b16 %v12406, %v12405
        %v12422 = vpack.c.b16 %v12408, %v12407
        %v12423 = vpack.c.b16 %v12410, %v12409
        %v12424 = vpack.c.b16 %v12412, %v12411
        %v12425 = vpack.c.b16 %v12414, %v12413
        %v12426 = vpack.c.b16 %v12416, %v12415
        %v12427 = vpack.c.b16 %v12418, %v12417
        %v12428 = vpack.c.b16 %v12420, %v12419
        %12437 = vmatpush.bf16.msra.mxu0 %v12428
        %12438 = vmatpush.bf16.msra.mxu0 %v12427
        %12439 = vmatpush.bf16.msra.mxu0 %v12426
        %12440 = vmatpush.bf16.msra.mxu0 %v12425
        %12441 = vmatpush.bf16.msra.mxu0 %v12424
        %12442 = vmatpush.bf16.msra.mxu0 %v12423
        %12443 = vmatpush.bf16.msra.mxu0 %v12422
        %12444 = vmatpush.bf16.msra.mxu0 %v12421
        %12445 = vmatmul.bf16.gmra.mxu0 %v12368
        %v12446 = vpop.f32.mrf.mxu0
        %v12447 = vadd.f32 %v12387, %v12446
        %v12448 = vpop.f32.mrf.mxu0
        %12449 = vdwg.mxu0
        %12450 = vst [vmem:[%s328] sm:$0xf] %v12447
        %s12451 = sand.u32 %s225, 1
        %s12452 = scalar_lea.sflag [#allocation3], %s12451
        %s12453 = sand.u32 %s225, 1
        %s12454 = smul.addr %s12453, 4
        %s12455 = scalar_lea.vmem [#allocation2], %s12454
        // Predicated region
        $region57: #{tpu_custom_call.1} parent=55 // pred_check
          %p12456 = pneg %p235
        $region58: #{tpu_custom_call.1} parent=55 // pred_check_branch
          %12458 = sbr.rel (%p12456) target = $region60
        $region59: #{tpu_custom_call.1} parent=55 // pred_region
          %12460 = vsyncadd %s12452, 0
          %s12461 = smul.addr %s23, 4
          %s12462 = scalar_lea.hbm %s9, %s12461
          %s12464 = sshll.u32 %s12455, 4
          %s12465 = int_to_ptr.vmem [resolvable:$true] %s12464
          %s12466 = sshll.u32 %s12462, 4
          %s12467 = int_to_ptr.hbm [resolvable:$true] %s12466
          %12469 = dma.vmem_to_hbm [thread:$0]  %s12465, 64, %s12467, %s12452
        $region60: #{tpu_custom_call.1} parent=55 // pred_fallthru
          _
      $region56: #{tpu_custom_call.1} parent=5 // pred_fallthru
        _
      %p12470 = scmp.le.s32.totalorder 2, %s18
      // Predicated region
      $region61: #{tpu_custom_call.1} parent=5 // pred_check
        %p12471 = pneg %p12470
      $region62: #{tpu_custom_call.1} parent=5 // pred_check_branch
        %12473 = sbr.rel (%p12471) target = $region64
      $region63: #{tpu_custom_call.1} parent=5 // pred_region
        %s12474 = ssub.s32 %s18, 2
        // Predicated region
        $region65: #{tpu_custom_call.1} parent=63 // pred_check
          %p12475 = pneg %p241
        $region66: #{tpu_custom_call.1} parent=63 // pred_check_branch
          %12477 = sbr.rel (%p12475) target = $region68
        $region67: #{tpu_custom_call.1} parent=63 // pred_region
          %s12478 = sand.u32 %s226, 1
          %s12479 = scalar_lea.sflag [#allocation3], %s12478
          %s12480 = sand.u32 %s226, 1
          %s12481 = smul.addr %s12480, 4
          %s12482 = scalar_lea.vmem [#allocation2], %s12481
          %12484 = dma.done %s12479, 64
        $region68: #{tpu_custom_call.1} parent=63 // pred_fallthru
          _
      $region64: #{tpu_custom_call.1} parent=5 // pred_fallthru
        _
    $region6: #{tpu_custom_call.1} parent=1 // loop_footer
      %s22 = sadd.s32 1, %s18
    $region7: #{tpu_custom_call.1} parent=1 // loop_footer_branch
      %17 = sbr.rel target = $region3
    $region8: #{tpu_custom_call.1} parent=1 // loop_exit
      _
    %12485 = vsyncpa [#allocation3], 1
    %s12486 = scalar_lea.sflag [#allocation3], 1
    %12487 = vsyncpa %s12486, 1

</llo_original>
